<compile_context>
chip_gen: v7x
topology: tpu7x:2x2x1
jax: 0.10.0
libtpu: 0.0.40
codegen_flags: <defaults>
</compile_context>

<pallas_src>
import functools

import jax
import jax.numpy as jnp
from jax.experimental import pallas as pl
from jax.experimental.pallas import tpu as pltpu


_K = 7                 # conv kernel size
_P = (_K - 1) // 2     # 'same' padding = 3
_ROW0 = 8              # sublane-aligned start row of the pool-map interior in scratch
_PAD_ROWS = 16         # extra scratch rows: 8 top (aligned) + >= 3 bottom halo


# ----------------------------- in-kernel helpers ------------------------------

def _conv7x7_mxu(scr_max, scr_mean, w_ref, bias, s0):
    """'Same' 7x7 cross-correlation, 2 input maps -> 1 map, on the MXU.

    scr_max / scr_mean : VMEM scratch (s0 + 16, s1).  Rows [8, 8+s0) hold the pooled
                         map; rows [5, 8) and [8+s0, 11+s0) are zero (halo).
    w_ref              : VMEM (2, 7, s1, s1) banded matrices,
                         w_ref[cin, kh][a, b] = tap[cin, kh, a - b + 3] inside the
                         7-wide band (0 outside), so a single jnp.dot per (cin, kh)
                         row band performs the entire kw loop on the MXU.
    bias               : folded BatchNorm bias (scalar from SMEM).
    Returns the (s0, s1) conv output (pre-sigmoid), f32.
    """
    acc = None
    for cin, scr in enumerate((scr_max, scr_mean)):
        for kh in range(_K):
            band = scr[_ROW0 - _P + kh:_ROW0 - _P + kh + s0, :]        # (s0, s1)
            d = jnp.dot(band, w_ref[cin, kh], preferred_element_type=jnp.float32)
            acc = d if acc is None else acc + d
    return acc + bias


def _triplet_kernel(x_ref, w1_ref, w2_ref, w3_ref, t1_ref, t2_ref, b_ref, o_ref,
                    p1max_s, p1mean_s, p2max_s, p2mean_s, p3max_s, p3mean_s, *, H, W):
    bt, C, HW = x_ref.shape

    # Zero only the 3-row halos the band matmuls read (no full-buffer zeroing, and the
    # big interior store below starts at the sublane-aligned row 8).  Re-zeroed every
    # grid step so the zero-padding stays valid under a megacore-sharded "parallel"
    # grid; the interiors are fully rewritten for every image.
    for scr, s0 in ((p1max_s, C), (p1mean_s, C), (p2max_s, C), (p2mean_s, C),
                    (p3max_s, H), (p3mean_s, H)):
        z = jnp.zeros((_P, scr.shape[1]), jnp.float32)
        scr[_ROW0 - _P:_ROW0, :] = z
        scr[_ROW0 + s0:_ROW0 + s0 + _P, :] = z

    t1 = t1_ref[...]                       # (W, HW) 0/1:  t1[w, k] = (k %  W == w)
    t2 = t2_ref[...]                       # (H, HW) 0/1:  t2[h, k] = (k // W == h)
    inv_w, inv_h, inv_c = 1.0 / W, 1.0 / H, 1.0 / C

    for b in range(bt):
        x2 = x_ref[b].astype(jnp.float32)                        # (C, H*W), lane-dense

        # ---- fused Z-pools: one pass over x in W-wide lane slices -----------------
        pmax = None
        psum = None
        for h in range(H):
            s = x2[:, h * W:(h + 1) * W]                         # (C, W)
            pmax = s if pmax is None else jnp.maximum(pmax, s)
            psum = s if psum is None else psum + s
            # branch-W gate: pool over W -> column h of the (C, H) map
            p2max_s[_ROW0:_ROW0 + C, h:h + 1] = jnp.max(s, axis=1, keepdims=True)
            p2mean_s[_ROW0:_ROW0 + C, h:h + 1] = jnp.sum(s, axis=1, keepdims=True) * inv_w
            # spatial gate: pool over C -> row h of the (H, W) map
            p3max_s[_ROW0 + h:_ROW0 + h + 1, :] = jnp.max(s, axis=0, keepdims=True)
            p3mean_s[_ROW0 + h:_ROW0 + h + 1, :] = jnp.sum(s, axis=0, keepdims=True) * inv_c
        # branch-H gate: pool over H -> (C, W) map (aligned interior store at row 8)
        p1max_s[_ROW0:_ROW0 + C, :] = pmax
        p1mean_s[_ROW0:_ROW0 + C, :] = psum * inv_h

        # ---- the three 7x7 SpatialGate convs as banded MXU matmuls ----------------
        s1 = jax.nn.sigmoid(_conv7x7_mxu(p1max_s, p1mean_s, w1_ref, b_ref[0], C))  # (C, W)
        s2 = jax.nn.sigmoid(_conv7x7_mxu(p2max_s, p2mean_s, w2_ref, b_ref[1], C))  # (C, H)
        s3 = jax.nn.sigmoid(_conv7x7_mxu(p3max_s, p3mean_s, w3_ref, b_ref[2], H))  # (H, W)

        # ---- broadcast the gates back to the flat (C, H*W) layout (MXU 0/1 expand) -
        e1 = jnp.dot(s1, t1, preferred_element_type=jnp.float32)       # s1[c, k %  W]
        e2 = jnp.dot(s2, t2, preferred_element_type=jnp.float32)       # s2[c, k // W]
        e3 = jnp.sum(jnp.dot(s3, t1, preferred_element_type=jnp.float32) * t2,
                     axis=0, keepdims=True)                            # s3[k//W, k%W]

        o_ref[b] = (x2 * ((e1 + e2 + e3) * (1.0 / 3.0))).astype(o_ref.dtype)


# ----------------------------- host-side preparation --------------------------

def _fold_conv_bn(w, gamma, beta, mean, var, eps=1e-5):
    """Fold single-channel BatchNorm (inference/running stats) into the bias-free conv."""
    s = gamma / jnp.sqrt(var + eps)
    return w[0] * s, beta - mean * s                         # (2, 7, 7), scalar


def _band_matrices(taps, size):
    """taps (2,7,7) -> (2,7,size,size) banded matrices M with
    M[cin, kh, a, b] = taps[cin, kh, a - b + 3] inside the 7-wide band, else 0,
    so  conv_out = sum_{cin,kh} row_band_kh(zero-row-padded map_cin) @ M[cin, kh]."""
    a = jnp.arange(size)[:, None]
    b = jnp.arange(size)[None, :]
    kw = a - b + _P
    valid = (kw >= 0) & (kw < _K)
    m = taps[:, :, jnp.clip(kw, 0, _K - 1)]                  # (2, 7, size, size)
    return jnp.where(valid[None, None], m, 0.0).astype(jnp.float32)


def _pick_batch_tile(n, bytes_per_image, target_bytes=4 << 20, max_images=8):
    """Images per grid step: target a few MiB of x per step (amortize ~0.35us/step)
    while keeping >= 2 grid steps so a 2-TC (v7x) megacore has work.
    Requires n % bt == 0 (divisor search; odd/prime n degrades to bt=1)."""
    bt = max(1, min(max_images, target_bytes // max(1, bytes_per_image), n))
    if n >= 2:
        bt = min(bt, n // 2)
    bt = max(1, bt)
    while n % bt:
        bt -= 1
    return bt


def triplet_attention(x, params):
    """x: (N, C, H, W) float32.
    params: dict {'h', 'w', 'sp'} -> (conv_w (1,2,7,7), bn_gamma, bn_beta, bn_mean, bn_var).
    """
    N, C, H, W = x.shape
    HW = H * W

    # Fold BN (running stats) into the conv taps; build banded MXU matrices.  Branch W
    # is evaluated in the transposed (C, H) layout, so its spatial taps are transposed
    # (corr(A^T, K^T) == corr(A, K)^T with symmetric 'same' padding).
    w1, b1 = _fold_conv_bn(*params['h'])     # conv over (C, W)
    w2, b2 = _fold_conv_bn(*params['w'])     # conv over (H, C) in PyTorch's view
    w3, b3 = _fold_conv_bn(*params['sp'])    # conv over (H, W)
    w2 = jnp.swapaxes(w2, 1, 2)

    w1b = _band_matrices(w1, W)              # (2, 7, W, W)
    w2b = _band_matrices(w2, H)              # (2, 7, H, H)
    w3b = _band_matrices(w3, W)              # (2, 7, W, W)
    bias = jnp.stack([b1, b2, b3]).astype(jnp.float32)                   # (3,)

    # 0/1 expansion matrices for the flat column index k = h*W + w.
    k = jnp.arange(HW)
    t1 = (k[None, :] % W == jnp.arange(W)[:, None]).astype(jnp.float32)   # (W, HW)
    t2 = (k[None, :] // W == jnp.arange(H)[:, None]).astype(jnp.float32)  # (H, HW)

    # Lane-dense layout: flatten (H, W) -> H*W (free metadata reshape in HBM).
    x_flat = x.reshape(N, C, HW)

    bt = _pick_batch_tile(N, C * HW * x.dtype.itemsize)
    grid = (N // bt,)

    blk_bytes = bt * C * HW * x.dtype.itemsize
    weight_bytes = 4 * int(w1b.size + w2b.size + w3b.size + t1.size + t2.size + 3)
    scratch_bytes = 4 * 128 * (4 * (C + _PAD_ROWS) + 2 * (H + _PAD_ROWS))
    work_bytes = 12 * C * HW * 4                       # rough f32 working set / image
    vmem_limit = int(min(48 << 20,                     # v7x-safe (64 MiB physical)
                         max(16 << 20,
                             4 * blk_bytes + weight_bytes + scratch_bytes
                             + work_bytes + (2 << 20))))

    conv_elems = C * W + C * H + H * W
    cost = pl.CostEstimate(
        flops=N * (4 * _K * _K * conv_elems                       # banded conv matmuls
                   + 2 * C * HW * (W + H) + 2 * H * HW * W        # gate-expand matmuls
                   + 12 * C * HW),                                # pools + gating
        transcendentals=N * conv_elems,
        bytes_accessed=2 * N * C * HW * x.dtype.itemsize + weight_bytes,
    )

    kernel = functools.partial(_triplet_kernel, H=H, W=W)

    out_flat = pl.pallas_call(
        kernel,
        out_shape=jax.ShapeDtypeStruct((N, C, HW), x.dtype),
        grid_spec=pltpu.PrefetchScalarGridSpec(
            num_scalar_prefetch=0,
            grid=grid,
            in_specs=[
                pl.BlockSpec((bt, C, HW), lambda n: (n, 0, 0)),              # x tile
                pl.BlockSpec((2, _K, W, W), lambda n: (0, 0, 0, 0)),         # gate-H taps
                pl.BlockSpec((2, _K, H, H), lambda n: (0, 0, 0, 0)),         # gate-W taps
                pl.BlockSpec((2, _K, W, W), lambda n: (0, 0, 0, 0)),         # spatial taps
                pl.BlockSpec((W, HW), lambda n: (0, 0)),                     # k -> k % W
                pl.BlockSpec((H, HW), lambda n: (0, 0)),                     # k -> k // W
                pl.BlockSpec(memory_space=pltpu.MemorySpace.SMEM),           # folded biases
            ],
            out_specs=pl.BlockSpec((bt, C, HW), lambda n: (n, 0, 0)),
            scratch_shapes=[
                pltpu.VMEM((C + _PAD_ROWS, W), jnp.float32),   # branch-H max  (C, W)
                pltpu.VMEM((C + _PAD_ROWS, W), jnp.float32),   # branch-H mean
                pltpu.VMEM((C + _PAD_ROWS, H), jnp.float32),   # branch-W max  (C, H)
                pltpu.VMEM((C + _PAD_ROWS, H), jnp.float32),   # branch-W mean
                pltpu.VMEM((H + _PAD_ROWS, W), jnp.float32),   # spatial  max  (H, W)
                pltpu.VMEM((H + _PAD_ROWS, W), jnp.float32),   # spatial  mean
            ],
        ),
        compiler_params=pltpu.CompilerParams(
            dimension_semantics=("parallel",),
            vmem_limit_bytes=vmem_limit,
        ),
        cost_estimate=cost,
    )(x_flat, w1b, w2b, w3b, t1, t2, bias)

    return out_flat.reshape(N, C, H, W)


# ----------------------------- pure-JAX reference -----------------------------

def _spatial_gate_ref(x, w, gamma, beta, mean, var, eps=1e-5):
    pooled = jnp.concatenate(
        [jnp.max(x, axis=1, keepdims=True), jnp.mean(x, axis=1, keepdims=True)], axis=1)
    y = jax.lax.conv_general_dilated(
        pooled, w, window_strides=(1, 1), padding=((_P, _P), (_P, _P)),
        dimension_numbers=('NCHW', 'OIHW', 'NCHW'),
        precision=jax.lax.Precision.HIGHEST)
    y = (y - mean) / jnp.sqrt(var + eps) * gamma + beta        # BN, inference mode
    return x * jax.nn.sigmoid(y)


def triplet_attention_ref(x, params):
    o11 = jnp.transpose(
        _spatial_gate_ref(jnp.transpose(x, (0, 2, 1, 3)), *params['h']), (0, 2, 1, 3))
    o21 = jnp.transpose(
        _spatial_gate_ref(jnp.transpose(x, (0, 3, 2, 1)), *params['w']), (0, 3, 2, 1))
    o = _spatial_gate_ref(x, *params['sp'])
    return (o + o11 + o21) * (1.0 / 3.0)


if __name__ == "__main__":
    key = jax.random.PRNGKey(0)
    kx, kh, kw, ksp = jax.random.split(key, 4)

    N, C, H, W = 2, 4, 16, 16
    x = jax.random.normal(kx, (N, C, H, W), dtype=jnp.float32)

    def make_gate_params(k):
        k0, k1, k2, k3, k4 = jax.random.split(k, 5)
        conv_w = jax.random.normal(k0, (1, 2, _K, _K), dtype=jnp.float32) * 0.3
        gamma = jax.random.uniform(k1, (), jnp.float32, 0.5, 1.5)
        beta = jax.random.normal(k2, (), jnp.float32) * 0.1
        mean = jax.random.normal(k3, (), jnp.float32) * 0.1
        var = jax.random.uniform(k4, (), jnp.float32, 0.5, 1.5)
        return (conv_w, gamma, beta, mean, var)

    # TODO(synk): BatchNorm is applied in inference mode (running stats folded into
    # the conv taps); training-mode batch statistics are not computed in-kernel.
    params = {'h': make_gate_params(kh),
              'w': make_gate_params(kw),
              'sp': make_gate_params(ksp)}

    out = jax.block_until_ready(triplet_attention(x, params))
    ref = triplet_attention_ref(x, params)

    assert out.shape == (N, C, H, W)
    max_err = float(jnp.max(jnp.abs(out - ref)))
    # Tolerance sized for the in-kernel MXU matmuls possibly running at the default
    # (reduced, bf16-class) contraction precision; structural errors are O(0.1 - 1).
    assert jnp.allclose(out, ref, atol=2e-2, rtol=2e-2), f"mismatch vs reference: {max_err}"

    print("KERNEL_OK")
</pallas_src>

<mosaic_0001>
module attributes {stable_mosaic.version = 11 : i64} {
  func.func @_triplet_kernel(%arg0: i32, %arg1: memref<1x4x256xf32, #tpu.memory_space<vmem>>, %arg2: memref<2x7x16x16xf32, #tpu.memory_space<vmem>>, %arg3: memref<2x7x16x16xf32, #tpu.memory_space<vmem>>, %arg4: memref<2x7x16x16xf32, #tpu.memory_space<vmem>>, %arg5: memref<16x256xf32, #tpu.memory_space<vmem>>, %arg6: memref<16x256xf32, #tpu.memory_space<vmem>>, %arg7: memref<3xf32, #tpu.memory_space<smem>>, %arg8: memref<1x4x256xf32, #tpu.memory_space<vmem>>, %arg9: memref<20x16xf32, #tpu.memory_space<vmem>>, %arg10: memref<20x16xf32, #tpu.memory_space<vmem>>, %arg11: memref<20x16xf32, #tpu.memory_space<vmem>>, %arg12: memref<20x16xf32, #tpu.memory_space<vmem>>, %arg13: memref<32x16xf32, #tpu.memory_space<vmem>>, %arg14: memref<32x16xf32, #tpu.memory_space<vmem>>) attributes {dimension_semantics = [#tpu.dimension_semantics<parallel>], iteration_bounds = array<i64: 2>, scalar_prefetch = 0 : i64, scratch_operands = 6 : i64, tpu.core_type = #tpu.core_type<tc>, window_params = [{transform_indices = @transform_0, window_bounds = array<i64: 1, 4, 256>}, {pipeline_mode = #tpu.pipeline_mode<synchronous>, transform_indices = @transform_1, window_bounds = array<i64: 2, 7, 16, 16>}, {pipeline_mode = #tpu.pipeline_mode<synchronous>, transform_indices = @transform_2, window_bounds = array<i64: 2, 7, 16, 16>}, {pipeline_mode = #tpu.pipeline_mode<synchronous>, transform_indices = @transform_3, window_bounds = array<i64: 2, 7, 16, 16>}, {pipeline_mode = #tpu.pipeline_mode<synchronous>, transform_indices = @transform_4, window_bounds = array<i64: 16, 256>}, {pipeline_mode = #tpu.pipeline_mode<synchronous>, transform_indices = @transform_5, window_bounds = array<i64: 16, 256>}, {transform_indices = @transform_6, window_bounds = array<i64: 3>}, {transform_indices = @transform_7, window_bounds = array<i64: 1, 4, 256>}]} {
    %cst = arith.constant 0.000000e+00 : f32
    %0 = vector.broadcast %cst : f32 to vector<3x16xf32>
    %c5 = arith.constant 5 : index
    %c0 = arith.constant 0 : index
    %1 = vector.load %arg9[%c5, %c0] : memref<20x16xf32, #tpu.memory_space<vmem>>, vector<3x16xf32>
    tpu.vector_store %arg9[%c5, %c0], %0 {strides = array<i32>} : memref<20x16xf32, #tpu.memory_space<vmem>>, vector<3x16xf32>,
    %c12 = arith.constant 12 : index
    %c0_0 = arith.constant 0 : index
    %2 = vector.load %arg9[%c12, %c0_0] : memref<20x16xf32, #tpu.memory_space<vmem>>, vector<3x16xf32>
    tpu.vector_store %arg9[%c12, %c0_0], %0 {strides = array<i32>} : memref<20x16xf32, #tpu.memory_space<vmem>>, vector<3x16xf32>,
    %cst_1 = arith.constant 0.000000e+00 : f32
    %3 = vector.broadcast %cst_1 : f32 to vector<3x16xf32>
    %c5_2 = arith.constant 5 : index
    %c0_3 = arith.constant 0 : index
    %4 = vector.load %arg10[%c5_2, %c0_3] : memref<20x16xf32, #tpu.memory_space<vmem>>, vector<3x16xf32>
    tpu.vector_store %arg10[%c5_2, %c0_3], %3 {strides = array<i32>} : memref<20x16xf32, #tpu.memory_space<vmem>>, vector<3x16xf32>,
    %c12_4 = arith.constant 12 : index
    %c0_5 = arith.constant 0 : index
    %5 = vector.load %arg10[%c12_4, %c0_5] : memref<20x16xf32, #tpu.memory_space<vmem>>, vector<3x16xf32>
    tpu.vector_store %arg10[%c12_4, %c0_5], %3 {strides = array<i32>} : memref<20x16xf32, #tpu.memory_space<vmem>>, vector<3x16xf32>,
    %cst_6 = arith.constant 0.000000e+00 : f32
    %6 = vector.broadcast %cst_6 : f32 to vector<3x16xf32>
    %c5_7 = arith.constant 5 : index
    %c0_8 = arith.constant 0 : index
    %7 = vector.load %arg11[%c5_7, %c0_8] : memref<20x16xf32, #tpu.memory_space<vmem>>, vector<3x16xf32>
    tpu.vector_store %arg11[%c5_7, %c0_8], %6 {strides = array<i32>} : memref<20x16xf32, #tpu.memory_space<vmem>>, vector<3x16xf32>,
    %c12_9 = arith.constant 12 : index
    %c0_10 = arith.constant 0 : index
    %8 = vector.load %arg11[%c12_9, %c0_10] : memref<20x16xf32, #tpu.memory_space<vmem>>, vector<3x16xf32>
    tpu.vector_store %arg11[%c12_9, %c0_10], %6 {strides = array<i32>} : memref<20x16xf32, #tpu.memory_space<vmem>>, vector<3x16xf32>,
    %cst_11 = arith.constant 0.000000e+00 : f32
    %9 = vector.broadcast %cst_11 : f32 to vector<3x16xf32>
    %c5_12 = arith.constant 5 : index
    %c0_13 = arith.constant 0 : index
    %10 = vector.load %arg12[%c5_12, %c0_13] : memref<20x16xf32, #tpu.memory_space<vmem>>, vector<3x16xf32>
    tpu.vector_store %arg12[%c5_12, %c0_13], %9 {strides = array<i32>} : memref<20x16xf32, #tpu.memory_space<vmem>>, vector<3x16xf32>,
    %c12_14 = arith.constant 12 : index
    %c0_15 = arith.constant 0 : index
    %11 = vector.load %arg12[%c12_14, %c0_15] : memref<20x16xf32, #tpu.memory_space<vmem>>, vector<3x16xf32>
    tpu.vector_store %arg12[%c12_14, %c0_15], %9 {strides = array<i32>} : memref<20x16xf32, #tpu.memory_space<vmem>>, vector<3x16xf32>,
    %cst_16 = arith.constant 0.000000e+00 : f32
    %12 = vector.broadcast %cst_16 : f32 to vector<3x16xf32>
    %c5_17 = arith.constant 5 : index
    %c0_18 = arith.constant 0 : index
    %13 = vector.load %arg13[%c5_17, %c0_18] : memref<32x16xf32, #tpu.memory_space<vmem>>, vector<3x16xf32>
    tpu.vector_store %arg13[%c5_17, %c0_18], %12 {strides = array<i32>} : memref<32x16xf32, #tpu.memory_space<vmem>>, vector<3x16xf32>,
    %c24 = arith.constant 24 : index
    %c0_19 = arith.constant 0 : index
    %14 = vector.load %arg13[%c24, %c0_19] : memref<32x16xf32, #tpu.memory_space<vmem>>, vector<3x16xf32>
    tpu.vector_store %arg13[%c24, %c0_19], %12 {strides = array<i32>} : memref<32x16xf32, #tpu.memory_space<vmem>>, vector<3x16xf32>,
    %cst_20 = arith.constant 0.000000e+00 : f32
    %15 = vector.broadcast %cst_20 : f32 to vector<3x16xf32>
    %c5_21 = arith.constant 5 : index
    %c0_22 = arith.constant 0 : index
    %16 = vector.load %arg14[%c5_21, %c0_22] : memref<32x16xf32, #tpu.memory_space<vmem>>, vector<3x16xf32>
    tpu.vector_store %arg14[%c5_21, %c0_22], %15 {strides = array<i32>} : memref<32x16xf32, #tpu.memory_space<vmem>>, vector<3x16xf32>,
    %c24_23 = arith.constant 24 : index
    %c0_24 = arith.constant 0 : index
    %17 = vector.load %arg14[%c24_23, %c0_24] : memref<32x16xf32, #tpu.memory_space<vmem>>, vector<3x16xf32>
    tpu.vector_store %arg14[%c24_23, %c0_24], %15 {strides = array<i32>} : memref<32x16xf32, #tpu.memory_space<vmem>>, vector<3x16xf32>,
    %c0_25 = arith.constant 0 : index
    %c0_26 = arith.constant 0 : index
    %18 = vector.load %arg5[%c0_25, %c0_26] : memref<16x256xf32, #tpu.memory_space<vmem>>, vector<16x256xf32>
    %c0_27 = arith.constant 0 : index
    %c0_28 = arith.constant 0 : index
    %19 = vector.load %arg6[%c0_27, %c0_28] : memref<16x256xf32, #tpu.memory_space<vmem>>, vector<16x256xf32>
    %c0_29 = arith.constant 0 : index
    %c0_30 = arith.constant 0 : index
    %c0_31 = arith.constant 0 : index
    %20 = vector.load %arg1[%c0_29, %c0_30, %c0_31] : memref<1x4x256xf32, #tpu.memory_space<vmem>>, vector<1x4x256xf32>
    %21 = vector.shape_cast %20 : vector<1x4x256xf32> to vector<4x256xf32>
    %22 = vector.extract_strided_slice %21 {offsets = [0, 0], sizes = [4, 16], strides = [1, 1]} : vector<4x256xf32> to vector<4x16xf32>
    %cst_32 = arith.constant dense<0xFF800000> : vector<4xf32>
    %23 = vector.multi_reduction <maximumf>, %22, %cst_32 [1] : vector<4x16xf32> to vector<4xf32>
    %24 = vector.shape_cast %23 : vector<4xf32> to vector<4x1xf32>
    %c8 = arith.constant 8 : index
    %c0_33 = arith.constant 0 : index
    %25 = vector.load %arg11[%c8, %c0_33] : memref<20x16xf32, #tpu.memory_space<vmem>>, vector<4x1xf32>
    tpu.vector_store %arg11[%c8, %c0_33], %24 {strides = array<i32>} : memref<20x16xf32, #tpu.memory_space<vmem>>, vector<4x1xf32>,
    %cst_34 = arith.constant dense<0.000000e+00> : vector<4xf32>
    %26 = vector.multi_reduction <add>, %22, %cst_34 [1] : vector<4x16xf32> to vector<4xf32>
    %27 = vector.shape_cast %26 : vector<4xf32> to vector<4x1xf32>
    %cst_35 = arith.constant 6.250000e-02 : f32
    %28 = vector.broadcast %cst_35 : f32 to vector<4x1xf32>
    %29 = arith.mulf %27, %28 : vector<4x1xf32>
    %c8_36 = arith.constant 8 : index
    %c0_37 = arith.constant 0 : index
    %30 = vector.load %arg12[%c8_36, %c0_37] : memref<20x16xf32, #tpu.memory_space<vmem>>, vector<4x1xf32>
    tpu.vector_store %arg12[%c8_36, %c0_37], %29 {strides = array<i32>} : memref<20x16xf32, #tpu.memory_space<vmem>>, vector<4x1xf32>,
    %cst_38 = arith.constant dense<0xFF800000> : vector<16xf32>
    %31 = vector.multi_reduction <maximumf>, %22, %cst_38 [0] : vector<4x16xf32> to vector<16xf32>
    %32 = vector.shape_cast %31 : vector<16xf32> to vector<1x16xf32>
    %c8_39 = arith.constant 8 : index
    %c0_40 = arith.constant 0 : index
    %33 = vector.load %arg13[%c8_39, %c0_40] : memref<32x16xf32, #tpu.memory_space<vmem>>, vector<1x16xf32>
    tpu.vector_store %arg13[%c8_39, %c0_40], %32 {strides = array<i32>} : memref<32x16xf32, #tpu.memory_space<vmem>>, vector<1x16xf32>,
    %cst_41 = arith.constant dense<0.000000e+00> : vector<16xf32>
    %34 = vector.multi_reduction <add>, %22, %cst_41 [0] : vector<4x16xf32> to vector<16xf32>
    %35 = vector.shape_cast %34 : vector<16xf32> to vector<1x16xf32>
    %cst_42 = arith.constant 2.500000e-01 : f32
    %36 = vector.broadcast %cst_42 : f32 to vector<1x16xf32>
    %37 = arith.mulf %35, %36 : vector<1x16xf32>
    %c8_43 = arith.constant 8 : index
    %c0_44 = arith.constant 0 : index
    %38 = vector.load %arg14[%c8_43, %c0_44] : memref<32x16xf32, #tpu.memory_space<vmem>>, vector<1x16xf32>
    tpu.vector_store %arg14[%c8_43, %c0_44], %37 {strides = array<i32>} : memref<32x16xf32, #tpu.memory_space<vmem>>, vector<1x16xf32>,
    %39 = vector.extract_strided_slice %21 {offsets = [0, 16], sizes = [4, 16], strides = [1, 1]} : vector<4x256xf32> to vector<4x16xf32>
    %40 = arith.maximumf %22, %39 : vector<4x16xf32>
    %41 = arith.addf %22, %39 : vector<4x16xf32>
    %cst_45 = arith.constant dense<0xFF800000> : vector<4xf32>
    %42 = vector.multi_reduction <maximumf>, %39, %cst_45 [1] : vector<4x16xf32> to vector<4xf32>
    %43 = vector.shape_cast %42 : vector<4xf32> to vector<4x1xf32>
    %c8_46 = arith.constant 8 : index
    %c1 = arith.constant 1 : index
    %44 = vector.load %arg11[%c8_46, %c1] : memref<20x16xf32, #tpu.memory_space<vmem>>, vector<4x1xf32>
    tpu.vector_store %arg11[%c8_46, %c1], %43 {strides = array<i32>} : memref<20x16xf32, #tpu.memory_space<vmem>>, vector<4x1xf32>,
    %cst_47 = arith.constant dense<0.000000e+00> : vector<4xf32>
    %45 = vector.multi_reduction <add>, %39, %cst_47 [1] : vector<4x16xf32> to vector<4xf32>
    %46 = vector.shape_cast %45 : vector<4xf32> to vector<4x1xf32>
    %cst_48 = arith.constant 6.250000e-02 : f32
    %47 = vector.broadcast %cst_48 : f32 to vector<4x1xf32>
    %48 = arith.mulf %46, %47 : vector<4x1xf32>
    %c8_49 = arith.constant 8 : index
    %c1_50 = arith.constant 1 : index
    %49 = vector.load %arg12[%c8_49, %c1_50] : memref<20x16xf32, #tpu.memory_space<vmem>>, vector<4x1xf32>
    tpu.vector_store %arg12[%c8_49, %c1_50], %48 {strides = array<i32>} : memref<20x16xf32, #tpu.memory_space<vmem>>, vector<4x1xf32>,
    %cst_51 = arith.constant dense<0xFF800000> : vector<16xf32>
    %50 = vector.multi_reduction <maximumf>, %39, %cst_51 [0] : vector<4x16xf32> to vector<16xf32>
    %51 = vector.shape_cast %50 : vector<16xf32> to vector<1x16xf32>
    %c9 = arith.constant 9 : index
    %c0_52 = arith.constant 0 : index
    %52 = vector.load %arg13[%c9, %c0_52] : memref<32x16xf32, #tpu.memory_space<vmem>>, vector<1x16xf32>
    tpu.vector_store %arg13[%c9, %c0_52], %51 {strides = array<i32>} : memref<32x16xf32, #tpu.memory_space<vmem>>, vector<1x16xf32>,
    %cst_53 = arith.constant dense<0.000000e+00> : vector<16xf32>
    %53 = vector.multi_reduction <add>, %39, %cst_53 [0] : vector<4x16xf32> to vector<16xf32>
    %54 = vector.shape_cast %53 : vector<16xf32> to vector<1x16xf32>
    %cst_54 = arith.constant 2.500000e-01 : f32
    %55 = vector.broadcast %cst_54 : f32 to vector<1x16xf32>
    %56 = arith.mulf %54, %55 : vector<1x16xf32>
    %c9_55 = arith.constant 9 : index
    %c0_56 = arith.constant 0 : index
    %57 = vector.load %arg14[%c9_55, %c0_56] : memref<32x16xf32, #tpu.memory_space<vmem>>, vector<1x16xf32>
    tpu.vector_store %arg14[%c9_55, %c0_56], %56 {strides = array<i32>} : memref<32x16xf32, #tpu.memory_space<vmem>>, vector<1x16xf32>,
    %58 = vector.extract_strided_slice %21 {offsets = [0, 32], sizes = [4, 16], strides = [1, 1]} : vector<4x256xf32> to vector<4x16xf32>
    %59 = arith.maximumf %40, %58 : vector<4x16xf32>
    %60 = arith.addf %41, %58 : vector<4x16xf32>
    %cst_57 = arith.constant dense<0xFF800000> : vector<4xf32>
    %61 = vector.multi_reduction <maximumf>, %58, %cst_57 [1] : vector<4x16xf32> to vector<4xf32>
    %62 = vector.shape_cast %61 : vector<4xf32> to vector<4x1xf32>
    %c8_58 = arith.constant 8 : index
    %c2 = arith.constant 2 : index
    %63 = vector.load %arg11[%c8_58, %c2] : memref<20x16xf32, #tpu.memory_space<vmem>>, vector<4x1xf32>
    tpu.vector_store %arg11[%c8_58, %c2], %62 {strides = array<i32>} : memref<20x16xf32, #tpu.memory_space<vmem>>, vector<4x1xf32>,
    %cst_59 = arith.constant dense<0.000000e+00> : vector<4xf32>
    %64 = vector.multi_reduction <add>, %58, %cst_59 [1] : vector<4x16xf32> to vector<4xf32>
    %65 = vector.shape_cast %64 : vector<4xf32> to vector<4x1xf32>
    %cst_60 = arith.constant 6.250000e-02 : f32
    %66 = vector.broadcast %cst_60 : f32 to vector<4x1xf32>
    %67 = arith.mulf %65, %66 : vector<4x1xf32>
    %c8_61 = arith.constant 8 : index
    %c2_62 = arith.constant 2 : index
    %68 = vector.load %arg12[%c8_61, %c2_62] : memref<20x16xf32, #tpu.memory_space<vmem>>, vector<4x1xf32>
    tpu.vector_store %arg12[%c8_61, %c2_62], %67 {strides = array<i32>} : memref<20x16xf32, #tpu.memory_space<vmem>>, vector<4x1xf32>,
    %cst_63 = arith.constant dense<0xFF800000> : vector<16xf32>
    %69 = vector.multi_reduction <maximumf>, %58, %cst_63 [0] : vector<4x16xf32> to vector<16xf32>
    %70 = vector.shape_cast %69 : vector<16xf32> to vector<1x16xf32>
    %c10 = arith.constant 10 : index
    %c0_64 = arith.constant 0 : index
    %71 = vector.load %arg13[%c10, %c0_64] : memref<32x16xf32, #tpu.memory_space<vmem>>, vector<1x16xf32>
    tpu.vector_store %arg13[%c10, %c0_64], %70 {strides = array<i32>} : memref<32x16xf32, #tpu.memory_space<vmem>>, vector<1x16xf32>,
    %cst_65 = arith.constant dense<0.000000e+00> : vector<16xf32>
    %72 = vector.multi_reduction <add>, %58, %cst_65 [0] : vector<4x16xf32> to vector<16xf32>
    %73 = vector.shape_cast %72 : vector<16xf32> to vector<1x16xf32>
    %cst_66 = arith.constant 2.500000e-01 : f32
    %74 = vector.broadcast %cst_66 : f32 to vector<1x16xf32>
    %75 = arith.mulf %73, %74 : vector<1x16xf32>
    %c10_67 = arith.constant 10 : index
    %c0_68 = arith.constant 0 : index
    %76 = vector.load %arg14[%c10_67, %c0_68] : memref<32x16xf32, #tpu.memory_space<vmem>>, vector<1x16xf32>
    tpu.vector_store %arg14[%c10_67, %c0_68], %75 {strides = array<i32>} : memref<32x16xf32, #tpu.memory_space<vmem>>, vector<1x16xf32>,
    %77 = vector.extract_strided_slice %21 {offsets = [0, 48], sizes = [4, 16], strides = [1, 1]} : vector<4x256xf32> to vector<4x16xf32>
    %78 = arith.maximumf %59, %77 : vector<4x16xf32>
    %79 = arith.addf %60, %77 : vector<4x16xf32>
    %cst_69 = arith.constant dense<0xFF800000> : vector<4xf32>
    %80 = vector.multi_reduction <maximumf>, %77, %cst_69 [1] : vector<4x16xf32> to vector<4xf32>
    %81 = vector.shape_cast %80 : vector<4xf32> to vector<4x1xf32>
    %c8_70 = arith.constant 8 : index
    %c3 = arith.constant 3 : index
    %82 = vector.load %arg11[%c8_70, %c3] : memref<20x16xf32, #tpu.memory_space<vmem>>, vector<4x1xf32>
    tpu.vector_store %arg11[%c8_70, %c3], %81 {strides = array<i32>} : memref<20x16xf32, #tpu.memory_space<vmem>>, vector<4x1xf32>,
    %cst_71 = arith.constant dense<0.000000e+00> : vector<4xf32>
    %83 = vector.multi_reduction <add>, %77, %cst_71 [1] : vector<4x16xf32> to vector<4xf32>
    %84 = vector.shape_cast %83 : vector<4xf32> to vector<4x1xf32>
    %cst_72 = arith.constant 6.250000e-02 : f32
    %85 = vector.broadcast %cst_72 : f32 to vector<4x1xf32>
    %86 = arith.mulf %84, %85 : vector<4x1xf32>
    %c8_73 = arith.constant 8 : index
    %c3_74 = arith.constant 3 : index
    %87 = vector.load %arg12[%c8_73, %c3_74] : memref<20x16xf32, #tpu.memory_space<vmem>>, vector<4x1xf32>
    tpu.vector_store %arg12[%c8_73, %c3_74], %86 {strides = array<i32>} : memref<20x16xf32, #tpu.memory_space<vmem>>, vector<4x1xf32>,
    %cst_75 = arith.constant dense<0xFF800000> : vector<16xf32>
    %88 = vector.multi_reduction <maximumf>, %77, %cst_75 [0] : vector<4x16xf32> to vector<16xf32>
    %89 = vector.shape_cast %88 : vector<16xf32> to vector<1x16xf32>
    %c11 = arith.constant 11 : index
    %c0_76 = arith.constant 0 : index
    %90 = vector.load %arg13[%c11, %c0_76] : memref<32x16xf32, #tpu.memory_space<vmem>>, vector<1x16xf32>
    tpu.vector_store %arg13[%c11, %c0_76], %89 {strides = array<i32>} : memref<32x16xf32, #tpu.memory_space<vmem>>, vector<1x16xf32>,
    %cst_77 = arith.constant dense<0.000000e+00> : vector<16xf32>
    %91 = vector.multi_reduction <add>, %77, %cst_77 [0] : vector<4x16xf32> to vector<16xf32>
    %92 = vector.shape_cast %91 : vector<16xf32> to vector<1x16xf32>
    %cst_78 = arith.constant 2.500000e-01 : f32
    %93 = vector.broadcast %cst_78 : f32 to vector<1x16xf32>
    %94 = arith.mulf %92, %93 : vector<1x16xf32>
    %c11_79 = arith.constant 11 : index
    %c0_80 = arith.constant 0 : index
    %95 = vector.load %arg14[%c11_79, %c0_80] : memref<32x16xf32, #tpu.memory_space<vmem>>, vector<1x16xf32>
    tpu.vector_store %arg14[%c11_79, %c0_80], %94 {strides = array<i32>} : memref<32x16xf32, #tpu.memory_space<vmem>>, vector<1x16xf32>,
    %96 = vector.extract_strided_slice %21 {offsets = [0, 64], sizes = [4, 16], strides = [1, 1]} : vector<4x256xf32> to vector<4x16xf32>
    %97 = arith.maximumf %78, %96 : vector<4x16xf32>
    %98 = arith.addf %79, %96 : vector<4x16xf32>
    %cst_81 = arith.constant dense<0xFF800000> : vector<4xf32>
    %99 = vector.multi_reduction <maximumf>, %96, %cst_81 [1] : vector<4x16xf32> to vector<4xf32>
    %100 = vector.shape_cast %99 : vector<4xf32> to vector<4x1xf32>
    %c8_82 = arith.constant 8 : index
    %c4 = arith.constant 4 : index
    %101 = vector.load %arg11[%c8_82, %c4] : memref<20x16xf32, #tpu.memory_space<vmem>>, vector<4x1xf32>
    tpu.vector_store %arg11[%c8_82, %c4], %100 {strides = array<i32>} : memref<20x16xf32, #tpu.memory_space<vmem>>, vector<4x1xf32>,
    %cst_83 = arith.constant dense<0.000000e+00> : vector<4xf32>
    %102 = vector.multi_reduction <add>, %96, %cst_83 [1] : vector<4x16xf32> to vector<4xf32>
    %103 = vector.shape_cast %102 : vector<4xf32> to vector<4x1xf32>
    %cst_84 = arith.constant 6.250000e-02 : f32
    %104 = vector.broadcast %cst_84 : f32 to vector<4x1xf32>
    %105 = arith.mulf %103, %104 : vector<4x1xf32>
    %c8_85 = arith.constant 8 : index
    %c4_86 = arith.constant 4 : index
    %106 = vector.load %arg12[%c8_85, %c4_86] : memref<20x16xf32, #tpu.memory_space<vmem>>, vector<4x1xf32>
    tpu.vector_store %arg12[%c8_85, %c4_86], %105 {strides = array<i32>} : memref<20x16xf32, #tpu.memory_space<vmem>>, vector<4x1xf32>,
    %cst_87 = arith.constant dense<0xFF800000> : vector<16xf32>
    %107 = vector.multi_reduction <maximumf>, %96, %cst_87 [0] : vector<4x16xf32> to vector<16xf32>
    %108 = vector.shape_cast %107 : vector<16xf32> to vector<1x16xf32>
    %c12_88 = arith.constant 12 : index
    %c0_89 = arith.constant 0 : index
    %109 = vector.load %arg13[%c12_88, %c0_89] : memref<32x16xf32, #tpu.memory_space<vmem>>, vector<1x16xf32>
    tpu.vector_store %arg13[%c12_88, %c0_89], %108 {strides = array<i32>} : memref<32x16xf32, #tpu.memory_space<vmem>>, vector<1x16xf32>,
    %cst_90 = arith.constant dense<0.000000e+00> : vector<16xf32>
    %110 = vector.multi_reduction <add>, %96, %cst_90 [0] : vector<4x16xf32> to vector<16xf32>
    %111 = vector.shape_cast %110 : vector<16xf32> to vector<1x16xf32>
    %cst_91 = arith.constant 2.500000e-01 : f32
    %112 = vector.broadcast %cst_91 : f32 to vector<1x16xf32>
    %113 = arith.mulf %111, %112 : vector<1x16xf32>
    %c12_92 = arith.constant 12 : index
    %c0_93 = arith.constant 0 : index
    %114 = vector.load %arg14[%c12_92, %c0_93] : memref<32x16xf32, #tpu.memory_space<vmem>>, vector<1x16xf32>
    tpu.vector_store %arg14[%c12_92, %c0_93], %113 {strides = array<i32>} : memref<32x16xf32, #tpu.memory_space<vmem>>, vector<1x16xf32>,
    %115 = vector.extract_strided_slice %21 {offsets = [0, 80], sizes = [4, 16], strides = [1, 1]} : vector<4x256xf32> to vector<4x16xf32>
    %116 = arith.maximumf %97, %115 : vector<4x16xf32>
    %117 = arith.addf %98, %115 : vector<4x16xf32>
    %cst_94 = arith.constant dense<0xFF800000> : vector<4xf32>
    %118 = vector.multi_reduction <maximumf>, %115, %cst_94 [1] : vector<4x16xf32> to vector<4xf32>
    %119 = vector.shape_cast %118 : vector<4xf32> to vector<4x1xf32>
    %c8_95 = arith.constant 8 : index
    %c5_96 = arith.constant 5 : index
    %120 = vector.load %arg11[%c8_95, %c5_96] : memref<20x16xf32, #tpu.memory_space<vmem>>, vector<4x1xf32>
    tpu.vector_store %arg11[%c8_95, %c5_96], %119 {strides = array<i32>} : memref<20x16xf32, #tpu.memory_space<vmem>>, vector<4x1xf32>,
    %cst_97 = arith.constant dense<0.000000e+00> : vector<4xf32>
    %121 = vector.multi_reduction <add>, %115, %cst_97 [1] : vector<4x16xf32> to vector<4xf32>
    %122 = vector.shape_cast %121 : vector<4xf32> to vector<4x1xf32>
    %cst_98 = arith.constant 6.250000e-02 : f32
    %123 = vector.broadcast %cst_98 : f32 to vector<4x1xf32>
    %124 = arith.mulf %122, %123 : vector<4x1xf32>
    %c8_99 = arith.constant 8 : index
    %c5_100 = arith.constant 5 : index
    %125 = vector.load %arg12[%c8_99, %c5_100] : memref<20x16xf32, #tpu.memory_space<vmem>>, vector<4x1xf32>
    tpu.vector_store %arg12[%c8_99, %c5_100], %124 {strides = array<i32>} : memref<20x16xf32, #tpu.memory_space<vmem>>, vector<4x1xf32>,
    %cst_101 = arith.constant dense<0xFF800000> : vector<16xf32>
    %126 = vector.multi_reduction <maximumf>, %115, %cst_101 [0] : vector<4x16xf32> to vector<16xf32>
    %127 = vector.shape_cast %126 : vector<16xf32> to vector<1x16xf32>
    %c13 = arith.constant 13 : index
    %c0_102 = arith.constant 0 : index
    %128 = vector.load %arg13[%c13, %c0_102] : memref<32x16xf32, #tpu.memory_space<vmem>>, vector<1x16xf32>
    tpu.vector_store %arg13[%c13, %c0_102], %127 {strides = array<i32>} : memref<32x16xf32, #tpu.memory_space<vmem>>, vector<1x16xf32>,
    %cst_103 = arith.constant dense<0.000000e+00> : vector<16xf32>
    %129 = vector.multi_reduction <add>, %115, %cst_103 [0] : vector<4x16xf32> to vector<16xf32>
    %130 = vector.shape_cast %129 : vector<16xf32> to vector<1x16xf32>
    %cst_104 = arith.constant 2.500000e-01 : f32
    %131 = vector.broadcast %cst_104 : f32 to vector<1x16xf32>
    %132 = arith.mulf %130, %131 : vector<1x16xf32>
    %c13_105 = arith.constant 13 : index
    %c0_106 = arith.constant 0 : index
    %133 = vector.load %arg14[%c13_105, %c0_106] : memref<32x16xf32, #tpu.memory_space<vmem>>, vector<1x16xf32>
    tpu.vector_store %arg14[%c13_105, %c0_106], %132 {strides = array<i32>} : memref<32x16xf32, #tpu.memory_space<vmem>>, vector<1x16xf32>,
    %134 = vector.extract_strided_slice %21 {offsets = [0, 96], sizes = [4, 16], strides = [1, 1]} : vector<4x256xf32> to vector<4x16xf32>
    %135 = arith.maximumf %116, %134 : vector<4x16xf32>
    %136 = arith.addf %117, %134 : vector<4x16xf32>
    %cst_107 = arith.constant dense<0xFF800000> : vector<4xf32>
    %137 = vector.multi_reduction <maximumf>, %134, %cst_107 [1] : vector<4x16xf32> to vector<4xf32>
    %138 = vector.shape_cast %137 : vector<4xf32> to vector<4x1xf32>
    %c8_108 = arith.constant 8 : index
    %c6 = arith.constant 6 : index
    %139 = vector.load %arg11[%c8_108, %c6] : memref<20x16xf32, #tpu.memory_space<vmem>>, vector<4x1xf32>
    tpu.vector_store %arg11[%c8_108, %c6], %138 {strides = array<i32>} : memref<20x16xf32, #tpu.memory_space<vmem>>, vector<4x1xf32>,
    %cst_109 = arith.constant dense<0.000000e+00> : vector<4xf32>
    %140 = vector.multi_reduction <add>, %134, %cst_109 [1] : vector<4x16xf32> to vector<4xf32>
    %141 = vector.shape_cast %140 : vector<4xf32> to vector<4x1xf32>
    %cst_110 = arith.constant 6.250000e-02 : f32
    %142 = vector.broadcast %cst_110 : f32 to vector<4x1xf32>
    %143 = arith.mulf %141, %142 : vector<4x1xf32>
    %c8_111 = arith.constant 8 : index
    %c6_112 = arith.constant 6 : index
    %144 = vector.load %arg12[%c8_111, %c6_112] : memref<20x16xf32, #tpu.memory_space<vmem>>, vector<4x1xf32>
    tpu.vector_store %arg12[%c8_111, %c6_112], %143 {strides = array<i32>} : memref<20x16xf32, #tpu.memory_space<vmem>>, vector<4x1xf32>,
    %cst_113 = arith.constant dense<0xFF800000> : vector<16xf32>
    %145 = vector.multi_reduction <maximumf>, %134, %cst_113 [0] : vector<4x16xf32> to vector<16xf32>
    %146 = vector.shape_cast %145 : vector<16xf32> to vector<1x16xf32>
    %c14 = arith.constant 14 : index
    %c0_114 = arith.constant 0 : index
    %147 = vector.load %arg13[%c14, %c0_114] : memref<32x16xf32, #tpu.memory_space<vmem>>, vector<1x16xf32>
    tpu.vector_store %arg13[%c14, %c0_114], %146 {strides = array<i32>} : memref<32x16xf32, #tpu.memory_space<vmem>>, vector<1x16xf32>,
    %cst_115 = arith.constant dense<0.000000e+00> : vector<16xf32>
    %148 = vector.multi_reduction <add>, %134, %cst_115 [0] : vector<4x16xf32> to vector<16xf32>
    %149 = vector.shape_cast %148 : vector<16xf32> to vector<1x16xf32>
    %cst_116 = arith.constant 2.500000e-01 : f32
    %150 = vector.broadcast %cst_116 : f32 to vector<1x16xf32>
    %151 = arith.mulf %149, %150 : vector<1x16xf32>
    %c14_117 = arith.constant 14 : index
    %c0_118 = arith.constant 0 : index
    %152 = vector.load %arg14[%c14_117, %c0_118] : memref<32x16xf32, #tpu.memory_space<vmem>>, vector<1x16xf32>
    tpu.vector_store %arg14[%c14_117, %c0_118], %151 {strides = array<i32>} : memref<32x16xf32, #tpu.memory_space<vmem>>, vector<1x16xf32>,
    %153 = vector.extract_strided_slice %21 {offsets = [0, 112], sizes = [4, 16], strides = [1, 1]} : vector<4x256xf32> to vector<4x16xf32>
    %154 = arith.maximumf %135, %153 : vector<4x16xf32>
    %155 = arith.addf %136, %153 : vector<4x16xf32>
    %cst_119 = arith.constant dense<0xFF800000> : vector<4xf32>
    %156 = vector.multi_reduction <maximumf>, %153, %cst_119 [1] : vector<4x16xf32> to vector<4xf32>
    %157 = vector.shape_cast %156 : vector<4xf32> to vector<4x1xf32>
    %c8_120 = arith.constant 8 : index
    %c7 = arith.constant 7 : index
    %158 = vector.load %arg11[%c8_120, %c7] : memref<20x16xf32, #tpu.memory_space<vmem>>, vector<4x1xf32>
    tpu.vector_store %arg11[%c8_120, %c7], %157 {strides = array<i32>} : memref<20x16xf32, #tpu.memory_space<vmem>>, vector<4x1xf32>,
    %cst_121 = arith.constant dense<0.000000e+00> : vector<4xf32>
    %159 = vector.multi_reduction <add>, %153, %cst_121 [1] : vector<4x16xf32> to vector<4xf32>
    %160 = vector.shape_cast %159 : vector<4xf32> to vector<4x1xf32>
    %cst_122 = arith.constant 6.250000e-02 : f32
    %161 = vector.broadcast %cst_122 : f32 to vector<4x1xf32>
    %162 = arith.mulf %160, %161 : vector<4x1xf32>
    %c8_123 = arith.constant 8 : index
    %c7_124 = arith.constant 7 : index
    %163 = vector.load %arg12[%c8_123, %c7_124] : memref<20x16xf32, #tpu.memory_space<vmem>>, vector<4x1xf32>
    tpu.vector_store %arg12[%c8_123, %c7_124], %162 {strides = array<i32>} : memref<20x16xf32, #tpu.memory_space<vmem>>, vector<4x1xf32>,
    %cst_125 = arith.constant dense<0xFF800000> : vector<16xf32>
    %164 = vector.multi_reduction <maximumf>, %153, %cst_125 [0] : vector<4x16xf32> to vector<16xf32>
    %165 = vector.shape_cast %164 : vector<16xf32> to vector<1x16xf32>
    %c15 = arith.constant 15 : index
    %c0_126 = arith.constant 0 : index
    %166 = vector.load %arg13[%c15, %c0_126] : memref<32x16xf32, #tpu.memory_space<vmem>>, vector<1x16xf32>
    tpu.vector_store %arg13[%c15, %c0_126], %165 {strides = array<i32>} : memref<32x16xf32, #tpu.memory_space<vmem>>, vector<1x16xf32>,
    %cst_127 = arith.constant dense<0.000000e+00> : vector<16xf32>
    %167 = vector.multi_reduction <add>, %153, %cst_127 [0] : vector<4x16xf32> to vector<16xf32>
    %168 = vector.shape_cast %167 : vector<16xf32> to vector<1x16xf32>
    %cst_128 = arith.constant 2.500000e-01 : f32
    %169 = vector.broadcast %cst_128 : f32 to vector<1x16xf32>
    %170 = arith.mulf %168, %169 : vector<1x16xf32>
    %c15_129 = arith.constant 15 : index
    %c0_130 = arith.constant 0 : index
    %171 = vector.load %arg14[%c15_129, %c0_130] : memref<32x16xf32, #tpu.memory_space<vmem>>, vector<1x16xf32>
    tpu.vector_store %arg14[%c15_129, %c0_130], %170 {strides = array<i32>} : memref<32x16xf32, #tpu.memory_space<vmem>>, vector<1x16xf32>,
    %172 = vector.extract_strided_slice %21 {offsets = [0, 128], sizes = [4, 16], strides = [1, 1]} : vector<4x256xf32> to vector<4x16xf32>
    %173 = arith.maximumf %154, %172 : vector<4x16xf32>
    %174 = arith.addf %155, %172 : vector<4x16xf32>
    %cst_131 = arith.constant dense<0xFF800000> : vector<4xf32>
    %175 = vector.multi_reduction <maximumf>, %172, %cst_131 [1] : vector<4x16xf32> to vector<4xf32>
    %176 = vector.shape_cast %175 : vector<4xf32> to vector<4x1xf32>
    %c8_132 = arith.constant 8 : index
    %c8_133 = arith.constant 8 : index
    %177 = vector.load %arg11[%c8_132, %c8_133] : memref<20x16xf32, #tpu.memory_space<vmem>>, vector<4x1xf32>
    tpu.vector_store %arg11[%c8_132, %c8_133], %176 {strides = array<i32>} : memref<20x16xf32, #tpu.memory_space<vmem>>, vector<4x1xf32>,
    %cst_134 = arith.constant dense<0.000000e+00> : vector<4xf32>
    %178 = vector.multi_reduction <add>, %172, %cst_134 [1] : vector<4x16xf32> to vector<4xf32>
    %179 = vector.shape_cast %178 : vector<4xf32> to vector<4x1xf32>
    %cst_135 = arith.constant 6.250000e-02 : f32
    %180 = vector.broadcast %cst_135 : f32 to vector<4x1xf32>
    %181 = arith.mulf %179, %180 : vector<4x1xf32>
    %c8_136 = arith.constant 8 : index
    %c8_137 = arith.constant 8 : index
    %182 = vector.load %arg12[%c8_136, %c8_137] : memref<20x16xf32, #tpu.memory_space<vmem>>, vector<4x1xf32>
    tpu.vector_store %arg12[%c8_136, %c8_137], %181 {strides = array<i32>} : memref<20x16xf32, #tpu.memory_space<vmem>>, vector<4x1xf32>,
    %cst_138 = arith.constant dense<0xFF800000> : vector<16xf32>
    %183 = vector.multi_reduction <maximumf>, %172, %cst_138 [0] : vector<4x16xf32> to vector<16xf32>
    %184 = vector.shape_cast %183 : vector<16xf32> to vector<1x16xf32>
    %c16 = arith.constant 16 : index
    %c0_139 = arith.constant 0 : index
    %185 = vector.load %arg13[%c16, %c0_139] : memref<32x16xf32, #tpu.memory_space<vmem>>, vector<1x16xf32>
    tpu.vector_store %arg13[%c16, %c0_139], %184 {strides = array<i32>} : memref<32x16xf32, #tpu.memory_space<vmem>>, vector<1x16xf32>,
    %cst_140 = arith.constant dense<0.000000e+00> : vector<16xf32>
    %186 = vector.multi_reduction <add>, %172, %cst_140 [0] : vector<4x16xf32> to vector<16xf32>
    %187 = vector.shape_cast %186 : vector<16xf32> to vector<1x16xf32>
    %cst_141 = arith.constant 2.500000e-01 : f32
    %188 = vector.broadcast %cst_141 : f32 to vector<1x16xf32>
    %189 = arith.mulf %187, %188 : vector<1x16xf32>
    %c16_142 = arith.constant 16 : index
    %c0_143 = arith.constant 0 : index
    %190 = vector.load %arg14[%c16_142, %c0_143] : memref<32x16xf32, #tpu.memory_space<vmem>>, vector<1x16xf32>
    tpu.vector_store %arg14[%c16_142, %c0_143], %189 {strides = array<i32>} : memref<32x16xf32, #tpu.memory_space<vmem>>, vector<1x16xf32>,
    %191 = vector.extract_strided_slice %21 {offsets = [0, 144], sizes = [4, 16], strides = [1, 1]} : vector<4x256xf32> to vector<4x16xf32>
    %192 = arith.maximumf %173, %191 : vector<4x16xf32>
    %193 = arith.addf %174, %191 : vector<4x16xf32>
    %cst_144 = arith.constant dense<0xFF800000> : vector<4xf32>
    %194 = vector.multi_reduction <maximumf>, %191, %cst_144 [1] : vector<4x16xf32> to vector<4xf32>
    %195 = vector.shape_cast %194 : vector<4xf32> to vector<4x1xf32>
    %c8_145 = arith.constant 8 : index
    %c9_146 = arith.constant 9 : index
    %196 = vector.load %arg11[%c8_145, %c9_146] : memref<20x16xf32, #tpu.memory_space<vmem>>, vector<4x1xf32>
    tpu.vector_store %arg11[%c8_145, %c9_146], %195 {strides = array<i32>} : memref<20x16xf32, #tpu.memory_space<vmem>>, vector<4x1xf32>,
    %cst_147 = arith.constant dense<0.000000e+00> : vector<4xf32>
    %197 = vector.multi_reduction <add>, %191, %cst_147 [1] : vector<4x16xf32> to vector<4xf32>
    %198 = vector.shape_cast %197 : vector<4xf32> to vector<4x1xf32>
    %cst_148 = arith.constant 6.250000e-02 : f32
    %199 = vector.broadcast %cst_148 : f32 to vector<4x1xf32>
    %200 = arith.mulf %198, %199 : vector<4x1xf32>
    %c8_149 = arith.constant 8 : index
    %c9_150 = arith.constant 9 : index
    %201 = vector.load %arg12[%c8_149, %c9_150] : memref<20x16xf32, #tpu.memory_space<vmem>>, vector<4x1xf32>
    tpu.vector_store %arg12[%c8_149, %c9_150], %200 {strides = array<i32>} : memref<20x16xf32, #tpu.memory_space<vmem>>, vector<4x1xf32>,
    %cst_151 = arith.constant dense<0xFF800000> : vector<16xf32>
    %202 = vector.multi_reduction <maximumf>, %191, %cst_151 [0] : vector<4x16xf32> to vector<16xf32>
    %203 = vector.shape_cast %202 : vector<16xf32> to vector<1x16xf32>
    %c17 = arith.constant 17 : index
    %c0_152 = arith.constant 0 : index
    %204 = vector.load %arg13[%c17, %c0_152] : memref<32x16xf32, #tpu.memory_space<vmem>>, vector<1x16xf32>
    tpu.vector_store %arg13[%c17, %c0_152], %203 {strides = array<i32>} : memref<32x16xf32, #tpu.memory_space<vmem>>, vector<1x16xf32>,
    %cst_153 = arith.constant dense<0.000000e+00> : vector<16xf32>
    %205 = vector.multi_reduction <add>, %191, %cst_153 [0] : vector<4x16xf32> to vector<16xf32>
    %206 = vector.shape_cast %205 : vector<16xf32> to vector<1x16xf32>
    %cst_154 = arith.constant 2.500000e-01 : f32
    %207 = vector.broadcast %cst_154 : f32 to vector<1x16xf32>
    %208 = arith.mulf %206, %207 : vector<1x16xf32>
    %c17_155 = arith.constant 17 : index
    %c0_156 = arith.constant 0 : index
    %209 = vector.load %arg14[%c17_155, %c0_156] : memref<32x16xf32, #tpu.memory_space<vmem>>, vector<1x16xf32>
    tpu.vector_store %arg14[%c17_155, %c0_156], %208 {strides = array<i32>} : memref<32x16xf32, #tpu.memory_space<vmem>>, vector<1x16xf32>,
    %210 = vector.extract_strided_slice %21 {offsets = [0, 160], sizes = [4, 16], strides = [1, 1]} : vector<4x256xf32> to vector<4x16xf32>
    %211 = arith.maximumf %192, %210 : vector<4x16xf32>
    %212 = arith.addf %193, %210 : vector<4x16xf32>
    %cst_157 = arith.constant dense<0xFF800000> : vector<4xf32>
    %213 = vector.multi_reduction <maximumf>, %210, %cst_157 [1] : vector<4x16xf32> to vector<4xf32>
    %214 = vector.shape_cast %213 : vector<4xf32> to vector<4x1xf32>
    %c8_158 = arith.constant 8 : index
    %c10_159 = arith.constant 10 : index
    %215 = vector.load %arg11[%c8_158, %c10_159] : memref<20x16xf32, #tpu.memory_space<vmem>>, vector<4x1xf32>
    tpu.vector_store %arg11[%c8_158, %c10_159], %214 {strides = array<i32>} : memref<20x16xf32, #tpu.memory_space<vmem>>, vector<4x1xf32>,
    %cst_160 = arith.constant dense<0.000000e+00> : vector<4xf32>
    %216 = vector.multi_reduction <add>, %210, %cst_160 [1] : vector<4x16xf32> to vector<4xf32>
    %217 = vector.shape_cast %216 : vector<4xf32> to vector<4x1xf32>
    %cst_161 = arith.constant 6.250000e-02 : f32
    %218 = vector.broadcast %cst_161 : f32 to vector<4x1xf32>
    %219 = arith.mulf %217, %218 : vector<4x1xf32>
    %c8_162 = arith.constant 8 : index
    %c10_163 = arith.constant 10 : index
    %220 = vector.load %arg12[%c8_162, %c10_163] : memref<20x16xf32, #tpu.memory_space<vmem>>, vector<4x1xf32>
    tpu.vector_store %arg12[%c8_162, %c10_163], %219 {strides = array<i32>} : memref<20x16xf32, #tpu.memory_space<vmem>>, vector<4x1xf32>,
    %cst_164 = arith.constant dense<0xFF800000> : vector<16xf32>
    %221 = vector.multi_reduction <maximumf>, %210, %cst_164 [0] : vector<4x16xf32> to vector<16xf32>
    %222 = vector.shape_cast %221 : vector<16xf32> to vector<1x16xf32>
    %c18 = arith.constant 18 : index
    %c0_165 = arith.constant 0 : index
    %223 = vector.load %arg13[%c18, %c0_165] : memref<32x16xf32, #tpu.memory_space<vmem>>, vector<1x16xf32>
    tpu.vector_store %arg13[%c18, %c0_165], %222 {strides = array<i32>} : memref<32x16xf32, #tpu.memory_space<vmem>>, vector<1x16xf32>,
    %cst_166 = arith.constant dense<0.000000e+00> : vector<16xf32>
    %224 = vector.multi_reduction <add>, %210, %cst_166 [0] : vector<4x16xf32> to vector<16xf32>
    %225 = vector.shape_cast %224 : vector<16xf32> to vector<1x16xf32>
    %cst_167 = arith.constant 2.500000e-01 : f32
    %226 = vector.broadcast %cst_167 : f32 to vector<1x16xf32>
    %227 = arith.mulf %225, %226 : vector<1x16xf32>
    %c18_168 = arith.constant 18 : index
    %c0_169 = arith.constant 0 : index
    %228 = vector.load %arg14[%c18_168, %c0_169] : memref<32x16xf32, #tpu.memory_space<vmem>>, vector<1x16xf32>
    tpu.vector_store %arg14[%c18_168, %c0_169], %227 {strides = array<i32>} : memref<32x16xf32, #tpu.memory_space<vmem>>, vector<1x16xf32>,
    %229 = vector.extract_strided_slice %21 {offsets = [0, 176], sizes = [4, 16], strides = [1, 1]} : vector<4x256xf32> to vector<4x16xf32>
    %230 = arith.maximumf %211, %229 : vector<4x16xf32>
    %231 = arith.addf %212, %229 : vector<4x16xf32>
    %cst_170 = arith.constant dense<0xFF800000> : vector<4xf32>
    %232 = vector.multi_reduction <maximumf>, %229, %cst_170 [1] : vector<4x16xf32> to vector<4xf32>
    %233 = vector.shape_cast %232 : vector<4xf32> to vector<4x1xf32>
    %c8_171 = arith.constant 8 : index
    %c11_172 = arith.constant 11 : index
    %234 = vector.load %arg11[%c8_171, %c11_172] : memref<20x16xf32, #tpu.memory_space<vmem>>, vector<4x1xf32>
    tpu.vector_store %arg11[%c8_171, %c11_172], %233 {strides = array<i32>} : memref<20x16xf32, #tpu.memory_space<vmem>>, vector<4x1xf32>,
    %cst_173 = arith.constant dense<0.000000e+00> : vector<4xf32>
    %235 = vector.multi_reduction <add>, %229, %cst_173 [1] : vector<4x16xf32> to vector<4xf32>
    %236 = vector.shape_cast %235 : vector<4xf32> to vector<4x1xf32>
    %cst_174 = arith.constant 6.250000e-02 : f32
    %237 = vector.broadcast %cst_174 : f32 to vector<4x1xf32>
    %238 = arith.mulf %236, %237 : vector<4x1xf32>
    %c8_175 = arith.constant 8 : index
    %c11_176 = arith.constant 11 : index
    %239 = vector.load %arg12[%c8_175, %c11_176] : memref<20x16xf32, #tpu.memory_space<vmem>>, vector<4x1xf32>
    tpu.vector_store %arg12[%c8_175, %c11_176], %238 {strides = array<i32>} : memref<20x16xf32, #tpu.memory_space<vmem>>, vector<4x1xf32>,
    %cst_177 = arith.constant dense<0xFF800000> : vector<16xf32>
    %240 = vector.multi_reduction <maximumf>, %229, %cst_177 [0] : vector<4x16xf32> to vector<16xf32>
    %241 = vector.shape_cast %240 : vector<16xf32> to vector<1x16xf32>
    %c19 = arith.constant 19 : index
    %c0_178 = arith.constant 0 : index
    %242 = vector.load %arg13[%c19, %c0_178] : memref<32x16xf32, #tpu.memory_space<vmem>>, vector<1x16xf32>
    tpu.vector_store %arg13[%c19, %c0_178], %241 {strides = array<i32>} : memref<32x16xf32, #tpu.memory_space<vmem>>, vector<1x16xf32>,
    %cst_179 = arith.constant dense<0.000000e+00> : vector<16xf32>
    %243 = vector.multi_reduction <add>, %229, %cst_179 [0] : vector<4x16xf32> to vector<16xf32>
    %244 = vector.shape_cast %243 : vector<16xf32> to vector<1x16xf32>
    %cst_180 = arith.constant 2.500000e-01 : f32
    %245 = vector.broadcast %cst_180 : f32 to vector<1x16xf32>
    %246 = arith.mulf %244, %245 : vector<1x16xf32>
    %c19_181 = arith.constant 19 : index
    %c0_182 = arith.constant 0 : index
    %247 = vector.load %arg14[%c19_181, %c0_182] : memref<32x16xf32, #tpu.memory_space<vmem>>, vector<1x16xf32>
    tpu.vector_store %arg14[%c19_181, %c0_182], %246 {strides = array<i32>} : memref<32x16xf32, #tpu.memory_space<vmem>>, vector<1x16xf32>,
    %248 = vector.extract_strided_slice %21 {offsets = [0, 192], sizes = [4, 16], strides = [1, 1]} : vector<4x256xf32> to vector<4x16xf32>
    %249 = arith.maximumf %230, %248 : vector<4x16xf32>
    %250 = arith.addf %231, %248 : vector<4x16xf32>
    %cst_183 = arith.constant dense<0xFF800000> : vector<4xf32>
    %251 = vector.multi_reduction <maximumf>, %248, %cst_183 [1] : vector<4x16xf32> to vector<4xf32>
    %252 = vector.shape_cast %251 : vector<4xf32> to vector<4x1xf32>
    %c8_184 = arith.constant 8 : index
    %c12_185 = arith.constant 12 : index
    %253 = vector.load %arg11[%c8_184, %c12_185] : memref<20x16xf32, #tpu.memory_space<vmem>>, vector<4x1xf32>
    tpu.vector_store %arg11[%c8_184, %c12_185], %252 {strides = array<i32>} : memref<20x16xf32, #tpu.memory_space<vmem>>, vector<4x1xf32>,
    %cst_186 = arith.constant dense<0.000000e+00> : vector<4xf32>
    %254 = vector.multi_reduction <add>, %248, %cst_186 [1] : vector<4x16xf32> to vector<4xf32>
    %255 = vector.shape_cast %254 : vector<4xf32> to vector<4x1xf32>
    %cst_187 = arith.constant 6.250000e-02 : f32
    %256 = vector.broadcast %cst_187 : f32 to vector<4x1xf32>
    %257 = arith.mulf %255, %256 : vector<4x1xf32>
    %c8_188 = arith.constant 8 : index
    %c12_189 = arith.constant 12 : index
    %258 = vector.load %arg12[%c8_188, %c12_189] : memref<20x16xf32, #tpu.memory_space<vmem>>, vector<4x1xf32>
    tpu.vector_store %arg12[%c8_188, %c12_189], %257 {strides = array<i32>} : memref<20x16xf32, #tpu.memory_space<vmem>>, vector<4x1xf32>,
    %cst_190 = arith.constant dense<0xFF800000> : vector<16xf32>
    %259 = vector.multi_reduction <maximumf>, %248, %cst_190 [0] : vector<4x16xf32> to vector<16xf32>
    %260 = vector.shape_cast %259 : vector<16xf32> to vector<1x16xf32>
    %c20 = arith.constant 20 : index
    %c0_191 = arith.constant 0 : index
    %261 = vector.load %arg13[%c20, %c0_191] : memref<32x16xf32, #tpu.memory_space<vmem>>, vector<1x16xf32>
    tpu.vector_store %arg13[%c20, %c0_191], %260 {strides = array<i32>} : memref<32x16xf32, #tpu.memory_space<vmem>>, vector<1x16xf32>,
    %cst_192 = arith.constant dense<0.000000e+00> : vector<16xf32>
    %262 = vector.multi_reduction <add>, %248, %cst_192 [0] : vector<4x16xf32> to vector<16xf32>
    %263 = vector.shape_cast %262 : vector<16xf32> to vector<1x16xf32>
    %cst_193 = arith.constant 2.500000e-01 : f32
    %264 = vector.broadcast %cst_193 : f32 to vector<1x16xf32>
    %265 = arith.mulf %263, %264 : vector<1x16xf32>
    %c20_194 = arith.constant 20 : index
    %c0_195 = arith.constant 0 : index
    %266 = vector.load %arg14[%c20_194, %c0_195] : memref<32x16xf32, #tpu.memory_space<vmem>>, vector<1x16xf32>
    tpu.vector_store %arg14[%c20_194, %c0_195], %265 {strides = array<i32>} : memref<32x16xf32, #tpu.memory_space<vmem>>, vector<1x16xf32>,
    %267 = vector.extract_strided_slice %21 {offsets = [0, 208], sizes = [4, 16], strides = [1, 1]} : vector<4x256xf32> to vector<4x16xf32>
    %268 = arith.maximumf %249, %267 : vector<4x16xf32>
    %269 = arith.addf %250, %267 : vector<4x16xf32>
    %cst_196 = arith.constant dense<0xFF800000> : vector<4xf32>
    %270 = vector.multi_reduction <maximumf>, %267, %cst_196 [1] : vector<4x16xf32> to vector<4xf32>
    %271 = vector.shape_cast %270 : vector<4xf32> to vector<4x1xf32>
    %c8_197 = arith.constant 8 : index
    %c13_198 = arith.constant 13 : index
    %272 = vector.load %arg11[%c8_197, %c13_198] : memref<20x16xf32, #tpu.memory_space<vmem>>, vector<4x1xf32>
    tpu.vector_store %arg11[%c8_197, %c13_198], %271 {strides = array<i32>} : memref<20x16xf32, #tpu.memory_space<vmem>>, vector<4x1xf32>,
    %cst_199 = arith.constant dense<0.000000e+00> : vector<4xf32>
    %273 = vector.multi_reduction <add>, %267, %cst_199 [1] : vector<4x16xf32> to vector<4xf32>
    %274 = vector.shape_cast %273 : vector<4xf32> to vector<4x1xf32>
    %cst_200 = arith.constant 6.250000e-02 : f32
    %275 = vector.broadcast %cst_200 : f32 to vector<4x1xf32>
    %276 = arith.mulf %274, %275 : vector<4x1xf32>
    %c8_201 = arith.constant 8 : index
    %c13_202 = arith.constant 13 : index
    %277 = vector.load %arg12[%c8_201, %c13_202] : memref<20x16xf32, #tpu.memory_space<vmem>>, vector<4x1xf32>
    tpu.vector_store %arg12[%c8_201, %c13_202], %276 {strides = array<i32>} : memref<20x16xf32, #tpu.memory_space<vmem>>, vector<4x1xf32>,
    %cst_203 = arith.constant dense<0xFF800000> : vector<16xf32>
    %278 = vector.multi_reduction <maximumf>, %267, %cst_203 [0] : vector<4x16xf32> to vector<16xf32>
    %279 = vector.shape_cast %278 : vector<16xf32> to vector<1x16xf32>
    %c21 = arith.constant 21 : index
    %c0_204 = arith.constant 0 : index
    %280 = vector.load %arg13[%c21, %c0_204] : memref<32x16xf32, #tpu.memory_space<vmem>>, vector<1x16xf32>
    tpu.vector_store %arg13[%c21, %c0_204], %279 {strides = array<i32>} : memref<32x16xf32, #tpu.memory_space<vmem>>, vector<1x16xf32>,
    %cst_205 = arith.constant dense<0.000000e+00> : vector<16xf32>
    %281 = vector.multi_reduction <add>, %267, %cst_205 [0] : vector<4x16xf32> to vector<16xf32>
    %282 = vector.shape_cast %281 : vector<16xf32> to vector<1x16xf32>
    %cst_206 = arith.constant 2.500000e-01 : f32
    %283 = vector.broadcast %cst_206 : f32 to vector<1x16xf32>
    %284 = arith.mulf %282, %283 : vector<1x16xf32>
    %c21_207 = arith.constant 21 : index
    %c0_208 = arith.constant 0 : index
    %285 = vector.load %arg14[%c21_207, %c0_208] : memref<32x16xf32, #tpu.memory_space<vmem>>, vector<1x16xf32>
    tpu.vector_store %arg14[%c21_207, %c0_208], %284 {strides = array<i32>} : memref<32x16xf32, #tpu.memory_space<vmem>>, vector<1x16xf32>,
    %286 = vector.extract_strided_slice %21 {offsets = [0, 224], sizes = [4, 16], strides = [1, 1]} : vector<4x256xf32> to vector<4x16xf32>
    %287 = arith.maximumf %268, %286 : vector<4x16xf32>
    %288 = arith.addf %269, %286 : vector<4x16xf32>
    %cst_209 = arith.constant dense<0xFF800000> : vector<4xf32>
    %289 = vector.multi_reduction <maximumf>, %286, %cst_209 [1] : vector<4x16xf32> to vector<4xf32>
    %290 = vector.shape_cast %289 : vector<4xf32> to vector<4x1xf32>
    %c8_210 = arith.constant 8 : index
    %c14_211 = arith.constant 14 : index
    %291 = vector.load %arg11[%c8_210, %c14_211] : memref<20x16xf32, #tpu.memory_space<vmem>>, vector<4x1xf32>
    tpu.vector_store %arg11[%c8_210, %c14_211], %290 {strides = array<i32>} : memref<20x16xf32, #tpu.memory_space<vmem>>, vector<4x1xf32>,
    %cst_212 = arith.constant dense<0.000000e+00> : vector<4xf32>
    %292 = vector.multi_reduction <add>, %286, %cst_212 [1] : vector<4x16xf32> to vector<4xf32>
    %293 = vector.shape_cast %292 : vector<4xf32> to vector<4x1xf32>
    %cst_213 = arith.constant 6.250000e-02 : f32
    %294 = vector.broadcast %cst_213 : f32 to vector<4x1xf32>
    %295 = arith.mulf %293, %294 : vector<4x1xf32>
    %c8_214 = arith.constant 8 : index
    %c14_215 = arith.constant 14 : index
    %296 = vector.load %arg12[%c8_214, %c14_215] : memref<20x16xf32, #tpu.memory_space<vmem>>, vector<4x1xf32>
    tpu.vector_store %arg12[%c8_214, %c14_215], %295 {strides = array<i32>} : memref<20x16xf32, #tpu.memory_space<vmem>>, vector<4x1xf32>,
    %cst_216 = arith.constant dense<0xFF800000> : vector<16xf32>
    %297 = vector.multi_reduction <maximumf>, %286, %cst_216 [0] : vector<4x16xf32> to vector<16xf32>
    %298 = vector.shape_cast %297 : vector<16xf32> to vector<1x16xf32>
    %c22 = arith.constant 22 : index
    %c0_217 = arith.constant 0 : index
    %299 = vector.load %arg13[%c22, %c0_217] : memref<32x16xf32, #tpu.memory_space<vmem>>, vector<1x16xf32>
    tpu.vector_store %arg13[%c22, %c0_217], %298 {strides = array<i32>} : memref<32x16xf32, #tpu.memory_space<vmem>>, vector<1x16xf32>,
    %cst_218 = arith.constant dense<0.000000e+00> : vector<16xf32>
    %300 = vector.multi_reduction <add>, %286, %cst_218 [0] : vector<4x16xf32> to vector<16xf32>
    %301 = vector.shape_cast %300 : vector<16xf32> to vector<1x16xf32>
    %cst_219 = arith.constant 2.500000e-01 : f32
    %302 = vector.broadcast %cst_219 : f32 to vector<1x16xf32>
    %303 = arith.mulf %301, %302 : vector<1x16xf32>
    %c22_220 = arith.constant 22 : index
    %c0_221 = arith.constant 0 : index
    %304 = vector.load %arg14[%c22_220, %c0_221] : memref<32x16xf32, #tpu.memory_space<vmem>>, vector<1x16xf32>
    tpu.vector_store %arg14[%c22_220, %c0_221], %303 {strides = array<i32>} : memref<32x16xf32, #tpu.memory_space<vmem>>, vector<1x16xf32>,
    %305 = vector.extract_strided_slice %21 {offsets = [0, 240], sizes = [4, 16], strides = [1, 1]} : vector<4x256xf32> to vector<4x16xf32>
    %306 = arith.maximumf %287, %305 : vector<4x16xf32>
    %307 = arith.addf %288, %305 : vector<4x16xf32>
    %cst_222 = arith.constant dense<0xFF800000> : vector<4xf32>
    %308 = vector.multi_reduction <maximumf>, %305, %cst_222 [1] : vector<4x16xf32> to vector<4xf32>
    %309 = vector.shape_cast %308 : vector<4xf32> to vector<4x1xf32>
    %c8_223 = arith.constant 8 : index
    %c15_224 = arith.constant 15 : index
    %310 = vector.load %arg11[%c8_223, %c15_224] : memref<20x16xf32, #tpu.memory_space<vmem>>, vector<4x1xf32>
    tpu.vector_store %arg11[%c8_223, %c15_224], %309 {strides = array<i32>} : memref<20x16xf32, #tpu.memory_space<vmem>>, vector<4x1xf32>,
    %cst_225 = arith.constant dense<0.000000e+00> : vector<4xf32>
    %311 = vector.multi_reduction <add>, %305, %cst_225 [1] : vector<4x16xf32> to vector<4xf32>
    %312 = vector.shape_cast %311 : vector<4xf32> to vector<4x1xf32>
    %cst_226 = arith.constant 6.250000e-02 : f32
    %313 = vector.broadcast %cst_226 : f32 to vector<4x1xf32>
    %314 = arith.mulf %312, %313 : vector<4x1xf32>
    %c8_227 = arith.constant 8 : index
    %c15_228 = arith.constant 15 : index
    %315 = vector.load %arg12[%c8_227, %c15_228] : memref<20x16xf32, #tpu.memory_space<vmem>>, vector<4x1xf32>
    tpu.vector_store %arg12[%c8_227, %c15_228], %314 {strides = array<i32>} : memref<20x16xf32, #tpu.memory_space<vmem>>, vector<4x1xf32>,
    %cst_229 = arith.constant dense<0xFF800000> : vector<16xf32>
    %316 = vector.multi_reduction <maximumf>, %305, %cst_229 [0] : vector<4x16xf32> to vector<16xf32>
    %317 = vector.shape_cast %316 : vector<16xf32> to vector<1x16xf32>
    %c23 = arith.constant 23 : index
    %c0_230 = arith.constant 0 : index
    %318 = vector.load %arg13[%c23, %c0_230] : memref<32x16xf32, #tpu.memory_space<vmem>>, vector<1x16xf32>
    tpu.vector_store %arg13[%c23, %c0_230], %317 {strides = array<i32>} : memref<32x16xf32, #tpu.memory_space<vmem>>, vector<1x16xf32>,
    %cst_231 = arith.constant dense<0.000000e+00> : vector<16xf32>
    %319 = vector.multi_reduction <add>, %305, %cst_231 [0] : vector<4x16xf32> to vector<16xf32>
    %320 = vector.shape_cast %319 : vector<16xf32> to vector<1x16xf32>
    %cst_232 = arith.constant 2.500000e-01 : f32
    %321 = vector.broadcast %cst_232 : f32 to vector<1x16xf32>
    %322 = arith.mulf %320, %321 : vector<1x16xf32>
    %c23_233 = arith.constant 23 : index
    %c0_234 = arith.constant 0 : index
    %323 = vector.load %arg14[%c23_233, %c0_234] : memref<32x16xf32, #tpu.memory_space<vmem>>, vector<1x16xf32>
    tpu.vector_store %arg14[%c23_233, %c0_234], %322 {strides = array<i32>} : memref<32x16xf32, #tpu.memory_space<vmem>>, vector<1x16xf32>,
    %c8_235 = arith.constant 8 : index
    %c0_236 = arith.constant 0 : index
    %324 = vector.load %arg9[%c8_235, %c0_236] : memref<20x16xf32, #tpu.memory_space<vmem>>, vector<4x16xf32>
    tpu.vector_store %arg9[%c8_235, %c0_236], %306 {strides = array<i32>} : memref<20x16xf32, #tpu.memory_space<vmem>>, vector<4x16xf32>,
    %cst_237 = arith.constant 6.250000e-02 : f32
    %325 = vector.broadcast %cst_237 : f32 to vector<4x16xf32>
    %326 = arith.mulf %307, %325 : vector<4x16xf32>
    %c8_238 = arith.constant 8 : index
    %c0_239 = arith.constant 0 : index
    %327 = vector.load %arg10[%c8_238, %c0_239] : memref<20x16xf32, #tpu.memory_space<vmem>>, vector<4x16xf32>
    tpu.vector_store %arg10[%c8_238, %c0_239], %326 {strides = array<i32>} : memref<20x16xf32, #tpu.memory_space<vmem>>, vector<4x16xf32>,
    %c0_240 = arith.constant 0 : index
    %328 = memref.load %arg7[%c0_240] : memref<3xf32, #tpu.memory_space<smem>>
    %c5_241 = arith.constant 5 : index
    %c0_242 = arith.constant 0 : index
    %329 = vector.load %arg9[%c5_241, %c0_242] : memref<20x16xf32, #tpu.memory_space<vmem>>, vector<4x16xf32>
    %c0_243 = arith.constant 0 : index
    %c0_244 = arith.constant 0 : index
    %c0_245 = arith.constant 0 : index
    %c0_246 = arith.constant 0 : index
    %330 = vector.load %arg2[%c0_243, %c0_244, %c0_245, %c0_246] : memref<2x7x16x16xf32, #tpu.memory_space<vmem>>, vector<1x1x16x16xf32>
    %331 = vector.shape_cast %330 : vector<1x1x16x16xf32> to vector<16x16xf32>
    %cst_247 = arith.constant dense<0.000000e+00> : vector<4x16xf32>
    %332 = tpu.matmul %329, %331, %cst_247 {dimension_numbers = #tpu.dot_dimension_numbers<[1], [0], [0], [1], [0, 0, 1, 1], [], []>} : vector<4x16xf32>, vector<16x16xf32>, vector<4x16xf32> -> vector<4x16xf32>
    %c6_248 = arith.constant 6 : index
    %c0_249 = arith.constant 0 : index
    %333 = vector.load %arg9[%c6_248, %c0_249] : memref<20x16xf32, #tpu.memory_space<vmem>>, vector<4x16xf32>
    %c0_250 = arith.constant 0 : index
    %c1_251 = arith.constant 1 : index
    %c0_252 = arith.constant 0 : index
    %c0_253 = arith.constant 0 : index
    %334 = vector.load %arg2[%c0_250, %c1_251, %c0_252, %c0_253] : memref<2x7x16x16xf32, #tpu.memory_space<vmem>>, vector<1x1x16x16xf32>
    %335 = vector.shape_cast %334 : vector<1x1x16x16xf32> to vector<16x16xf32>
    %cst_254 = arith.constant dense<0.000000e+00> : vector<4x16xf32>
    %336 = tpu.matmul %333, %335, %cst_254 {dimension_numbers = #tpu.dot_dimension_numbers<[1], [0], [0], [1], [0, 0, 1, 1], [], []>} : vector<4x16xf32>, vector<16x16xf32>, vector<4x16xf32> -> vector<4x16xf32>
    %337 = arith.addf %332, %336 : vector<4x16xf32>
    %c7_255 = arith.constant 7 : index
    %c0_256 = arith.constant 0 : index
    %338 = vector.load %arg9[%c7_255, %c0_256] : memref<20x16xf32, #tpu.memory_space<vmem>>, vector<4x16xf32>
    %c0_257 = arith.constant 0 : index
    %c2_258 = arith.constant 2 : index
    %c0_259 = arith.constant 0 : index
    %c0_260 = arith.constant 0 : index
    %339 = vector.load %arg2[%c0_257, %c2_258, %c0_259, %c0_260] : memref<2x7x16x16xf32, #tpu.memory_space<vmem>>, vector<1x1x16x16xf32>
    %340 = vector.shape_cast %339 : vector<1x1x16x16xf32> to vector<16x16xf32>
    %cst_261 = arith.constant dense<0.000000e+00> : vector<4x16xf32>
    %341 = tpu.matmul %338, %340, %cst_261 {dimension_numbers = #tpu.dot_dimension_numbers<[1], [0], [0], [1], [0, 0, 1, 1], [], []>} : vector<4x16xf32>, vector<16x16xf32>, vector<4x16xf32> -> vector<4x16xf32>
    %342 = arith.addf %337, %341 : vector<4x16xf32>
    %c8_262 = arith.constant 8 : index
    %c0_263 = arith.constant 0 : index
    %343 = vector.load %arg9[%c8_262, %c0_263] : memref<20x16xf32, #tpu.memory_space<vmem>>, vector<4x16xf32>
    %c0_264 = arith.constant 0 : index
    %c3_265 = arith.constant 3 : index
    %c0_266 = arith.constant 0 : index
    %c0_267 = arith.constant 0 : index
    %344 = vector.load %arg2[%c0_264, %c3_265, %c0_266, %c0_267] : memref<2x7x16x16xf32, #tpu.memory_space<vmem>>, vector<1x1x16x16xf32>
    %345 = vector.shape_cast %344 : vector<1x1x16x16xf32> to vector<16x16xf32>
    %cst_268 = arith.constant dense<0.000000e+00> : vector<4x16xf32>
    %346 = tpu.matmul %343, %345, %cst_268 {dimension_numbers = #tpu.dot_dimension_numbers<[1], [0], [0], [1], [0, 0, 1, 1], [], []>} : vector<4x16xf32>, vector<16x16xf32>, vector<4x16xf32> -> vector<4x16xf32>
    %347 = arith.addf %342, %346 : vector<4x16xf32>
    %c9_269 = arith.constant 9 : index
    %c0_270 = arith.constant 0 : index
    %348 = vector.load %arg9[%c9_269, %c0_270] : memref<20x16xf32, #tpu.memory_space<vmem>>, vector<4x16xf32>
    %c0_271 = arith.constant 0 : index
    %c4_272 = arith.constant 4 : index
    %c0_273 = arith.constant 0 : index
    %c0_274 = arith.constant 0 : index
    %349 = vector.load %arg2[%c0_271, %c4_272, %c0_273, %c0_274] : memref<2x7x16x16xf32, #tpu.memory_space<vmem>>, vector<1x1x16x16xf32>
    %350 = vector.shape_cast %349 : vector<1x1x16x16xf32> to vector<16x16xf32>
    %cst_275 = arith.constant dense<0.000000e+00> : vector<4x16xf32>
    %351 = tpu.matmul %348, %350, %cst_275 {dimension_numbers = #tpu.dot_dimension_numbers<[1], [0], [0], [1], [0, 0, 1, 1], [], []>} : vector<4x16xf32>, vector<16x16xf32>, vector<4x16xf32> -> vector<4x16xf32>
    %352 = arith.addf %347, %351 : vector<4x16xf32>
    %c10_276 = arith.constant 10 : index
    %c0_277 = arith.constant 0 : index
    %353 = vector.load %arg9[%c10_276, %c0_277] : memref<20x16xf32, #tpu.memory_space<vmem>>, vector<4x16xf32>
    %c0_278 = arith.constant 0 : index
    %c5_279 = arith.constant 5 : index
    %c0_280 = arith.constant 0 : index
    %c0_281 = arith.constant 0 : index
    %354 = vector.load %arg2[%c0_278, %c5_279, %c0_280, %c0_281] : memref<2x7x16x16xf32, #tpu.memory_space<vmem>>, vector<1x1x16x16xf32>
    %355 = vector.shape_cast %354 : vector<1x1x16x16xf32> to vector<16x16xf32>
    %cst_282 = arith.constant dense<0.000000e+00> : vector<4x16xf32>
    %356 = tpu.matmul %353, %355, %cst_282 {dimension_numbers = #tpu.dot_dimension_numbers<[1], [0], [0], [1], [0, 0, 1, 1], [], []>} : vector<4x16xf32>, vector<16x16xf32>, vector<4x16xf32> -> vector<4x16xf32>
    %357 = arith.addf %352, %356 : vector<4x16xf32>
    %c11_283 = arith.constant 11 : index
    %c0_284 = arith.constant 0 : index
    %358 = vector.load %arg9[%c11_283, %c0_284] : memref<20x16xf32, #tpu.memory_space<vmem>>, vector<4x16xf32>
    %c0_285 = arith.constant 0 : index
    %c6_286 = arith.constant 6 : index
    %c0_287 = arith.constant 0 : index
    %c0_288 = arith.constant 0 : index
    %359 = vector.load %arg2[%c0_285, %c6_286, %c0_287, %c0_288] : memref<2x7x16x16xf32, #tpu.memory_space<vmem>>, vector<1x1x16x16xf32>
    %360 = vector.shape_cast %359 : vector<1x1x16x16xf32> to vector<16x16xf32>
    %cst_289 = arith.constant dense<0.000000e+00> : vector<4x16xf32>
    %361 = tpu.matmul %358, %360, %cst_289 {dimension_numbers = #tpu.dot_dimension_numbers<[1], [0], [0], [1], [0, 0, 1, 1], [], []>} : vector<4x16xf32>, vector<16x16xf32>, vector<4x16xf32> -> vector<4x16xf32>
    %362 = arith.addf %357, %361 : vector<4x16xf32>
    %c5_290 = arith.constant 5 : index
    %c0_291 = arith.constant 0 : index
    %363 = vector.load %arg10[%c5_290, %c0_291] : memref<20x16xf32, #tpu.memory_space<vmem>>, vector<4x16xf32>
    %c1_292 = arith.constant 1 : index
    %c0_293 = arith.constant 0 : index
    %c0_294 = arith.constant 0 : index
    %c0_295 = arith.constant 0 : index
    %364 = vector.load %arg2[%c1_292, %c0_293, %c0_294, %c0_295] : memref<2x7x16x16xf32, #tpu.memory_space<vmem>>, vector<1x1x16x16xf32>
    %365 = vector.shape_cast %364 : vector<1x1x16x16xf32> to vector<16x16xf32>
    %cst_296 = arith.constant dense<0.000000e+00> : vector<4x16xf32>
    %366 = tpu.matmul %363, %365, %cst_296 {dimension_numbers = #tpu.dot_dimension_numbers<[1], [0], [0], [1], [0, 0, 1, 1], [], []>} : vector<4x16xf32>, vector<16x16xf32>, vector<4x16xf32> -> vector<4x16xf32>
    %367 = arith.addf %362, %366 : vector<4x16xf32>
    %c6_297 = arith.constant 6 : index
    %c0_298 = arith.constant 0 : index
    %368 = vector.load %arg10[%c6_297, %c0_298] : memref<20x16xf32, #tpu.memory_space<vmem>>, vector<4x16xf32>
    %c1_299 = arith.constant 1 : index
    %c1_300 = arith.constant 1 : index
    %c0_301 = arith.constant 0 : index
    %c0_302 = arith.constant 0 : index
    %369 = vector.load %arg2[%c1_299, %c1_300, %c0_301, %c0_302] : memref<2x7x16x16xf32, #tpu.memory_space<vmem>>, vector<1x1x16x16xf32>
    %370 = vector.shape_cast %369 : vector<1x1x16x16xf32> to vector<16x16xf32>
    %cst_303 = arith.constant dense<0.000000e+00> : vector<4x16xf32>
    %371 = tpu.matmul %368, %370, %cst_303 {dimension_numbers = #tpu.dot_dimension_numbers<[1], [0], [0], [1], [0, 0, 1, 1], [], []>} : vector<4x16xf32>, vector<16x16xf32>, vector<4x16xf32> -> vector<4x16xf32>
    %372 = arith.addf %367, %371 : vector<4x16xf32>
    %c7_304 = arith.constant 7 : index
    %c0_305 = arith.constant 0 : index
    %373 = vector.load %arg10[%c7_304, %c0_305] : memref<20x16xf32, #tpu.memory_space<vmem>>, vector<4x16xf32>
    %c1_306 = arith.constant 1 : index
    %c2_307 = arith.constant 2 : index
    %c0_308 = arith.constant 0 : index
    %c0_309 = arith.constant 0 : index
    %374 = vector.load %arg2[%c1_306, %c2_307, %c0_308, %c0_309] : memref<2x7x16x16xf32, #tpu.memory_space<vmem>>, vector<1x1x16x16xf32>
    %375 = vector.shape_cast %374 : vector<1x1x16x16xf32> to vector<16x16xf32>
    %cst_310 = arith.constant dense<0.000000e+00> : vector<4x16xf32>
    %376 = tpu.matmul %373, %375, %cst_310 {dimension_numbers = #tpu.dot_dimension_numbers<[1], [0], [0], [1], [0, 0, 1, 1], [], []>} : vector<4x16xf32>, vector<16x16xf32>, vector<4x16xf32> -> vector<4x16xf32>
    %377 = arith.addf %372, %376 : vector<4x16xf32>
    %c8_311 = arith.constant 8 : index
    %c0_312 = arith.constant 0 : index
    %378 = vector.load %arg10[%c8_311, %c0_312] : memref<20x16xf32, #tpu.memory_space<vmem>>, vector<4x16xf32>
    %c1_313 = arith.constant 1 : index
    %c3_314 = arith.constant 3 : index
    %c0_315 = arith.constant 0 : index
    %c0_316 = arith.constant 0 : index
    %379 = vector.load %arg2[%c1_313, %c3_314, %c0_315, %c0_316] : memref<2x7x16x16xf32, #tpu.memory_space<vmem>>, vector<1x1x16x16xf32>
    %380 = vector.shape_cast %379 : vector<1x1x16x16xf32> to vector<16x16xf32>
    %cst_317 = arith.constant dense<0.000000e+00> : vector<4x16xf32>
    %381 = tpu.matmul %378, %380, %cst_317 {dimension_numbers = #tpu.dot_dimension_numbers<[1], [0], [0], [1], [0, 0, 1, 1], [], []>} : vector<4x16xf32>, vector<16x16xf32>, vector<4x16xf32> -> vector<4x16xf32>
    %382 = arith.addf %377, %381 : vector<4x16xf32>
    %c9_318 = arith.constant 9 : index
    %c0_319 = arith.constant 0 : index
    %383 = vector.load %arg10[%c9_318, %c0_319] : memref<20x16xf32, #tpu.memory_space<vmem>>, vector<4x16xf32>
    %c1_320 = arith.constant 1 : index
    %c4_321 = arith.constant 4 : index
    %c0_322 = arith.constant 0 : index
    %c0_323 = arith.constant 0 : index
    %384 = vector.load %arg2[%c1_320, %c4_321, %c0_322, %c0_323] : memref<2x7x16x16xf32, #tpu.memory_space<vmem>>, vector<1x1x16x16xf32>
    %385 = vector.shape_cast %384 : vector<1x1x16x16xf32> to vector<16x16xf32>
    %cst_324 = arith.constant dense<0.000000e+00> : vector<4x16xf32>
    %386 = tpu.matmul %383, %385, %cst_324 {dimension_numbers = #tpu.dot_dimension_numbers<[1], [0], [0], [1], [0, 0, 1, 1], [], []>} : vector<4x16xf32>, vector<16x16xf32>, vector<4x16xf32> -> vector<4x16xf32>
    %387 = arith.addf %382, %386 : vector<4x16xf32>
    %c10_325 = arith.constant 10 : index
    %c0_326 = arith.constant 0 : index
    %388 = vector.load %arg10[%c10_325, %c0_326] : memref<20x16xf32, #tpu.memory_space<vmem>>, vector<4x16xf32>
    %c1_327 = arith.constant 1 : index
    %c5_328 = arith.constant 5 : index
    %c0_329 = arith.constant 0 : index
    %c0_330 = arith.constant 0 : index
    %389 = vector.load %arg2[%c1_327, %c5_328, %c0_329, %c0_330] : memref<2x7x16x16xf32, #tpu.memory_space<vmem>>, vector<1x1x16x16xf32>
    %390 = vector.shape_cast %389 : vector<1x1x16x16xf32> to vector<16x16xf32>
    %cst_331 = arith.constant dense<0.000000e+00> : vector<4x16xf32>
    %391 = tpu.matmul %388, %390, %cst_331 {dimension_numbers = #tpu.dot_dimension_numbers<[1], [0], [0], [1], [0, 0, 1, 1], [], []>} : vector<4x16xf32>, vector<16x16xf32>, vector<4x16xf32> -> vector<4x16xf32>
    %392 = arith.addf %387, %391 : vector<4x16xf32>
    %c11_332 = arith.constant 11 : index
    %c0_333 = arith.constant 0 : index
    %393 = vector.load %arg10[%c11_332, %c0_333] : memref<20x16xf32, #tpu.memory_space<vmem>>, vector<4x16xf32>
    %c1_334 = arith.constant 1 : index
    %c6_335 = arith.constant 6 : index
    %c0_336 = arith.constant 0 : index
    %c0_337 = arith.constant 0 : index
    %394 = vector.load %arg2[%c1_334, %c6_335, %c0_336, %c0_337] : memref<2x7x16x16xf32, #tpu.memory_space<vmem>>, vector<1x1x16x16xf32>
    %395 = vector.shape_cast %394 : vector<1x1x16x16xf32> to vector<16x16xf32>
    %cst_338 = arith.constant dense<0.000000e+00> : vector<4x16xf32>
    %396 = tpu.matmul %393, %395, %cst_338 {dimension_numbers = #tpu.dot_dimension_numbers<[1], [0], [0], [1], [0, 0, 1, 1], [], []>} : vector<4x16xf32>, vector<16x16xf32>, vector<4x16xf32> -> vector<4x16xf32>
    %397 = arith.addf %392, %396 : vector<4x16xf32>
    %398 = vector.broadcast %328 : f32 to vector<4x16xf32>
    %399 = arith.addf %397, %398 : vector<4x16xf32>
    %400 = arith.negf %399 : vector<4x16xf32>
    %401 = math.exp %400 : vector<4x16xf32>
    %cst_339 = arith.constant 1.000000e+00 : f32
    %402 = vector.broadcast %cst_339 : f32 to vector<4x16xf32>
    %403 = arith.addf %402, %401 : vector<4x16xf32>
    %404 = arith.divf %402, %403 : vector<4x16xf32>
    %c1_340 = arith.constant 1 : index
    %405 = memref.load %arg7[%c1_340] : memref<3xf32, #tpu.memory_space<smem>>
    %c5_341 = arith.constant 5 : index
    %c0_342 = arith.constant 0 : index
    %406 = vector.load %arg11[%c5_341, %c0_342] : memref<20x16xf32, #tpu.memory_space<vmem>>, vector<4x16xf32>
    %c0_343 = arith.constant 0 : index
    %c0_344 = arith.constant 0 : index
    %c0_345 = arith.constant 0 : index
    %c0_346 = arith.constant 0 : index
    %407 = vector.load %arg3[%c0_343, %c0_344, %c0_345, %c0_346] : memref<2x7x16x16xf32, #tpu.memory_space<vmem>>, vector<1x1x16x16xf32>
    %408 = vector.shape_cast %407 : vector<1x1x16x16xf32> to vector<16x16xf32>
    %cst_347 = arith.constant dense<0.000000e+00> : vector<4x16xf32>
    %409 = tpu.matmul %406, %408, %cst_347 {dimension_numbers = #tpu.dot_dimension_numbers<[1], [0], [0], [1], [0, 0, 1, 1], [], []>} : vector<4x16xf32>, vector<16x16xf32>, vector<4x16xf32> -> vector<4x16xf32>
    %c6_348 = arith.constant 6 : index
    %c0_349 = arith.constant 0 : index
    %410 = vector.load %arg11[%c6_348, %c0_349] : memref<20x16xf32, #tpu.memory_space<vmem>>, vector<4x16xf32>
    %c0_350 = arith.constant 0 : index
    %c1_351 = arith.constant 1 : index
    %c0_352 = arith.constant 0 : index
    %c0_353 = arith.constant 0 : index
    %411 = vector.load %arg3[%c0_350, %c1_351, %c0_352, %c0_353] : memref<2x7x16x16xf32, #tpu.memory_space<vmem>>, vector<1x1x16x16xf32>
    %412 = vector.shape_cast %411 : vector<1x1x16x16xf32> to vector<16x16xf32>
    %cst_354 = arith.constant dense<0.000000e+00> : vector<4x16xf32>
    %413 = tpu.matmul %410, %412, %cst_354 {dimension_numbers = #tpu.dot_dimension_numbers<[1], [0], [0], [1], [0, 0, 1, 1], [], []>} : vector<4x16xf32>, vector<16x16xf32>, vector<4x16xf32> -> vector<4x16xf32>
    %414 = arith.addf %409, %413 : vector<4x16xf32>
    %c7_355 = arith.constant 7 : index
    %c0_356 = arith.constant 0 : index
    %415 = vector.load %arg11[%c7_355, %c0_356] : memref<20x16xf32, #tpu.memory_space<vmem>>, vector<4x16xf32>
    %c0_357 = arith.constant 0 : index
    %c2_358 = arith.constant 2 : index
    %c0_359 = arith.constant 0 : index
    %c0_360 = arith.constant 0 : index
    %416 = vector.load %arg3[%c0_357, %c2_358, %c0_359, %c0_360] : memref<2x7x16x16xf32, #tpu.memory_space<vmem>>, vector<1x1x16x16xf32>
    %417 = vector.shape_cast %416 : vector<1x1x16x16xf32> to vector<16x16xf32>
    %cst_361 = arith.constant dense<0.000000e+00> : vector<4x16xf32>
    %418 = tpu.matmul %415, %417, %cst_361 {dimension_numbers = #tpu.dot_dimension_numbers<[1], [0], [0], [1], [0, 0, 1, 1], [], []>} : vector<4x16xf32>, vector<16x16xf32>, vector<4x16xf32> -> vector<4x16xf32>
    %419 = arith.addf %414, %418 : vector<4x16xf32>
    %c8_362 = arith.constant 8 : index
    %c0_363 = arith.constant 0 : index
    %420 = vector.load %arg11[%c8_362, %c0_363] : memref<20x16xf32, #tpu.memory_space<vmem>>, vector<4x16xf32>
    %c0_364 = arith.constant 0 : index
    %c3_365 = arith.constant 3 : index
    %c0_366 = arith.constant 0 : index
    %c0_367 = arith.constant 0 : index
    %421 = vector.load %arg3[%c0_364, %c3_365, %c0_366, %c0_367] : memref<2x7x16x16xf32, #tpu.memory_space<vmem>>, vector<1x1x16x16xf32>
    %422 = vector.shape_cast %421 : vector<1x1x16x16xf32> to vector<16x16xf32>
    %cst_368 = arith.constant dense<0.000000e+00> : vector<4x16xf32>
    %423 = tpu.matmul %420, %422, %cst_368 {dimension_numbers = #tpu.dot_dimension_numbers<[1], [0], [0], [1], [0, 0, 1, 1], [], []>} : vector<4x16xf32>, vector<16x16xf32>, vector<4x16xf32> -> vector<4x16xf32>
    %424 = arith.addf %419, %423 : vector<4x16xf32>
    %c9_369 = arith.constant 9 : index
    %c0_370 = arith.constant 0 : index
    %425 = vector.load %arg11[%c9_369, %c0_370] : memref<20x16xf32, #tpu.memory_space<vmem>>, vector<4x16xf32>
    %c0_371 = arith.constant 0 : index
    %c4_372 = arith.constant 4 : index
    %c0_373 = arith.constant 0 : index
    %c0_374 = arith.constant 0 : index
    %426 = vector.load %arg3[%c0_371, %c4_372, %c0_373, %c0_374] : memref<2x7x16x16xf32, #tpu.memory_space<vmem>>, vector<1x1x16x16xf32>
    %427 = vector.shape_cast %426 : vector<1x1x16x16xf32> to vector<16x16xf32>
    %cst_375 = arith.constant dense<0.000000e+00> : vector<4x16xf32>
    %428 = tpu.matmul %425, %427, %cst_375 {dimension_numbers = #tpu.dot_dimension_numbers<[1], [0], [0], [1], [0, 0, 1, 1], [], []>} : vector<4x16xf32>, vector<16x16xf32>, vector<4x16xf32> -> vector<4x16xf32>
    %429 = arith.addf %424, %428 : vector<4x16xf32>
    %c10_376 = arith.constant 10 : index
    %c0_377 = arith.constant 0 : index
    %430 = vector.load %arg11[%c10_376, %c0_377] : memref<20x16xf32, #tpu.memory_space<vmem>>, vector<4x16xf32>
    %c0_378 = arith.constant 0 : index
    %c5_379 = arith.constant 5 : index
    %c0_380 = arith.constant 0 : index
    %c0_381 = arith.constant 0 : index
    %431 = vector.load %arg3[%c0_378, %c5_379, %c0_380, %c0_381] : memref<2x7x16x16xf32, #tpu.memory_space<vmem>>, vector<1x1x16x16xf32>
    %432 = vector.shape_cast %431 : vector<1x1x16x16xf32> to vector<16x16xf32>
    %cst_382 = arith.constant dense<0.000000e+00> : vector<4x16xf32>
    %433 = tpu.matmul %430, %432, %cst_382 {dimension_numbers = #tpu.dot_dimension_numbers<[1], [0], [0], [1], [0, 0, 1, 1], [], []>} : vector<4x16xf32>, vector<16x16xf32>, vector<4x16xf32> -> vector<4x16xf32>
    %434 = arith.addf %429, %433 : vector<4x16xf32>
    %c11_383 = arith.constant 11 : index
    %c0_384 = arith.constant 0 : index
    %435 = vector.load %arg11[%c11_383, %c0_384] : memref<20x16xf32, #tpu.memory_space<vmem>>, vector<4x16xf32>
    %c0_385 = arith.constant 0 : index
    %c6_386 = arith.constant 6 : index
    %c0_387 = arith.constant 0 : index
    %c0_388 = arith.constant 0 : index
    %436 = vector.load %arg3[%c0_385, %c6_386, %c0_387, %c0_388] : memref<2x7x16x16xf32, #tpu.memory_space<vmem>>, vector<1x1x16x16xf32>
    %437 = vector.shape_cast %436 : vector<1x1x16x16xf32> to vector<16x16xf32>
    %cst_389 = arith.constant dense<0.000000e+00> : vector<4x16xf32>
    %438 = tpu.matmul %435, %437, %cst_389 {dimension_numbers = #tpu.dot_dimension_numbers<[1], [0], [0], [1], [0, 0, 1, 1], [], []>} : vector<4x16xf32>, vector<16x16xf32>, vector<4x16xf32> -> vector<4x16xf32>
    %439 = arith.addf %434, %438 : vector<4x16xf32>
    %c5_390 = arith.constant 5 : index
    %c0_391 = arith.constant 0 : index
    %440 = vector.load %arg12[%c5_390, %c0_391] : memref<20x16xf32, #tpu.memory_space<vmem>>, vector<4x16xf32>
    %c1_392 = arith.constant 1 : index
    %c0_393 = arith.constant 0 : index
    %c0_394 = arith.constant 0 : index
    %c0_395 = arith.constant 0 : index
    %441 = vector.load %arg3[%c1_392, %c0_393, %c0_394, %c0_395] : memref<2x7x16x16xf32, #tpu.memory_space<vmem>>, vector<1x1x16x16xf32>
    %442 = vector.shape_cast %441 : vector<1x1x16x16xf32> to vector<16x16xf32>
    %cst_396 = arith.constant dense<0.000000e+00> : vector<4x16xf32>
    %443 = tpu.matmul %440, %442, %cst_396 {dimension_numbers = #tpu.dot_dimension_numbers<[1], [0], [0], [1], [0, 0, 1, 1], [], []>} : vector<4x16xf32>, vector<16x16xf32>, vector<4x16xf32> -> vector<4x16xf32>
    %444 = arith.addf %439, %443 : vector<4x16xf32>
    %c6_397 = arith.constant 6 : index
    %c0_398 = arith.constant 0 : index
    %445 = vector.load %arg12[%c6_397, %c0_398] : memref<20x16xf32, #tpu.memory_space<vmem>>, vector<4x16xf32>
    %c1_399 = arith.constant 1 : index
    %c1_400 = arith.constant 1 : index
    %c0_401 = arith.constant 0 : index
    %c0_402 = arith.constant 0 : index
    %446 = vector.load %arg3[%c1_399, %c1_400, %c0_401, %c0_402] : memref<2x7x16x16xf32, #tpu.memory_space<vmem>>, vector<1x1x16x16xf32>
    %447 = vector.shape_cast %446 : vector<1x1x16x16xf32> to vector<16x16xf32>
    %cst_403 = arith.constant dense<0.000000e+00> : vector<4x16xf32>
    %448 = tpu.matmul %445, %447, %cst_403 {dimension_numbers = #tpu.dot_dimension_numbers<[1], [0], [0], [1], [0, 0, 1, 1], [], []>} : vector<4x16xf32>, vector<16x16xf32>, vector<4x16xf32> -> vector<4x16xf32>
    %449 = arith.addf %444, %448 : vector<4x16xf32>
    %c7_404 = arith.constant 7 : index
    %c0_405 = arith.constant 0 : index
    %450 = vector.load %arg12[%c7_404, %c0_405] : memref<20x16xf32, #tpu.memory_space<vmem>>, vector<4x16xf32>
    %c1_406 = arith.constant 1 : index
    %c2_407 = arith.constant 2 : index
    %c0_408 = arith.constant 0 : index
    %c0_409 = arith.constant 0 : index
    %451 = vector.load %arg3[%c1_406, %c2_407, %c0_408, %c0_409] : memref<2x7x16x16xf32, #tpu.memory_space<vmem>>, vector<1x1x16x16xf32>
    %452 = vector.shape_cast %451 : vector<1x1x16x16xf32> to vector<16x16xf32>
    %cst_410 = arith.constant dense<0.000000e+00> : vector<4x16xf32>
    %453 = tpu.matmul %450, %452, %cst_410 {dimension_numbers = #tpu.dot_dimension_numbers<[1], [0], [0], [1], [0, 0, 1, 1], [], []>} : vector<4x16xf32>, vector<16x16xf32>, vector<4x16xf32> -> vector<4x16xf32>
    %454 = arith.addf %449, %453 : vector<4x16xf32>
    %c8_411 = arith.constant 8 : index
    %c0_412 = arith.constant 0 : index
    %455 = vector.load %arg12[%c8_411, %c0_412] : memref<20x16xf32, #tpu.memory_space<vmem>>, vector<4x16xf32>
    %c1_413 = arith.constant 1 : index
    %c3_414 = arith.constant 3 : index
    %c0_415 = arith.constant 0 : index
    %c0_416 = arith.constant 0 : index
    %456 = vector.load %arg3[%c1_413, %c3_414, %c0_415, %c0_416] : memref<2x7x16x16xf32, #tpu.memory_space<vmem>>, vector<1x1x16x16xf32>
    %457 = vector.shape_cast %456 : vector<1x1x16x16xf32> to vector<16x16xf32>
    %cst_417 = arith.constant dense<0.000000e+00> : vector<4x16xf32>
    %458 = tpu.matmul %455, %457, %cst_417 {dimension_numbers = #tpu.dot_dimension_numbers<[1], [0], [0], [1], [0, 0, 1, 1], [], []>} : vector<4x16xf32>, vector<16x16xf32>, vector<4x16xf32> -> vector<4x16xf32>
    %459 = arith.addf %454, %458 : vector<4x16xf32>
    %c9_418 = arith.constant 9 : index
    %c0_419 = arith.constant 0 : index
    %460 = vector.load %arg12[%c9_418, %c0_419] : memref<20x16xf32, #tpu.memory_space<vmem>>, vector<4x16xf32>
    %c1_420 = arith.constant 1 : index
    %c4_421 = arith.constant 4 : index
    %c0_422 = arith.constant 0 : index
    %c0_423 = arith.constant 0 : index
    %461 = vector.load %arg3[%c1_420, %c4_421, %c0_422, %c0_423] : memref<2x7x16x16xf32, #tpu.memory_space<vmem>>, vector<1x1x16x16xf32>
    %462 = vector.shape_cast %461 : vector<1x1x16x16xf32> to vector<16x16xf32>
    %cst_424 = arith.constant dense<0.000000e+00> : vector<4x16xf32>
    %463 = tpu.matmul %460, %462, %cst_424 {dimension_numbers = #tpu.dot_dimension_numbers<[1], [0], [0], [1], [0, 0, 1, 1], [], []>} : vector<4x16xf32>, vector<16x16xf32>, vector<4x16xf32> -> vector<4x16xf32>
    %464 = arith.addf %459, %463 : vector<4x16xf32>
    %c10_425 = arith.constant 10 : index
    %c0_426 = arith.constant 0 : index
    %465 = vector.load %arg12[%c10_425, %c0_426] : memref<20x16xf32, #tpu.memory_space<vmem>>, vector<4x16xf32>
    %c1_427 = arith.constant 1 : index
    %c5_428 = arith.constant 5 : index
    %c0_429 = arith.constant 0 : index
    %c0_430 = arith.constant 0 : index
    %466 = vector.load %arg3[%c1_427, %c5_428, %c0_429, %c0_430] : memref<2x7x16x16xf32, #tpu.memory_space<vmem>>, vector<1x1x16x16xf32>
    %467 = vector.shape_cast %466 : vector<1x1x16x16xf32> to vector<16x16xf32>
    %cst_431 = arith.constant dense<0.000000e+00> : vector<4x16xf32>
    %468 = tpu.matmul %465, %467, %cst_431 {dimension_numbers = #tpu.dot_dimension_numbers<[1], [0], [0], [1], [0, 0, 1, 1], [], []>} : vector<4x16xf32>, vector<16x16xf32>, vector<4x16xf32> -> vector<4x16xf32>
    %469 = arith.addf %464, %468 : vector<4x16xf32>
    %c11_432 = arith.constant 11 : index
    %c0_433 = arith.constant 0 : index
    %470 = vector.load %arg12[%c11_432, %c0_433] : memref<20x16xf32, #tpu.memory_space<vmem>>, vector<4x16xf32>
    %c1_434 = arith.constant 1 : index
    %c6_435 = arith.constant 6 : index
    %c0_436 = arith.constant 0 : index
    %c0_437 = arith.constant 0 : index
    %471 = vector.load %arg3[%c1_434, %c6_435, %c0_436, %c0_437] : memref<2x7x16x16xf32, #tpu.memory_space<vmem>>, vector<1x1x16x16xf32>
    %472 = vector.shape_cast %471 : vector<1x1x16x16xf32> to vector<16x16xf32>
    %cst_438 = arith.constant dense<0.000000e+00> : vector<4x16xf32>
    %473 = tpu.matmul %470, %472, %cst_438 {dimension_numbers = #tpu.dot_dimension_numbers<[1], [0], [0], [1], [0, 0, 1, 1], [], []>} : vector<4x16xf32>, vector<16x16xf32>, vector<4x16xf32> -> vector<4x16xf32>
    %474 = arith.addf %469, %473 : vector<4x16xf32>
    %475 = vector.broadcast %405 : f32 to vector<4x16xf32>
    %476 = arith.addf %474, %475 : vector<4x16xf32>
    %477 = arith.negf %476 : vector<4x16xf32>
    %478 = math.exp %477 : vector<4x16xf32>
    %cst_439 = arith.constant 1.000000e+00 : f32
    %479 = vector.broadcast %cst_439 : f32 to vector<4x16xf32>
    %480 = arith.addf %479, %478 : vector<4x16xf32>
    %481 = arith.divf %479, %480 : vector<4x16xf32>
    %c2_440 = arith.constant 2 : index
    %482 = memref.load %arg7[%c2_440] : memref<3xf32, #tpu.memory_space<smem>>
    %c5_441 = arith.constant 5 : index
    %c0_442 = arith.constant 0 : index
    %483 = vector.load %arg13[%c5_441, %c0_442] : memref<32x16xf32, #tpu.memory_space<vmem>>, vector<16x16xf32>
    %c0_443 = arith.constant 0 : index
    %c0_444 = arith.constant 0 : index
    %c0_445 = arith.constant 0 : index
    %c0_446 = arith.constant 0 : index
    %484 = vector.load %arg4[%c0_443, %c0_444, %c0_445, %c0_446] : memref<2x7x16x16xf32, #tpu.memory_space<vmem>>, vector<1x1x16x16xf32>
    %485 = vector.shape_cast %484 : vector<1x1x16x16xf32> to vector<16x16xf32>
    %cst_447 = arith.constant dense<0.000000e+00> : vector<16x16xf32>
    %486 = tpu.matmul %483, %485, %cst_447 {dimension_numbers = #tpu.dot_dimension_numbers<[1], [0], [0], [1], [0, 0, 1, 1], [], []>} : vector<16x16xf32>, vector<16x16xf32>, vector<16x16xf32> -> vector<16x16xf32>
    %c6_448 = arith.constant 6 : index
    %c0_449 = arith.constant 0 : index
    %487 = vector.load %arg13[%c6_448, %c0_449] : memref<32x16xf32, #tpu.memory_space<vmem>>, vector<16x16xf32>
    %c0_450 = arith.constant 0 : index
    %c1_451 = arith.constant 1 : index
    %c0_452 = arith.constant 0 : index
    %c0_453 = arith.constant 0 : index
    %488 = vector.load %arg4[%c0_450, %c1_451, %c0_452, %c0_453] : memref<2x7x16x16xf32, #tpu.memory_space<vmem>>, vector<1x1x16x16xf32>
    %489 = vector.shape_cast %488 : vector<1x1x16x16xf32> to vector<16x16xf32>
    %cst_454 = arith.constant dense<0.000000e+00> : vector<16x16xf32>
    %490 = tpu.matmul %487, %489, %cst_454 {dimension_numbers = #tpu.dot_dimension_numbers<[1], [0], [0], [1], [0, 0, 1, 1], [], []>} : vector<16x16xf32>, vector<16x16xf32>, vector<16x16xf32> -> vector<16x16xf32>
    %491 = arith.addf %486, %490 : vector<16x16xf32>
    %c7_455 = arith.constant 7 : index
    %c0_456 = arith.constant 0 : index
    %492 = vector.load %arg13[%c7_455, %c0_456] : memref<32x16xf32, #tpu.memory_space<vmem>>, vector<16x16xf32>
    %c0_457 = arith.constant 0 : index
    %c2_458 = arith.constant 2 : index
    %c0_459 = arith.constant 0 : index
    %c0_460 = arith.constant 0 : index
    %493 = vector.load %arg4[%c0_457, %c2_458, %c0_459, %c0_460] : memref<2x7x16x16xf32, #tpu.memory_space<vmem>>, vector<1x1x16x16xf32>
    %494 = vector.shape_cast %493 : vector<1x1x16x16xf32> to vector<16x16xf32>
    %cst_461 = arith.constant dense<0.000000e+00> : vector<16x16xf32>
    %495 = tpu.matmul %492, %494, %cst_461 {dimension_numbers = #tpu.dot_dimension_numbers<[1], [0], [0], [1], [0, 0, 1, 1], [], []>} : vector<16x16xf32>, vector<16x16xf32>, vector<16x16xf32> -> vector<16x16xf32>
    %496 = arith.addf %491, %495 : vector<16x16xf32>
    %c8_462 = arith.constant 8 : index
    %c0_463 = arith.constant 0 : index
    %497 = vector.load %arg13[%c8_462, %c0_463] : memref<32x16xf32, #tpu.memory_space<vmem>>, vector<16x16xf32>
    %c0_464 = arith.constant 0 : index
    %c3_465 = arith.constant 3 : index
    %c0_466 = arith.constant 0 : index
    %c0_467 = arith.constant 0 : index
    %498 = vector.load %arg4[%c0_464, %c3_465, %c0_466, %c0_467] : memref<2x7x16x16xf32, #tpu.memory_space<vmem>>, vector<1x1x16x16xf32>
    %499 = vector.shape_cast %498 : vector<1x1x16x16xf32> to vector<16x16xf32>
    %cst_468 = arith.constant dense<0.000000e+00> : vector<16x16xf32>
    %500 = tpu.matmul %497, %499, %cst_468 {dimension_numbers = #tpu.dot_dimension_numbers<[1], [0], [0], [1], [0, 0, 1, 1], [], []>} : vector<16x16xf32>, vector<16x16xf32>, vector<16x16xf32> -> vector<16x16xf32>
    %501 = arith.addf %496, %500 : vector<16x16xf32>
    %c9_469 = arith.constant 9 : index
    %c0_470 = arith.constant 0 : index
    %502 = vector.load %arg13[%c9_469, %c0_470] : memref<32x16xf32, #tpu.memory_space<vmem>>, vector<16x16xf32>
    %c0_471 = arith.constant 0 : index
    %c4_472 = arith.constant 4 : index
    %c0_473 = arith.constant 0 : index
    %c0_474 = arith.constant 0 : index
    %503 = vector.load %arg4[%c0_471, %c4_472, %c0_473, %c0_474] : memref<2x7x16x16xf32, #tpu.memory_space<vmem>>, vector<1x1x16x16xf32>
    %504 = vector.shape_cast %503 : vector<1x1x16x16xf32> to vector<16x16xf32>
    %cst_475 = arith.constant dense<0.000000e+00> : vector<16x16xf32>
    %505 = tpu.matmul %502, %504, %cst_475 {dimension_numbers = #tpu.dot_dimension_numbers<[1], [0], [0], [1], [0, 0, 1, 1], [], []>} : vector<16x16xf32>, vector<16x16xf32>, vector<16x16xf32> -> vector<16x16xf32>
    %506 = arith.addf %501, %505 : vector<16x16xf32>
    %c10_476 = arith.constant 10 : index
    %c0_477 = arith.constant 0 : index
    %507 = vector.load %arg13[%c10_476, %c0_477] : memref<32x16xf32, #tpu.memory_space<vmem>>, vector<16x16xf32>
    %c0_478 = arith.constant 0 : index
    %c5_479 = arith.constant 5 : index
    %c0_480 = arith.constant 0 : index
    %c0_481 = arith.constant 0 : index
    %508 = vector.load %arg4[%c0_478, %c5_479, %c0_480, %c0_481] : memref<2x7x16x16xf32, #tpu.memory_space<vmem>>, vector<1x1x16x16xf32>
    %509 = vector.shape_cast %508 : vector<1x1x16x16xf32> to vector<16x16xf32>
    %cst_482 = arith.constant dense<0.000000e+00> : vector<16x16xf32>
    %510 = tpu.matmul %507, %509, %cst_482 {dimension_numbers = #tpu.dot_dimension_numbers<[1], [0], [0], [1], [0, 0, 1, 1], [], []>} : vector<16x16xf32>, vector<16x16xf32>, vector<16x16xf32> -> vector<16x16xf32>
    %511 = arith.addf %506, %510 : vector<16x16xf32>
    %c11_483 = arith.constant 11 : index
    %c0_484 = arith.constant 0 : index
    %512 = vector.load %arg13[%c11_483, %c0_484] : memref<32x16xf32, #tpu.memory_space<vmem>>, vector<16x16xf32>
    %c0_485 = arith.constant 0 : index
    %c6_486 = arith.constant 6 : index
    %c0_487 = arith.constant 0 : index
    %c0_488 = arith.constant 0 : index
    %513 = vector.load %arg4[%c0_485, %c6_486, %c0_487, %c0_488] : memref<2x7x16x16xf32, #tpu.memory_space<vmem>>, vector<1x1x16x16xf32>
    %514 = vector.shape_cast %513 : vector<1x1x16x16xf32> to vector<16x16xf32>
    %cst_489 = arith.constant dense<0.000000e+00> : vector<16x16xf32>
    %515 = tpu.matmul %512, %514, %cst_489 {dimension_numbers = #tpu.dot_dimension_numbers<[1], [0], [0], [1], [0, 0, 1, 1], [], []>} : vector<16x16xf32>, vector<16x16xf32>, vector<16x16xf32> -> vector<16x16xf32>
    %516 = arith.addf %511, %515 : vector<16x16xf32>
    %c5_490 = arith.constant 5 : index
    %c0_491 = arith.constant 0 : index
    %517 = vector.load %arg14[%c5_490, %c0_491] : memref<32x16xf32, #tpu.memory_space<vmem>>, vector<16x16xf32>
    %c1_492 = arith.constant 1 : index
    %c0_493 = arith.constant 0 : index
    %c0_494 = arith.constant 0 : index
    %c0_495 = arith.constant 0 : index
    %518 = vector.load %arg4[%c1_492, %c0_493, %c0_494, %c0_495] : memref<2x7x16x16xf32, #tpu.memory_space<vmem>>, vector<1x1x16x16xf32>
    %519 = vector.shape_cast %518 : vector<1x1x16x16xf32> to vector<16x16xf32>
    %cst_496 = arith.constant dense<0.000000e+00> : vector<16x16xf32>
    %520 = tpu.matmul %517, %519, %cst_496 {dimension_numbers = #tpu.dot_dimension_numbers<[1], [0], [0], [1], [0, 0, 1, 1], [], []>} : vector<16x16xf32>, vector<16x16xf32>, vector<16x16xf32> -> vector<16x16xf32>
    %521 = arith.addf %516, %520 : vector<16x16xf32>
    %c6_497 = arith.constant 6 : index
    %c0_498 = arith.constant 0 : index
    %522 = vector.load %arg14[%c6_497, %c0_498] : memref<32x16xf32, #tpu.memory_space<vmem>>, vector<16x16xf32>
    %c1_499 = arith.constant 1 : index
    %c1_500 = arith.constant 1 : index
    %c0_501 = arith.constant 0 : index
    %c0_502 = arith.constant 0 : index
    %523 = vector.load %arg4[%c1_499, %c1_500, %c0_501, %c0_502] : memref<2x7x16x16xf32, #tpu.memory_space<vmem>>, vector<1x1x16x16xf32>
    %524 = vector.shape_cast %523 : vector<1x1x16x16xf32> to vector<16x16xf32>
    %cst_503 = arith.constant dense<0.000000e+00> : vector<16x16xf32>
    %525 = tpu.matmul %522, %524, %cst_503 {dimension_numbers = #tpu.dot_dimension_numbers<[1], [0], [0], [1], [0, 0, 1, 1], [], []>} : vector<16x16xf32>, vector<16x16xf32>, vector<16x16xf32> -> vector<16x16xf32>
    %526 = arith.addf %521, %525 : vector<16x16xf32>
    %c7_504 = arith.constant 7 : index
    %c0_505 = arith.constant 0 : index
    %527 = vector.load %arg14[%c7_504, %c0_505] : memref<32x16xf32, #tpu.memory_space<vmem>>, vector<16x16xf32>
    %c1_506 = arith.constant 1 : index
    %c2_507 = arith.constant 2 : index
    %c0_508 = arith.constant 0 : index
    %c0_509 = arith.constant 0 : index
    %528 = vector.load %arg4[%c1_506, %c2_507, %c0_508, %c0_509] : memref<2x7x16x16xf32, #tpu.memory_space<vmem>>, vector<1x1x16x16xf32>
    %529 = vector.shape_cast %528 : vector<1x1x16x16xf32> to vector<16x16xf32>
    %cst_510 = arith.constant dense<0.000000e+00> : vector<16x16xf32>
    %530 = tpu.matmul %527, %529, %cst_510 {dimension_numbers = #tpu.dot_dimension_numbers<[1], [0], [0], [1], [0, 0, 1, 1], [], []>} : vector<16x16xf32>, vector<16x16xf32>, vector<16x16xf32> -> vector<16x16xf32>
    %531 = arith.addf %526, %530 : vector<16x16xf32>
    %c8_511 = arith.constant 8 : index
    %c0_512 = arith.constant 0 : index
    %532 = vector.load %arg14[%c8_511, %c0_512] : memref<32x16xf32, #tpu.memory_space<vmem>>, vector<16x16xf32>
    %c1_513 = arith.constant 1 : index
    %c3_514 = arith.constant 3 : index
    %c0_515 = arith.constant 0 : index
    %c0_516 = arith.constant 0 : index
    %533 = vector.load %arg4[%c1_513, %c3_514, %c0_515, %c0_516] : memref<2x7x16x16xf32, #tpu.memory_space<vmem>>, vector<1x1x16x16xf32>
    %534 = vector.shape_cast %533 : vector<1x1x16x16xf32> to vector<16x16xf32>
    %cst_517 = arith.constant dense<0.000000e+00> : vector<16x16xf32>
    %535 = tpu.matmul %532, %534, %cst_517 {dimension_numbers = #tpu.dot_dimension_numbers<[1], [0], [0], [1], [0, 0, 1, 1], [], []>} : vector<16x16xf32>, vector<16x16xf32>, vector<16x16xf32> -> vector<16x16xf32>
    %536 = arith.addf %531, %535 : vector<16x16xf32>
    %c9_518 = arith.constant 9 : index
    %c0_519 = arith.constant 0 : index
    %537 = vector.load %arg14[%c9_518, %c0_519] : memref<32x16xf32, #tpu.memory_space<vmem>>, vector<16x16xf32>
    %c1_520 = arith.constant 1 : index
    %c4_521 = arith.constant 4 : index
    %c0_522 = arith.constant 0 : index
    %c0_523 = arith.constant 0 : index
    %538 = vector.load %arg4[%c1_520, %c4_521, %c0_522, %c0_523] : memref<2x7x16x16xf32, #tpu.memory_space<vmem>>, vector<1x1x16x16xf32>
    %539 = vector.shape_cast %538 : vector<1x1x16x16xf32> to vector<16x16xf32>
    %cst_524 = arith.constant dense<0.000000e+00> : vector<16x16xf32>
    %540 = tpu.matmul %537, %539, %cst_524 {dimension_numbers = #tpu.dot_dimension_numbers<[1], [0], [0], [1], [0, 0, 1, 1], [], []>} : vector<16x16xf32>, vector<16x16xf32>, vector<16x16xf32> -> vector<16x16xf32>
    %541 = arith.addf %536, %540 : vector<16x16xf32>
    %c10_525 = arith.constant 10 : index
    %c0_526 = arith.constant 0 : index
    %542 = vector.load %arg14[%c10_525, %c0_526] : memref<32x16xf32, #tpu.memory_space<vmem>>, vector<16x16xf32>
    %c1_527 = arith.constant 1 : index
    %c5_528 = arith.constant 5 : index
    %c0_529 = arith.constant 0 : index
    %c0_530 = arith.constant 0 : index
    %543 = vector.load %arg4[%c1_527, %c5_528, %c0_529, %c0_530] : memref<2x7x16x16xf32, #tpu.memory_space<vmem>>, vector<1x1x16x16xf32>
    %544 = vector.shape_cast %543 : vector<1x1x16x16xf32> to vector<16x16xf32>
    %cst_531 = arith.constant dense<0.000000e+00> : vector<16x16xf32>
    %545 = tpu.matmul %542, %544, %cst_531 {dimension_numbers = #tpu.dot_dimension_numbers<[1], [0], [0], [1], [0, 0, 1, 1], [], []>} : vector<16x16xf32>, vector<16x16xf32>, vector<16x16xf32> -> vector<16x16xf32>
    %546 = arith.addf %541, %545 : vector<16x16xf32>
    %c11_532 = arith.constant 11 : index
    %c0_533 = arith.constant 0 : index
    %547 = vector.load %arg14[%c11_532, %c0_533] : memref<32x16xf32, #tpu.memory_space<vmem>>, vector<16x16xf32>
    %c1_534 = arith.constant 1 : index
    %c6_535 = arith.constant 6 : index
    %c0_536 = arith.constant 0 : index
    %c0_537 = arith.constant 0 : index
    %548 = vector.load %arg4[%c1_534, %c6_535, %c0_536, %c0_537] : memref<2x7x16x16xf32, #tpu.memory_space<vmem>>, vector<1x1x16x16xf32>
    %549 = vector.shape_cast %548 : vector<1x1x16x16xf32> to vector<16x16xf32>
    %cst_538 = arith.constant dense<0.000000e+00> : vector<16x16xf32>
    %550 = tpu.matmul %547, %549, %cst_538 {dimension_numbers = #tpu.dot_dimension_numbers<[1], [0], [0], [1], [0, 0, 1, 1], [], []>} : vector<16x16xf32>, vector<16x16xf32>, vector<16x16xf32> -> vector<16x16xf32>
    %551 = arith.addf %546, %550 : vector<16x16xf32>
    %552 = vector.broadcast %482 : f32 to vector<16x16xf32>
    %553 = arith.addf %551, %552 : vector<16x16xf32>
    %554 = arith.negf %553 : vector<16x16xf32>
    %555 = math.exp %554 : vector<16x16xf32>
    %cst_539 = arith.constant 1.000000e+00 : f32
    %556 = vector.broadcast %cst_539 : f32 to vector<16x16xf32>
    %557 = arith.addf %556, %555 : vector<16x16xf32>
    %558 = arith.divf %556, %557 : vector<16x16xf32>
    %cst_540 = arith.constant dense<0.000000e+00> : vector<4x256xf32>
    %559 = tpu.matmul %404, %18, %cst_540 {dimension_numbers = #tpu.dot_dimension_numbers<[1], [0], [0], [1], [0, 0, 1, 1], [], []>} : vector<4x16xf32>, vector<16x256xf32>, vector<4x256xf32> -> vector<4x256xf32>
    %cst_541 = arith.constant dense<0.000000e+00> : vector<4x256xf32>
    %560 = tpu.matmul %481, %19, %cst_541 {dimension_numbers = #tpu.dot_dimension_numbers<[1], [0], [0], [1], [0, 0, 1, 1], [], []>} : vector<4x16xf32>, vector<16x256xf32>, vector<4x256xf32> -> vector<4x256xf32>
    %cst_542 = arith.constant dense<0.000000e+00> : vector<16x256xf32>
    %561 = tpu.matmul %558, %18, %cst_542 {dimension_numbers = #tpu.dot_dimension_numbers<[1], [0], [0], [1], [0, 0, 1, 1], [], []>} : vector<16x16xf32>, vector<16x256xf32>, vector<16x256xf32> -> vector<16x256xf32>
    %562 = arith.mulf %561, %19 : vector<16x256xf32>
    %cst_543 = arith.constant dense<0.000000e+00> : vector<256xf32>
    %563 = vector.multi_reduction <add>, %562, %cst_543 [0] : vector<16x256xf32> to vector<256xf32>
    %564 = vector.shape_cast %563 : vector<256xf32> to vector<1x256xf32>
    %565 = arith.addf %559, %560 : vector<4x256xf32>
    %566 = vector.broadcast %564 : vector<1x256xf32> to vector<4x256xf32>
    %567 = arith.addf %565, %566 : vector<4x256xf32>
    %cst_544 = arith.constant 0.333333343 : f32
    %568 = vector.broadcast %cst_544 : f32 to vector<4x256xf32>
    %569 = arith.mulf %567, %568 : vector<4x256xf32>
    %570 = arith.mulf %21, %569 : vector<4x256xf32>
    %c0_545 = arith.constant 0 : index
    %c0_546 = arith.constant 0 : index
    %c0_547 = arith.constant 0 : index
    %571 = vector.load %arg8[%c0_545, %c0_546, %c0_547] : memref<1x4x256xf32, #tpu.memory_space<vmem>>, vector<1x4x256xf32>
    %572 = vector.shape_cast %571 : vector<1x4x256xf32> to vector<4x256xf32>
    %573 = vector.shape_cast %570 : vector<4x256xf32> to vector<1x4x256xf32>
    tpu.vector_store %arg8[%c0_545, %c0_546, %c0_547], %573 {strides = array<i32>} : memref<1x4x256xf32, #tpu.memory_space<vmem>>, vector<1x4x256xf32>,
    return
  }
  func.func @transform_0(%arg0: i32) -> (i32, i32, i32) {
    %c0_i32 = arith.constant 0 : i32
    %c0_i32_0 = arith.constant 0 : i32
    %c0_i32_1 = arith.constant 0 : i32
    return %arg0, %c0_i32, %c0_i32_0 : i32, i32, i32
  }
  func.func @transform_1(%arg0: i32) -> (i32, i32, i32, i32) {
    %c0_i32 = arith.constant 0 : i32
    %c0_i32_0 = arith.constant 0 : i32
    %c0_i32_1 = arith.constant 0 : i32
    %c0_i32_2 = arith.constant 0 : i32
    %c0_i32_3 = arith.constant 0 : i32
    return %c0_i32, %c0_i32_0, %c0_i32_1, %c0_i32_2 : i32, i32, i32, i32
  }
  func.func @transform_2(%arg0: i32) -> (i32, i32, i32, i32) {
    %c0_i32 = arith.constant 0 : i32
    %c0_i32_0 = arith.constant 0 : i32
    %c0_i32_1 = arith.constant 0 : i32
    %c0_i32_2 = arith.constant 0 : i32
    %c0_i32_3 = arith.constant 0 : i32
    return %c0_i32, %c0_i32_0, %c0_i32_1, %c0_i32_2 : i32, i32, i32, i32
  }
  func.func @transform_3(%arg0: i32) -> (i32, i32, i32, i32) {
    %c0_i32 = arith.constant 0 : i32
    %c0_i32_0 = arith.constant 0 : i32
    %c0_i32_1 = arith.constant 0 : i32
    %c0_i32_2 = arith.constant 0 : i32
    %c0_i32_3 = arith.constant 0 : i32
    return %c0_i32, %c0_i32_0, %c0_i32_1, %c0_i32_2 : i32, i32, i32, i32
  }
  func.func @transform_4(%arg0: i32) -> (i32, i32) {
    %c0_i32 = arith.constant 0 : i32
    %c0_i32_0 = arith.constant 0 : i32
    %c0_i32_1 = arith.constant 0 : i32
    return %c0_i32, %c0_i32_0 : i32, i32
  }
  func.func @transform_5(%arg0: i32) -> (i32, i32) {
    %c0_i32 = arith.constant 0 : i32
    %c0_i32_0 = arith.constant 0 : i32
    %c0_i32_1 = arith.constant 0 : i32
    return %c0_i32, %c0_i32_0 : i32, i32
  }
  func.func @transform_6(%arg0: i32) -> i32 {
    %c0_i32 = arith.constant 0 : i32
    %c0_i32_0 = arith.constant 0 : i32
    return %c0_i32 : i32
  }
  func.func @transform_7(%arg0: i32) -> (i32, i32, i32) {
    %c0_i32 = arith.constant 0 : i32
    %c0_i32_0 = arith.constant 0 : i32
    %c0_i32_1 = arith.constant 0 : i32
    return %arg0, %c0_i32, %c0_i32_0 : i32, i32, i32
  }
}

</mosaic_0001>

<llo_original>
// kernel: tpu_custom_call.1
$region0: #{tpu_custom_call.1}
  #allocation0 [shape = 'u32[]', space=smem, size = 0x4, offset = 0x4, fixed_abs, tag = 'smem constant byte address 0x4 - core index']
  #allocation1 [shape = 'u32[144,128]{1,0:T(1,128)}', space=vmem, size = 0x12000, scoped, tag = 'internal scratch']
  #allocation2 [shape = 'f32[20,16]{1,0:T(8,128)}', space=vmem, size = 0x3000, scoped, tag = 'scratch operand']
  #allocation3 [shape = 'f32[20,16]{1,0:T(8,128)}', space=vmem, size = 0x3000, scoped, tag = 'scratch operand']
  #allocation4 [shape = 'f32[20,16]{1,0:T(8,128)}', space=vmem, size = 0x3000, scoped, tag = 'scratch operand']
  #allocation5 [shape = 'f32[20,16]{1,0:T(8,128)}', space=vmem, size = 0x3000, scoped, tag = 'scratch operand']
  #allocation6 [shape = 'f32[32,16]{1,0:T(8,128)}', space=vmem, size = 0x4000, scoped, tag = 'scratch operand']
  #allocation7 [shape = 'f32[32,16]{1,0:T(8,128)}', space=vmem, size = 0x4000, scoped, tag = 'scratch operand']
  %s0 = inlined_call_operand.hbm [shape: f32[2,4,256], index: 0, kind: input, shape index: {}]
  %s1 = inlined_call_operand.hbm [shape: f32[2,7,16,16], index: 1, kind: input, shape index: {}]
  %s2 = inlined_call_operand.hbm [shape: f32[2,7,16,16], index: 2, kind: input, shape index: {}]
  %s3 = inlined_call_operand.hbm [shape: f32[2,7,16,16], index: 3, kind: input, shape index: {}]
  %s4 = inlined_call_operand.hbm [shape: f32[16,256], index: 4, kind: input, shape index: {}]
  %s5 = inlined_call_operand.hbm [shape: f32[16,256], index: 5, kind: input, shape index: {}]
  %s6 = inlined_call_operand.vmem [shape: f32[3], index: 6, kind: input, shape index: {}]
  %s7 = inlined_call_operand.hbm [shape: f32[2,4,256], index: 7, kind: output, shape index: {}]
  %s8 = sld [smem:[#allocation0]]
  $region89: #{tpu_custom_call.1} parent=0
    _
  %s10 = ssub.s32 1, %s8
  %s11 = scalar_select 0, %s10, %s8
  $region1: #{tpu_custom_call.1} parent=0
    #allocation8 [shape = 'u8[8192]{0}', space=vmem, size = 0x2000, scoped, tag = 'input window, operand 0']
    #allocation9 [shape = 's32[2]{0}', space=sflag, size = 0x8, scoped, tag = 'scoped memory for tpu_custom_call.1']
    #allocation10 [shape = 's32[2]{0}', space=sflag, size = 0x8, scoped, tag = 'scoped memory for tpu_custom_call.1']
    #allocation11 [shape = 's32[2]{0}', space=sflag, size = 0x8, scoped, tag = 'scoped memory for tpu_custom_call.1']
    #allocation12 [shape = 'u8[114688]{0}', space=vmem, size = 0x1c000, scoped, tag = 'input window, operand 1, single buffered']
    #allocation13 [shape = 's32[1]{0}', space=sflag, size = 0x4, scoped, tag = 'scoped memory for tpu_custom_call.1']
    #allocation14 [shape = 'u8[114688]{0}', space=vmem, size = 0x1c000, scoped, tag = 'input window, operand 2, single buffered']
    #allocation15 [shape = 'u8[114688]{0}', space=vmem, size = 0x1c000, scoped, tag = 'input window, operand 3, single buffered']
    #allocation16 [shape = 's32[1]{0}', space=sflag, size = 0x4, scoped, tag = 'scoped memory for tpu_custom_call.1']
    #allocation17 [shape = 'u8[16384]{0}', space=vmem, size = 0x4000, scoped, tag = 'input window, operand 4, single buffered']
    #allocation18 [shape = 'u8[16384]{0}', space=vmem, size = 0x4000, scoped, tag = 'input window, operand 5, single buffered']
    #allocation19 [shape = 's32[1]{0}', space=sflag, size = 0x4, scoped, tag = 'scoped memory for tpu_custom_call.1']
    #allocation20 [shape = 'u8[512]{0}', space=smem, size = 0x200, scoped, tag = 'input window, operand 6, single buffered']
    #allocation21 [shape = 'u8[8192]{0}', space=vmem, size = 0x2000, scoped, tag = 'output window, operand 0']
    %12 = vsyncpa [#allocation9], 0
    %s13 = scalar_lea.sflag [#allocation9], 1
    %14 = vsyncpa %s13, 0
    %15 = vsyncpa [#allocation13], 0
    %16 = vsyncpa [#allocation16], 0
    %17 = vsyncpa [#allocation19], 0
    %18 = vsyncpa [#allocation11], 0
    %19 = vsyncpa [#allocation10], 0
    %s20 = scalar_lea.sflag [#allocation10], 1
    %21 = vsyncpa %s20, 0
    loop: start=0, step=1, limit=4
    $region2: #{tpu_custom_call.1} parent=1 // loop_pre_header
      _
    $region3: #{tpu_custom_call.1} parent=1 // loop_header
      %s23 = sphi 0, %s27
      %p24 = scmp.ge.s32.totalorder %s23, 4
      %s33 = sphi 0, %s35
      %s36 = sphi 0, %s33
      %s37 = sphi 0, %s36
      %s53 = sphi 0, %s37
      %s57 = sphi 0, %s57
      %s59 = sphi 0, %s57
      %s60 = sphi 0, %s59
      %s74 = sphi 0, %s60
      %s78 = sphi 0, %s78
      %s80 = sphi 0, %s78
      %s81 = sphi 0, %s80
      %s95 = sphi 0, %s81
      %s99 = sphi 0, %s99
      %s101 = sphi 0, %s99
      %s102 = sphi 0, %s101
      %s116 = sphi 0, %s102
      %s120 = sphi 0, %s120
      %s122 = sphi 0, %s120
      %s123 = sphi 0, %s122
      %s137 = sphi 0, %s123
      %s141 = sphi 0, %s141
      %s143 = sphi 0, %s141
      %s144 = sphi 0, %s143
      %s158 = sphi 0, %s144
      %s162 = sphi 0, %s162
      %s164 = sphi 0, %s162
      %s165 = sphi 0, %s164
      %s179 = sphi 0, %s165
      %s185 = sphi 0, %s187
      %s188 = sphi 0, %s185
      %s189 = sphi 0, %s188
      %s205 = sphi 0, %s189
    $region4: #{tpu_custom_call.1} parent=1 // loop_header_branch
      %26 = sbr.rel (%p24) target = $region8
    $region5: #{tpu_custom_call.1} parent=1 // loop_body
      %s28 = ssub.s32 %s23, 1
      %s29 = ssub.s32 %s23, 2
      %s30 = sadd.s32 %s23, 1
      %s31 = ssub.s32 %s23, %s30
      %p32 = scmp.eq.s32.totalorder %s31, 0
      %s34 = sadd.s32 %s33, 1
      %s35 = scalar_select %p32, %s33, %s34
      %p38 = pneg %p32
      %p39 = scmp.eq.s32.totalorder %s23, 1
      %p40 = por %p38, %p39
      %p41 = scmp.ne.s32.totalorder %s33, %s36
      %p42 = scmp.eq.s32.totalorder %s23, 0
      %p43 = por %p41, %p42
      %p44 = scmp.ne.s32.totalorder %s33, %s36
      %p45 = scmp.eq.s32.totalorder %s28, 1
      %p46 = por %p44, %p45
      %p47 = scmp.ne.s32.totalorder %s36, %s37
      %p48 = scmp.eq.s32.totalorder %s28, 0
      %p49 = por %p47, %p48
      %p50 = scmp.ne.s32.totalorder %s36, %s37
      %p51 = scmp.eq.s32.totalorder %s29, 1
      %p52 = por %p50, %p51
      %p54 = scmp.ne.s32.totalorder %s37, %s53
      %p55 = scmp.eq.s32.totalorder %s29, 0
      %p56 = por %p54, %p55
      %s58 = sadd.s32 %s57, 1
      %p61 = scmp.eq.s32.totalorder %s23, 1
      %p62 = scmp.ne.s32.totalorder %s57, %s59
      %p63 = scmp.eq.s32.totalorder %s23, 0
      %p64 = por %p62, %p63
      %p65 = scmp.ne.s32.totalorder %s57, %s59
      %p66 = scmp.eq.s32.totalorder %s28, 1
      %p67 = por %p65, %p66
      %p68 = scmp.ne.s32.totalorder %s59, %s60
      %p69 = scmp.eq.s32.totalorder %s28, 0
      %p70 = por %p68, %p69
      %p71 = scmp.ne.s32.totalorder %s59, %s60
      %p72 = scmp.eq.s32.totalorder %s29, 1
      %p73 = por %p71, %p72
      %p75 = scmp.ne.s32.totalorder %s60, %s74
      %p76 = scmp.eq.s32.totalorder %s29, 0
      %p77 = por %p75, %p76
      %s79 = sadd.s32 %s78, 1
      %p82 = scmp.eq.s32.totalorder %s23, 1
      %p83 = scmp.ne.s32.totalorder %s78, %s80
      %p84 = scmp.eq.s32.totalorder %s23, 0
      %p85 = por %p83, %p84
      %p86 = scmp.ne.s32.totalorder %s78, %s80
      %p87 = scmp.eq.s32.totalorder %s28, 1
      %p88 = por %p86, %p87
      %p89 = scmp.ne.s32.totalorder %s80, %s81
      %p90 = scmp.eq.s32.totalorder %s28, 0
      %p91 = por %p89, %p90
      %p92 = scmp.ne.s32.totalorder %s80, %s81
      %p93 = scmp.eq.s32.totalorder %s29, 1
      %p94 = por %p92, %p93
      %p96 = scmp.ne.s32.totalorder %s81, %s95
      %p97 = scmp.eq.s32.totalorder %s29, 0
      %p98 = por %p96, %p97
      %s100 = sadd.s32 %s99, 1
      %p103 = scmp.eq.s32.totalorder %s23, 1
      %p104 = scmp.ne.s32.totalorder %s99, %s101
      %p105 = scmp.eq.s32.totalorder %s23, 0
      %p106 = por %p104, %p105
      %p107 = scmp.ne.s32.totalorder %s99, %s101
      %p108 = scmp.eq.s32.totalorder %s28, 1
      %p109 = por %p107, %p108
      %p110 = scmp.ne.s32.totalorder %s101, %s102
      %p111 = scmp.eq.s32.totalorder %s28, 0
      %p112 = por %p110, %p111
      %p113 = scmp.ne.s32.totalorder %s101, %s102
      %p114 = scmp.eq.s32.totalorder %s29, 1
      %p115 = por %p113, %p114
      %p117 = scmp.ne.s32.totalorder %s102, %s116
      %p118 = scmp.eq.s32.totalorder %s29, 0
      %p119 = por %p117, %p118
      %s121 = sadd.s32 %s120, 1
      %p124 = scmp.eq.s32.totalorder %s23, 1
      %p125 = scmp.ne.s32.totalorder %s120, %s122
      %p126 = scmp.eq.s32.totalorder %s23, 0
      %p127 = por %p125, %p126
      %p128 = scmp.ne.s32.totalorder %s120, %s122
      %p129 = scmp.eq.s32.totalorder %s28, 1
      %p130 = por %p128, %p129
      %p131 = scmp.ne.s32.totalorder %s122, %s123
      %p132 = scmp.eq.s32.totalorder %s28, 0
      %p133 = por %p131, %p132
      %p134 = scmp.ne.s32.totalorder %s122, %s123
      %p135 = scmp.eq.s32.totalorder %s29, 1
      %p136 = por %p134, %p135
      %p138 = scmp.ne.s32.totalorder %s123, %s137
      %p139 = scmp.eq.s32.totalorder %s29, 0
      %p140 = por %p138, %p139
      %s142 = sadd.s32 %s141, 1
      %p145 = scmp.eq.s32.totalorder %s23, 1
      %p146 = scmp.ne.s32.totalorder %s141, %s143
      %p147 = scmp.eq.s32.totalorder %s23, 0
      %p148 = por %p146, %p147
      %p149 = scmp.ne.s32.totalorder %s141, %s143
      %p150 = scmp.eq.s32.totalorder %s28, 1
      %p151 = por %p149, %p150
      %p152 = scmp.ne.s32.totalorder %s143, %s144
      %p153 = scmp.eq.s32.totalorder %s28, 0
      %p154 = por %p152, %p153
      %p155 = scmp.ne.s32.totalorder %s143, %s144
      %p156 = scmp.eq.s32.totalorder %s29, 1
      %p157 = por %p155, %p156
      %p159 = scmp.ne.s32.totalorder %s144, %s158
      %p160 = scmp.eq.s32.totalorder %s29, 0
      %p161 = por %p159, %p160
      %s163 = sadd.s32 %s162, 1
      %p166 = scmp.eq.s32.totalorder %s23, 1
      %p167 = scmp.ne.s32.totalorder %s162, %s164
      %p168 = scmp.eq.s32.totalorder %s23, 0
      %p169 = por %p167, %p168
      %p170 = scmp.ne.s32.totalorder %s162, %s164
      %p171 = scmp.eq.s32.totalorder %s28, 1
      %p172 = por %p170, %p171
      %p173 = scmp.ne.s32.totalorder %s164, %s165
      %p174 = scmp.eq.s32.totalorder %s28, 0
      %p175 = por %p173, %p174
      %p176 = scmp.ne.s32.totalorder %s164, %s165
      %p177 = scmp.eq.s32.totalorder %s29, 1
      %p178 = por %p176, %p177
      %p180 = scmp.ne.s32.totalorder %s165, %s179
      %p181 = scmp.eq.s32.totalorder %s29, 0
      %p182 = por %p180, %p181
      %s183 = ssub.s32 %s23, %s30
      %p184 = scmp.eq.s32.totalorder %s183, 0
      %s186 = sadd.s32 %s185, 1
      %s187 = scalar_select %p184, %s185, %s186
      %p190 = pneg %p184
      %p191 = scmp.eq.s32.totalorder %s23, 1
      %p192 = por %p190, %p191
      %p193 = scmp.ne.s32.totalorder %s185, %s188
      %p194 = scmp.eq.s32.totalorder %s23, 0
      %p195 = por %p193, %p194
      %p196 = scmp.ne.s32.totalorder %s185, %s188
      %p197 = scmp.eq.s32.totalorder %s28, 1
      %p198 = por %p196, %p197
      %p199 = scmp.ne.s32.totalorder %s188, %s189
      %p200 = scmp.eq.s32.totalorder %s28, 0
      %p201 = por %p199, %p200
      %p202 = scmp.ne.s32.totalorder %s188, %s189
      %p203 = scmp.eq.s32.totalorder %s29, 1
      %p204 = por %p202, %p203
      %p206 = scmp.ne.s32.totalorder %s189, %s205
      %p207 = scmp.eq.s32.totalorder %s29, 0
      %p208 = por %p206, %p207
      %p209 = scmp.le.s32.totalorder 1, %s23
      %p210 = scmp.lt.s32.totalorder %s23, 3
      %p211 = pnand %p209, %p210
      %p212 = pneg %p211
      // Predicated region
      $region9: #{tpu_custom_call.1} parent=5 // pred_check
        _
      $region10: #{tpu_custom_call.1} parent=5 // pred_check_branch
        %214 = sbr.rel (%p211) target = $region12
      $region11: #{tpu_custom_call.1} parent=5 // pred_region
        %s215 = ssub.s32 %s23, 1
        // Predicated region
        $region13: #{tpu_custom_call.1} parent=11 // pred_check
          %p216 = pneg %p70
        $region14: #{tpu_custom_call.1} parent=11 // pred_check_branch
          %218 = sbr.rel (%p216) target = $region16
        $region15: #{tpu_custom_call.1} parent=11 // pred_region
          %s220 = ssub.s32 3584, 3584
          %221 = vsyncadd [#allocation13], %s220
          %s222 = sshll.u32 [#allocation12], 4
          %s223 = int_to_ptr.vmem [resolvable:$true] %s222
          %228 = dma.hbm_to_vmem [thread:$0]  %s1, 3584, %s223, [#allocation13], 128, 128, 8
        $region16: #{tpu_custom_call.1} parent=11 // pred_fallthru
          _
        // Predicated region
        $region17: #{tpu_custom_call.1} parent=11 // pred_check
          %p229 = pneg %p91
        $region18: #{tpu_custom_call.1} parent=11 // pred_check_branch
          %231 = sbr.rel (%p229) target = $region20
        $region19: #{tpu_custom_call.1} parent=11 // pred_region
          %s233 = ssub.s32 3584, 3584
          %234 = vsyncadd [#allocation13], %s233
          %s235 = sshll.u32 [#allocation14], 4
          %s236 = int_to_ptr.vmem [resolvable:$true] %s235
          %241 = dma.hbm_to_vmem [thread:$0]  %s2, 3584, %s236, [#allocation13], 128, 128, 8
        $region20: #{tpu_custom_call.1} parent=11 // pred_fallthru
          _
        // Predicated region
        $region21: #{tpu_custom_call.1} parent=11 // pred_check
          %p242 = pneg %p112
        $region22: #{tpu_custom_call.1} parent=11 // pred_check_branch
          %244 = sbr.rel (%p242) target = $region24
        $region23: #{tpu_custom_call.1} parent=11 // pred_region
          %s246 = ssub.s32 3584, 3584
          %247 = vsyncadd [#allocation16], %s246
          %s248 = sshll.u32 [#allocation15], 4
          %s249 = int_to_ptr.vmem [resolvable:$true] %s248
          %254 = dma.hbm_to_vmem [thread:$0]  %s3, 3584, %s249, [#allocation16], 128, 128, 8
        $region24: #{tpu_custom_call.1} parent=11 // pred_fallthru
          _
        // Predicated region
        $region25: #{tpu_custom_call.1} parent=11 // pred_check
          %p255 = pneg %p133
        $region26: #{tpu_custom_call.1} parent=11 // pred_check_branch
          %257 = sbr.rel (%p255) target = $region28
        $region27: #{tpu_custom_call.1} parent=11 // pred_region
          %s259 = ssub.s32 512, 512
          %260 = vsyncadd [#allocation16], %s259
          %s261 = sshll.u32 [#allocation17], 4
          %s262 = int_to_ptr.vmem [resolvable:$true] %s261
          %267 = dma.hbm_to_vmem [thread:$0]  %s4, 512, %s262, [#allocation16], 256, 256, 16
        $region28: #{tpu_custom_call.1} parent=11 // pred_fallthru
          _
        // Predicated region
        $region29: #{tpu_custom_call.1} parent=11 // pred_check
          %p268 = pneg %p154
        $region30: #{tpu_custom_call.1} parent=11 // pred_check_branch
          %270 = sbr.rel (%p268) target = $region32
        $region31: #{tpu_custom_call.1} parent=11 // pred_region
          %s272 = ssub.s32 512, 512
          %273 = vsyncadd [#allocation19], %s272
          %s274 = sshll.u32 [#allocation18], 4
          %s275 = int_to_ptr.vmem [resolvable:$true] %s274
          %280 = dma.hbm_to_vmem [thread:$0]  %s5, 512, %s275, [#allocation19], 256, 256, 16
        $region32: #{tpu_custom_call.1} parent=11 // pred_fallthru
          _
        // Predicated region
        $region33: #{tpu_custom_call.1} parent=11 // pred_check
          %p281 = pneg %p175
        $region34: #{tpu_custom_call.1} parent=11 // pred_check_branch
          %283 = sbr.rel (%p281) target = $region36
        $region35: #{tpu_custom_call.1} parent=11 // pred_region
          %s285 = ssub.s32 16, 16
          %286 = vsyncadd [#allocation11], %s285
          %s288 = sshll.u32 %s6, 4
          %s289 = int_to_ptr.vmem [resolvable:$true] %s288
          %291 = dma.vmem_to_smem %s289, 16, [#allocation20], [#allocation11]
        $region36: #{tpu_custom_call.1} parent=11 // pred_fallthru
          _
      $region12: #{tpu_custom_call.1} parent=5 // pred_fallthru
        _
      %p292 = scmp.lt.s32.totalorder %s23, 2
      // Predicated region
      $region37: #{tpu_custom_call.1} parent=5 // pred_check
        %p293 = pneg %p292
      $region38: #{tpu_custom_call.1} parent=5 // pred_check_branch
        %295 = sbr.rel (%p293) target = $region40
      $region39: #{tpu_custom_call.1} parent=5 // pred_region
        // Predicated region
        $region41: #{tpu_custom_call.1} parent=39 // pred_check
          %p296 = pneg %p43
        $region42: #{tpu_custom_call.1} parent=39 // pred_check_branch
          %298 = sbr.rel (%p296) target = $region44
        $region43: #{tpu_custom_call.1} parent=39 // pred_region
          %s299 = sand.u32 %s33, 1
          %s300 = scalar_lea.sflag [#allocation9], %s299
          %s301 = sand.u32 %s33, 1
          %s302 = smul.addr %s301, 8
          %s303 = scalar_lea.vmem [#allocation8], %s302
          %s305 = ssub.s32 128, 128
          %306 = vsyncadd %s300, %s305
          %s307 = smul.addr %s23, 2
          %s308 = smul.addr %s307, 64
          %s309 = scalar_lea.hbm %s0, %s308
          %s311 = sshll.u32 %s303, 4
          %s312 = int_to_ptr.vmem [resolvable:$true] %s311
          %314 = dma.hbm_to_vmem [thread:$0]  %s309, 128, %s312, %s300
        $region44: #{tpu_custom_call.1} parent=39 // pred_fallthru
          _
      $region40: #{tpu_custom_call.1} parent=5 // pred_fallthru
        _
      %p315 = scmp.le.s32.totalorder 1, %s23
      %p316 = scmp.lt.s32.totalorder %s23, 3
      %p317 = pnand %p315, %p316
      %p318 = pneg %p317
      // Predicated region
      $region45: #{tpu_custom_call.1} parent=5 // pred_check
        _
      $region46: #{tpu_custom_call.1} parent=5 // pred_check_branch
        %320 = sbr.rel (%p317) target = $region48
      $region47: #{tpu_custom_call.1} parent=5 // pred_region
        %s321 = ssub.s32 %s23, 1
        %s322 = sand.u32 %s36, 1
        %s323 = scalar_lea.sflag [#allocation9], %s322
        %s324 = sand.u32 %s36, 1
        %s325 = smul.addr %s324, 8
        %s326 = scalar_lea.vmem [#allocation8], %s325
        // Predicated region
        $region49: #{tpu_custom_call.1} parent=47 // pred_check
          %p327 = pneg %p49
        $region50: #{tpu_custom_call.1} parent=47 // pred_check_branch
          %329 = sbr.rel (%p327) target = $region52
        $region51: #{tpu_custom_call.1} parent=47 // pred_region
          %330 = dma.done %s323, 128
        $region52: #{tpu_custom_call.1} parent=47 // pred_fallthru
          _
        // Predicated region
        $region53: #{tpu_custom_call.1} parent=47 // pred_check
          %p331 = pneg %p70
        $region54: #{tpu_custom_call.1} parent=47 // pred_check_branch
          %333 = sbr.rel (%p331) target = $region56
        $region55: #{tpu_custom_call.1} parent=47 // pred_region
          %334 = dma.done [#allocation13], 3584
        $region56: #{tpu_custom_call.1} parent=47 // pred_fallthru
          _
        // Predicated region
        $region57: #{tpu_custom_call.1} parent=47 // pred_check
          %p335 = pneg %p91
        $region58: #{tpu_custom_call.1} parent=47 // pred_check_branch
          %337 = sbr.rel (%p335) target = $region60
        $region59: #{tpu_custom_call.1} parent=47 // pred_region
          %338 = dma.done [#allocation13], 3584
        $region60: #{tpu_custom_call.1} parent=47 // pred_fallthru
          _
        // Predicated region
        $region61: #{tpu_custom_call.1} parent=47 // pred_check
          %p339 = pneg %p112
        $region62: #{tpu_custom_call.1} parent=47 // pred_check_branch
          %341 = sbr.rel (%p339) target = $region64
        $region63: #{tpu_custom_call.1} parent=47 // pred_region
          %342 = dma.done [#allocation16], 3584
        $region64: #{tpu_custom_call.1} parent=47 // pred_fallthru
          _
        // Predicated region
        $region65: #{tpu_custom_call.1} parent=47 // pred_check
          %p343 = pneg %p133
        $region66: #{tpu_custom_call.1} parent=47 // pred_check_branch
          %345 = sbr.rel (%p343) target = $region68
        $region67: #{tpu_custom_call.1} parent=47 // pred_region
          %346 = dma.done [#allocation16], 512
        $region68: #{tpu_custom_call.1} parent=47 // pred_fallthru
          _
        // Predicated region
        $region69: #{tpu_custom_call.1} parent=47 // pred_check
          %p347 = pneg %p154
        $region70: #{tpu_custom_call.1} parent=47 // pred_check_branch
          %349 = sbr.rel (%p347) target = $region72
        $region71: #{tpu_custom_call.1} parent=47 // pred_region
          %350 = dma.done [#allocation19], 512
        $region72: #{tpu_custom_call.1} parent=47 // pred_fallthru
          _
        // Predicated region
        $region73: #{tpu_custom_call.1} parent=47 // pred_check
          %p351 = pneg %p175
        $region74: #{tpu_custom_call.1} parent=47 // pred_check_branch
          %353 = sbr.rel (%p351) target = $region76
        $region75: #{tpu_custom_call.1} parent=47 // pred_region
          %354 = dma.done [#allocation11], 16
        $region76: #{tpu_custom_call.1} parent=47 // pred_fallthru
          _
        %355 = sfence
        %s356 = sand.u32 %s36, 1
        %s357 = scalar_lea.sflag [#allocation9], %s356
        %s358 = sand.u32 %s36, 1
        %s359 = smul.addr %s358, 8
        %s360 = scalar_lea.vmem [#allocation8], %s359
        %p361 = pneg %p49
        %p362 = pneg %p46
        %p363 = pneg %p70
        %p364 = pneg %p67
        %p365 = pneg %p91
        %p366 = pneg %p88
        %p367 = pneg %p112
        %p368 = pneg %p109
        %p369 = pneg %p133
        %p370 = pneg %p130
        %p371 = pneg %p154
        %p372 = pneg %p151
        %p373 = pneg %p175
        %p374 = pneg %p172
        %p375 = pneg %p201
        %p376 = pneg %p198
        %s377 = sand.u32 %s188, 1
        %s378 = scalar_lea.sflag [#allocation10], %s377
        %s379 = sand.u32 %s188, 1
        %s380 = smul.addr %s379, 8
        %s381 = scalar_lea.vmem [#allocation21], %s380
        %vm382 = vcmask 124928
        %383 = vst.msk [vmem:[#allocation2 + $0x5] sm:$0x7] %vm382, 0.0
        %384 = vst.msk [vmem:[#allocation2 + $0xc] sm:$0x7] %vm382, 0.0
        %385 = vst.msk [vmem:[#allocation3 + $0x5] sm:$0x7] %vm382, 0.0
        %386 = vst.msk [vmem:[#allocation3 + $0xc] sm:$0x7] %vm382, 0.0
        %387 = vst.msk [vmem:[#allocation4 + $0x5] sm:$0x7] %vm382, 0.0
        %388 = vst.msk [vmem:[#allocation4 + $0xc] sm:$0x7] %vm382, 0.0
        %389 = vst.msk [vmem:[#allocation5 + $0x5] sm:$0x7] %vm382, 0.0
        %390 = vst.msk [vmem:[#allocation5 + $0xc] sm:$0x7] %vm382, 0.0
        %391 = vst.msk [vmem:[#allocation6 + $0x5] sm:$0x7] %vm382, 0.0
        %392 = vst.msk [vmem:[#allocation6 + $0x18] sm:$0x7] %vm382, 0.0
        %393 = vst.msk [vmem:[#allocation7 + $0x5] sm:$0x7] %vm382, 0.0
        %394 = vst.msk [vmem:[#allocation7 + $0x18] sm:$0x7] %vm382, 0.0
        %v395 = vld [vmem:[#allocation17] sm:$0xff]
        %v396 = vld [vmem:[#allocation17 + $0x8] sm:$0xff]
        %v397 = vld [vmem:[#allocation17 + $0x10] sm:$0xff]
        %v398 = vld [vmem:[#allocation17 + $0x18] sm:$0xff]
        %v399 = vld [vmem:[#allocation18] sm:$0xff]
        %v400 = vld [vmem:[#allocation18 + $0x8] sm:$0xff]
        %v401 = vld [vmem:[#allocation18 + $0x10] sm:$0xff]
        %v402 = vld [vmem:[#allocation18 + $0x18] sm:$0xff]
        %v403 = vld [vmem:[%s326] sm:$0xff]
        %vm404 = vcmask 125952
        %v405 = vsel %vm404, %v403, -inf
        %406 = vmax.xlane.f32.xlu0 %v405
        %v407 = vpop.xlane.xlu0 %406
        %vm408 = vcmask 3072
        %409 = vst.msk [vmem:[#allocation4 + $0x8] sm:$0xf] %vm408, %v407
        %v410 = vsel %vm404, %v403, 0.0
        %411 = vadd.xlane.f32.xlu0 %v410
        %v412 = vpop.xlane.xlu0 %411
        %v413 = vmul.f32 %v412, 0.0625
        %414 = vst.msk [vmem:[#allocation5 + $0x8] sm:$0xf] %vm408, %v413
        %v415 = vrot.slane %v405, 4
        %v416 = vmax.f32 %v405, %v415
        %v417 = vrot.slane %v416, 2
        %v418 = vmax.f32 %v416, %v417
        %v419 = vrot.slane %v418, 1
        %v420 = vmax.f32 %v418, %v419
        %vm421 = vcmask 122880
        %422 = vst.msk [vmem:[#allocation6 + $0x8] sm:$0x1] %vm421, %v420
        %v423 = vrot.slane %v410, 4
        %v424 = vadd.f32 %v410, %v423
        %v425 = vrot.slane %v424, 2
        %v426 = vadd.f32 %v424, %v425
        %v427 = vrot.slane %v426, 1
        %v428 = vadd.f32 %v426, %v427
        %v429 = vmul.f32 %v428, 0.25
        %430 = vst.msk [vmem:[#allocation7 + $0x8] sm:$0x1] %vm421, %v429
        %432 = vrot.lane.b32.xlu0 %v403, 112
        %v433 = vpop.permute.xlu0 %432
        %v435 = vmax.f32 %v403, %v433
        %v436 = vadd.f32 %v403, %v433
        %vm437 = vcmask 257152
        %v438 = vsel %vm437, %v403, -inf
        %439 = vmax.xlane.f32.xlu0 %v438
        %v440 = vpop.xlane.xlu0 %439
        %vm441 = vcmask 11272
        %442 = vst.msk [vmem:[#allocation4 + $0x8] sm:$0xf] %vm441, %v440
        %v443 = vsel %vm404, %v433, 0.0
        %444 = vadd.xlane.f32.xlu0 %v443
        %v445 = vpop.xlane.xlu0 %444
        %v446 = vmul.f32 %v445, 0.0625
        %447 = vst.msk [vmem:[#allocation5 + $0x8] sm:$0xf] %vm441, %v446
        %v448 = vrot.slane %v438, 4
        %v449 = vmax.f32 %v438, %v448
        %v450 = vrot.slane %v449, 2
        %v451 = vmax.f32 %v449, %v450
        %v452 = vrot.slane %v451, 1
        %v453 = vmax.f32 %v451, %v452
        %455 = vrot.lane.b32.xlu0 %v453, 112
        %v456 = vpop.permute.xlu0 %455
        %458 = vst.msk [vmem:[#allocation6 + $0x9] sm:$0x1] %vm421, %v456
        %v459 = vsel %vm437, %v403, 0.0
        %v460 = vrot.slane %v459, 4
        %v461 = vadd.f32 %v459, %v460
        %v462 = vrot.slane %v461, 2
        %v463 = vadd.f32 %v461, %v462
        %v464 = vrot.slane %v463, 1
        %v465 = vadd.f32 %v463, %v464
        %v466 = vmul.f32 %v465, 0.25
        %468 = vrot.lane.b32.xlu0 %v466, 112
        %v469 = vpop.permute.xlu0 %468
        %471 = vst.msk [vmem:[#allocation7 + $0x9] sm:$0x1] %vm421, %v469
        %472 = vrot.lane.b32.xlu0 %v403, 96
        %v473 = vpop.permute.xlu0 %472
        %v475 = vmax.f32 %v435, %v473
        %v476 = vadd.f32 %v436, %v473
        %vm477 = vcmask 388352
        %v478 = vsel %vm477, %v403, -inf
        %479 = vmax.xlane.f32.xlu0 %v478
        %v480 = vpop.xlane.xlu0 %479
        %vm481 = vcmask 19472
        %482 = vst.msk [vmem:[#allocation4 + $0x8] sm:$0xf] %vm481, %v480
        %v483 = vsel %vm404, %v473, 0.0
        %484 = vadd.xlane.f32.xlu0 %v483
        %v485 = vpop.xlane.xlu0 %484
        %v486 = vmul.f32 %v485, 0.0625
        %487 = vst.msk [vmem:[#allocation5 + $0x8] sm:$0xf] %vm481, %v486
        %v488 = vrot.slane %v478, 4
        %v489 = vmax.f32 %v478, %v488
        %v490 = vrot.slane %v489, 2
        %v491 = vmax.f32 %v489, %v490
        %v492 = vrot.slane %v491, 1
        %v493 = vmax.f32 %v491, %v492
        %495 = vrot.lane.b32.xlu0 %v493, 96
        %v496 = vpop.permute.xlu0 %495
        %498 = vst.msk [vmem:[#allocation6 + $0xa] sm:$0x1] %vm421, %v496
        %v499 = vsel %vm477, %v403, 0.0
        %v500 = vrot.slane %v499, 4
        %v501 = vadd.f32 %v499, %v500
        %v502 = vrot.slane %v501, 2
        %v503 = vadd.f32 %v501, %v502
        %v504 = vrot.slane %v503, 1
        %v505 = vadd.f32 %v503, %v504
        %v506 = vmul.f32 %v505, 0.25
        %508 = vrot.lane.b32.xlu0 %v506, 96
        %v509 = vpop.permute.xlu0 %508
        %511 = vst.msk [vmem:[#allocation7 + $0xa] sm:$0x1] %vm421, %v509
        %512 = vrot.lane.b32.xlu0 %v403, 80
        %v513 = vpop.permute.xlu0 %512
        %v515 = vmax.f32 %v475, %v513
        %v516 = vadd.f32 %v476, %v513
        %vm517 = vcmask 519552
        %v518 = vsel %vm517, %v403, -inf
        %519 = vmax.xlane.f32.xlu0 %v518
        %v520 = vpop.xlane.xlu0 %519
        %vm521 = vcmask 27672
        %522 = vst.msk [vmem:[#allocation4 + $0x8] sm:$0xf] %vm521, %v520
        %v523 = vsel %vm404, %v513, 0.0
        %524 = vadd.xlane.f32.xlu0 %v523
        %v525 = vpop.xlane.xlu0 %524
        %v526 = vmul.f32 %v525, 0.0625
        %527 = vst.msk [vmem:[#allocation5 + $0x8] sm:$0xf] %vm521, %v526
        %v528 = vrot.slane %v518, 4
        %v529 = vmax.f32 %v518, %v528
        %v530 = vrot.slane %v529, 2
        %v531 = vmax.f32 %v529, %v530
        %v532 = vrot.slane %v531, 1
        %v533 = vmax.f32 %v531, %v532
        %535 = vrot.lane.b32.xlu0 %v533, 80
        %v536 = vpop.permute.xlu0 %535
        %538 = vst.msk [vmem:[#allocation6 + $0xb] sm:$0x1] %vm421, %v536
        %v539 = vsel %vm517, %v403, 0.0
        %v540 = vrot.slane %v539, 4
        %v541 = vadd.f32 %v539, %v540
        %v542 = vrot.slane %v541, 2
        %v543 = vadd.f32 %v541, %v542
        %v544 = vrot.slane %v543, 1
        %v545 = vadd.f32 %v543, %v544
        %v546 = vmul.f32 %v545, 0.25
        %548 = vrot.lane.b32.xlu0 %v546, 80
        %v549 = vpop.permute.xlu0 %548
        %551 = vst.msk [vmem:[#allocation7 + $0xb] sm:$0x1] %vm421, %v549
        %552 = vrot.lane.b32.xlu0 %v403, 64
        %v553 = vpop.permute.xlu0 %552
        %v555 = vmax.f32 %v515, %v553
        %v556 = vadd.f32 %v516, %v553
        %vm557 = vcmask 650752
        %v558 = vsel %vm557, %v403, -inf
        %559 = vmax.xlane.f32.xlu0 %v558
        %v560 = vpop.xlane.xlu0 %559
        %vm561 = vcmask 35872
        %562 = vst.msk [vmem:[#allocation4 + $0x8] sm:$0xf] %vm561, %v560
        %v563 = vsel %vm404, %v553, 0.0
        %564 = vadd.xlane.f32.xlu0 %v563
        %v565 = vpop.xlane.xlu0 %564
        %v566 = vmul.f32 %v565, 0.0625
        %567 = vst.msk [vmem:[#allocation5 + $0x8] sm:$0xf] %vm561, %v566
        %v568 = vrot.slane %v558, 4
        %v569 = vmax.f32 %v558, %v568
        %v570 = vrot.slane %v569, 2
        %v571 = vmax.f32 %v569, %v570
        %v572 = vrot.slane %v571, 1
        %v573 = vmax.f32 %v571, %v572
        %575 = vrot.lane.b32.xlu0 %v573, 64
        %v576 = vpop.permute.xlu0 %575
        %578 = vst.msk [vmem:[#allocation6 + $0xc] sm:$0x1] %vm421, %v576
        %v579 = vsel %vm557, %v403, 0.0
        %v580 = vrot.slane %v579, 4
        %v581 = vadd.f32 %v579, %v580
        %v582 = vrot.slane %v581, 2
        %v583 = vadd.f32 %v581, %v582
        %v584 = vrot.slane %v583, 1
        %v585 = vadd.f32 %v583, %v584
        %v586 = vmul.f32 %v585, 0.25
        %588 = vrot.lane.b32.xlu0 %v586, 64
        %v589 = vpop.permute.xlu0 %588
        %591 = vst.msk [vmem:[#allocation7 + $0xc] sm:$0x1] %vm421, %v589
        %592 = vrot.lane.b32.xlu0 %v403, 48
        %v593 = vpop.permute.xlu0 %592
        %v595 = vmax.f32 %v555, %v593
        %v596 = vadd.f32 %v556, %v593
        %vm597 = vcmask 781952
        %v598 = vsel %vm597, %v403, -inf
        %599 = vmax.xlane.f32.xlu0 %v598
        %v600 = vpop.xlane.xlu0 %599
        %vm601 = vcmask 44072
        %602 = vst.msk [vmem:[#allocation4 + $0x8] sm:$0xf] %vm601, %v600
        %v603 = vsel %vm404, %v593, 0.0
        %604 = vadd.xlane.f32.xlu0 %v603
        %v605 = vpop.xlane.xlu0 %604
        %v606 = vmul.f32 %v605, 0.0625
        %607 = vst.msk [vmem:[#allocation5 + $0x8] sm:$0xf] %vm601, %v606
        %v608 = vrot.slane %v598, 4
        %v609 = vmax.f32 %v598, %v608
        %v610 = vrot.slane %v609, 2
        %v611 = vmax.f32 %v609, %v610
        %v612 = vrot.slane %v611, 1
        %v613 = vmax.f32 %v611, %v612
        %615 = vrot.lane.b32.xlu0 %v613, 48
        %v616 = vpop.permute.xlu0 %615
        %618 = vst.msk [vmem:[#allocation6 + $0xd] sm:$0x1] %vm421, %v616
        %v619 = vsel %vm597, %v403, 0.0
        %v620 = vrot.slane %v619, 4
        %v621 = vadd.f32 %v619, %v620
        %v622 = vrot.slane %v621, 2
        %v623 = vadd.f32 %v621, %v622
        %v624 = vrot.slane %v623, 1
        %v625 = vadd.f32 %v623, %v624
        %v626 = vmul.f32 %v625, 0.25
        %628 = vrot.lane.b32.xlu0 %v626, 48
        %v629 = vpop.permute.xlu0 %628
        %631 = vst.msk [vmem:[#allocation7 + $0xd] sm:$0x1] %vm421, %v629
        %632 = vrot.lane.b32.xlu0 %v403, 32
        %v633 = vpop.permute.xlu0 %632
        %v635 = vmax.f32 %v595, %v633
        %v636 = vadd.f32 %v596, %v633
        %vm637 = vcmask 913152
        %v638 = vsel %vm637, %v403, -inf
        %639 = vmax.xlane.f32.xlu0 %v638
        %v640 = vpop.xlane.xlu0 %639
        %vm641 = vcmask 52272
        %642 = vst.msk [vmem:[#allocation4 + $0x8] sm:$0xf] %vm641, %v640
        %v643 = vsel %vm404, %v633, 0.0
        %644 = vadd.xlane.f32.xlu0 %v643
        %v645 = vpop.xlane.xlu0 %644
        %v646 = vmul.f32 %v645, 0.0625
        %647 = vst.msk [vmem:[#allocation5 + $0x8] sm:$0xf] %vm641, %v646
        %v648 = vrot.slane %v638, 4
        %v649 = vmax.f32 %v638, %v648
        %v650 = vrot.slane %v649, 2
        %v651 = vmax.f32 %v649, %v650
        %v652 = vrot.slane %v651, 1
        %v653 = vmax.f32 %v651, %v652
        %655 = vrot.lane.b32.xlu0 %v653, 32
        %v656 = vpop.permute.xlu0 %655
        %658 = vst.msk [vmem:[#allocation6 + $0xe] sm:$0x1] %vm421, %v656
        %v659 = vsel %vm637, %v403, 0.0
        %v660 = vrot.slane %v659, 4
        %v661 = vadd.f32 %v659, %v660
        %v662 = vrot.slane %v661, 2
        %v663 = vadd.f32 %v661, %v662
        %v664 = vrot.slane %v663, 1
        %v665 = vadd.f32 %v663, %v664
        %v666 = vmul.f32 %v665, 0.25
        %668 = vrot.lane.b32.xlu0 %v666, 32
        %v669 = vpop.permute.xlu0 %668
        %671 = vst.msk [vmem:[#allocation7 + $0xe] sm:$0x1] %vm421, %v669
        %672 = vrot.lane.b32.xlu0 %v403, 16
        %v673 = vpop.permute.xlu0 %672
        %v675 = vmax.f32 %v635, %v673
        %v676 = vadd.f32 %v636, %v673
        %vm677 = vcmask 1044352
        %v678 = vsel %vm677, %v403, -inf
        %679 = vmax.xlane.f32.xlu0 %v678
        %v680 = vpop.xlane.xlu0 %679
        %vm681 = vcmask 60472
        %682 = vst.msk [vmem:[#allocation4 + $0x8] sm:$0xf] %vm681, %v680
        %v683 = vsel %vm404, %v673, 0.0
        %684 = vadd.xlane.f32.xlu0 %v683
        %v685 = vpop.xlane.xlu0 %684
        %v686 = vmul.f32 %v685, 0.0625
        %687 = vst.msk [vmem:[#allocation5 + $0x8] sm:$0xf] %vm681, %v686
        %v688 = vrot.slane %v678, 4
        %v689 = vmax.f32 %v678, %v688
        %v690 = vrot.slane %v689, 2
        %v691 = vmax.f32 %v689, %v690
        %v692 = vrot.slane %v691, 1
        %v693 = vmax.f32 %v691, %v692
        %695 = vrot.lane.b32.xlu0 %v693, 16
        %v696 = vpop.permute.xlu0 %695
        %698 = vst.msk [vmem:[#allocation6 + $0xf] sm:$0x1] %vm421, %v696
        %v699 = vsel %vm677, %v403, 0.0
        %v700 = vrot.slane %v699, 4
        %v701 = vadd.f32 %v699, %v700
        %v702 = vrot.slane %v701, 2
        %v703 = vadd.f32 %v701, %v702
        %v704 = vrot.slane %v703, 1
        %v705 = vadd.f32 %v703, %v704
        %v706 = vmul.f32 %v705, 0.25
        %708 = vrot.lane.b32.xlu0 %v706, 16
        %v709 = vpop.permute.xlu0 %708
        %711 = vst.msk [vmem:[#allocation7 + $0xf] sm:$0x1] %vm421, %v709
        %v712 = vrot.slane %v403, 4
        %v714 = vmax.f32 %v675, %v712
        %v715 = vadd.f32 %v676, %v712
        %v716 = vcombine.high %v403, %v403
        %v718 = vsel %vm404, %v716, -inf
        %719 = vmax.xlane.f32.xlu0 %v718
        %v720 = vpop.xlane.xlu0 %719
        %vm721 = vcmask 68672
        %722 = vst.msk [vmem:[#allocation4 + $0x8] sm:$0xf] %vm721, %v720
        %v723 = vsel %vm404, %v716, 0.0
        %724 = vadd.xlane.f32.xlu0 %v723
        %v725 = vpop.xlane.xlu0 %724
        %v726 = vmul.f32 %v725, 0.0625
        %727 = vst.msk [vmem:[#allocation5 + $0x8] sm:$0xf] %vm721, %v726
        %v728 = vrot.slane %v718, 4
        %v729 = vmax.f32 %v718, %v728
        %v730 = vrot.slane %v729, 2
        %v731 = vmax.f32 %v729, %v730
        %v732 = vrot.slane %v731, 1
        %v733 = vmax.f32 %v731, %v732
        %734 = vst.msk [vmem:[#allocation6 + $0x10] sm:$0x1] %vm421, %v733
        %v735 = vrot.slane %v723, 4
        %v736 = vadd.f32 %v723, %v735
        %v737 = vrot.slane %v736, 2
        %v738 = vadd.f32 %v736, %v737
        %v739 = vrot.slane %v738, 1
        %v740 = vadd.f32 %v738, %v739
        %v741 = vmul.f32 %v740, 0.25
        %742 = vst.msk [vmem:[#allocation7 + $0x10] sm:$0x1] %vm421, %v741
        %v743 = vrot.slane %v433, 4
        %v745 = vmax.f32 %v714, %v743
        %v746 = vadd.f32 %v715, %v743
        %747 = vrot.lane.b32.xlu0 %v716, 112
        %v748 = vpop.permute.xlu0 %747
        %v750 = vsel %vm404, %v748, -inf
        %751 = vmax.xlane.f32.xlu0 %v750
        %v752 = vpop.xlane.xlu0 %751
        %vm753 = vcmask 76872
        %754 = vst.msk [vmem:[#allocation4 + $0x8] sm:$0xf] %vm753, %v752
        %v755 = vsel %vm404, %v748, 0.0
        %756 = vadd.xlane.f32.xlu0 %v755
        %v757 = vpop.xlane.xlu0 %756
        %v758 = vmul.f32 %v757, 0.0625
        %759 = vst.msk [vmem:[#allocation5 + $0x8] sm:$0xf] %vm753, %v758
        %v760 = vrot.slane %v750, 4
        %v761 = vmax.f32 %v750, %v760
        %v762 = vrot.slane %v761, 2
        %v763 = vmax.f32 %v761, %v762
        %v764 = vrot.slane %v763, 1
        %v765 = vmax.f32 %v763, %v764
        %766 = vst.msk [vmem:[#allocation6 + $0x11] sm:$0x1] %vm421, %v765
        %v767 = vrot.slane %v755, 4
        %v768 = vadd.f32 %v755, %v767
        %v769 = vrot.slane %v768, 2
        %v770 = vadd.f32 %v768, %v769
        %v771 = vrot.slane %v770, 1
        %v772 = vadd.f32 %v770, %v771
        %v773 = vmul.f32 %v772, 0.25
        %774 = vst.msk [vmem:[#allocation7 + $0x11] sm:$0x1] %vm421, %v773
        %v775 = vrot.slane %v473, 4
        %v777 = vmax.f32 %v745, %v775
        %v778 = vadd.f32 %v746, %v775
        %779 = vrot.lane.b32.xlu0 %v716, 96
        %v780 = vpop.permute.xlu0 %779
        %v782 = vsel %vm404, %v780, -inf
        %783 = vmax.xlane.f32.xlu0 %v782
        %v784 = vpop.xlane.xlu0 %783
        %vm785 = vcmask 85072
        %786 = vst.msk [vmem:[#allocation4 + $0x8] sm:$0xf] %vm785, %v784
        %v787 = vsel %vm404, %v780, 0.0
        %788 = vadd.xlane.f32.xlu0 %v787
        %v789 = vpop.xlane.xlu0 %788
        %v790 = vmul.f32 %v789, 0.0625
        %791 = vst.msk [vmem:[#allocation5 + $0x8] sm:$0xf] %vm785, %v790
        %v792 = vrot.slane %v782, 4
        %v793 = vmax.f32 %v782, %v792
        %v794 = vrot.slane %v793, 2
        %v795 = vmax.f32 %v793, %v794
        %v796 = vrot.slane %v795, 1
        %v797 = vmax.f32 %v795, %v796
        %798 = vst.msk [vmem:[#allocation6 + $0x12] sm:$0x1] %vm421, %v797
        %v799 = vrot.slane %v787, 4
        %v800 = vadd.f32 %v787, %v799
        %v801 = vrot.slane %v800, 2
        %v802 = vadd.f32 %v800, %v801
        %v803 = vrot.slane %v802, 1
        %v804 = vadd.f32 %v802, %v803
        %v805 = vmul.f32 %v804, 0.25
        %806 = vst.msk [vmem:[#allocation7 + $0x12] sm:$0x1] %vm421, %v805
        %v807 = vrot.slane %v513, 4
        %v809 = vmax.f32 %v777, %v807
        %v810 = vadd.f32 %v778, %v807
        %811 = vrot.lane.b32.xlu0 %v716, 80
        %v812 = vpop.permute.xlu0 %811
        %v814 = vsel %vm404, %v812, -inf
        %815 = vmax.xlane.f32.xlu0 %v814
        %v816 = vpop.xlane.xlu0 %815
        %vm817 = vcmask 93272
        %818 = vst.msk [vmem:[#allocation4 + $0x8] sm:$0xf] %vm817, %v816
        %v819 = vsel %vm404, %v812, 0.0
        %820 = vadd.xlane.f32.xlu0 %v819
        %v821 = vpop.xlane.xlu0 %820
        %v822 = vmul.f32 %v821, 0.0625
        %823 = vst.msk [vmem:[#allocation5 + $0x8] sm:$0xf] %vm817, %v822
        %v824 = vrot.slane %v814, 4
        %v825 = vmax.f32 %v814, %v824
        %v826 = vrot.slane %v825, 2
        %v827 = vmax.f32 %v825, %v826
        %v828 = vrot.slane %v827, 1
        %v829 = vmax.f32 %v827, %v828
        %830 = vst.msk [vmem:[#allocation6 + $0x13] sm:$0x1] %vm421, %v829
        %v831 = vrot.slane %v819, 4
        %v832 = vadd.f32 %v819, %v831
        %v833 = vrot.slane %v832, 2
        %v834 = vadd.f32 %v832, %v833
        %v835 = vrot.slane %v834, 1
        %v836 = vadd.f32 %v834, %v835
        %v837 = vmul.f32 %v836, 0.25
        %838 = vst.msk [vmem:[#allocation7 + $0x13] sm:$0x1] %vm421, %v837
        %v839 = vrot.slane %v553, 4
        %v841 = vmax.f32 %v809, %v839
        %v842 = vadd.f32 %v810, %v839
        %843 = vrot.lane.b32.xlu0 %v716, 64
        %v844 = vpop.permute.xlu0 %843
        %v846 = vsel %vm404, %v844, -inf
        %847 = vmax.xlane.f32.xlu0 %v846
        %v848 = vpop.xlane.xlu0 %847
        %vm849 = vcmask 101472
        %850 = vst.msk [vmem:[#allocation4 + $0x8] sm:$0xf] %vm849, %v848
        %v851 = vsel %vm404, %v844, 0.0
        %852 = vadd.xlane.f32.xlu0 %v851
        %v853 = vpop.xlane.xlu0 %852
        %v854 = vmul.f32 %v853, 0.0625
        %855 = vst.msk [vmem:[#allocation5 + $0x8] sm:$0xf] %vm849, %v854
        %v856 = vrot.slane %v846, 4
        %v857 = vmax.f32 %v846, %v856
        %v858 = vrot.slane %v857, 2
        %v859 = vmax.f32 %v857, %v858
        %v860 = vrot.slane %v859, 1
        %v861 = vmax.f32 %v859, %v860
        %862 = vst.msk [vmem:[#allocation6 + $0x14] sm:$0x1] %vm421, %v861
        %v863 = vrot.slane %v851, 4
        %v864 = vadd.f32 %v851, %v863
        %v865 = vrot.slane %v864, 2
        %v866 = vadd.f32 %v864, %v865
        %v867 = vrot.slane %v866, 1
        %v868 = vadd.f32 %v866, %v867
        %v869 = vmul.f32 %v868, 0.25
        %870 = vst.msk [vmem:[#allocation7 + $0x14] sm:$0x1] %vm421, %v869
        %v871 = vrot.slane %v593, 4
        %v873 = vmax.f32 %v841, %v871
        %v874 = vadd.f32 %v842, %v871
        %875 = vrot.lane.b32.xlu0 %v716, 48
        %v876 = vpop.permute.xlu0 %875
        %v878 = vsel %vm404, %v876, -inf
        %879 = vmax.xlane.f32.xlu0 %v878
        %v880 = vpop.xlane.xlu0 %879
        %vm881 = vcmask 109672
        %882 = vst.msk [vmem:[#allocation4 + $0x8] sm:$0xf] %vm881, %v880
        %v883 = vsel %vm404, %v876, 0.0
        %884 = vadd.xlane.f32.xlu0 %v883
        %v885 = vpop.xlane.xlu0 %884
        %v886 = vmul.f32 %v885, 0.0625
        %887 = vst.msk [vmem:[#allocation5 + $0x8] sm:$0xf] %vm881, %v886
        %v888 = vrot.slane %v878, 4
        %v889 = vmax.f32 %v878, %v888
        %v890 = vrot.slane %v889, 2
        %v891 = vmax.f32 %v889, %v890
        %v892 = vrot.slane %v891, 1
        %v893 = vmax.f32 %v891, %v892
        %894 = vst.msk [vmem:[#allocation6 + $0x15] sm:$0x1] %vm421, %v893
        %v895 = vrot.slane %v883, 4
        %v896 = vadd.f32 %v883, %v895
        %v897 = vrot.slane %v896, 2
        %v898 = vadd.f32 %v896, %v897
        %v899 = vrot.slane %v898, 1
        %v900 = vadd.f32 %v898, %v899
        %v901 = vmul.f32 %v900, 0.25
        %902 = vst.msk [vmem:[#allocation7 + $0x15] sm:$0x1] %vm421, %v901
        %v903 = vrot.slane %v633, 4
        %v905 = vmax.f32 %v873, %v903
        %v906 = vadd.f32 %v874, %v903
        %907 = vrot.lane.b32.xlu0 %v716, 32
        %v908 = vpop.permute.xlu0 %907
        %v910 = vsel %vm404, %v908, -inf
        %911 = vmax.xlane.f32.xlu0 %v910
        %v912 = vpop.xlane.xlu0 %911
        %vm913 = vcmask 117872
        %914 = vst.msk [vmem:[#allocation4 + $0x8] sm:$0xf] %vm913, %v912
        %v915 = vsel %vm404, %v908, 0.0
        %916 = vadd.xlane.f32.xlu0 %v915
        %v917 = vpop.xlane.xlu0 %916
        %v918 = vmul.f32 %v917, 0.0625
        %919 = vst.msk [vmem:[#allocation5 + $0x8] sm:$0xf] %vm913, %v918
        %v920 = vrot.slane %v910, 4
        %v921 = vmax.f32 %v910, %v920
        %v922 = vrot.slane %v921, 2
        %v923 = vmax.f32 %v921, %v922
        %v924 = vrot.slane %v923, 1
        %v925 = vmax.f32 %v923, %v924
        %926 = vst.msk [vmem:[#allocation6 + $0x16] sm:$0x1] %vm421, %v925
        %v927 = vrot.slane %v915, 4
        %v928 = vadd.f32 %v915, %v927
        %v929 = vrot.slane %v928, 2
        %v930 = vadd.f32 %v928, %v929
        %v931 = vrot.slane %v930, 1
        %v932 = vadd.f32 %v930, %v931
        %v933 = vmul.f32 %v932, 0.25
        %934 = vst.msk [vmem:[#allocation7 + $0x16] sm:$0x1] %vm421, %v933
        %v935 = vrot.slane %v673, 4
        %v937 = vmax.f32 %v905, %v935
        %v938 = vadd.f32 %v906, %v935
        %939 = vrot.lane.b32.xlu0 %v716, 16
        %v940 = vpop.permute.xlu0 %939
        %v942 = vsel %vm404, %v940, -inf
        %943 = vmax.xlane.f32.xlu0 %v942
        %v944 = vpop.xlane.xlu0 %943
        %vm945 = vcmask 126072
        %946 = vst.msk [vmem:[#allocation4 + $0x8] sm:$0xf] %vm945, %v944
        %v947 = vsel %vm404, %v940, 0.0
        %948 = vadd.xlane.f32.xlu0 %v947
        %v949 = vpop.xlane.xlu0 %948
        %v950 = vmul.f32 %v949, 0.0625
        %951 = vst.msk [vmem:[#allocation5 + $0x8] sm:$0xf] %vm945, %v950
        %v952 = vrot.slane %v942, 4
        %v953 = vmax.f32 %v942, %v952
        %v954 = vrot.slane %v953, 2
        %v955 = vmax.f32 %v953, %v954
        %v956 = vrot.slane %v955, 1
        %v957 = vmax.f32 %v955, %v956
        %958 = vst.msk [vmem:[#allocation6 + $0x17] sm:$0x1] %vm421, %v957
        %v959 = vrot.slane %v947, 4
        %v960 = vadd.f32 %v947, %v959
        %v961 = vrot.slane %v960, 2
        %v962 = vadd.f32 %v960, %v961
        %v963 = vrot.slane %v962, 1
        %v964 = vadd.f32 %v962, %v963
        %v965 = vmul.f32 %v964, 0.25
        %966 = vst.msk [vmem:[#allocation7 + $0x17] sm:$0x1] %vm421, %v965
        %967 = vst.msk [vmem:[#allocation2 + $0x8] sm:$0xf] %vm404, %v937
        %v968 = vmul.f32 %v938, 0.0625
        %969 = vst.msk [vmem:[#allocation3 + $0x8] sm:$0xf] %vm404, %v968
        %s970 = sld [smem:[#allocation20]]
        %v971 = vld [vmem:[#allocation2 + $0x5] sm:$0xf]
        %v972 = vld [vmem:[#allocation12] sm:$0xff]
        %v973 = vld [vmem:[#allocation12 + $0x8] sm:$0xff]
        %v974 = vld [vmem:[#allocation2 + $0x6] sm:$0xf]
        %s975 = scalar_lea.vmem [#allocation12], 16
        %v976 = vld [vmem:[%s975] sm:$0xff]
        %v977 = vld [vmem:[%s975 + $0x8] sm:$0xff]
        %vm978 = vcmask 130048
        %v980 = vsel %vm978, %v974, 0
        %982 = vmatprep.subr.mxu0 0.0
        %983 = vmatpush1.msra.mxu0 %v976
        %984 = vmatprep.subr.mxu0 0.0
        %985 = vmatpush1.msra.mxu0 %v977
        %986 = vmatprep.subr.mxu0 0.0
        %987 = vmatpush1.msra.mxu0 0.0
        %988 = vmatprep.subr.mxu0 0.0
        %989 = vmatpush1.msra.mxu0 0.0
        %990 = vmatprep.subr.mxu0 0.0
        %991 = vmatpush1.msra.mxu0 0.0
        %992 = vmatprep.subr.mxu0 0.0
        %993 = vmatpush1.msra.mxu0 0.0
        %994 = vmatprep.subr.mxu0 0.0
        %995 = vmatpush1.msra.mxu0 0.0
        %996 = vmatprep.subr.mxu0 0.0
        %997 = vmatpush1.msra.mxu0 0.0
        %998 = vmatprep.subr.mxu0 0.0
        %999 = vmatpush1.msra.mxu0 0.0
        %1000 = vmatprep.subr.mxu0 0.0
        %1001 = vmatpush1.msra.mxu0 0.0
        %1002 = vmatprep.subr.mxu0 0.0
        %1003 = vmatpush1.msra.mxu0 0.0
        %1004 = vmatprep.subr.mxu0 0.0
        %1005 = vmatpush1.msra.mxu0 0.0
        %1006 = vmatprep.subr.mxu0 0.0
        %1007 = vmatpush1.msra.mxu0 0.0
        %1008 = vmatprep.subr.mxu0 0.0
        %1009 = vmatpush1.msra.mxu0 0.0
        %1010 = vmatprep.subr.mxu0 0.0
        %1011 = vmatpush1.msra.mxu0 0.0
        %1012 = vmatprep.subr.mxu0 0.0
        %1013 = vmatpush1.msra.mxu0 0.0
        %1014 = vmatprep.subr.mxu0 0.0
        %1015 = vmatpush1.msra.mxu0 0.0
        %1016 = vmatprep.subr.mxu0 0.0
        %1017 = vmatpush1.msra.mxu0 0.0
        %1018 = vmatprep.subr.mxu0 0.0
        %1019 = vmatpush1.msra.mxu0 0.0
        %1020 = vmatprep.subr.mxu0 0.0
        %1021 = vmatpush1.msra.mxu0 0.0
        %1022 = vmatprep.subr.mxu0 0.0
        %1023 = vmatpush1.msra.mxu0 0.0
        %1024 = vmatprep.subr.mxu0 0.0
        %1025 = vmatpush1.msra.mxu0 0.0
        %1026 = vmatprep.subr.mxu0 0.0
        %1027 = vmatpush1.msra.mxu0 0.0
        %1028 = vmatprep.subr.mxu0 0.0
        %1029 = vmatpush1.msra.mxu0 0.0
        %1030 = vmatprep.subr.mxu0 0.0
        %1031 = vmatpush1.msra.mxu0 0.0
        %1032 = vmatprep.subr.mxu0 0.0
        %1033 = vmatpush1.msra.mxu0 0.0
        %1034 = vmatprep.subr.mxu0 0.0
        %1035 = vmatpush1.msra.mxu0 0.0
        %1036 = vmatprep.subr.mxu0 0.0
        %1037 = vmatpush1.msra.mxu0 0.0
        %1038 = vmatprep.subr.mxu0 0.0
        %1039 = vmatpush1.msra.mxu0 0.0
        %1040 = vmatprep.subr.mxu0 0.0
        %1041 = vmatpush1.msra.mxu0 0.0
        %1042 = vmatprep.subr.mxu0 0.0
        %1043 = vmatpush1.msra.mxu0 0.0
        %1044 = vmatprep.subr.mxu0 0.0
        %1045 = vmatpush1.msra.mxu0 0.0
        %1046 = vmatprep.mubr.f32.mxu0 0.0
        %1047 = vmatmul.mubr.f32.gmra.mrb[0].mxu0 %v980
        %v1048 = vpop.f32.mrb[0].mxu0
        %v1049 = vadd.f32 0.0, %v1048
        %v1050 = vpop.f32.mrb[0].mxu0
        %1051 = vdwg.mxu0
        %v1053 = vsel %vm978, %v971, 0
        %1055 = vmatprep.subr.mxu0 0.0
        %1056 = vmatpush1.msra.mxu0 %v972
        %1057 = vmatprep.subr.mxu0 0.0
        %1058 = vmatpush1.msra.mxu0 %v973
        %1059 = vmatprep.subr.mxu0 0.0
        %1060 = vmatpush1.msra.mxu0 0.0
        %1061 = vmatprep.subr.mxu0 0.0
        %1062 = vmatpush1.msra.mxu0 0.0
        %1063 = vmatprep.subr.mxu0 0.0
        %1064 = vmatpush1.msra.mxu0 0.0
        %1065 = vmatprep.subr.mxu0 0.0
        %1066 = vmatpush1.msra.mxu0 0.0
        %1067 = vmatprep.subr.mxu0 0.0
        %1068 = vmatpush1.msra.mxu0 0.0
        %1069 = vmatprep.subr.mxu0 0.0
        %1070 = vmatpush1.msra.mxu0 0.0
        %1071 = vmatprep.subr.mxu0 0.0
        %1072 = vmatpush1.msra.mxu0 0.0
        %1073 = vmatprep.subr.mxu0 0.0
        %1074 = vmatpush1.msra.mxu0 0.0
        %1075 = vmatprep.subr.mxu0 0.0
        %1076 = vmatpush1.msra.mxu0 0.0
        %1077 = vmatprep.subr.mxu0 0.0
        %1078 = vmatpush1.msra.mxu0 0.0
        %1079 = vmatprep.subr.mxu0 0.0
        %1080 = vmatpush1.msra.mxu0 0.0
        %1081 = vmatprep.subr.mxu0 0.0
        %1082 = vmatpush1.msra.mxu0 0.0
        %1083 = vmatprep.subr.mxu0 0.0
        %1084 = vmatpush1.msra.mxu0 0.0
        %1085 = vmatprep.subr.mxu0 0.0
        %1086 = vmatpush1.msra.mxu0 0.0
        %1087 = vmatprep.subr.mxu0 0.0
        %1088 = vmatpush1.msra.mxu0 0.0
        %1089 = vmatprep.subr.mxu0 0.0
        %1090 = vmatpush1.msra.mxu0 0.0
        %1091 = vmatprep.subr.mxu0 0.0
        %1092 = vmatpush1.msra.mxu0 0.0
        %1093 = vmatprep.subr.mxu0 0.0
        %1094 = vmatpush1.msra.mxu0 0.0
        %1095 = vmatprep.subr.mxu0 0.0
        %1096 = vmatpush1.msra.mxu0 0.0
        %1097 = vmatprep.subr.mxu0 0.0
        %1098 = vmatpush1.msra.mxu0 0.0
        %1099 = vmatprep.subr.mxu0 0.0
        %1100 = vmatpush1.msra.mxu0 0.0
        %1101 = vmatprep.subr.mxu0 0.0
        %1102 = vmatpush1.msra.mxu0 0.0
        %1103 = vmatprep.subr.mxu0 0.0
        %1104 = vmatpush1.msra.mxu0 0.0
        %1105 = vmatprep.subr.mxu0 0.0
        %1106 = vmatpush1.msra.mxu0 0.0
        %1107 = vmatprep.subr.mxu0 0.0
        %1108 = vmatpush1.msra.mxu0 0.0
        %1109 = vmatprep.subr.mxu0 0.0
        %1110 = vmatpush1.msra.mxu0 0.0
        %1111 = vmatprep.subr.mxu0 0.0
        %1112 = vmatpush1.msra.mxu0 0.0
        %1113 = vmatprep.subr.mxu0 0.0
        %1114 = vmatpush1.msra.mxu0 0.0
        %1115 = vmatprep.subr.mxu0 0.0
        %1116 = vmatpush1.msra.mxu0 0.0
        %1117 = vmatprep.subr.mxu0 0.0
        %1118 = vmatpush1.msra.mxu0 0.0
        %1119 = vmatprep.mubr.f32.mxu0 0.0
        %1120 = vmatmul.mubr.f32.gmra.mrb[0].mxu0 %v1053
        %v1121 = vpop.f32.mrb[0].mxu0
        %v1122 = vadd.f32 %v1049, %v1121
        %v1123 = vpop.f32.mrb[0].mxu0
        %1124 = vdwg.mxu0
        %v1125 = vld [vmem:[#allocation2 + $0x7] sm:$0xf]
        %s1126 = scalar_lea.vmem [#allocation12], 32
        %v1127 = vld [vmem:[%s1126] sm:$0xff]
        %v1128 = vld [vmem:[%s1126 + $0x8] sm:$0xff]
        %v1130 = vsel %vm978, %v1125, 0
        %1132 = vmatprep.subr.mxu0 0.0
        %1133 = vmatpush1.msra.mxu0 %v1127
        %1134 = vmatprep.subr.mxu0 0.0
        %1135 = vmatpush1.msra.mxu0 %v1128
        %1136 = vmatprep.subr.mxu0 0.0
        %1137 = vmatpush1.msra.mxu0 0.0
        %1138 = vmatprep.subr.mxu0 0.0
        %1139 = vmatpush1.msra.mxu0 0.0
        %1140 = vmatprep.subr.mxu0 0.0
        %1141 = vmatpush1.msra.mxu0 0.0
        %1142 = vmatprep.subr.mxu0 0.0
        %1143 = vmatpush1.msra.mxu0 0.0
        %1144 = vmatprep.subr.mxu0 0.0
        %1145 = vmatpush1.msra.mxu0 0.0
        %1146 = vmatprep.subr.mxu0 0.0
        %1147 = vmatpush1.msra.mxu0 0.0
        %1148 = vmatprep.subr.mxu0 0.0
        %1149 = vmatpush1.msra.mxu0 0.0
        %1150 = vmatprep.subr.mxu0 0.0
        %1151 = vmatpush1.msra.mxu0 0.0
        %1152 = vmatprep.subr.mxu0 0.0
        %1153 = vmatpush1.msra.mxu0 0.0
        %1154 = vmatprep.subr.mxu0 0.0
        %1155 = vmatpush1.msra.mxu0 0.0
        %1156 = vmatprep.subr.mxu0 0.0
        %1157 = vmatpush1.msra.mxu0 0.0
        %1158 = vmatprep.subr.mxu0 0.0
        %1159 = vmatpush1.msra.mxu0 0.0
        %1160 = vmatprep.subr.mxu0 0.0
        %1161 = vmatpush1.msra.mxu0 0.0
        %1162 = vmatprep.subr.mxu0 0.0
        %1163 = vmatpush1.msra.mxu0 0.0
        %1164 = vmatprep.subr.mxu0 0.0
        %1165 = vmatpush1.msra.mxu0 0.0
        %1166 = vmatprep.subr.mxu0 0.0
        %1167 = vmatpush1.msra.mxu0 0.0
        %1168 = vmatprep.subr.mxu0 0.0
        %1169 = vmatpush1.msra.mxu0 0.0
        %1170 = vmatprep.subr.mxu0 0.0
        %1171 = vmatpush1.msra.mxu0 0.0
        %1172 = vmatprep.subr.mxu0 0.0
        %1173 = vmatpush1.msra.mxu0 0.0
        %1174 = vmatprep.subr.mxu0 0.0
        %1175 = vmatpush1.msra.mxu0 0.0
        %1176 = vmatprep.subr.mxu0 0.0
        %1177 = vmatpush1.msra.mxu0 0.0
        %1178 = vmatprep.subr.mxu0 0.0
        %1179 = vmatpush1.msra.mxu0 0.0
        %1180 = vmatprep.subr.mxu0 0.0
        %1181 = vmatpush1.msra.mxu0 0.0
        %1182 = vmatprep.subr.mxu0 0.0
        %1183 = vmatpush1.msra.mxu0 0.0
        %1184 = vmatprep.subr.mxu0 0.0
        %1185 = vmatpush1.msra.mxu0 0.0
        %1186 = vmatprep.subr.mxu0 0.0
        %1187 = vmatpush1.msra.mxu0 0.0
        %1188 = vmatprep.subr.mxu0 0.0
        %1189 = vmatpush1.msra.mxu0 0.0
        %1190 = vmatprep.subr.mxu0 0.0
        %1191 = vmatpush1.msra.mxu0 0.0
        %1192 = vmatprep.subr.mxu0 0.0
        %1193 = vmatpush1.msra.mxu0 0.0
        %1194 = vmatprep.subr.mxu0 0.0
        %1195 = vmatpush1.msra.mxu0 0.0
        %1196 = vmatprep.mubr.f32.mxu0 0.0
        %1197 = vmatmul.mubr.f32.gmra.mrb[0].mxu0 %v1130
        %v1198 = vpop.f32.mrb[0].mxu0
        %v1199 = vadd.f32 0.0, %v1198
        %v1200 = vpop.f32.mrb[0].mxu0
        %1201 = vdwg.mxu0
        %v1202 = vadd.f32 %v1122, %v1199
        %v1203 = vld [vmem:[#allocation2 + $0x8] sm:$0xf]
        %s1204 = scalar_lea.vmem [#allocation12], 48
        %v1205 = vld [vmem:[%s1204] sm:$0xff]
        %v1206 = vld [vmem:[%s1204 + $0x8] sm:$0xff]
        %v1208 = vsel %vm978, %v1203, 0
        %1210 = vmatprep.subr.mxu0 0.0
        %1211 = vmatpush1.msra.mxu0 %v1205
        %1212 = vmatprep.subr.mxu0 0.0
        %1213 = vmatpush1.msra.mxu0 %v1206
        %1214 = vmatprep.subr.mxu0 0.0
        %1215 = vmatpush1.msra.mxu0 0.0
        %1216 = vmatprep.subr.mxu0 0.0
        %1217 = vmatpush1.msra.mxu0 0.0
        %1218 = vmatprep.subr.mxu0 0.0
        %1219 = vmatpush1.msra.mxu0 0.0
        %1220 = vmatprep.subr.mxu0 0.0
        %1221 = vmatpush1.msra.mxu0 0.0
        %1222 = vmatprep.subr.mxu0 0.0
        %1223 = vmatpush1.msra.mxu0 0.0
        %1224 = vmatprep.subr.mxu0 0.0
        %1225 = vmatpush1.msra.mxu0 0.0
        %1226 = vmatprep.subr.mxu0 0.0
        %1227 = vmatpush1.msra.mxu0 0.0
        %1228 = vmatprep.subr.mxu0 0.0
        %1229 = vmatpush1.msra.mxu0 0.0
        %1230 = vmatprep.subr.mxu0 0.0
        %1231 = vmatpush1.msra.mxu0 0.0
        %1232 = vmatprep.subr.mxu0 0.0
        %1233 = vmatpush1.msra.mxu0 0.0
        %1234 = vmatprep.subr.mxu0 0.0
        %1235 = vmatpush1.msra.mxu0 0.0
        %1236 = vmatprep.subr.mxu0 0.0
        %1237 = vmatpush1.msra.mxu0 0.0
        %1238 = vmatprep.subr.mxu0 0.0
        %1239 = vmatpush1.msra.mxu0 0.0
        %1240 = vmatprep.subr.mxu0 0.0
        %1241 = vmatpush1.msra.mxu0 0.0
        %1242 = vmatprep.subr.mxu0 0.0
        %1243 = vmatpush1.msra.mxu0 0.0
        %1244 = vmatprep.subr.mxu0 0.0
        %1245 = vmatpush1.msra.mxu0 0.0
        %1246 = vmatprep.subr.mxu0 0.0
        %1247 = vmatpush1.msra.mxu0 0.0
        %1248 = vmatprep.subr.mxu0 0.0
        %1249 = vmatpush1.msra.mxu0 0.0
        %1250 = vmatprep.subr.mxu0 0.0
        %1251 = vmatpush1.msra.mxu0 0.0
        %1252 = vmatprep.subr.mxu0 0.0
        %1253 = vmatpush1.msra.mxu0 0.0
        %1254 = vmatprep.subr.mxu0 0.0
        %1255 = vmatpush1.msra.mxu0 0.0
        %1256 = vmatprep.subr.mxu0 0.0
        %1257 = vmatpush1.msra.mxu0 0.0
        %1258 = vmatprep.subr.mxu0 0.0
        %1259 = vmatpush1.msra.mxu0 0.0
        %1260 = vmatprep.subr.mxu0 0.0
        %1261 = vmatpush1.msra.mxu0 0.0
        %1262 = vmatprep.subr.mxu0 0.0
        %1263 = vmatpush1.msra.mxu0 0.0
        %1264 = vmatprep.subr.mxu0 0.0
        %1265 = vmatpush1.msra.mxu0 0.0
        %1266 = vmatprep.subr.mxu0 0.0
        %1267 = vmatpush1.msra.mxu0 0.0
        %1268 = vmatprep.subr.mxu0 0.0
        %1269 = vmatpush1.msra.mxu0 0.0
        %1270 = vmatprep.subr.mxu0 0.0
        %1271 = vmatpush1.msra.mxu0 0.0
        %1272 = vmatprep.subr.mxu0 0.0
        %1273 = vmatpush1.msra.mxu0 0.0
        %1274 = vmatprep.mubr.f32.mxu0 0.0
        %1275 = vmatmul.mubr.f32.gmra.mrb[0].mxu0 %v1208
        %v1276 = vpop.f32.mrb[0].mxu0
        %v1277 = vadd.f32 0.0, %v1276
        %v1278 = vpop.f32.mrb[0].mxu0
        %1279 = vdwg.mxu0
        %v1280 = vadd.f32 %v1202, %v1277
        %v1281 = vld [vmem:[#allocation2 + $0x9] sm:$0xf]
        %s1282 = scalar_lea.vmem [#allocation12], 64
        %v1283 = vld [vmem:[%s1282] sm:$0xff]
        %v1284 = vld [vmem:[%s1282 + $0x8] sm:$0xff]
        %v1286 = vsel %vm978, %v1281, 0
        %1288 = vmatprep.subr.mxu0 0.0
        %1289 = vmatpush1.msra.mxu0 %v1283
        %1290 = vmatprep.subr.mxu0 0.0
        %1291 = vmatpush1.msra.mxu0 %v1284
        %1292 = vmatprep.subr.mxu0 0.0
        %1293 = vmatpush1.msra.mxu0 0.0
        %1294 = vmatprep.subr.mxu0 0.0
        %1295 = vmatpush1.msra.mxu0 0.0
        %1296 = vmatprep.subr.mxu0 0.0
        %1297 = vmatpush1.msra.mxu0 0.0
        %1298 = vmatprep.subr.mxu0 0.0
        %1299 = vmatpush1.msra.mxu0 0.0
        %1300 = vmatprep.subr.mxu0 0.0
        %1301 = vmatpush1.msra.mxu0 0.0
        %1302 = vmatprep.subr.mxu0 0.0
        %1303 = vmatpush1.msra.mxu0 0.0
        %1304 = vmatprep.subr.mxu0 0.0
        %1305 = vmatpush1.msra.mxu0 0.0
        %1306 = vmatprep.subr.mxu0 0.0
        %1307 = vmatpush1.msra.mxu0 0.0
        %1308 = vmatprep.subr.mxu0 0.0
        %1309 = vmatpush1.msra.mxu0 0.0
        %1310 = vmatprep.subr.mxu0 0.0
        %1311 = vmatpush1.msra.mxu0 0.0
        %1312 = vmatprep.subr.mxu0 0.0
        %1313 = vmatpush1.msra.mxu0 0.0
        %1314 = vmatprep.subr.mxu0 0.0
        %1315 = vmatpush1.msra.mxu0 0.0
        %1316 = vmatprep.subr.mxu0 0.0
        %1317 = vmatpush1.msra.mxu0 0.0
        %1318 = vmatprep.subr.mxu0 0.0
        %1319 = vmatpush1.msra.mxu0 0.0
        %1320 = vmatprep.subr.mxu0 0.0
        %1321 = vmatpush1.msra.mxu0 0.0
        %1322 = vmatprep.subr.mxu0 0.0
        %1323 = vmatpush1.msra.mxu0 0.0
        %1324 = vmatprep.subr.mxu0 0.0
        %1325 = vmatpush1.msra.mxu0 0.0
        %1326 = vmatprep.subr.mxu0 0.0
        %1327 = vmatpush1.msra.mxu0 0.0
        %1328 = vmatprep.subr.mxu0 0.0
        %1329 = vmatpush1.msra.mxu0 0.0
        %1330 = vmatprep.subr.mxu0 0.0
        %1331 = vmatpush1.msra.mxu0 0.0
        %1332 = vmatprep.subr.mxu0 0.0
        %1333 = vmatpush1.msra.mxu0 0.0
        %1334 = vmatprep.subr.mxu0 0.0
        %1335 = vmatpush1.msra.mxu0 0.0
        %1336 = vmatprep.subr.mxu0 0.0
        %1337 = vmatpush1.msra.mxu0 0.0
        %1338 = vmatprep.subr.mxu0 0.0
        %1339 = vmatpush1.msra.mxu0 0.0
        %1340 = vmatprep.subr.mxu0 0.0
        %1341 = vmatpush1.msra.mxu0 0.0
        %1342 = vmatprep.subr.mxu0 0.0
        %1343 = vmatpush1.msra.mxu0 0.0
        %1344 = vmatprep.subr.mxu0 0.0
        %1345 = vmatpush1.msra.mxu0 0.0
        %1346 = vmatprep.subr.mxu0 0.0
        %1347 = vmatpush1.msra.mxu0 0.0
        %1348 = vmatprep.subr.mxu0 0.0
        %1349 = vmatpush1.msra.mxu0 0.0
        %1350 = vmatprep.subr.mxu0 0.0
        %1351 = vmatpush1.msra.mxu0 0.0
        %1352 = vmatprep.mubr.f32.mxu0 0.0
        %1353 = vmatmul.mubr.f32.gmra.mrb[0].mxu0 %v1286
        %v1354 = vpop.f32.mrb[0].mxu0
        %v1355 = vadd.f32 0.0, %v1354
        %v1356 = vpop.f32.mrb[0].mxu0
        %1357 = vdwg.mxu0
        %v1358 = vadd.f32 %v1280, %v1355
        %v1359 = vld [vmem:[#allocation2 + $0xa] sm:$0xf]
        %s1360 = scalar_lea.vmem [#allocation12], 80
        %v1361 = vld [vmem:[%s1360] sm:$0xff]
        %v1362 = vld [vmem:[%s1360 + $0x8] sm:$0xff]
        %v1364 = vsel %vm978, %v1359, 0
        %1366 = vmatprep.subr.mxu0 0.0
        %1367 = vmatpush1.msra.mxu0 %v1361
        %1368 = vmatprep.subr.mxu0 0.0
        %1369 = vmatpush1.msra.mxu0 %v1362
        %1370 = vmatprep.subr.mxu0 0.0
        %1371 = vmatpush1.msra.mxu0 0.0
        %1372 = vmatprep.subr.mxu0 0.0
        %1373 = vmatpush1.msra.mxu0 0.0
        %1374 = vmatprep.subr.mxu0 0.0
        %1375 = vmatpush1.msra.mxu0 0.0
        %1376 = vmatprep.subr.mxu0 0.0
        %1377 = vmatpush1.msra.mxu0 0.0
        %1378 = vmatprep.subr.mxu0 0.0
        %1379 = vmatpush1.msra.mxu0 0.0
        %1380 = vmatprep.subr.mxu0 0.0
        %1381 = vmatpush1.msra.mxu0 0.0
        %1382 = vmatprep.subr.mxu0 0.0
        %1383 = vmatpush1.msra.mxu0 0.0
        %1384 = vmatprep.subr.mxu0 0.0
        %1385 = vmatpush1.msra.mxu0 0.0
        %1386 = vmatprep.subr.mxu0 0.0
        %1387 = vmatpush1.msra.mxu0 0.0
        %1388 = vmatprep.subr.mxu0 0.0
        %1389 = vmatpush1.msra.mxu0 0.0
        %1390 = vmatprep.subr.mxu0 0.0
        %1391 = vmatpush1.msra.mxu0 0.0
        %1392 = vmatprep.subr.mxu0 0.0
        %1393 = vmatpush1.msra.mxu0 0.0
        %1394 = vmatprep.subr.mxu0 0.0
        %1395 = vmatpush1.msra.mxu0 0.0
        %1396 = vmatprep.subr.mxu0 0.0
        %1397 = vmatpush1.msra.mxu0 0.0
        %1398 = vmatprep.subr.mxu0 0.0
        %1399 = vmatpush1.msra.mxu0 0.0
        %1400 = vmatprep.subr.mxu0 0.0
        %1401 = vmatpush1.msra.mxu0 0.0
        %1402 = vmatprep.subr.mxu0 0.0
        %1403 = vmatpush1.msra.mxu0 0.0
        %1404 = vmatprep.subr.mxu0 0.0
        %1405 = vmatpush1.msra.mxu0 0.0
        %1406 = vmatprep.subr.mxu0 0.0
        %1407 = vmatpush1.msra.mxu0 0.0
        %1408 = vmatprep.subr.mxu0 0.0
        %1409 = vmatpush1.msra.mxu0 0.0
        %1410 = vmatprep.subr.mxu0 0.0
        %1411 = vmatpush1.msra.mxu0 0.0
        %1412 = vmatprep.subr.mxu0 0.0
        %1413 = vmatpush1.msra.mxu0 0.0
        %1414 = vmatprep.subr.mxu0 0.0
        %1415 = vmatpush1.msra.mxu0 0.0
        %1416 = vmatprep.subr.mxu0 0.0
        %1417 = vmatpush1.msra.mxu0 0.0
        %1418 = vmatprep.subr.mxu0 0.0
        %1419 = vmatpush1.msra.mxu0 0.0
        %1420 = vmatprep.subr.mxu0 0.0
        %1421 = vmatpush1.msra.mxu0 0.0
        %1422 = vmatprep.subr.mxu0 0.0
        %1423 = vmatpush1.msra.mxu0 0.0
        %1424 = vmatprep.subr.mxu0 0.0
        %1425 = vmatpush1.msra.mxu0 0.0
        %1426 = vmatprep.subr.mxu0 0.0
        %1427 = vmatpush1.msra.mxu0 0.0
        %1428 = vmatprep.subr.mxu0 0.0
        %1429 = vmatpush1.msra.mxu0 0.0
        %1430 = vmatprep.mubr.f32.mxu0 0.0
        %1431 = vmatmul.mubr.f32.gmra.mrb[0].mxu0 %v1364
        %v1432 = vpop.f32.mrb[0].mxu0
        %v1433 = vadd.f32 0.0, %v1432
        %v1434 = vpop.f32.mrb[0].mxu0
        %1435 = vdwg.mxu0
        %v1436 = vadd.f32 %v1358, %v1433
        %v1437 = vld [vmem:[#allocation2 + $0xb] sm:$0xf]
        %s1438 = scalar_lea.vmem [#allocation12], 96
        %v1439 = vld [vmem:[%s1438] sm:$0xff]
        %v1440 = vld [vmem:[%s1438 + $0x8] sm:$0xff]
        %v1442 = vsel %vm978, %v1437, 0
        %1444 = vmatprep.subr.mxu0 0.0
        %1445 = vmatpush1.msra.mxu0 %v1439
        %1446 = vmatprep.subr.mxu0 0.0
        %1447 = vmatpush1.msra.mxu0 %v1440
        %1448 = vmatprep.subr.mxu0 0.0
        %1449 = vmatpush1.msra.mxu0 0.0
        %1450 = vmatprep.subr.mxu0 0.0
        %1451 = vmatpush1.msra.mxu0 0.0
        %1452 = vmatprep.subr.mxu0 0.0
        %1453 = vmatpush1.msra.mxu0 0.0
        %1454 = vmatprep.subr.mxu0 0.0
        %1455 = vmatpush1.msra.mxu0 0.0
        %1456 = vmatprep.subr.mxu0 0.0
        %1457 = vmatpush1.msra.mxu0 0.0
        %1458 = vmatprep.subr.mxu0 0.0
        %1459 = vmatpush1.msra.mxu0 0.0
        %1460 = vmatprep.subr.mxu0 0.0
        %1461 = vmatpush1.msra.mxu0 0.0
        %1462 = vmatprep.subr.mxu0 0.0
        %1463 = vmatpush1.msra.mxu0 0.0
        %1464 = vmatprep.subr.mxu0 0.0
        %1465 = vmatpush1.msra.mxu0 0.0
        %1466 = vmatprep.subr.mxu0 0.0
        %1467 = vmatpush1.msra.mxu0 0.0
        %1468 = vmatprep.subr.mxu0 0.0
        %1469 = vmatpush1.msra.mxu0 0.0
        %1470 = vmatprep.subr.mxu0 0.0
        %1471 = vmatpush1.msra.mxu0 0.0
        %1472 = vmatprep.subr.mxu0 0.0
        %1473 = vmatpush1.msra.mxu0 0.0
        %1474 = vmatprep.subr.mxu0 0.0
        %1475 = vmatpush1.msra.mxu0 0.0
        %1476 = vmatprep.subr.mxu0 0.0
        %1477 = vmatpush1.msra.mxu0 0.0
        %1478 = vmatprep.subr.mxu0 0.0
        %1479 = vmatpush1.msra.mxu0 0.0
        %1480 = vmatprep.subr.mxu0 0.0
        %1481 = vmatpush1.msra.mxu0 0.0
        %1482 = vmatprep.subr.mxu0 0.0
        %1483 = vmatpush1.msra.mxu0 0.0
        %1484 = vmatprep.subr.mxu0 0.0
        %1485 = vmatpush1.msra.mxu0 0.0
        %1486 = vmatprep.subr.mxu0 0.0
        %1487 = vmatpush1.msra.mxu0 0.0
        %1488 = vmatprep.subr.mxu0 0.0
        %1489 = vmatpush1.msra.mxu0 0.0
        %1490 = vmatprep.subr.mxu0 0.0
        %1491 = vmatpush1.msra.mxu0 0.0
        %1492 = vmatprep.subr.mxu0 0.0
        %1493 = vmatpush1.msra.mxu0 0.0
        %1494 = vmatprep.subr.mxu0 0.0
        %1495 = vmatpush1.msra.mxu0 0.0
        %1496 = vmatprep.subr.mxu0 0.0
        %1497 = vmatpush1.msra.mxu0 0.0
        %1498 = vmatprep.subr.mxu0 0.0
        %1499 = vmatpush1.msra.mxu0 0.0
        %1500 = vmatprep.subr.mxu0 0.0
        %1501 = vmatpush1.msra.mxu0 0.0
        %1502 = vmatprep.subr.mxu0 0.0
        %1503 = vmatpush1.msra.mxu0 0.0
        %1504 = vmatprep.subr.mxu0 0.0
        %1505 = vmatpush1.msra.mxu0 0.0
        %1506 = vmatprep.subr.mxu0 0.0
        %1507 = vmatpush1.msra.mxu0 0.0
        %1508 = vmatprep.mubr.f32.mxu0 0.0
        %1509 = vmatmul.mubr.f32.gmra.mrb[0].mxu0 %v1442
        %v1510 = vpop.f32.mrb[0].mxu0
        %v1511 = vadd.f32 0.0, %v1510
        %v1512 = vpop.f32.mrb[0].mxu0
        %1513 = vdwg.mxu0
        %v1514 = vadd.f32 %v1436, %v1511
        %v1515 = vld [vmem:[#allocation3 + $0x5] sm:$0xf]
        %s1516 = scalar_lea.vmem [#allocation12], 112
        %v1517 = vld [vmem:[%s1516] sm:$0xff]
        %v1518 = vld [vmem:[%s1516 + $0x8] sm:$0xff]
        %v1520 = vsel %vm978, %v1515, 0
        %1522 = vmatprep.subr.mxu0 0.0
        %1523 = vmatpush1.msra.mxu0 %v1517
        %1524 = vmatprep.subr.mxu0 0.0
        %1525 = vmatpush1.msra.mxu0 %v1518
        %1526 = vmatprep.subr.mxu0 0.0
        %1527 = vmatpush1.msra.mxu0 0.0
        %1528 = vmatprep.subr.mxu0 0.0
        %1529 = vmatpush1.msra.mxu0 0.0
        %1530 = vmatprep.subr.mxu0 0.0
        %1531 = vmatpush1.msra.mxu0 0.0
        %1532 = vmatprep.subr.mxu0 0.0
        %1533 = vmatpush1.msra.mxu0 0.0
        %1534 = vmatprep.subr.mxu0 0.0
        %1535 = vmatpush1.msra.mxu0 0.0
        %1536 = vmatprep.subr.mxu0 0.0
        %1537 = vmatpush1.msra.mxu0 0.0
        %1538 = vmatprep.subr.mxu0 0.0
        %1539 = vmatpush1.msra.mxu0 0.0
        %1540 = vmatprep.subr.mxu0 0.0
        %1541 = vmatpush1.msra.mxu0 0.0
        %1542 = vmatprep.subr.mxu0 0.0
        %1543 = vmatpush1.msra.mxu0 0.0
        %1544 = vmatprep.subr.mxu0 0.0
        %1545 = vmatpush1.msra.mxu0 0.0
        %1546 = vmatprep.subr.mxu0 0.0
        %1547 = vmatpush1.msra.mxu0 0.0
        %1548 = vmatprep.subr.mxu0 0.0
        %1549 = vmatpush1.msra.mxu0 0.0
        %1550 = vmatprep.subr.mxu0 0.0
        %1551 = vmatpush1.msra.mxu0 0.0
        %1552 = vmatprep.subr.mxu0 0.0
        %1553 = vmatpush1.msra.mxu0 0.0
        %1554 = vmatprep.subr.mxu0 0.0
        %1555 = vmatpush1.msra.mxu0 0.0
        %1556 = vmatprep.subr.mxu0 0.0
        %1557 = vmatpush1.msra.mxu0 0.0
        %1558 = vmatprep.subr.mxu0 0.0
        %1559 = vmatpush1.msra.mxu0 0.0
        %1560 = vmatprep.subr.mxu0 0.0
        %1561 = vmatpush1.msra.mxu0 0.0
        %1562 = vmatprep.subr.mxu0 0.0
        %1563 = vmatpush1.msra.mxu0 0.0
        %1564 = vmatprep.subr.mxu0 0.0
        %1565 = vmatpush1.msra.mxu0 0.0
        %1566 = vmatprep.subr.mxu0 0.0
        %1567 = vmatpush1.msra.mxu0 0.0
        %1568 = vmatprep.subr.mxu0 0.0
        %1569 = vmatpush1.msra.mxu0 0.0
        %1570 = vmatprep.subr.mxu0 0.0
        %1571 = vmatpush1.msra.mxu0 0.0
        %1572 = vmatprep.subr.mxu0 0.0
        %1573 = vmatpush1.msra.mxu0 0.0
        %1574 = vmatprep.subr.mxu0 0.0
        %1575 = vmatpush1.msra.mxu0 0.0
        %1576 = vmatprep.subr.mxu0 0.0
        %1577 = vmatpush1.msra.mxu0 0.0
        %1578 = vmatprep.subr.mxu0 0.0
        %1579 = vmatpush1.msra.mxu0 0.0
        %1580 = vmatprep.subr.mxu0 0.0
        %1581 = vmatpush1.msra.mxu0 0.0
        %1582 = vmatprep.subr.mxu0 0.0
        %1583 = vmatpush1.msra.mxu0 0.0
        %1584 = vmatprep.subr.mxu0 0.0
        %1585 = vmatpush1.msra.mxu0 0.0
        %1586 = vmatprep.mubr.f32.mxu0 0.0
        %1587 = vmatmul.mubr.f32.gmra.mrb[0].mxu0 %v1520
        %v1588 = vpop.f32.mrb[0].mxu0
        %v1589 = vadd.f32 0.0, %v1588
        %v1590 = vpop.f32.mrb[0].mxu0
        %1591 = vdwg.mxu0
        %v1592 = vadd.f32 %v1514, %v1589
        %v1593 = vld [vmem:[#allocation3 + $0x6] sm:$0xf]
        %s1594 = scalar_lea.vmem [#allocation12], 128
        %v1595 = vld [vmem:[%s1594] sm:$0xff]
        %v1596 = vld [vmem:[%s1594 + $0x8] sm:$0xff]
        %v1598 = vsel %vm978, %v1593, 0
        %1600 = vmatprep.subr.mxu0 0.0
        %1601 = vmatpush1.msra.mxu0 %v1595
        %1602 = vmatprep.subr.mxu0 0.0
        %1603 = vmatpush1.msra.mxu0 %v1596
        %1604 = vmatprep.subr.mxu0 0.0
        %1605 = vmatpush1.msra.mxu0 0.0
        %1606 = vmatprep.subr.mxu0 0.0
        %1607 = vmatpush1.msra.mxu0 0.0
        %1608 = vmatprep.subr.mxu0 0.0
        %1609 = vmatpush1.msra.mxu0 0.0
        %1610 = vmatprep.subr.mxu0 0.0
        %1611 = vmatpush1.msra.mxu0 0.0
        %1612 = vmatprep.subr.mxu0 0.0
        %1613 = vmatpush1.msra.mxu0 0.0
        %1614 = vmatprep.subr.mxu0 0.0
        %1615 = vmatpush1.msra.mxu0 0.0
        %1616 = vmatprep.subr.mxu0 0.0
        %1617 = vmatpush1.msra.mxu0 0.0
        %1618 = vmatprep.subr.mxu0 0.0
        %1619 = vmatpush1.msra.mxu0 0.0
        %1620 = vmatprep.subr.mxu0 0.0
        %1621 = vmatpush1.msra.mxu0 0.0
        %1622 = vmatprep.subr.mxu0 0.0
        %1623 = vmatpush1.msra.mxu0 0.0
        %1624 = vmatprep.subr.mxu0 0.0
        %1625 = vmatpush1.msra.mxu0 0.0
        %1626 = vmatprep.subr.mxu0 0.0
        %1627 = vmatpush1.msra.mxu0 0.0
        %1628 = vmatprep.subr.mxu0 0.0
        %1629 = vmatpush1.msra.mxu0 0.0
        %1630 = vmatprep.subr.mxu0 0.0
        %1631 = vmatpush1.msra.mxu0 0.0
        %1632 = vmatprep.subr.mxu0 0.0
        %1633 = vmatpush1.msra.mxu0 0.0
        %1634 = vmatprep.subr.mxu0 0.0
        %1635 = vmatpush1.msra.mxu0 0.0
        %1636 = vmatprep.subr.mxu0 0.0
        %1637 = vmatpush1.msra.mxu0 0.0
        %1638 = vmatprep.subr.mxu0 0.0
        %1639 = vmatpush1.msra.mxu0 0.0
        %1640 = vmatprep.subr.mxu0 0.0
        %1641 = vmatpush1.msra.mxu0 0.0
        %1642 = vmatprep.subr.mxu0 0.0
        %1643 = vmatpush1.msra.mxu0 0.0
        %1644 = vmatprep.subr.mxu0 0.0
        %1645 = vmatpush1.msra.mxu0 0.0
        %1646 = vmatprep.subr.mxu0 0.0
        %1647 = vmatpush1.msra.mxu0 0.0
        %1648 = vmatprep.subr.mxu0 0.0
        %1649 = vmatpush1.msra.mxu0 0.0
        %1650 = vmatprep.subr.mxu0 0.0
        %1651 = vmatpush1.msra.mxu0 0.0
        %1652 = vmatprep.subr.mxu0 0.0
        %1653 = vmatpush1.msra.mxu0 0.0
        %1654 = vmatprep.subr.mxu0 0.0
        %1655 = vmatpush1.msra.mxu0 0.0
        %1656 = vmatprep.subr.mxu0 0.0
        %1657 = vmatpush1.msra.mxu0 0.0
        %1658 = vmatprep.subr.mxu0 0.0
        %1659 = vmatpush1.msra.mxu0 0.0
        %1660 = vmatprep.subr.mxu0 0.0
        %1661 = vmatpush1.msra.mxu0 0.0
        %1662 = vmatprep.subr.mxu0 0.0
        %1663 = vmatpush1.msra.mxu0 0.0
        %1664 = vmatprep.mubr.f32.mxu0 0.0
        %1665 = vmatmul.mubr.f32.gmra.mrb[0].mxu0 %v1598
        %v1666 = vpop.f32.mrb[0].mxu0
        %v1667 = vadd.f32 0.0, %v1666
        %v1668 = vpop.f32.mrb[0].mxu0
        %1669 = vdwg.mxu0
        %v1670 = vadd.f32 %v1592, %v1667
        %v1671 = vld [vmem:[#allocation3 + $0x7] sm:$0xf]
        %s1672 = scalar_lea.vmem [#allocation12], 144
        %v1673 = vld [vmem:[%s1672] sm:$0xff]
        %v1674 = vld [vmem:[%s1672 + $0x8] sm:$0xff]
        %v1676 = vsel %vm978, %v1671, 0
        %1678 = vmatprep.subr.mxu0 0.0
        %1679 = vmatpush1.msra.mxu0 %v1673
        %1680 = vmatprep.subr.mxu0 0.0
        %1681 = vmatpush1.msra.mxu0 %v1674
        %1682 = vmatprep.subr.mxu0 0.0
        %1683 = vmatpush1.msra.mxu0 0.0
        %1684 = vmatprep.subr.mxu0 0.0
        %1685 = vmatpush1.msra.mxu0 0.0
        %1686 = vmatprep.subr.mxu0 0.0
        %1687 = vmatpush1.msra.mxu0 0.0
        %1688 = vmatprep.subr.mxu0 0.0
        %1689 = vmatpush1.msra.mxu0 0.0
        %1690 = vmatprep.subr.mxu0 0.0
        %1691 = vmatpush1.msra.mxu0 0.0
        %1692 = vmatprep.subr.mxu0 0.0
        %1693 = vmatpush1.msra.mxu0 0.0
        %1694 = vmatprep.subr.mxu0 0.0
        %1695 = vmatpush1.msra.mxu0 0.0
        %1696 = vmatprep.subr.mxu0 0.0
        %1697 = vmatpush1.msra.mxu0 0.0
        %1698 = vmatprep.subr.mxu0 0.0
        %1699 = vmatpush1.msra.mxu0 0.0
        %1700 = vmatprep.subr.mxu0 0.0
        %1701 = vmatpush1.msra.mxu0 0.0
        %1702 = vmatprep.subr.mxu0 0.0
        %1703 = vmatpush1.msra.mxu0 0.0
        %1704 = vmatprep.subr.mxu0 0.0
        %1705 = vmatpush1.msra.mxu0 0.0
        %1706 = vmatprep.subr.mxu0 0.0
        %1707 = vmatpush1.msra.mxu0 0.0
        %1708 = vmatprep.subr.mxu0 0.0
        %1709 = vmatpush1.msra.mxu0 0.0
        %1710 = vmatprep.subr.mxu0 0.0
        %1711 = vmatpush1.msra.mxu0 0.0
        %1712 = vmatprep.subr.mxu0 0.0
        %1713 = vmatpush1.msra.mxu0 0.0
        %1714 = vmatprep.subr.mxu0 0.0
        %1715 = vmatpush1.msra.mxu0 0.0
        %1716 = vmatprep.subr.mxu0 0.0
        %1717 = vmatpush1.msra.mxu0 0.0
        %1718 = vmatprep.subr.mxu0 0.0
        %1719 = vmatpush1.msra.mxu0 0.0
        %1720 = vmatprep.subr.mxu0 0.0
        %1721 = vmatpush1.msra.mxu0 0.0
        %1722 = vmatprep.subr.mxu0 0.0
        %1723 = vmatpush1.msra.mxu0 0.0
        %1724 = vmatprep.subr.mxu0 0.0
        %1725 = vmatpush1.msra.mxu0 0.0
        %1726 = vmatprep.subr.mxu0 0.0
        %1727 = vmatpush1.msra.mxu0 0.0
        %1728 = vmatprep.subr.mxu0 0.0
        %1729 = vmatpush1.msra.mxu0 0.0
        %1730 = vmatprep.subr.mxu0 0.0
        %1731 = vmatpush1.msra.mxu0 0.0
        %1732 = vmatprep.subr.mxu0 0.0
        %1733 = vmatpush1.msra.mxu0 0.0
        %1734 = vmatprep.subr.mxu0 0.0
        %1735 = vmatpush1.msra.mxu0 0.0
        %1736 = vmatprep.subr.mxu0 0.0
        %1737 = vmatpush1.msra.mxu0 0.0
        %1738 = vmatprep.subr.mxu0 0.0
        %1739 = vmatpush1.msra.mxu0 0.0
        %1740 = vmatprep.subr.mxu0 0.0
        %1741 = vmatpush1.msra.mxu0 0.0
        %1742 = vmatprep.mubr.f32.mxu0 0.0
        %1743 = vmatmul.mubr.f32.gmra.mrb[0].mxu0 %v1676
        %v1744 = vpop.f32.mrb[0].mxu0
        %v1745 = vadd.f32 0.0, %v1744
        %v1746 = vpop.f32.mrb[0].mxu0
        %1747 = vdwg.mxu0
        %v1748 = vadd.f32 %v1670, %v1745
        %v1749 = vld [vmem:[#allocation3 + $0x8] sm:$0xf]
        %s1750 = scalar_lea.vmem [#allocation12], 160
        %v1751 = vld [vmem:[%s1750] sm:$0xff]
        %v1752 = vld [vmem:[%s1750 + $0x8] sm:$0xff]
        %v1754 = vsel %vm978, %v1749, 0
        %1756 = vmatprep.subr.mxu0 0.0
        %1757 = vmatpush1.msra.mxu0 %v1751
        %1758 = vmatprep.subr.mxu0 0.0
        %1759 = vmatpush1.msra.mxu0 %v1752
        %1760 = vmatprep.subr.mxu0 0.0
        %1761 = vmatpush1.msra.mxu0 0.0
        %1762 = vmatprep.subr.mxu0 0.0
        %1763 = vmatpush1.msra.mxu0 0.0
        %1764 = vmatprep.subr.mxu0 0.0
        %1765 = vmatpush1.msra.mxu0 0.0
        %1766 = vmatprep.subr.mxu0 0.0
        %1767 = vmatpush1.msra.mxu0 0.0
        %1768 = vmatprep.subr.mxu0 0.0
        %1769 = vmatpush1.msra.mxu0 0.0
        %1770 = vmatprep.subr.mxu0 0.0
        %1771 = vmatpush1.msra.mxu0 0.0
        %1772 = vmatprep.subr.mxu0 0.0
        %1773 = vmatpush1.msra.mxu0 0.0
        %1774 = vmatprep.subr.mxu0 0.0
        %1775 = vmatpush1.msra.mxu0 0.0
        %1776 = vmatprep.subr.mxu0 0.0
        %1777 = vmatpush1.msra.mxu0 0.0
        %1778 = vmatprep.subr.mxu0 0.0
        %1779 = vmatpush1.msra.mxu0 0.0
        %1780 = vmatprep.subr.mxu0 0.0
        %1781 = vmatpush1.msra.mxu0 0.0
        %1782 = vmatprep.subr.mxu0 0.0
        %1783 = vmatpush1.msra.mxu0 0.0
        %1784 = vmatprep.subr.mxu0 0.0
        %1785 = vmatpush1.msra.mxu0 0.0
        %1786 = vmatprep.subr.mxu0 0.0
        %1787 = vmatpush1.msra.mxu0 0.0
        %1788 = vmatprep.subr.mxu0 0.0
        %1789 = vmatpush1.msra.mxu0 0.0
        %1790 = vmatprep.subr.mxu0 0.0
        %1791 = vmatpush1.msra.mxu0 0.0
        %1792 = vmatprep.subr.mxu0 0.0
        %1793 = vmatpush1.msra.mxu0 0.0
        %1794 = vmatprep.subr.mxu0 0.0
        %1795 = vmatpush1.msra.mxu0 0.0
        %1796 = vmatprep.subr.mxu0 0.0
        %1797 = vmatpush1.msra.mxu0 0.0
        %1798 = vmatprep.subr.mxu0 0.0
        %1799 = vmatpush1.msra.mxu0 0.0
        %1800 = vmatprep.subr.mxu0 0.0
        %1801 = vmatpush1.msra.mxu0 0.0
        %1802 = vmatprep.subr.mxu0 0.0
        %1803 = vmatpush1.msra.mxu0 0.0
        %1804 = vmatprep.subr.mxu0 0.0
        %1805 = vmatpush1.msra.mxu0 0.0
        %1806 = vmatprep.subr.mxu0 0.0
        %1807 = vmatpush1.msra.mxu0 0.0
        %1808 = vmatprep.subr.mxu0 0.0
        %1809 = vmatpush1.msra.mxu0 0.0
        %1810 = vmatprep.subr.mxu0 0.0
        %1811 = vmatpush1.msra.mxu0 0.0
        %1812 = vmatprep.subr.mxu0 0.0
        %1813 = vmatpush1.msra.mxu0 0.0
        %1814 = vmatprep.subr.mxu0 0.0
        %1815 = vmatpush1.msra.mxu0 0.0
        %1816 = vmatprep.subr.mxu0 0.0
        %1817 = vmatpush1.msra.mxu0 0.0
        %1818 = vmatprep.subr.mxu0 0.0
        %1819 = vmatpush1.msra.mxu0 0.0
        %1820 = vmatprep.mubr.f32.mxu0 0.0
        %1821 = vmatmul.mubr.f32.gmra.mrb[0].mxu0 %v1754
        %v1822 = vpop.f32.mrb[0].mxu0
        %v1823 = vadd.f32 0.0, %v1822
        %v1824 = vpop.f32.mrb[0].mxu0
        %1825 = vdwg.mxu0
        %v1826 = vadd.f32 %v1748, %v1823
        %v1827 = vld [vmem:[#allocation3 + $0x9] sm:$0xf]
        %s1828 = scalar_lea.vmem [#allocation12], 176
        %v1829 = vld [vmem:[%s1828] sm:$0xff]
        %v1830 = vld [vmem:[%s1828 + $0x8] sm:$0xff]
        %v1832 = vsel %vm978, %v1827, 0
        %1834 = vmatprep.subr.mxu0 0.0
        %1835 = vmatpush1.msra.mxu0 %v1829
        %1836 = vmatprep.subr.mxu0 0.0
        %1837 = vmatpush1.msra.mxu0 %v1830
        %1838 = vmatprep.subr.mxu0 0.0
        %1839 = vmatpush1.msra.mxu0 0.0
        %1840 = vmatprep.subr.mxu0 0.0
        %1841 = vmatpush1.msra.mxu0 0.0
        %1842 = vmatprep.subr.mxu0 0.0
        %1843 = vmatpush1.msra.mxu0 0.0
        %1844 = vmatprep.subr.mxu0 0.0
        %1845 = vmatpush1.msra.mxu0 0.0
        %1846 = vmatprep.subr.mxu0 0.0
        %1847 = vmatpush1.msra.mxu0 0.0
        %1848 = vmatprep.subr.mxu0 0.0
        %1849 = vmatpush1.msra.mxu0 0.0
        %1850 = vmatprep.subr.mxu0 0.0
        %1851 = vmatpush1.msra.mxu0 0.0
        %1852 = vmatprep.subr.mxu0 0.0
        %1853 = vmatpush1.msra.mxu0 0.0
        %1854 = vmatprep.subr.mxu0 0.0
        %1855 = vmatpush1.msra.mxu0 0.0
        %1856 = vmatprep.subr.mxu0 0.0
        %1857 = vmatpush1.msra.mxu0 0.0
        %1858 = vmatprep.subr.mxu0 0.0
        %1859 = vmatpush1.msra.mxu0 0.0
        %1860 = vmatprep.subr.mxu0 0.0
        %1861 = vmatpush1.msra.mxu0 0.0
        %1862 = vmatprep.subr.mxu0 0.0
        %1863 = vmatpush1.msra.mxu0 0.0
        %1864 = vmatprep.subr.mxu0 0.0
        %1865 = vmatpush1.msra.mxu0 0.0
        %1866 = vmatprep.subr.mxu0 0.0
        %1867 = vmatpush1.msra.mxu0 0.0
        %1868 = vmatprep.subr.mxu0 0.0
        %1869 = vmatpush1.msra.mxu0 0.0
        %1870 = vmatprep.subr.mxu0 0.0
        %1871 = vmatpush1.msra.mxu0 0.0
        %1872 = vmatprep.subr.mxu0 0.0
        %1873 = vmatpush1.msra.mxu0 0.0
        %1874 = vmatprep.subr.mxu0 0.0
        %1875 = vmatpush1.msra.mxu0 0.0
        %1876 = vmatprep.subr.mxu0 0.0
        %1877 = vmatpush1.msra.mxu0 0.0
        %1878 = vmatprep.subr.mxu0 0.0
        %1879 = vmatpush1.msra.mxu0 0.0
        %1880 = vmatprep.subr.mxu0 0.0
        %1881 = vmatpush1.msra.mxu0 0.0
        %1882 = vmatprep.subr.mxu0 0.0
        %1883 = vmatpush1.msra.mxu0 0.0
        %1884 = vmatprep.subr.mxu0 0.0
        %1885 = vmatpush1.msra.mxu0 0.0
        %1886 = vmatprep.subr.mxu0 0.0
        %1887 = vmatpush1.msra.mxu0 0.0
        %1888 = vmatprep.subr.mxu0 0.0
        %1889 = vmatpush1.msra.mxu0 0.0
        %1890 = vmatprep.subr.mxu0 0.0
        %1891 = vmatpush1.msra.mxu0 0.0
        %1892 = vmatprep.subr.mxu0 0.0
        %1893 = vmatpush1.msra.mxu0 0.0
        %1894 = vmatprep.subr.mxu0 0.0
        %1895 = vmatpush1.msra.mxu0 0.0
        %1896 = vmatprep.subr.mxu0 0.0
        %1897 = vmatpush1.msra.mxu0 0.0
        %1898 = vmatprep.mubr.f32.mxu0 0.0
        %1899 = vmatmul.mubr.f32.gmra.mrb[0].mxu0 %v1832
        %v1900 = vpop.f32.mrb[0].mxu0
        %v1901 = vadd.f32 0.0, %v1900
        %v1902 = vpop.f32.mrb[0].mxu0
        %1903 = vdwg.mxu0
        %v1904 = vadd.f32 %v1826, %v1901
        %v1905 = vld [vmem:[#allocation3 + $0xa] sm:$0xf]
        %s1906 = scalar_lea.vmem [#allocation12], 192
        %v1907 = vld [vmem:[%s1906] sm:$0xff]
        %v1908 = vld [vmem:[%s1906 + $0x8] sm:$0xff]
        %v1910 = vsel %vm978, %v1905, 0
        %1912 = vmatprep.subr.mxu0 0.0
        %1913 = vmatpush1.msra.mxu0 %v1907
        %1914 = vmatprep.subr.mxu0 0.0
        %1915 = vmatpush1.msra.mxu0 %v1908
        %1916 = vmatprep.subr.mxu0 0.0
        %1917 = vmatpush1.msra.mxu0 0.0
        %1918 = vmatprep.subr.mxu0 0.0
        %1919 = vmatpush1.msra.mxu0 0.0
        %1920 = vmatprep.subr.mxu0 0.0
        %1921 = vmatpush1.msra.mxu0 0.0
        %1922 = vmatprep.subr.mxu0 0.0
        %1923 = vmatpush1.msra.mxu0 0.0
        %1924 = vmatprep.subr.mxu0 0.0
        %1925 = vmatpush1.msra.mxu0 0.0
        %1926 = vmatprep.subr.mxu0 0.0
        %1927 = vmatpush1.msra.mxu0 0.0
        %1928 = vmatprep.subr.mxu0 0.0
        %1929 = vmatpush1.msra.mxu0 0.0
        %1930 = vmatprep.subr.mxu0 0.0
        %1931 = vmatpush1.msra.mxu0 0.0
        %1932 = vmatprep.subr.mxu0 0.0
        %1933 = vmatpush1.msra.mxu0 0.0
        %1934 = vmatprep.subr.mxu0 0.0
        %1935 = vmatpush1.msra.mxu0 0.0
        %1936 = vmatprep.subr.mxu0 0.0
        %1937 = vmatpush1.msra.mxu0 0.0
        %1938 = vmatprep.subr.mxu0 0.0
        %1939 = vmatpush1.msra.mxu0 0.0
        %1940 = vmatprep.subr.mxu0 0.0
        %1941 = vmatpush1.msra.mxu0 0.0
        %1942 = vmatprep.subr.mxu0 0.0
        %1943 = vmatpush1.msra.mxu0 0.0
        %1944 = vmatprep.subr.mxu0 0.0
        %1945 = vmatpush1.msra.mxu0 0.0
        %1946 = vmatprep.subr.mxu0 0.0
        %1947 = vmatpush1.msra.mxu0 0.0
        %1948 = vmatprep.subr.mxu0 0.0
        %1949 = vmatpush1.msra.mxu0 0.0
        %1950 = vmatprep.subr.mxu0 0.0
        %1951 = vmatpush1.msra.mxu0 0.0
        %1952 = vmatprep.subr.mxu0 0.0
        %1953 = vmatpush1.msra.mxu0 0.0
        %1954 = vmatprep.subr.mxu0 0.0
        %1955 = vmatpush1.msra.mxu0 0.0
        %1956 = vmatprep.subr.mxu0 0.0
        %1957 = vmatpush1.msra.mxu0 0.0
        %1958 = vmatprep.subr.mxu0 0.0
        %1959 = vmatpush1.msra.mxu0 0.0
        %1960 = vmatprep.subr.mxu0 0.0
        %1961 = vmatpush1.msra.mxu0 0.0
        %1962 = vmatprep.subr.mxu0 0.0
        %1963 = vmatpush1.msra.mxu0 0.0
        %1964 = vmatprep.subr.mxu0 0.0
        %1965 = vmatpush1.msra.mxu0 0.0
        %1966 = vmatprep.subr.mxu0 0.0
        %1967 = vmatpush1.msra.mxu0 0.0
        %1968 = vmatprep.subr.mxu0 0.0
        %1969 = vmatpush1.msra.mxu0 0.0
        %1970 = vmatprep.subr.mxu0 0.0
        %1971 = vmatpush1.msra.mxu0 0.0
        %1972 = vmatprep.subr.mxu0 0.0
        %1973 = vmatpush1.msra.mxu0 0.0
        %1974 = vmatprep.subr.mxu0 0.0
        %1975 = vmatpush1.msra.mxu0 0.0
        %1976 = vmatprep.mubr.f32.mxu0 0.0
        %1977 = vmatmul.mubr.f32.gmra.mrb[0].mxu0 %v1910
        %v1978 = vpop.f32.mrb[0].mxu0
        %v1979 = vadd.f32 0.0, %v1978
        %v1980 = vpop.f32.mrb[0].mxu0
        %1981 = vdwg.mxu0
        %v1982 = vadd.f32 %v1904, %v1979
        %v1983 = vld [vmem:[#allocation3 + $0xb] sm:$0xf]
        %s1984 = scalar_lea.vmem [#allocation12], 208
        %v1985 = vld [vmem:[%s1984] sm:$0xff]
        %v1986 = vld [vmem:[%s1984 + $0x8] sm:$0xff]
        %v1988 = vsel %vm978, %v1983, 0
        %1990 = vmatprep.subr.mxu0 0.0
        %1991 = vmatpush1.msra.mxu0 %v1985
        %1992 = vmatprep.subr.mxu0 0.0
        %1993 = vmatpush1.msra.mxu0 %v1986
        %1994 = vmatprep.subr.mxu0 0.0
        %1995 = vmatpush1.msra.mxu0 0.0
        %1996 = vmatprep.subr.mxu0 0.0
        %1997 = vmatpush1.msra.mxu0 0.0
        %1998 = vmatprep.subr.mxu0 0.0
        %1999 = vmatpush1.msra.mxu0 0.0
        %2000 = vmatprep.subr.mxu0 0.0
        %2001 = vmatpush1.msra.mxu0 0.0
        %2002 = vmatprep.subr.mxu0 0.0
        %2003 = vmatpush1.msra.mxu0 0.0
        %2004 = vmatprep.subr.mxu0 0.0
        %2005 = vmatpush1.msra.mxu0 0.0
        %2006 = vmatprep.subr.mxu0 0.0
        %2007 = vmatpush1.msra.mxu0 0.0
        %2008 = vmatprep.subr.mxu0 0.0
        %2009 = vmatpush1.msra.mxu0 0.0
        %2010 = vmatprep.subr.mxu0 0.0
        %2011 = vmatpush1.msra.mxu0 0.0
        %2012 = vmatprep.subr.mxu0 0.0
        %2013 = vmatpush1.msra.mxu0 0.0
        %2014 = vmatprep.subr.mxu0 0.0
        %2015 = vmatpush1.msra.mxu0 0.0
        %2016 = vmatprep.subr.mxu0 0.0
        %2017 = vmatpush1.msra.mxu0 0.0
        %2018 = vmatprep.subr.mxu0 0.0
        %2019 = vmatpush1.msra.mxu0 0.0
        %2020 = vmatprep.subr.mxu0 0.0
        %2021 = vmatpush1.msra.mxu0 0.0
        %2022 = vmatprep.subr.mxu0 0.0
        %2023 = vmatpush1.msra.mxu0 0.0
        %2024 = vmatprep.subr.mxu0 0.0
        %2025 = vmatpush1.msra.mxu0 0.0
        %2026 = vmatprep.subr.mxu0 0.0
        %2027 = vmatpush1.msra.mxu0 0.0
        %2028 = vmatprep.subr.mxu0 0.0
        %2029 = vmatpush1.msra.mxu0 0.0
        %2030 = vmatprep.subr.mxu0 0.0
        %2031 = vmatpush1.msra.mxu0 0.0
        %2032 = vmatprep.subr.mxu0 0.0
        %2033 = vmatpush1.msra.mxu0 0.0
        %2034 = vmatprep.subr.mxu0 0.0
        %2035 = vmatpush1.msra.mxu0 0.0
        %2036 = vmatprep.subr.mxu0 0.0
        %2037 = vmatpush1.msra.mxu0 0.0
        %2038 = vmatprep.subr.mxu0 0.0
        %2039 = vmatpush1.msra.mxu0 0.0
        %2040 = vmatprep.subr.mxu0 0.0
        %2041 = vmatpush1.msra.mxu0 0.0
        %2042 = vmatprep.subr.mxu0 0.0
        %2043 = vmatpush1.msra.mxu0 0.0
        %2044 = vmatprep.subr.mxu0 0.0
        %2045 = vmatpush1.msra.mxu0 0.0
        %2046 = vmatprep.subr.mxu0 0.0
        %2047 = vmatpush1.msra.mxu0 0.0
        %2048 = vmatprep.subr.mxu0 0.0
        %2049 = vmatpush1.msra.mxu0 0.0
        %2050 = vmatprep.subr.mxu0 0.0
        %2051 = vmatpush1.msra.mxu0 0.0
        %2052 = vmatprep.subr.mxu0 0.0
        %2053 = vmatpush1.msra.mxu0 0.0
        %2054 = vmatprep.mubr.f32.mxu0 0.0
        %2055 = vmatmul.mubr.f32.gmra.mrb[0].mxu0 %v1988
        %v2056 = vpop.f32.mrb[0].mxu0
        %v2057 = vadd.f32 0.0, %v2056
        %v2058 = vpop.f32.mrb[0].mxu0
        %2059 = vdwg.mxu0
        %v2060 = vadd.f32 %v1982, %v2057
        %v2061 = vstv %s970
        %v2062 = vadd.f32 %v2060, %v2061
        %v2063 = vxor.u32 %v2062, 2147483648
        %v2064 = vmul.f32 %v2063, 1.442695
        %v2065 = vpow.pop %v2064
        %v2066 = vadd.f32 %v2065, 1.0
        %v2067 = vrcp.pop %v2066
        %v2068 = vmul.f32 1.0, %v2067
        %s2069 = sld [smem:[#allocation20 + $0x1]]
        %v2070 = vld [vmem:[#allocation4 + $0x5] sm:$0xf]
        %v2071 = vld [vmem:[#allocation14] sm:$0xff]
        %v2072 = vld [vmem:[#allocation14 + $0x8] sm:$0xff]
        %v2073 = vld [vmem:[#allocation4 + $0x6] sm:$0xf]
        %s2074 = scalar_lea.vmem [#allocation14], 16
        %v2075 = vld [vmem:[%s2074] sm:$0xff]
        %v2076 = vld [vmem:[%s2074 + $0x8] sm:$0xff]
        %v2078 = vsel %vm978, %v2073, 0
        %2080 = vmatprep.subr.mxu0 0.0
        %2081 = vmatpush1.msra.mxu0 %v2075
        %2082 = vmatprep.subr.mxu0 0.0
        %2083 = vmatpush1.msra.mxu0 %v2076
        %2084 = vmatprep.subr.mxu0 0.0
        %2085 = vmatpush1.msra.mxu0 0.0
        %2086 = vmatprep.subr.mxu0 0.0
        %2087 = vmatpush1.msra.mxu0 0.0
        %2088 = vmatprep.subr.mxu0 0.0
        %2089 = vmatpush1.msra.mxu0 0.0
        %2090 = vmatprep.subr.mxu0 0.0
        %2091 = vmatpush1.msra.mxu0 0.0
        %2092 = vmatprep.subr.mxu0 0.0
        %2093 = vmatpush1.msra.mxu0 0.0
        %2094 = vmatprep.subr.mxu0 0.0
        %2095 = vmatpush1.msra.mxu0 0.0
        %2096 = vmatprep.subr.mxu0 0.0
        %2097 = vmatpush1.msra.mxu0 0.0
        %2098 = vmatprep.subr.mxu0 0.0
        %2099 = vmatpush1.msra.mxu0 0.0
        %2100 = vmatprep.subr.mxu0 0.0
        %2101 = vmatpush1.msra.mxu0 0.0
        %2102 = vmatprep.subr.mxu0 0.0
        %2103 = vmatpush1.msra.mxu0 0.0
        %2104 = vmatprep.subr.mxu0 0.0
        %2105 = vmatpush1.msra.mxu0 0.0
        %2106 = vmatprep.subr.mxu0 0.0
        %2107 = vmatpush1.msra.mxu0 0.0
        %2108 = vmatprep.subr.mxu0 0.0
        %2109 = vmatpush1.msra.mxu0 0.0
        %2110 = vmatprep.subr.mxu0 0.0
        %2111 = vmatpush1.msra.mxu0 0.0
        %2112 = vmatprep.subr.mxu0 0.0
        %2113 = vmatpush1.msra.mxu0 0.0
        %2114 = vmatprep.subr.mxu0 0.0
        %2115 = vmatpush1.msra.mxu0 0.0
        %2116 = vmatprep.subr.mxu0 0.0
        %2117 = vmatpush1.msra.mxu0 0.0
        %2118 = vmatprep.subr.mxu0 0.0
        %2119 = vmatpush1.msra.mxu0 0.0
        %2120 = vmatprep.subr.mxu0 0.0
        %2121 = vmatpush1.msra.mxu0 0.0
        %2122 = vmatprep.subr.mxu0 0.0
        %2123 = vmatpush1.msra.mxu0 0.0
        %2124 = vmatprep.subr.mxu0 0.0
        %2125 = vmatpush1.msra.mxu0 0.0
        %2126 = vmatprep.subr.mxu0 0.0
        %2127 = vmatpush1.msra.mxu0 0.0
        %2128 = vmatprep.subr.mxu0 0.0
        %2129 = vmatpush1.msra.mxu0 0.0
        %2130 = vmatprep.subr.mxu0 0.0
        %2131 = vmatpush1.msra.mxu0 0.0
        %2132 = vmatprep.subr.mxu0 0.0
        %2133 = vmatpush1.msra.mxu0 0.0
        %2134 = vmatprep.subr.mxu0 0.0
        %2135 = vmatpush1.msra.mxu0 0.0
        %2136 = vmatprep.subr.mxu0 0.0
        %2137 = vmatpush1.msra.mxu0 0.0
        %2138 = vmatprep.subr.mxu0 0.0
        %2139 = vmatpush1.msra.mxu0 0.0
        %2140 = vmatprep.subr.mxu0 0.0
        %2141 = vmatpush1.msra.mxu0 0.0
        %2142 = vmatprep.subr.mxu0 0.0
        %2143 = vmatpush1.msra.mxu0 0.0
        %2144 = vmatprep.mubr.f32.mxu0 0.0
        %2145 = vmatmul.mubr.f32.gmra.mrb[0].mxu0 %v2078
        %v2146 = vpop.f32.mrb[0].mxu0
        %v2147 = vadd.f32 0.0, %v2146
        %v2148 = vpop.f32.mrb[0].mxu0
        %2149 = vdwg.mxu0
        %v2151 = vsel %vm978, %v2070, 0
        %2153 = vmatprep.subr.mxu0 0.0
        %2154 = vmatpush1.msra.mxu0 %v2071
        %2155 = vmatprep.subr.mxu0 0.0
        %2156 = vmatpush1.msra.mxu0 %v2072
        %2157 = vmatprep.subr.mxu0 0.0
        %2158 = vmatpush1.msra.mxu0 0.0
        %2159 = vmatprep.subr.mxu0 0.0
        %2160 = vmatpush1.msra.mxu0 0.0
        %2161 = vmatprep.subr.mxu0 0.0
        %2162 = vmatpush1.msra.mxu0 0.0
        %2163 = vmatprep.subr.mxu0 0.0
        %2164 = vmatpush1.msra.mxu0 0.0
        %2165 = vmatprep.subr.mxu0 0.0
        %2166 = vmatpush1.msra.mxu0 0.0
        %2167 = vmatprep.subr.mxu0 0.0
        %2168 = vmatpush1.msra.mxu0 0.0
        %2169 = vmatprep.subr.mxu0 0.0
        %2170 = vmatpush1.msra.mxu0 0.0
        %2171 = vmatprep.subr.mxu0 0.0
        %2172 = vmatpush1.msra.mxu0 0.0
        %2173 = vmatprep.subr.mxu0 0.0
        %2174 = vmatpush1.msra.mxu0 0.0
        %2175 = vmatprep.subr.mxu0 0.0
        %2176 = vmatpush1.msra.mxu0 0.0
        %2177 = vmatprep.subr.mxu0 0.0
        %2178 = vmatpush1.msra.mxu0 0.0
        %2179 = vmatprep.subr.mxu0 0.0
        %2180 = vmatpush1.msra.mxu0 0.0
        %2181 = vmatprep.subr.mxu0 0.0
        %2182 = vmatpush1.msra.mxu0 0.0
        %2183 = vmatprep.subr.mxu0 0.0
        %2184 = vmatpush1.msra.mxu0 0.0
        %2185 = vmatprep.subr.mxu0 0.0
        %2186 = vmatpush1.msra.mxu0 0.0
        %2187 = vmatprep.subr.mxu0 0.0
        %2188 = vmatpush1.msra.mxu0 0.0
        %2189 = vmatprep.subr.mxu0 0.0
        %2190 = vmatpush1.msra.mxu0 0.0
        %2191 = vmatprep.subr.mxu0 0.0
        %2192 = vmatpush1.msra.mxu0 0.0
        %2193 = vmatprep.subr.mxu0 0.0
        %2194 = vmatpush1.msra.mxu0 0.0
        %2195 = vmatprep.subr.mxu0 0.0
        %2196 = vmatpush1.msra.mxu0 0.0
        %2197 = vmatprep.subr.mxu0 0.0
        %2198 = vmatpush1.msra.mxu0 0.0
        %2199 = vmatprep.subr.mxu0 0.0
        %2200 = vmatpush1.msra.mxu0 0.0
        %2201 = vmatprep.subr.mxu0 0.0
        %2202 = vmatpush1.msra.mxu0 0.0
        %2203 = vmatprep.subr.mxu0 0.0
        %2204 = vmatpush1.msra.mxu0 0.0
        %2205 = vmatprep.subr.mxu0 0.0
        %2206 = vmatpush1.msra.mxu0 0.0
        %2207 = vmatprep.subr.mxu0 0.0
        %2208 = vmatpush1.msra.mxu0 0.0
        %2209 = vmatprep.subr.mxu0 0.0
        %2210 = vmatpush1.msra.mxu0 0.0
        %2211 = vmatprep.subr.mxu0 0.0
        %2212 = vmatpush1.msra.mxu0 0.0
        %2213 = vmatprep.subr.mxu0 0.0
        %2214 = vmatpush1.msra.mxu0 0.0
        %2215 = vmatprep.subr.mxu0 0.0
        %2216 = vmatpush1.msra.mxu0 0.0
        %2217 = vmatprep.mubr.f32.mxu0 0.0
        %2218 = vmatmul.mubr.f32.gmra.mrb[0].mxu0 %v2151
        %v2219 = vpop.f32.mrb[0].mxu0
        %v2220 = vadd.f32 %v2147, %v2219
        %v2221 = vpop.f32.mrb[0].mxu0
        %2222 = vdwg.mxu0
        %v2223 = vld [vmem:[#allocation4 + $0x7] sm:$0xf]
        %s2224 = scalar_lea.vmem [#allocation14], 32
        %v2225 = vld [vmem:[%s2224] sm:$0xff]
        %v2226 = vld [vmem:[%s2224 + $0x8] sm:$0xff]
        %v2228 = vsel %vm978, %v2223, 0
        %2230 = vmatprep.subr.mxu0 0.0
        %2231 = vmatpush1.msra.mxu0 %v2225
        %2232 = vmatprep.subr.mxu0 0.0
        %2233 = vmatpush1.msra.mxu0 %v2226
        %2234 = vmatprep.subr.mxu0 0.0
        %2235 = vmatpush1.msra.mxu0 0.0
        %2236 = vmatprep.subr.mxu0 0.0
        %2237 = vmatpush1.msra.mxu0 0.0
        %2238 = vmatprep.subr.mxu0 0.0
        %2239 = vmatpush1.msra.mxu0 0.0
        %2240 = vmatprep.subr.mxu0 0.0
        %2241 = vmatpush1.msra.mxu0 0.0
        %2242 = vmatprep.subr.mxu0 0.0
        %2243 = vmatpush1.msra.mxu0 0.0
        %2244 = vmatprep.subr.mxu0 0.0
        %2245 = vmatpush1.msra.mxu0 0.0
        %2246 = vmatprep.subr.mxu0 0.0
        %2247 = vmatpush1.msra.mxu0 0.0
        %2248 = vmatprep.subr.mxu0 0.0
        %2249 = vmatpush1.msra.mxu0 0.0
        %2250 = vmatprep.subr.mxu0 0.0
        %2251 = vmatpush1.msra.mxu0 0.0
        %2252 = vmatprep.subr.mxu0 0.0
        %2253 = vmatpush1.msra.mxu0 0.0
        %2254 = vmatprep.subr.mxu0 0.0
        %2255 = vmatpush1.msra.mxu0 0.0
        %2256 = vmatprep.subr.mxu0 0.0
        %2257 = vmatpush1.msra.mxu0 0.0
        %2258 = vmatprep.subr.mxu0 0.0
        %2259 = vmatpush1.msra.mxu0 0.0
        %2260 = vmatprep.subr.mxu0 0.0
        %2261 = vmatpush1.msra.mxu0 0.0
        %2262 = vmatprep.subr.mxu0 0.0
        %2263 = vmatpush1.msra.mxu0 0.0
        %2264 = vmatprep.subr.mxu0 0.0
        %2265 = vmatpush1.msra.mxu0 0.0
        %2266 = vmatprep.subr.mxu0 0.0
        %2267 = vmatpush1.msra.mxu0 0.0
        %2268 = vmatprep.subr.mxu0 0.0
        %2269 = vmatpush1.msra.mxu0 0.0
        %2270 = vmatprep.subr.mxu0 0.0
        %2271 = vmatpush1.msra.mxu0 0.0
        %2272 = vmatprep.subr.mxu0 0.0
        %2273 = vmatpush1.msra.mxu0 0.0
        %2274 = vmatprep.subr.mxu0 0.0
        %2275 = vmatpush1.msra.mxu0 0.0
        %2276 = vmatprep.subr.mxu0 0.0
        %2277 = vmatpush1.msra.mxu0 0.0
        %2278 = vmatprep.subr.mxu0 0.0
        %2279 = vmatpush1.msra.mxu0 0.0
        %2280 = vmatprep.subr.mxu0 0.0
        %2281 = vmatpush1.msra.mxu0 0.0
        %2282 = vmatprep.subr.mxu0 0.0
        %2283 = vmatpush1.msra.mxu0 0.0
        %2284 = vmatprep.subr.mxu0 0.0
        %2285 = vmatpush1.msra.mxu0 0.0
        %2286 = vmatprep.subr.mxu0 0.0
        %2287 = vmatpush1.msra.mxu0 0.0
        %2288 = vmatprep.subr.mxu0 0.0
        %2289 = vmatpush1.msra.mxu0 0.0
        %2290 = vmatprep.subr.mxu0 0.0
        %2291 = vmatpush1.msra.mxu0 0.0
        %2292 = vmatprep.subr.mxu0 0.0
        %2293 = vmatpush1.msra.mxu0 0.0
        %2294 = vmatprep.mubr.f32.mxu0 0.0
        %2295 = vmatmul.mubr.f32.gmra.mrb[0].mxu0 %v2228
        %v2296 = vpop.f32.mrb[0].mxu0
        %v2297 = vadd.f32 0.0, %v2296
        %v2298 = vpop.f32.mrb[0].mxu0
        %2299 = vdwg.mxu0
        %v2300 = vadd.f32 %v2220, %v2297
        %v2301 = vld [vmem:[#allocation4 + $0x8] sm:$0xf]
        %s2302 = scalar_lea.vmem [#allocation14], 48
        %v2303 = vld [vmem:[%s2302] sm:$0xff]
        %v2304 = vld [vmem:[%s2302 + $0x8] sm:$0xff]
        %v2306 = vsel %vm978, %v2301, 0
        %2308 = vmatprep.subr.mxu0 0.0
        %2309 = vmatpush1.msra.mxu0 %v2303
        %2310 = vmatprep.subr.mxu0 0.0
        %2311 = vmatpush1.msra.mxu0 %v2304
        %2312 = vmatprep.subr.mxu0 0.0
        %2313 = vmatpush1.msra.mxu0 0.0
        %2314 = vmatprep.subr.mxu0 0.0
        %2315 = vmatpush1.msra.mxu0 0.0
        %2316 = vmatprep.subr.mxu0 0.0
        %2317 = vmatpush1.msra.mxu0 0.0
        %2318 = vmatprep.subr.mxu0 0.0
        %2319 = vmatpush1.msra.mxu0 0.0
        %2320 = vmatprep.subr.mxu0 0.0
        %2321 = vmatpush1.msra.mxu0 0.0
        %2322 = vmatprep.subr.mxu0 0.0
        %2323 = vmatpush1.msra.mxu0 0.0
        %2324 = vmatprep.subr.mxu0 0.0
        %2325 = vmatpush1.msra.mxu0 0.0
        %2326 = vmatprep.subr.mxu0 0.0
        %2327 = vmatpush1.msra.mxu0 0.0
        %2328 = vmatprep.subr.mxu0 0.0
        %2329 = vmatpush1.msra.mxu0 0.0
        %2330 = vmatprep.subr.mxu0 0.0
        %2331 = vmatpush1.msra.mxu0 0.0
        %2332 = vmatprep.subr.mxu0 0.0
        %2333 = vmatpush1.msra.mxu0 0.0
        %2334 = vmatprep.subr.mxu0 0.0
        %2335 = vmatpush1.msra.mxu0 0.0
        %2336 = vmatprep.subr.mxu0 0.0
        %2337 = vmatpush1.msra.mxu0 0.0
        %2338 = vmatprep.subr.mxu0 0.0
        %2339 = vmatpush1.msra.mxu0 0.0
        %2340 = vmatprep.subr.mxu0 0.0
        %2341 = vmatpush1.msra.mxu0 0.0
        %2342 = vmatprep.subr.mxu0 0.0
        %2343 = vmatpush1.msra.mxu0 0.0
        %2344 = vmatprep.subr.mxu0 0.0
        %2345 = vmatpush1.msra.mxu0 0.0
        %2346 = vmatprep.subr.mxu0 0.0
        %2347 = vmatpush1.msra.mxu0 0.0
        %2348 = vmatprep.subr.mxu0 0.0
        %2349 = vmatpush1.msra.mxu0 0.0
        %2350 = vmatprep.subr.mxu0 0.0
        %2351 = vmatpush1.msra.mxu0 0.0
        %2352 = vmatprep.subr.mxu0 0.0
        %2353 = vmatpush1.msra.mxu0 0.0
        %2354 = vmatprep.subr.mxu0 0.0
        %2355 = vmatpush1.msra.mxu0 0.0
        %2356 = vmatprep.subr.mxu0 0.0
        %2357 = vmatpush1.msra.mxu0 0.0
        %2358 = vmatprep.subr.mxu0 0.0
        %2359 = vmatpush1.msra.mxu0 0.0
        %2360 = vmatprep.subr.mxu0 0.0
        %2361 = vmatpush1.msra.mxu0 0.0
        %2362 = vmatprep.subr.mxu0 0.0
        %2363 = vmatpush1.msra.mxu0 0.0
        %2364 = vmatprep.subr.mxu0 0.0
        %2365 = vmatpush1.msra.mxu0 0.0
        %2366 = vmatprep.subr.mxu0 0.0
        %2367 = vmatpush1.msra.mxu0 0.0
        %2368 = vmatprep.subr.mxu0 0.0
        %2369 = vmatpush1.msra.mxu0 0.0
        %2370 = vmatprep.subr.mxu0 0.0
        %2371 = vmatpush1.msra.mxu0 0.0
        %2372 = vmatprep.mubr.f32.mxu0 0.0
        %2373 = vmatmul.mubr.f32.gmra.mrb[0].mxu0 %v2306
        %v2374 = vpop.f32.mrb[0].mxu0
        %v2375 = vadd.f32 0.0, %v2374
        %v2376 = vpop.f32.mrb[0].mxu0
        %2377 = vdwg.mxu0
        %v2378 = vadd.f32 %v2300, %v2375
        %v2379 = vld [vmem:[#allocation4 + $0x9] sm:$0xf]
        %s2380 = scalar_lea.vmem [#allocation14], 64
        %v2381 = vld [vmem:[%s2380] sm:$0xff]
        %v2382 = vld [vmem:[%s2380 + $0x8] sm:$0xff]
        %v2384 = vsel %vm978, %v2379, 0
        %2386 = vmatprep.subr.mxu0 0.0
        %2387 = vmatpush1.msra.mxu0 %v2381
        %2388 = vmatprep.subr.mxu0 0.0
        %2389 = vmatpush1.msra.mxu0 %v2382
        %2390 = vmatprep.subr.mxu0 0.0
        %2391 = vmatpush1.msra.mxu0 0.0
        %2392 = vmatprep.subr.mxu0 0.0
        %2393 = vmatpush1.msra.mxu0 0.0
        %2394 = vmatprep.subr.mxu0 0.0
        %2395 = vmatpush1.msra.mxu0 0.0
        %2396 = vmatprep.subr.mxu0 0.0
        %2397 = vmatpush1.msra.mxu0 0.0
        %2398 = vmatprep.subr.mxu0 0.0
        %2399 = vmatpush1.msra.mxu0 0.0
        %2400 = vmatprep.subr.mxu0 0.0
        %2401 = vmatpush1.msra.mxu0 0.0
        %2402 = vmatprep.subr.mxu0 0.0
        %2403 = vmatpush1.msra.mxu0 0.0
        %2404 = vmatprep.subr.mxu0 0.0
        %2405 = vmatpush1.msra.mxu0 0.0
        %2406 = vmatprep.subr.mxu0 0.0
        %2407 = vmatpush1.msra.mxu0 0.0
        %2408 = vmatprep.subr.mxu0 0.0
        %2409 = vmatpush1.msra.mxu0 0.0
        %2410 = vmatprep.subr.mxu0 0.0
        %2411 = vmatpush1.msra.mxu0 0.0
        %2412 = vmatprep.subr.mxu0 0.0
        %2413 = vmatpush1.msra.mxu0 0.0
        %2414 = vmatprep.subr.mxu0 0.0
        %2415 = vmatpush1.msra.mxu0 0.0
        %2416 = vmatprep.subr.mxu0 0.0
        %2417 = vmatpush1.msra.mxu0 0.0
        %2418 = vmatprep.subr.mxu0 0.0
        %2419 = vmatpush1.msra.mxu0 0.0
        %2420 = vmatprep.subr.mxu0 0.0
        %2421 = vmatpush1.msra.mxu0 0.0
        %2422 = vmatprep.subr.mxu0 0.0
        %2423 = vmatpush1.msra.mxu0 0.0
        %2424 = vmatprep.subr.mxu0 0.0
        %2425 = vmatpush1.msra.mxu0 0.0
        %2426 = vmatprep.subr.mxu0 0.0
        %2427 = vmatpush1.msra.mxu0 0.0
        %2428 = vmatprep.subr.mxu0 0.0
        %2429 = vmatpush1.msra.mxu0 0.0
        %2430 = vmatprep.subr.mxu0 0.0
        %2431 = vmatpush1.msra.mxu0 0.0
        %2432 = vmatprep.subr.mxu0 0.0
        %2433 = vmatpush1.msra.mxu0 0.0
        %2434 = vmatprep.subr.mxu0 0.0
        %2435 = vmatpush1.msra.mxu0 0.0
        %2436 = vmatprep.subr.mxu0 0.0
        %2437 = vmatpush1.msra.mxu0 0.0
        %2438 = vmatprep.subr.mxu0 0.0
        %2439 = vmatpush1.msra.mxu0 0.0
        %2440 = vmatprep.subr.mxu0 0.0
        %2441 = vmatpush1.msra.mxu0 0.0
        %2442 = vmatprep.subr.mxu0 0.0
        %2443 = vmatpush1.msra.mxu0 0.0
        %2444 = vmatprep.subr.mxu0 0.0
        %2445 = vmatpush1.msra.mxu0 0.0
        %2446 = vmatprep.subr.mxu0 0.0
        %2447 = vmatpush1.msra.mxu0 0.0
        %2448 = vmatprep.subr.mxu0 0.0
        %2449 = vmatpush1.msra.mxu0 0.0
        %2450 = vmatprep.mubr.f32.mxu0 0.0
        %2451 = vmatmul.mubr.f32.gmra.mrb[0].mxu0 %v2384
        %v2452 = vpop.f32.mrb[0].mxu0
        %v2453 = vadd.f32 0.0, %v2452
        %v2454 = vpop.f32.mrb[0].mxu0
        %2455 = vdwg.mxu0
        %v2456 = vadd.f32 %v2378, %v2453
        %v2457 = vld [vmem:[#allocation4 + $0xa] sm:$0xf]
        %s2458 = scalar_lea.vmem [#allocation14], 80
        %v2459 = vld [vmem:[%s2458] sm:$0xff]
        %v2460 = vld [vmem:[%s2458 + $0x8] sm:$0xff]
        %v2462 = vsel %vm978, %v2457, 0
        %2464 = vmatprep.subr.mxu0 0.0
        %2465 = vmatpush1.msra.mxu0 %v2459
        %2466 = vmatprep.subr.mxu0 0.0
        %2467 = vmatpush1.msra.mxu0 %v2460
        %2468 = vmatprep.subr.mxu0 0.0
        %2469 = vmatpush1.msra.mxu0 0.0
        %2470 = vmatprep.subr.mxu0 0.0
        %2471 = vmatpush1.msra.mxu0 0.0
        %2472 = vmatprep.subr.mxu0 0.0
        %2473 = vmatpush1.msra.mxu0 0.0
        %2474 = vmatprep.subr.mxu0 0.0
        %2475 = vmatpush1.msra.mxu0 0.0
        %2476 = vmatprep.subr.mxu0 0.0
        %2477 = vmatpush1.msra.mxu0 0.0
        %2478 = vmatprep.subr.mxu0 0.0
        %2479 = vmatpush1.msra.mxu0 0.0
        %2480 = vmatprep.subr.mxu0 0.0
        %2481 = vmatpush1.msra.mxu0 0.0
        %2482 = vmatprep.subr.mxu0 0.0
        %2483 = vmatpush1.msra.mxu0 0.0
        %2484 = vmatprep.subr.mxu0 0.0
        %2485 = vmatpush1.msra.mxu0 0.0
        %2486 = vmatprep.subr.mxu0 0.0
        %2487 = vmatpush1.msra.mxu0 0.0
        %2488 = vmatprep.subr.mxu0 0.0
        %2489 = vmatpush1.msra.mxu0 0.0
        %2490 = vmatprep.subr.mxu0 0.0
        %2491 = vmatpush1.msra.mxu0 0.0
        %2492 = vmatprep.subr.mxu0 0.0
        %2493 = vmatpush1.msra.mxu0 0.0
        %2494 = vmatprep.subr.mxu0 0.0
        %2495 = vmatpush1.msra.mxu0 0.0
        %2496 = vmatprep.subr.mxu0 0.0
        %2497 = vmatpush1.msra.mxu0 0.0
        %2498 = vmatprep.subr.mxu0 0.0
        %2499 = vmatpush1.msra.mxu0 0.0
        %2500 = vmatprep.subr.mxu0 0.0
        %2501 = vmatpush1.msra.mxu0 0.0
        %2502 = vmatprep.subr.mxu0 0.0
        %2503 = vmatpush1.msra.mxu0 0.0
        %2504 = vmatprep.subr.mxu0 0.0
        %2505 = vmatpush1.msra.mxu0 0.0
        %2506 = vmatprep.subr.mxu0 0.0
        %2507 = vmatpush1.msra.mxu0 0.0
        %2508 = vmatprep.subr.mxu0 0.0
        %2509 = vmatpush1.msra.mxu0 0.0
        %2510 = vmatprep.subr.mxu0 0.0
        %2511 = vmatpush1.msra.mxu0 0.0
        %2512 = vmatprep.subr.mxu0 0.0
        %2513 = vmatpush1.msra.mxu0 0.0
        %2514 = vmatprep.subr.mxu0 0.0
        %2515 = vmatpush1.msra.mxu0 0.0
        %2516 = vmatprep.subr.mxu0 0.0
        %2517 = vmatpush1.msra.mxu0 0.0
        %2518 = vmatprep.subr.mxu0 0.0
        %2519 = vmatpush1.msra.mxu0 0.0
        %2520 = vmatprep.subr.mxu0 0.0
        %2521 = vmatpush1.msra.mxu0 0.0
        %2522 = vmatprep.subr.mxu0 0.0
        %2523 = vmatpush1.msra.mxu0 0.0
        %2524 = vmatprep.subr.mxu0 0.0
        %2525 = vmatpush1.msra.mxu0 0.0
        %2526 = vmatprep.subr.mxu0 0.0
        %2527 = vmatpush1.msra.mxu0 0.0
        %2528 = vmatprep.mubr.f32.mxu0 0.0
        %2529 = vmatmul.mubr.f32.gmra.mrb[0].mxu0 %v2462
        %v2530 = vpop.f32.mrb[0].mxu0
        %v2531 = vadd.f32 0.0, %v2530
        %v2532 = vpop.f32.mrb[0].mxu0
        %2533 = vdwg.mxu0
        %v2534 = vadd.f32 %v2456, %v2531
        %v2535 = vld [vmem:[#allocation4 + $0xb] sm:$0xf]
        %s2536 = scalar_lea.vmem [#allocation14], 96
        %v2537 = vld [vmem:[%s2536] sm:$0xff]
        %v2538 = vld [vmem:[%s2536 + $0x8] sm:$0xff]
        %v2540 = vsel %vm978, %v2535, 0
        %2542 = vmatprep.subr.mxu0 0.0
        %2543 = vmatpush1.msra.mxu0 %v2537
        %2544 = vmatprep.subr.mxu0 0.0
        %2545 = vmatpush1.msra.mxu0 %v2538
        %2546 = vmatprep.subr.mxu0 0.0
        %2547 = vmatpush1.msra.mxu0 0.0
        %2548 = vmatprep.subr.mxu0 0.0
        %2549 = vmatpush1.msra.mxu0 0.0
        %2550 = vmatprep.subr.mxu0 0.0
        %2551 = vmatpush1.msra.mxu0 0.0
        %2552 = vmatprep.subr.mxu0 0.0
        %2553 = vmatpush1.msra.mxu0 0.0
        %2554 = vmatprep.subr.mxu0 0.0
        %2555 = vmatpush1.msra.mxu0 0.0
        %2556 = vmatprep.subr.mxu0 0.0
        %2557 = vmatpush1.msra.mxu0 0.0
        %2558 = vmatprep.subr.mxu0 0.0
        %2559 = vmatpush1.msra.mxu0 0.0
        %2560 = vmatprep.subr.mxu0 0.0
        %2561 = vmatpush1.msra.mxu0 0.0
        %2562 = vmatprep.subr.mxu0 0.0
        %2563 = vmatpush1.msra.mxu0 0.0
        %2564 = vmatprep.subr.mxu0 0.0
        %2565 = vmatpush1.msra.mxu0 0.0
        %2566 = vmatprep.subr.mxu0 0.0
        %2567 = vmatpush1.msra.mxu0 0.0
        %2568 = vmatprep.subr.mxu0 0.0
        %2569 = vmatpush1.msra.mxu0 0.0
        %2570 = vmatprep.subr.mxu0 0.0
        %2571 = vmatpush1.msra.mxu0 0.0
        %2572 = vmatprep.subr.mxu0 0.0
        %2573 = vmatpush1.msra.mxu0 0.0
        %2574 = vmatprep.subr.mxu0 0.0
        %2575 = vmatpush1.msra.mxu0 0.0
        %2576 = vmatprep.subr.mxu0 0.0
        %2577 = vmatpush1.msra.mxu0 0.0
        %2578 = vmatprep.subr.mxu0 0.0
        %2579 = vmatpush1.msra.mxu0 0.0
        %2580 = vmatprep.subr.mxu0 0.0
        %2581 = vmatpush1.msra.mxu0 0.0
        %2582 = vmatprep.subr.mxu0 0.0
        %2583 = vmatpush1.msra.mxu0 0.0
        %2584 = vmatprep.subr.mxu0 0.0
        %2585 = vmatpush1.msra.mxu0 0.0
        %2586 = vmatprep.subr.mxu0 0.0
        %2587 = vmatpush1.msra.mxu0 0.0
        %2588 = vmatprep.subr.mxu0 0.0
        %2589 = vmatpush1.msra.mxu0 0.0
        %2590 = vmatprep.subr.mxu0 0.0
        %2591 = vmatpush1.msra.mxu0 0.0
        %2592 = vmatprep.subr.mxu0 0.0
        %2593 = vmatpush1.msra.mxu0 0.0
        %2594 = vmatprep.subr.mxu0 0.0
        %2595 = vmatpush1.msra.mxu0 0.0
        %2596 = vmatprep.subr.mxu0 0.0
        %2597 = vmatpush1.msra.mxu0 0.0
        %2598 = vmatprep.subr.mxu0 0.0
        %2599 = vmatpush1.msra.mxu0 0.0
        %2600 = vmatprep.subr.mxu0 0.0
        %2601 = vmatpush1.msra.mxu0 0.0
        %2602 = vmatprep.subr.mxu0 0.0
        %2603 = vmatpush1.msra.mxu0 0.0
        %2604 = vmatprep.subr.mxu0 0.0
        %2605 = vmatpush1.msra.mxu0 0.0
        %2606 = vmatprep.mubr.f32.mxu0 0.0
        %2607 = vmatmul.mubr.f32.gmra.mrb[0].mxu0 %v2540
        %v2608 = vpop.f32.mrb[0].mxu0
        %v2609 = vadd.f32 0.0, %v2608
        %v2610 = vpop.f32.mrb[0].mxu0
        %2611 = vdwg.mxu0
        %v2612 = vadd.f32 %v2534, %v2609
        %v2613 = vld [vmem:[#allocation5 + $0x5] sm:$0xf]
        %s2614 = scalar_lea.vmem [#allocation14], 112
        %v2615 = vld [vmem:[%s2614] sm:$0xff]
        %v2616 = vld [vmem:[%s2614 + $0x8] sm:$0xff]
        %v2618 = vsel %vm978, %v2613, 0
        %2620 = vmatprep.subr.mxu0 0.0
        %2621 = vmatpush1.msra.mxu0 %v2615
        %2622 = vmatprep.subr.mxu0 0.0
        %2623 = vmatpush1.msra.mxu0 %v2616
        %2624 = vmatprep.subr.mxu0 0.0
        %2625 = vmatpush1.msra.mxu0 0.0
        %2626 = vmatprep.subr.mxu0 0.0
        %2627 = vmatpush1.msra.mxu0 0.0
        %2628 = vmatprep.subr.mxu0 0.0
        %2629 = vmatpush1.msra.mxu0 0.0
        %2630 = vmatprep.subr.mxu0 0.0
        %2631 = vmatpush1.msra.mxu0 0.0
        %2632 = vmatprep.subr.mxu0 0.0
        %2633 = vmatpush1.msra.mxu0 0.0
        %2634 = vmatprep.subr.mxu0 0.0
        %2635 = vmatpush1.msra.mxu0 0.0
        %2636 = vmatprep.subr.mxu0 0.0
        %2637 = vmatpush1.msra.mxu0 0.0
        %2638 = vmatprep.subr.mxu0 0.0
        %2639 = vmatpush1.msra.mxu0 0.0
        %2640 = vmatprep.subr.mxu0 0.0
        %2641 = vmatpush1.msra.mxu0 0.0
        %2642 = vmatprep.subr.mxu0 0.0
        %2643 = vmatpush1.msra.mxu0 0.0
        %2644 = vmatprep.subr.mxu0 0.0
        %2645 = vmatpush1.msra.mxu0 0.0
        %2646 = vmatprep.subr.mxu0 0.0
        %2647 = vmatpush1.msra.mxu0 0.0
        %2648 = vmatprep.subr.mxu0 0.0
        %2649 = vmatpush1.msra.mxu0 0.0
        %2650 = vmatprep.subr.mxu0 0.0
        %2651 = vmatpush1.msra.mxu0 0.0
        %2652 = vmatprep.subr.mxu0 0.0
        %2653 = vmatpush1.msra.mxu0 0.0
        %2654 = vmatprep.subr.mxu0 0.0
        %2655 = vmatpush1.msra.mxu0 0.0
        %2656 = vmatprep.subr.mxu0 0.0
        %2657 = vmatpush1.msra.mxu0 0.0
        %2658 = vmatprep.subr.mxu0 0.0
        %2659 = vmatpush1.msra.mxu0 0.0
        %2660 = vmatprep.subr.mxu0 0.0
        %2661 = vmatpush1.msra.mxu0 0.0
        %2662 = vmatprep.subr.mxu0 0.0
        %2663 = vmatpush1.msra.mxu0 0.0
        %2664 = vmatprep.subr.mxu0 0.0
        %2665 = vmatpush1.msra.mxu0 0.0
        %2666 = vmatprep.subr.mxu0 0.0
        %2667 = vmatpush1.msra.mxu0 0.0
        %2668 = vmatprep.subr.mxu0 0.0
        %2669 = vmatpush1.msra.mxu0 0.0
        %2670 = vmatprep.subr.mxu0 0.0
        %2671 = vmatpush1.msra.mxu0 0.0
        %2672 = vmatprep.subr.mxu0 0.0
        %2673 = vmatpush1.msra.mxu0 0.0
        %2674 = vmatprep.subr.mxu0 0.0
        %2675 = vmatpush1.msra.mxu0 0.0
        %2676 = vmatprep.subr.mxu0 0.0
        %2677 = vmatpush1.msra.mxu0 0.0
        %2678 = vmatprep.subr.mxu0 0.0
        %2679 = vmatpush1.msra.mxu0 0.0
        %2680 = vmatprep.subr.mxu0 0.0
        %2681 = vmatpush1.msra.mxu0 0.0
        %2682 = vmatprep.subr.mxu0 0.0
        %2683 = vmatpush1.msra.mxu0 0.0
        %2684 = vmatprep.mubr.f32.mxu0 0.0
        %2685 = vmatmul.mubr.f32.gmra.mrb[0].mxu0 %v2618
        %v2686 = vpop.f32.mrb[0].mxu0
        %v2687 = vadd.f32 0.0, %v2686
        %v2688 = vpop.f32.mrb[0].mxu0
        %2689 = vdwg.mxu0
        %v2690 = vadd.f32 %v2612, %v2687
        %v2691 = vld [vmem:[#allocation5 + $0x6] sm:$0xf]
        %s2692 = scalar_lea.vmem [#allocation14], 128
        %v2693 = vld [vmem:[%s2692] sm:$0xff]
        %v2694 = vld [vmem:[%s2692 + $0x8] sm:$0xff]
        %v2696 = vsel %vm978, %v2691, 0
        %2698 = vmatprep.subr.mxu0 0.0
        %2699 = vmatpush1.msra.mxu0 %v2693
        %2700 = vmatprep.subr.mxu0 0.0
        %2701 = vmatpush1.msra.mxu0 %v2694
        %2702 = vmatprep.subr.mxu0 0.0
        %2703 = vmatpush1.msra.mxu0 0.0
        %2704 = vmatprep.subr.mxu0 0.0
        %2705 = vmatpush1.msra.mxu0 0.0
        %2706 = vmatprep.subr.mxu0 0.0
        %2707 = vmatpush1.msra.mxu0 0.0
        %2708 = vmatprep.subr.mxu0 0.0
        %2709 = vmatpush1.msra.mxu0 0.0
        %2710 = vmatprep.subr.mxu0 0.0
        %2711 = vmatpush1.msra.mxu0 0.0
        %2712 = vmatprep.subr.mxu0 0.0
        %2713 = vmatpush1.msra.mxu0 0.0
        %2714 = vmatprep.subr.mxu0 0.0
        %2715 = vmatpush1.msra.mxu0 0.0
        %2716 = vmatprep.subr.mxu0 0.0
        %2717 = vmatpush1.msra.mxu0 0.0
        %2718 = vmatprep.subr.mxu0 0.0
        %2719 = vmatpush1.msra.mxu0 0.0
        %2720 = vmatprep.subr.mxu0 0.0
        %2721 = vmatpush1.msra.mxu0 0.0
        %2722 = vmatprep.subr.mxu0 0.0
        %2723 = vmatpush1.msra.mxu0 0.0
        %2724 = vmatprep.subr.mxu0 0.0
        %2725 = vmatpush1.msra.mxu0 0.0
        %2726 = vmatprep.subr.mxu0 0.0
        %2727 = vmatpush1.msra.mxu0 0.0
        %2728 = vmatprep.subr.mxu0 0.0
        %2729 = vmatpush1.msra.mxu0 0.0
        %2730 = vmatprep.subr.mxu0 0.0
        %2731 = vmatpush1.msra.mxu0 0.0
        %2732 = vmatprep.subr.mxu0 0.0
        %2733 = vmatpush1.msra.mxu0 0.0
        %2734 = vmatprep.subr.mxu0 0.0
        %2735 = vmatpush1.msra.mxu0 0.0
        %2736 = vmatprep.subr.mxu0 0.0
        %2737 = vmatpush1.msra.mxu0 0.0
        %2738 = vmatprep.subr.mxu0 0.0
        %2739 = vmatpush1.msra.mxu0 0.0
        %2740 = vmatprep.subr.mxu0 0.0
        %2741 = vmatpush1.msra.mxu0 0.0
        %2742 = vmatprep.subr.mxu0 0.0
        %2743 = vmatpush1.msra.mxu0 0.0
        %2744 = vmatprep.subr.mxu0 0.0
        %2745 = vmatpush1.msra.mxu0 0.0
        %2746 = vmatprep.subr.mxu0 0.0
        %2747 = vmatpush1.msra.mxu0 0.0
        %2748 = vmatprep.subr.mxu0 0.0
        %2749 = vmatpush1.msra.mxu0 0.0
        %2750 = vmatprep.subr.mxu0 0.0
        %2751 = vmatpush1.msra.mxu0 0.0
        %2752 = vmatprep.subr.mxu0 0.0
        %2753 = vmatpush1.msra.mxu0 0.0
        %2754 = vmatprep.subr.mxu0 0.0
        %2755 = vmatpush1.msra.mxu0 0.0
        %2756 = vmatprep.subr.mxu0 0.0
        %2757 = vmatpush1.msra.mxu0 0.0
        %2758 = vmatprep.subr.mxu0 0.0
        %2759 = vmatpush1.msra.mxu0 0.0
        %2760 = vmatprep.subr.mxu0 0.0
        %2761 = vmatpush1.msra.mxu0 0.0
        %2762 = vmatprep.mubr.f32.mxu0 0.0
        %2763 = vmatmul.mubr.f32.gmra.mrb[0].mxu0 %v2696
        %v2764 = vpop.f32.mrb[0].mxu0
        %v2765 = vadd.f32 0.0, %v2764
        %v2766 = vpop.f32.mrb[0].mxu0
        %2767 = vdwg.mxu0
        %v2768 = vadd.f32 %v2690, %v2765
        %v2769 = vld [vmem:[#allocation5 + $0x7] sm:$0xf]
        %s2770 = scalar_lea.vmem [#allocation14], 144
        %v2771 = vld [vmem:[%s2770] sm:$0xff]
        %v2772 = vld [vmem:[%s2770 + $0x8] sm:$0xff]
        %v2774 = vsel %vm978, %v2769, 0
        %2776 = vmatprep.subr.mxu0 0.0
        %2777 = vmatpush1.msra.mxu0 %v2771
        %2778 = vmatprep.subr.mxu0 0.0
        %2779 = vmatpush1.msra.mxu0 %v2772
        %2780 = vmatprep.subr.mxu0 0.0
        %2781 = vmatpush1.msra.mxu0 0.0
        %2782 = vmatprep.subr.mxu0 0.0
        %2783 = vmatpush1.msra.mxu0 0.0
        %2784 = vmatprep.subr.mxu0 0.0
        %2785 = vmatpush1.msra.mxu0 0.0
        %2786 = vmatprep.subr.mxu0 0.0
        %2787 = vmatpush1.msra.mxu0 0.0
        %2788 = vmatprep.subr.mxu0 0.0
        %2789 = vmatpush1.msra.mxu0 0.0
        %2790 = vmatprep.subr.mxu0 0.0
        %2791 = vmatpush1.msra.mxu0 0.0
        %2792 = vmatprep.subr.mxu0 0.0
        %2793 = vmatpush1.msra.mxu0 0.0
        %2794 = vmatprep.subr.mxu0 0.0
        %2795 = vmatpush1.msra.mxu0 0.0
        %2796 = vmatprep.subr.mxu0 0.0
        %2797 = vmatpush1.msra.mxu0 0.0
        %2798 = vmatprep.subr.mxu0 0.0
        %2799 = vmatpush1.msra.mxu0 0.0
        %2800 = vmatprep.subr.mxu0 0.0
        %2801 = vmatpush1.msra.mxu0 0.0
        %2802 = vmatprep.subr.mxu0 0.0
        %2803 = vmatpush1.msra.mxu0 0.0
        %2804 = vmatprep.subr.mxu0 0.0
        %2805 = vmatpush1.msra.mxu0 0.0
        %2806 = vmatprep.subr.mxu0 0.0
        %2807 = vmatpush1.msra.mxu0 0.0
        %2808 = vmatprep.subr.mxu0 0.0
        %2809 = vmatpush1.msra.mxu0 0.0
        %2810 = vmatprep.subr.mxu0 0.0
        %2811 = vmatpush1.msra.mxu0 0.0
        %2812 = vmatprep.subr.mxu0 0.0
        %2813 = vmatpush1.msra.mxu0 0.0
        %2814 = vmatprep.subr.mxu0 0.0
        %2815 = vmatpush1.msra.mxu0 0.0
        %2816 = vmatprep.subr.mxu0 0.0
        %2817 = vmatpush1.msra.mxu0 0.0
        %2818 = vmatprep.subr.mxu0 0.0
        %2819 = vmatpush1.msra.mxu0 0.0
        %2820 = vmatprep.subr.mxu0 0.0
        %2821 = vmatpush1.msra.mxu0 0.0
        %2822 = vmatprep.subr.mxu0 0.0
        %2823 = vmatpush1.msra.mxu0 0.0
        %2824 = vmatprep.subr.mxu0 0.0
        %2825 = vmatpush1.msra.mxu0 0.0
        %2826 = vmatprep.subr.mxu0 0.0
        %2827 = vmatpush1.msra.mxu0 0.0
        %2828 = vmatprep.subr.mxu0 0.0
        %2829 = vmatpush1.msra.mxu0 0.0
        %2830 = vmatprep.subr.mxu0 0.0
        %2831 = vmatpush1.msra.mxu0 0.0
        %2832 = vmatprep.subr.mxu0 0.0
        %2833 = vmatpush1.msra.mxu0 0.0
        %2834 = vmatprep.subr.mxu0 0.0
        %2835 = vmatpush1.msra.mxu0 0.0
        %2836 = vmatprep.subr.mxu0 0.0
        %2837 = vmatpush1.msra.mxu0 0.0
        %2838 = vmatprep.subr.mxu0 0.0
        %2839 = vmatpush1.msra.mxu0 0.0
        %2840 = vmatprep.mubr.f32.mxu0 0.0
        %2841 = vmatmul.mubr.f32.gmra.mrb[0].mxu0 %v2774
        %v2842 = vpop.f32.mrb[0].mxu0
        %v2843 = vadd.f32 0.0, %v2842
        %v2844 = vpop.f32.mrb[0].mxu0
        %2845 = vdwg.mxu0
        %v2846 = vadd.f32 %v2768, %v2843
        %v2847 = vld [vmem:[#allocation5 + $0x8] sm:$0xf]
        %s2848 = scalar_lea.vmem [#allocation14], 160
        %v2849 = vld [vmem:[%s2848] sm:$0xff]
        %v2850 = vld [vmem:[%s2848 + $0x8] sm:$0xff]
        %v2852 = vsel %vm978, %v2847, 0
        %2854 = vmatprep.subr.mxu0 0.0
        %2855 = vmatpush1.msra.mxu0 %v2849
        %2856 = vmatprep.subr.mxu0 0.0
        %2857 = vmatpush1.msra.mxu0 %v2850
        %2858 = vmatprep.subr.mxu0 0.0
        %2859 = vmatpush1.msra.mxu0 0.0
        %2860 = vmatprep.subr.mxu0 0.0
        %2861 = vmatpush1.msra.mxu0 0.0
        %2862 = vmatprep.subr.mxu0 0.0
        %2863 = vmatpush1.msra.mxu0 0.0
        %2864 = vmatprep.subr.mxu0 0.0
        %2865 = vmatpush1.msra.mxu0 0.0
        %2866 = vmatprep.subr.mxu0 0.0
        %2867 = vmatpush1.msra.mxu0 0.0
        %2868 = vmatprep.subr.mxu0 0.0
        %2869 = vmatpush1.msra.mxu0 0.0
        %2870 = vmatprep.subr.mxu0 0.0
        %2871 = vmatpush1.msra.mxu0 0.0
        %2872 = vmatprep.subr.mxu0 0.0
        %2873 = vmatpush1.msra.mxu0 0.0
        %2874 = vmatprep.subr.mxu0 0.0
        %2875 = vmatpush1.msra.mxu0 0.0
        %2876 = vmatprep.subr.mxu0 0.0
        %2877 = vmatpush1.msra.mxu0 0.0
        %2878 = vmatprep.subr.mxu0 0.0
        %2879 = vmatpush1.msra.mxu0 0.0
        %2880 = vmatprep.subr.mxu0 0.0
        %2881 = vmatpush1.msra.mxu0 0.0
        %2882 = vmatprep.subr.mxu0 0.0
        %2883 = vmatpush1.msra.mxu0 0.0
        %2884 = vmatprep.subr.mxu0 0.0
        %2885 = vmatpush1.msra.mxu0 0.0
        %2886 = vmatprep.subr.mxu0 0.0
        %2887 = vmatpush1.msra.mxu0 0.0
        %2888 = vmatprep.subr.mxu0 0.0
        %2889 = vmatpush1.msra.mxu0 0.0
        %2890 = vmatprep.subr.mxu0 0.0
        %2891 = vmatpush1.msra.mxu0 0.0
        %2892 = vmatprep.subr.mxu0 0.0
        %2893 = vmatpush1.msra.mxu0 0.0
        %2894 = vmatprep.subr.mxu0 0.0
        %2895 = vmatpush1.msra.mxu0 0.0
        %2896 = vmatprep.subr.mxu0 0.0
        %2897 = vmatpush1.msra.mxu0 0.0
        %2898 = vmatprep.subr.mxu0 0.0
        %2899 = vmatpush1.msra.mxu0 0.0
        %2900 = vmatprep.subr.mxu0 0.0
        %2901 = vmatpush1.msra.mxu0 0.0
        %2902 = vmatprep.subr.mxu0 0.0
        %2903 = vmatpush1.msra.mxu0 0.0
        %2904 = vmatprep.subr.mxu0 0.0
        %2905 = vmatpush1.msra.mxu0 0.0
        %2906 = vmatprep.subr.mxu0 0.0
        %2907 = vmatpush1.msra.mxu0 0.0
        %2908 = vmatprep.subr.mxu0 0.0
        %2909 = vmatpush1.msra.mxu0 0.0
        %2910 = vmatprep.subr.mxu0 0.0
        %2911 = vmatpush1.msra.mxu0 0.0
        %2912 = vmatprep.subr.mxu0 0.0
        %2913 = vmatpush1.msra.mxu0 0.0
        %2914 = vmatprep.subr.mxu0 0.0
        %2915 = vmatpush1.msra.mxu0 0.0
        %2916 = vmatprep.subr.mxu0 0.0
        %2917 = vmatpush1.msra.mxu0 0.0
        %2918 = vmatprep.mubr.f32.mxu0 0.0
        %2919 = vmatmul.mubr.f32.gmra.mrb[0].mxu0 %v2852
        %v2920 = vpop.f32.mrb[0].mxu0
        %v2921 = vadd.f32 0.0, %v2920
        %v2922 = vpop.f32.mrb[0].mxu0
        %2923 = vdwg.mxu0
        %v2924 = vadd.f32 %v2846, %v2921
        %v2925 = vld [vmem:[#allocation5 + $0x9] sm:$0xf]
        %s2926 = scalar_lea.vmem [#allocation14], 176
        %v2927 = vld [vmem:[%s2926] sm:$0xff]
        %v2928 = vld [vmem:[%s2926 + $0x8] sm:$0xff]
        %v2930 = vsel %vm978, %v2925, 0
        %2932 = vmatprep.subr.mxu0 0.0
        %2933 = vmatpush1.msra.mxu0 %v2927
        %2934 = vmatprep.subr.mxu0 0.0
        %2935 = vmatpush1.msra.mxu0 %v2928
        %2936 = vmatprep.subr.mxu0 0.0
        %2937 = vmatpush1.msra.mxu0 0.0
        %2938 = vmatprep.subr.mxu0 0.0
        %2939 = vmatpush1.msra.mxu0 0.0
        %2940 = vmatprep.subr.mxu0 0.0
        %2941 = vmatpush1.msra.mxu0 0.0
        %2942 = vmatprep.subr.mxu0 0.0
        %2943 = vmatpush1.msra.mxu0 0.0
        %2944 = vmatprep.subr.mxu0 0.0
        %2945 = vmatpush1.msra.mxu0 0.0
        %2946 = vmatprep.subr.mxu0 0.0
        %2947 = vmatpush1.msra.mxu0 0.0
        %2948 = vmatprep.subr.mxu0 0.0
        %2949 = vmatpush1.msra.mxu0 0.0
        %2950 = vmatprep.subr.mxu0 0.0
        %2951 = vmatpush1.msra.mxu0 0.0
        %2952 = vmatprep.subr.mxu0 0.0
        %2953 = vmatpush1.msra.mxu0 0.0
        %2954 = vmatprep.subr.mxu0 0.0
        %2955 = vmatpush1.msra.mxu0 0.0
        %2956 = vmatprep.subr.mxu0 0.0
        %2957 = vmatpush1.msra.mxu0 0.0
        %2958 = vmatprep.subr.mxu0 0.0
        %2959 = vmatpush1.msra.mxu0 0.0
        %2960 = vmatprep.subr.mxu0 0.0
        %2961 = vmatpush1.msra.mxu0 0.0
        %2962 = vmatprep.subr.mxu0 0.0
        %2963 = vmatpush1.msra.mxu0 0.0
        %2964 = vmatprep.subr.mxu0 0.0
        %2965 = vmatpush1.msra.mxu0 0.0
        %2966 = vmatprep.subr.mxu0 0.0
        %2967 = vmatpush1.msra.mxu0 0.0
        %2968 = vmatprep.subr.mxu0 0.0
        %2969 = vmatpush1.msra.mxu0 0.0
        %2970 = vmatprep.subr.mxu0 0.0
        %2971 = vmatpush1.msra.mxu0 0.0
        %2972 = vmatprep.subr.mxu0 0.0
        %2973 = vmatpush1.msra.mxu0 0.0
        %2974 = vmatprep.subr.mxu0 0.0
        %2975 = vmatpush1.msra.mxu0 0.0
        %2976 = vmatprep.subr.mxu0 0.0
        %2977 = vmatpush1.msra.mxu0 0.0
        %2978 = vmatprep.subr.mxu0 0.0
        %2979 = vmatpush1.msra.mxu0 0.0
        %2980 = vmatprep.subr.mxu0 0.0
        %2981 = vmatpush1.msra.mxu0 0.0
        %2982 = vmatprep.subr.mxu0 0.0
        %2983 = vmatpush1.msra.mxu0 0.0
        %2984 = vmatprep.subr.mxu0 0.0
        %2985 = vmatpush1.msra.mxu0 0.0
        %2986 = vmatprep.subr.mxu0 0.0
        %2987 = vmatpush1.msra.mxu0 0.0
        %2988 = vmatprep.subr.mxu0 0.0
        %2989 = vmatpush1.msra.mxu0 0.0
        %2990 = vmatprep.subr.mxu0 0.0
        %2991 = vmatpush1.msra.mxu0 0.0
        %2992 = vmatprep.subr.mxu0 0.0
        %2993 = vmatpush1.msra.mxu0 0.0
        %2994 = vmatprep.subr.mxu0 0.0
        %2995 = vmatpush1.msra.mxu0 0.0
        %2996 = vmatprep.mubr.f32.mxu0 0.0
        %2997 = vmatmul.mubr.f32.gmra.mrb[0].mxu0 %v2930
        %v2998 = vpop.f32.mrb[0].mxu0
        %v2999 = vadd.f32 0.0, %v2998
        %v3000 = vpop.f32.mrb[0].mxu0
        %3001 = vdwg.mxu0
        %v3002 = vadd.f32 %v2924, %v2999
        %v3003 = vld [vmem:[#allocation5 + $0xa] sm:$0xf]
        %s3004 = scalar_lea.vmem [#allocation14], 192
        %v3005 = vld [vmem:[%s3004] sm:$0xff]
        %v3006 = vld [vmem:[%s3004 + $0x8] sm:$0xff]
        %v3008 = vsel %vm978, %v3003, 0
        %3010 = vmatprep.subr.mxu0 0.0
        %3011 = vmatpush1.msra.mxu0 %v3005
        %3012 = vmatprep.subr.mxu0 0.0
        %3013 = vmatpush1.msra.mxu0 %v3006
        %3014 = vmatprep.subr.mxu0 0.0
        %3015 = vmatpush1.msra.mxu0 0.0
        %3016 = vmatprep.subr.mxu0 0.0
        %3017 = vmatpush1.msra.mxu0 0.0
        %3018 = vmatprep.subr.mxu0 0.0
        %3019 = vmatpush1.msra.mxu0 0.0
        %3020 = vmatprep.subr.mxu0 0.0
        %3021 = vmatpush1.msra.mxu0 0.0
        %3022 = vmatprep.subr.mxu0 0.0
        %3023 = vmatpush1.msra.mxu0 0.0
        %3024 = vmatprep.subr.mxu0 0.0
        %3025 = vmatpush1.msra.mxu0 0.0
        %3026 = vmatprep.subr.mxu0 0.0
        %3027 = vmatpush1.msra.mxu0 0.0
        %3028 = vmatprep.subr.mxu0 0.0
        %3029 = vmatpush1.msra.mxu0 0.0
        %3030 = vmatprep.subr.mxu0 0.0
        %3031 = vmatpush1.msra.mxu0 0.0
        %3032 = vmatprep.subr.mxu0 0.0
        %3033 = vmatpush1.msra.mxu0 0.0
        %3034 = vmatprep.subr.mxu0 0.0
        %3035 = vmatpush1.msra.mxu0 0.0
        %3036 = vmatprep.subr.mxu0 0.0
        %3037 = vmatpush1.msra.mxu0 0.0
        %3038 = vmatprep.subr.mxu0 0.0
        %3039 = vmatpush1.msra.mxu0 0.0
        %3040 = vmatprep.subr.mxu0 0.0
        %3041 = vmatpush1.msra.mxu0 0.0
        %3042 = vmatprep.subr.mxu0 0.0
        %3043 = vmatpush1.msra.mxu0 0.0
        %3044 = vmatprep.subr.mxu0 0.0
        %3045 = vmatpush1.msra.mxu0 0.0
        %3046 = vmatprep.subr.mxu0 0.0
        %3047 = vmatpush1.msra.mxu0 0.0
        %3048 = vmatprep.subr.mxu0 0.0
        %3049 = vmatpush1.msra.mxu0 0.0
        %3050 = vmatprep.subr.mxu0 0.0
        %3051 = vmatpush1.msra.mxu0 0.0
        %3052 = vmatprep.subr.mxu0 0.0
        %3053 = vmatpush1.msra.mxu0 0.0
        %3054 = vmatprep.subr.mxu0 0.0
        %3055 = vmatpush1.msra.mxu0 0.0
        %3056 = vmatprep.subr.mxu0 0.0
        %3057 = vmatpush1.msra.mxu0 0.0
        %3058 = vmatprep.subr.mxu0 0.0
        %3059 = vmatpush1.msra.mxu0 0.0
        %3060 = vmatprep.subr.mxu0 0.0
        %3061 = vmatpush1.msra.mxu0 0.0
        %3062 = vmatprep.subr.mxu0 0.0
        %3063 = vmatpush1.msra.mxu0 0.0
        %3064 = vmatprep.subr.mxu0 0.0
        %3065 = vmatpush1.msra.mxu0 0.0
        %3066 = vmatprep.subr.mxu0 0.0
        %3067 = vmatpush1.msra.mxu0 0.0
        %3068 = vmatprep.subr.mxu0 0.0
        %3069 = vmatpush1.msra.mxu0 0.0
        %3070 = vmatprep.subr.mxu0 0.0
        %3071 = vmatpush1.msra.mxu0 0.0
        %3072 = vmatprep.subr.mxu0 0.0
        %3073 = vmatpush1.msra.mxu0 0.0
        %3074 = vmatprep.mubr.f32.mxu0 0.0
        %3075 = vmatmul.mubr.f32.gmra.mrb[0].mxu0 %v3008
        %v3076 = vpop.f32.mrb[0].mxu0
        %v3077 = vadd.f32 0.0, %v3076
        %v3078 = vpop.f32.mrb[0].mxu0
        %3079 = vdwg.mxu0
        %v3080 = vadd.f32 %v3002, %v3077
        %v3081 = vld [vmem:[#allocation5 + $0xb] sm:$0xf]
        %s3082 = scalar_lea.vmem [#allocation14], 208
        %v3083 = vld [vmem:[%s3082] sm:$0xff]
        %v3084 = vld [vmem:[%s3082 + $0x8] sm:$0xff]
        %v3086 = vsel %vm978, %v3081, 0
        %3088 = vmatprep.subr.mxu0 0.0
        %3089 = vmatpush1.msra.mxu0 %v3083
        %3090 = vmatprep.subr.mxu0 0.0
        %3091 = vmatpush1.msra.mxu0 %v3084
        %3092 = vmatprep.subr.mxu0 0.0
        %3093 = vmatpush1.msra.mxu0 0.0
        %3094 = vmatprep.subr.mxu0 0.0
        %3095 = vmatpush1.msra.mxu0 0.0
        %3096 = vmatprep.subr.mxu0 0.0
        %3097 = vmatpush1.msra.mxu0 0.0
        %3098 = vmatprep.subr.mxu0 0.0
        %3099 = vmatpush1.msra.mxu0 0.0
        %3100 = vmatprep.subr.mxu0 0.0
        %3101 = vmatpush1.msra.mxu0 0.0
        %3102 = vmatprep.subr.mxu0 0.0
        %3103 = vmatpush1.msra.mxu0 0.0
        %3104 = vmatprep.subr.mxu0 0.0
        %3105 = vmatpush1.msra.mxu0 0.0
        %3106 = vmatprep.subr.mxu0 0.0
        %3107 = vmatpush1.msra.mxu0 0.0
        %3108 = vmatprep.subr.mxu0 0.0
        %3109 = vmatpush1.msra.mxu0 0.0
        %3110 = vmatprep.subr.mxu0 0.0
        %3111 = vmatpush1.msra.mxu0 0.0
        %3112 = vmatprep.subr.mxu0 0.0
        %3113 = vmatpush1.msra.mxu0 0.0
        %3114 = vmatprep.subr.mxu0 0.0
        %3115 = vmatpush1.msra.mxu0 0.0
        %3116 = vmatprep.subr.mxu0 0.0
        %3117 = vmatpush1.msra.mxu0 0.0
        %3118 = vmatprep.subr.mxu0 0.0
        %3119 = vmatpush1.msra.mxu0 0.0
        %3120 = vmatprep.subr.mxu0 0.0
        %3121 = vmatpush1.msra.mxu0 0.0
        %3122 = vmatprep.subr.mxu0 0.0
        %3123 = vmatpush1.msra.mxu0 0.0
        %3124 = vmatprep.subr.mxu0 0.0
        %3125 = vmatpush1.msra.mxu0 0.0
        %3126 = vmatprep.subr.mxu0 0.0
        %3127 = vmatpush1.msra.mxu0 0.0
        %3128 = vmatprep.subr.mxu0 0.0
        %3129 = vmatpush1.msra.mxu0 0.0
        %3130 = vmatprep.subr.mxu0 0.0
        %3131 = vmatpush1.msra.mxu0 0.0
        %3132 = vmatprep.subr.mxu0 0.0
        %3133 = vmatpush1.msra.mxu0 0.0
        %3134 = vmatprep.subr.mxu0 0.0
        %3135 = vmatpush1.msra.mxu0 0.0
        %3136 = vmatprep.subr.mxu0 0.0
        %3137 = vmatpush1.msra.mxu0 0.0
        %3138 = vmatprep.subr.mxu0 0.0
        %3139 = vmatpush1.msra.mxu0 0.0
        %3140 = vmatprep.subr.mxu0 0.0
        %3141 = vmatpush1.msra.mxu0 0.0
        %3142 = vmatprep.subr.mxu0 0.0
        %3143 = vmatpush1.msra.mxu0 0.0
        %3144 = vmatprep.subr.mxu0 0.0
        %3145 = vmatpush1.msra.mxu0 0.0
        %3146 = vmatprep.subr.mxu0 0.0
        %3147 = vmatpush1.msra.mxu0 0.0
        %3148 = vmatprep.subr.mxu0 0.0
        %3149 = vmatpush1.msra.mxu0 0.0
        %3150 = vmatprep.subr.mxu0 0.0
        %3151 = vmatpush1.msra.mxu0 0.0
        %3152 = vmatprep.mubr.f32.mxu0 0.0
        %3153 = vmatmul.mubr.f32.gmra.mrb[0].mxu0 %v3086
        %v3154 = vpop.f32.mrb[0].mxu0
        %v3155 = vadd.f32 0.0, %v3154
        %v3156 = vpop.f32.mrb[0].mxu0
        %3157 = vdwg.mxu0
        %v3158 = vadd.f32 %v3080, %v3155
        %v3159 = vstv %s2069
        %v3160 = vadd.f32 %v3158, %v3159
        %v3161 = vxor.u32 %v3160, 2147483648
        %v3162 = vmul.f32 %v3161, 1.442695
        %v3163 = vpow.pop %v3162
        %v3164 = vadd.f32 %v3163, 1.0
        %v3165 = vrcp.pop %v3164
        %v3166 = vmul.f32 1.0, %v3165
        %s3167 = sld [smem:[#allocation20 + $0x2]]
        %v3168 = vld [vmem:[#allocation6 + $0x5] sm:$0xff]
        %v3169 = vld [vmem:[#allocation6 + $0xd] sm:$0xff]
        %v3170 = vld [vmem:[#allocation15] sm:$0xff]
        %v3171 = vld [vmem:[#allocation15 + $0x8] sm:$0xff]
        %v3172 = vld [vmem:[#allocation6 + $0x6] sm:$0xff]
        %v3173 = vld [vmem:[#allocation6 + $0xe] sm:$0xff]
        %s3174 = scalar_lea.vmem [#allocation15], 16
        %v3175 = vld [vmem:[%s3174] sm:$0xff]
        %v3176 = vld [vmem:[%s3174 + $0x8] sm:$0xff]
        %v3178 = vsel %vm978, %v3172, 0
        %v3181 = vsel %vm978, %v3173, 0
        %3183 = vmatprep.subr.mxu0 0.0
        %3184 = vmatpush1.msra.mxu0 %v3175
        %3185 = vmatprep.subr.mxu0 0.0
        %3186 = vmatpush1.msra.mxu0 %v3176
        %3187 = vmatprep.subr.mxu0 0.0
        %3188 = vmatpush1.msra.mxu0 0.0
        %3189 = vmatprep.subr.mxu0 0.0
        %3190 = vmatpush1.msra.mxu0 0.0
        %3191 = vmatprep.subr.mxu0 0.0
        %3192 = vmatpush1.msra.mxu0 0.0
        %3193 = vmatprep.subr.mxu0 0.0
        %3194 = vmatpush1.msra.mxu0 0.0
        %3195 = vmatprep.subr.mxu0 0.0
        %3196 = vmatpush1.msra.mxu0 0.0
        %3197 = vmatprep.subr.mxu0 0.0
        %3198 = vmatpush1.msra.mxu0 0.0
        %3199 = vmatprep.subr.mxu0 0.0
        %3200 = vmatpush1.msra.mxu0 0.0
        %3201 = vmatprep.subr.mxu0 0.0
        %3202 = vmatpush1.msra.mxu0 0.0
        %3203 = vmatprep.subr.mxu0 0.0
        %3204 = vmatpush1.msra.mxu0 0.0
        %3205 = vmatprep.subr.mxu0 0.0
        %3206 = vmatpush1.msra.mxu0 0.0
        %3207 = vmatprep.subr.mxu0 0.0
        %3208 = vmatpush1.msra.mxu0 0.0
        %3209 = vmatprep.subr.mxu0 0.0
        %3210 = vmatpush1.msra.mxu0 0.0
        %3211 = vmatprep.subr.mxu0 0.0
        %3212 = vmatpush1.msra.mxu0 0.0
        %3213 = vmatprep.subr.mxu0 0.0
        %3214 = vmatpush1.msra.mxu0 0.0
        %3215 = vmatprep.subr.mxu0 0.0
        %3216 = vmatpush1.msra.mxu0 0.0
        %3217 = vmatprep.subr.mxu0 0.0
        %3218 = vmatpush1.msra.mxu0 0.0
        %3219 = vmatprep.subr.mxu0 0.0
        %3220 = vmatpush1.msra.mxu0 0.0
        %3221 = vmatprep.subr.mxu0 0.0
        %3222 = vmatpush1.msra.mxu0 0.0
        %3223 = vmatprep.subr.mxu0 0.0
        %3224 = vmatpush1.msra.mxu0 0.0
        %3225 = vmatprep.subr.mxu0 0.0
        %3226 = vmatpush1.msra.mxu0 0.0
        %3227 = vmatprep.subr.mxu0 0.0
        %3228 = vmatpush1.msra.mxu0 0.0
        %3229 = vmatprep.subr.mxu0 0.0
        %3230 = vmatpush1.msra.mxu0 0.0
        %3231 = vmatprep.subr.mxu0 0.0
        %3232 = vmatpush1.msra.mxu0 0.0
        %3233 = vmatprep.subr.mxu0 0.0
        %3234 = vmatpush1.msra.mxu0 0.0
        %3235 = vmatprep.subr.mxu0 0.0
        %3236 = vmatpush1.msra.mxu0 0.0
        %3237 = vmatprep.subr.mxu0 0.0
        %3238 = vmatpush1.msra.mxu0 0.0
        %3239 = vmatprep.subr.mxu0 0.0
        %3240 = vmatpush1.msra.mxu0 0.0
        %3241 = vmatprep.subr.mxu0 0.0
        %3242 = vmatpush1.msra.mxu0 0.0
        %3243 = vmatprep.subr.mxu0 0.0
        %3244 = vmatpush1.msra.mxu0 0.0
        %3245 = vmatprep.subr.mxu0 0.0
        %3246 = vmatpush1.msra.mxu0 0.0
        %3247 = vmatprep.mubr.f32.mxu0 0.0
        %3248 = vmatmul.mubr.f32.gmra.mrb[0].mxu0 %v3178
        %v3249 = vpop.f32.mrb[0].mxu0
        %v3250 = vadd.f32 0.0, %v3249
        %v3251 = vpop.f32.mrb[0].mxu0
        %3252 = vmatprep.mubr.f32.mxu0 0.0
        %3253 = vmatmul.mubr.f32.gmra.mrb[0].mxu0 %v3181
        %v3254 = vpop.f32.mrb[0].mxu0
        %v3255 = vadd.f32 0.0, %v3254
        %v3256 = vpop.f32.mrb[0].mxu0
        %3257 = vdwg.mxu0
        %v3259 = vsel %vm978, %v3168, 0
        %v3262 = vsel %vm978, %v3169, 0
        %3264 = vmatprep.subr.mxu0 0.0
        %3265 = vmatpush1.msra.mxu0 %v3170
        %3266 = vmatprep.subr.mxu0 0.0
        %3267 = vmatpush1.msra.mxu0 %v3171
        %3268 = vmatprep.subr.mxu0 0.0
        %3269 = vmatpush1.msra.mxu0 0.0
        %3270 = vmatprep.subr.mxu0 0.0
        %3271 = vmatpush1.msra.mxu0 0.0
        %3272 = vmatprep.subr.mxu0 0.0
        %3273 = vmatpush1.msra.mxu0 0.0
        %3274 = vmatprep.subr.mxu0 0.0
        %3275 = vmatpush1.msra.mxu0 0.0
        %3276 = vmatprep.subr.mxu0 0.0
        %3277 = vmatpush1.msra.mxu0 0.0
        %3278 = vmatprep.subr.mxu0 0.0
        %3279 = vmatpush1.msra.mxu0 0.0
        %3280 = vmatprep.subr.mxu0 0.0
        %3281 = vmatpush1.msra.mxu0 0.0
        %3282 = vmatprep.subr.mxu0 0.0
        %3283 = vmatpush1.msra.mxu0 0.0
        %3284 = vmatprep.subr.mxu0 0.0
        %3285 = vmatpush1.msra.mxu0 0.0
        %3286 = vmatprep.subr.mxu0 0.0
        %3287 = vmatpush1.msra.mxu0 0.0
        %3288 = vmatprep.subr.mxu0 0.0
        %3289 = vmatpush1.msra.mxu0 0.0
        %3290 = vmatprep.subr.mxu0 0.0
        %3291 = vmatpush1.msra.mxu0 0.0
        %3292 = vmatprep.subr.mxu0 0.0
        %3293 = vmatpush1.msra.mxu0 0.0
        %3294 = vmatprep.subr.mxu0 0.0
        %3295 = vmatpush1.msra.mxu0 0.0
        %3296 = vmatprep.subr.mxu0 0.0
        %3297 = vmatpush1.msra.mxu0 0.0
        %3298 = vmatprep.subr.mxu0 0.0
        %3299 = vmatpush1.msra.mxu0 0.0
        %3300 = vmatprep.subr.mxu0 0.0
        %3301 = vmatpush1.msra.mxu0 0.0
        %3302 = vmatprep.subr.mxu0 0.0
        %3303 = vmatpush1.msra.mxu0 0.0
        %3304 = vmatprep.subr.mxu0 0.0
        %3305 = vmatpush1.msra.mxu0 0.0
        %3306 = vmatprep.subr.mxu0 0.0
        %3307 = vmatpush1.msra.mxu0 0.0
        %3308 = vmatprep.subr.mxu0 0.0
        %3309 = vmatpush1.msra.mxu0 0.0
        %3310 = vmatprep.subr.mxu0 0.0
        %3311 = vmatpush1.msra.mxu0 0.0
        %3312 = vmatprep.subr.mxu0 0.0
        %3313 = vmatpush1.msra.mxu0 0.0
        %3314 = vmatprep.subr.mxu0 0.0
        %3315 = vmatpush1.msra.mxu0 0.0
        %3316 = vmatprep.subr.mxu0 0.0
        %3317 = vmatpush1.msra.mxu0 0.0
        %3318 = vmatprep.subr.mxu0 0.0
        %3319 = vmatpush1.msra.mxu0 0.0
        %3320 = vmatprep.subr.mxu0 0.0
        %3321 = vmatpush1.msra.mxu0 0.0
        %3322 = vmatprep.subr.mxu0 0.0
        %3323 = vmatpush1.msra.mxu0 0.0
        %3324 = vmatprep.subr.mxu0 0.0
        %3325 = vmatpush1.msra.mxu0 0.0
        %3326 = vmatprep.subr.mxu0 0.0
        %3327 = vmatpush1.msra.mxu0 0.0
        %3328 = vmatprep.mubr.f32.mxu0 0.0
        %3329 = vmatmul.mubr.f32.gmra.mrb[0].mxu0 %v3259
        %v3330 = vpop.f32.mrb[0].mxu0
        %v3331 = vadd.f32 %v3250, %v3330
        %v3332 = vpop.f32.mrb[0].mxu0
        %3333 = vmatprep.mubr.f32.mxu0 0.0
        %3334 = vmatmul.mubr.f32.gmra.mrb[0].mxu0 %v3262
        %v3335 = vpop.f32.mrb[0].mxu0
        %v3336 = vadd.f32 %v3255, %v3335
        %v3337 = vpop.f32.mrb[0].mxu0
        %3338 = vdwg.mxu0
        %v3339 = vld [vmem:[#allocation6 + $0x7] sm:$0xff]
        %v3340 = vld [vmem:[#allocation6 + $0xf] sm:$0xff]
        %s3341 = scalar_lea.vmem [#allocation15], 32
        %v3342 = vld [vmem:[%s3341] sm:$0xff]
        %v3343 = vld [vmem:[%s3341 + $0x8] sm:$0xff]
        %v3345 = vsel %vm978, %v3339, 0
        %v3348 = vsel %vm978, %v3340, 0
        %3350 = vmatprep.subr.mxu0 0.0
        %3351 = vmatpush1.msra.mxu0 %v3342
        %3352 = vmatprep.subr.mxu0 0.0
        %3353 = vmatpush1.msra.mxu0 %v3343
        %3354 = vmatprep.subr.mxu0 0.0
        %3355 = vmatpush1.msra.mxu0 0.0
        %3356 = vmatprep.subr.mxu0 0.0
        %3357 = vmatpush1.msra.mxu0 0.0
        %3358 = vmatprep.subr.mxu0 0.0
        %3359 = vmatpush1.msra.mxu0 0.0
        %3360 = vmatprep.subr.mxu0 0.0
        %3361 = vmatpush1.msra.mxu0 0.0
        %3362 = vmatprep.subr.mxu0 0.0
        %3363 = vmatpush1.msra.mxu0 0.0
        %3364 = vmatprep.subr.mxu0 0.0
        %3365 = vmatpush1.msra.mxu0 0.0
        %3366 = vmatprep.subr.mxu0 0.0
        %3367 = vmatpush1.msra.mxu0 0.0
        %3368 = vmatprep.subr.mxu0 0.0
        %3369 = vmatpush1.msra.mxu0 0.0
        %3370 = vmatprep.subr.mxu0 0.0
        %3371 = vmatpush1.msra.mxu0 0.0
        %3372 = vmatprep.subr.mxu0 0.0
        %3373 = vmatpush1.msra.mxu0 0.0
        %3374 = vmatprep.subr.mxu0 0.0
        %3375 = vmatpush1.msra.mxu0 0.0
        %3376 = vmatprep.subr.mxu0 0.0
        %3377 = vmatpush1.msra.mxu0 0.0
        %3378 = vmatprep.subr.mxu0 0.0
        %3379 = vmatpush1.msra.mxu0 0.0
        %3380 = vmatprep.subr.mxu0 0.0
        %3381 = vmatpush1.msra.mxu0 0.0
        %3382 = vmatprep.subr.mxu0 0.0
        %3383 = vmatpush1.msra.mxu0 0.0
        %3384 = vmatprep.subr.mxu0 0.0
        %3385 = vmatpush1.msra.mxu0 0.0
        %3386 = vmatprep.subr.mxu0 0.0
        %3387 = vmatpush1.msra.mxu0 0.0
        %3388 = vmatprep.subr.mxu0 0.0
        %3389 = vmatpush1.msra.mxu0 0.0
        %3390 = vmatprep.subr.mxu0 0.0
        %3391 = vmatpush1.msra.mxu0 0.0
        %3392 = vmatprep.subr.mxu0 0.0
        %3393 = vmatpush1.msra.mxu0 0.0
        %3394 = vmatprep.subr.mxu0 0.0
        %3395 = vmatpush1.msra.mxu0 0.0
        %3396 = vmatprep.subr.mxu0 0.0
        %3397 = vmatpush1.msra.mxu0 0.0
        %3398 = vmatprep.subr.mxu0 0.0
        %3399 = vmatpush1.msra.mxu0 0.0
        %3400 = vmatprep.subr.mxu0 0.0
        %3401 = vmatpush1.msra.mxu0 0.0
        %3402 = vmatprep.subr.mxu0 0.0
        %3403 = vmatpush1.msra.mxu0 0.0
        %3404 = vmatprep.subr.mxu0 0.0
        %3405 = vmatpush1.msra.mxu0 0.0
        %3406 = vmatprep.subr.mxu0 0.0
        %3407 = vmatpush1.msra.mxu0 0.0
        %3408 = vmatprep.subr.mxu0 0.0
        %3409 = vmatpush1.msra.mxu0 0.0
        %3410 = vmatprep.subr.mxu0 0.0
        %3411 = vmatpush1.msra.mxu0 0.0
        %3412 = vmatprep.subr.mxu0 0.0
        %3413 = vmatpush1.msra.mxu0 0.0
        %3414 = vmatprep.mubr.f32.mxu0 0.0
        %3415 = vmatmul.mubr.f32.gmra.mrb[0].mxu0 %v3345
        %v3416 = vpop.f32.mrb[0].mxu0
        %v3417 = vadd.f32 0.0, %v3416
        %v3418 = vpop.f32.mrb[0].mxu0
        %3419 = vmatprep.mubr.f32.mxu0 0.0
        %3420 = vmatmul.mubr.f32.gmra.mrb[0].mxu0 %v3348
        %v3421 = vpop.f32.mrb[0].mxu0
        %v3422 = vadd.f32 0.0, %v3421
        %v3423 = vpop.f32.mrb[0].mxu0
        %3424 = vdwg.mxu0
        %v3425 = vadd.f32 %v3331, %v3417
        %v3426 = vadd.f32 %v3336, %v3422
        %v3427 = vld [vmem:[#allocation6 + $0x8] sm:$0xff]
        %v3428 = vld [vmem:[#allocation6 + $0x10] sm:$0xff]
        %s3429 = scalar_lea.vmem [#allocation15], 48
        %v3430 = vld [vmem:[%s3429] sm:$0xff]
        %v3431 = vld [vmem:[%s3429 + $0x8] sm:$0xff]
        %v3433 = vsel %vm978, %v3427, 0
        %v3436 = vsel %vm978, %v3428, 0
        %3438 = vmatprep.subr.mxu0 0.0
        %3439 = vmatpush1.msra.mxu0 %v3430
        %3440 = vmatprep.subr.mxu0 0.0
        %3441 = vmatpush1.msra.mxu0 %v3431
        %3442 = vmatprep.subr.mxu0 0.0
        %3443 = vmatpush1.msra.mxu0 0.0
        %3444 = vmatprep.subr.mxu0 0.0
        %3445 = vmatpush1.msra.mxu0 0.0
        %3446 = vmatprep.subr.mxu0 0.0
        %3447 = vmatpush1.msra.mxu0 0.0
        %3448 = vmatprep.subr.mxu0 0.0
        %3449 = vmatpush1.msra.mxu0 0.0
        %3450 = vmatprep.subr.mxu0 0.0
        %3451 = vmatpush1.msra.mxu0 0.0
        %3452 = vmatprep.subr.mxu0 0.0
        %3453 = vmatpush1.msra.mxu0 0.0
        %3454 = vmatprep.subr.mxu0 0.0
        %3455 = vmatpush1.msra.mxu0 0.0
        %3456 = vmatprep.subr.mxu0 0.0
        %3457 = vmatpush1.msra.mxu0 0.0
        %3458 = vmatprep.subr.mxu0 0.0
        %3459 = vmatpush1.msra.mxu0 0.0
        %3460 = vmatprep.subr.mxu0 0.0
        %3461 = vmatpush1.msra.mxu0 0.0
        %3462 = vmatprep.subr.mxu0 0.0
        %3463 = vmatpush1.msra.mxu0 0.0
        %3464 = vmatprep.subr.mxu0 0.0
        %3465 = vmatpush1.msra.mxu0 0.0
        %3466 = vmatprep.subr.mxu0 0.0
        %3467 = vmatpush1.msra.mxu0 0.0
        %3468 = vmatprep.subr.mxu0 0.0
        %3469 = vmatpush1.msra.mxu0 0.0
        %3470 = vmatprep.subr.mxu0 0.0
        %3471 = vmatpush1.msra.mxu0 0.0
        %3472 = vmatprep.subr.mxu0 0.0
        %3473 = vmatpush1.msra.mxu0 0.0
        %3474 = vmatprep.subr.mxu0 0.0
        %3475 = vmatpush1.msra.mxu0 0.0
        %3476 = vmatprep.subr.mxu0 0.0
        %3477 = vmatpush1.msra.mxu0 0.0
        %3478 = vmatprep.subr.mxu0 0.0
        %3479 = vmatpush1.msra.mxu0 0.0
        %3480 = vmatprep.subr.mxu0 0.0
        %3481 = vmatpush1.msra.mxu0 0.0
        %3482 = vmatprep.subr.mxu0 0.0
        %3483 = vmatpush1.msra.mxu0 0.0
        %3484 = vmatprep.subr.mxu0 0.0
        %3485 = vmatpush1.msra.mxu0 0.0
        %3486 = vmatprep.subr.mxu0 0.0
        %3487 = vmatpush1.msra.mxu0 0.0
        %3488 = vmatprep.subr.mxu0 0.0
        %3489 = vmatpush1.msra.mxu0 0.0
        %3490 = vmatprep.subr.mxu0 0.0
        %3491 = vmatpush1.msra.mxu0 0.0
        %3492 = vmatprep.subr.mxu0 0.0
        %3493 = vmatpush1.msra.mxu0 0.0
        %3494 = vmatprep.subr.mxu0 0.0
        %3495 = vmatpush1.msra.mxu0 0.0
        %3496 = vmatprep.subr.mxu0 0.0
        %3497 = vmatpush1.msra.mxu0 0.0
        %3498 = vmatprep.subr.mxu0 0.0
        %3499 = vmatpush1.msra.mxu0 0.0
        %3500 = vmatprep.subr.mxu0 0.0
        %3501 = vmatpush1.msra.mxu0 0.0
        %3502 = vmatprep.mubr.f32.mxu0 0.0
        %3503 = vmatmul.mubr.f32.gmra.mrb[0].mxu0 %v3433
        %v3504 = vpop.f32.mrb[0].mxu0
        %v3505 = vadd.f32 0.0, %v3504
        %v3506 = vpop.f32.mrb[0].mxu0
        %3507 = vmatprep.mubr.f32.mxu0 0.0
        %3508 = vmatmul.mubr.f32.gmra.mrb[0].mxu0 %v3436
        %v3509 = vpop.f32.mrb[0].mxu0
        %v3510 = vadd.f32 0.0, %v3509
        %v3511 = vpop.f32.mrb[0].mxu0
        %3512 = vdwg.mxu0
        %v3513 = vadd.f32 %v3425, %v3505
        %v3514 = vadd.f32 %v3426, %v3510
        %v3515 = vld [vmem:[#allocation6 + $0x9] sm:$0xff]
        %v3516 = vld [vmem:[#allocation6 + $0x11] sm:$0xff]
        %s3517 = scalar_lea.vmem [#allocation15], 64
        %v3518 = vld [vmem:[%s3517] sm:$0xff]
        %v3519 = vld [vmem:[%s3517 + $0x8] sm:$0xff]
        %v3521 = vsel %vm978, %v3515, 0
        %v3524 = vsel %vm978, %v3516, 0
        %3526 = vmatprep.subr.mxu0 0.0
        %3527 = vmatpush1.msra.mxu0 %v3518
        %3528 = vmatprep.subr.mxu0 0.0
        %3529 = vmatpush1.msra.mxu0 %v3519
        %3530 = vmatprep.subr.mxu0 0.0
        %3531 = vmatpush1.msra.mxu0 0.0
        %3532 = vmatprep.subr.mxu0 0.0
        %3533 = vmatpush1.msra.mxu0 0.0
        %3534 = vmatprep.subr.mxu0 0.0
        %3535 = vmatpush1.msra.mxu0 0.0
        %3536 = vmatprep.subr.mxu0 0.0
        %3537 = vmatpush1.msra.mxu0 0.0
        %3538 = vmatprep.subr.mxu0 0.0
        %3539 = vmatpush1.msra.mxu0 0.0
        %3540 = vmatprep.subr.mxu0 0.0
        %3541 = vmatpush1.msra.mxu0 0.0
        %3542 = vmatprep.subr.mxu0 0.0
        %3543 = vmatpush1.msra.mxu0 0.0
        %3544 = vmatprep.subr.mxu0 0.0
        %3545 = vmatpush1.msra.mxu0 0.0
        %3546 = vmatprep.subr.mxu0 0.0
        %3547 = vmatpush1.msra.mxu0 0.0
        %3548 = vmatprep.subr.mxu0 0.0
        %3549 = vmatpush1.msra.mxu0 0.0
        %3550 = vmatprep.subr.mxu0 0.0
        %3551 = vmatpush1.msra.mxu0 0.0
        %3552 = vmatprep.subr.mxu0 0.0
        %3553 = vmatpush1.msra.mxu0 0.0
        %3554 = vmatprep.subr.mxu0 0.0
        %3555 = vmatpush1.msra.mxu0 0.0
        %3556 = vmatprep.subr.mxu0 0.0
        %3557 = vmatpush1.msra.mxu0 0.0
        %3558 = vmatprep.subr.mxu0 0.0
        %3559 = vmatpush1.msra.mxu0 0.0
        %3560 = vmatprep.subr.mxu0 0.0
        %3561 = vmatpush1.msra.mxu0 0.0
        %3562 = vmatprep.subr.mxu0 0.0
        %3563 = vmatpush1.msra.mxu0 0.0
        %3564 = vmatprep.subr.mxu0 0.0
        %3565 = vmatpush1.msra.mxu0 0.0
        %3566 = vmatprep.subr.mxu0 0.0
        %3567 = vmatpush1.msra.mxu0 0.0
        %3568 = vmatprep.subr.mxu0 0.0
        %3569 = vmatpush1.msra.mxu0 0.0
        %3570 = vmatprep.subr.mxu0 0.0
        %3571 = vmatpush1.msra.mxu0 0.0
        %3572 = vmatprep.subr.mxu0 0.0
        %3573 = vmatpush1.msra.mxu0 0.0
        %3574 = vmatprep.subr.mxu0 0.0
        %3575 = vmatpush1.msra.mxu0 0.0
        %3576 = vmatprep.subr.mxu0 0.0
        %3577 = vmatpush1.msra.mxu0 0.0
        %3578 = vmatprep.subr.mxu0 0.0
        %3579 = vmatpush1.msra.mxu0 0.0
        %3580 = vmatprep.subr.mxu0 0.0
        %3581 = vmatpush1.msra.mxu0 0.0
        %3582 = vmatprep.subr.mxu0 0.0
        %3583 = vmatpush1.msra.mxu0 0.0
        %3584 = vmatprep.subr.mxu0 0.0
        %3585 = vmatpush1.msra.mxu0 0.0
        %3586 = vmatprep.subr.mxu0 0.0
        %3587 = vmatpush1.msra.mxu0 0.0
        %3588 = vmatprep.subr.mxu0 0.0
        %3589 = vmatpush1.msra.mxu0 0.0
        %3590 = vmatprep.mubr.f32.mxu0 0.0
        %3591 = vmatmul.mubr.f32.gmra.mrb[0].mxu0 %v3521
        %v3592 = vpop.f32.mrb[0].mxu0
        %v3593 = vadd.f32 0.0, %v3592
        %v3594 = vpop.f32.mrb[0].mxu0
        %3595 = vmatprep.mubr.f32.mxu0 0.0
        %3596 = vmatmul.mubr.f32.gmra.mrb[0].mxu0 %v3524
        %v3597 = vpop.f32.mrb[0].mxu0
        %v3598 = vadd.f32 0.0, %v3597
        %v3599 = vpop.f32.mrb[0].mxu0
        %3600 = vdwg.mxu0
        %v3601 = vadd.f32 %v3513, %v3593
        %v3602 = vadd.f32 %v3514, %v3598
        %v3603 = vld [vmem:[#allocation6 + $0xa] sm:$0xff]
        %v3604 = vld [vmem:[#allocation6 + $0x12] sm:$0xff]
        %s3605 = scalar_lea.vmem [#allocation15], 80
        %v3606 = vld [vmem:[%s3605] sm:$0xff]
        %v3607 = vld [vmem:[%s3605 + $0x8] sm:$0xff]
        %v3609 = vsel %vm978, %v3603, 0
        %v3612 = vsel %vm978, %v3604, 0
        %3614 = vmatprep.subr.mxu0 0.0
        %3615 = vmatpush1.msra.mxu0 %v3606
        %3616 = vmatprep.subr.mxu0 0.0
        %3617 = vmatpush1.msra.mxu0 %v3607
        %3618 = vmatprep.subr.mxu0 0.0
        %3619 = vmatpush1.msra.mxu0 0.0
        %3620 = vmatprep.subr.mxu0 0.0
        %3621 = vmatpush1.msra.mxu0 0.0
        %3622 = vmatprep.subr.mxu0 0.0
        %3623 = vmatpush1.msra.mxu0 0.0
        %3624 = vmatprep.subr.mxu0 0.0
        %3625 = vmatpush1.msra.mxu0 0.0
        %3626 = vmatprep.subr.mxu0 0.0
        %3627 = vmatpush1.msra.mxu0 0.0
        %3628 = vmatprep.subr.mxu0 0.0
        %3629 = vmatpush1.msra.mxu0 0.0
        %3630 = vmatprep.subr.mxu0 0.0
        %3631 = vmatpush1.msra.mxu0 0.0
        %3632 = vmatprep.subr.mxu0 0.0
        %3633 = vmatpush1.msra.mxu0 0.0
        %3634 = vmatprep.subr.mxu0 0.0
        %3635 = vmatpush1.msra.mxu0 0.0
        %3636 = vmatprep.subr.mxu0 0.0
        %3637 = vmatpush1.msra.mxu0 0.0
        %3638 = vmatprep.subr.mxu0 0.0
        %3639 = vmatpush1.msra.mxu0 0.0
        %3640 = vmatprep.subr.mxu0 0.0
        %3641 = vmatpush1.msra.mxu0 0.0
        %3642 = vmatprep.subr.mxu0 0.0
        %3643 = vmatpush1.msra.mxu0 0.0
        %3644 = vmatprep.subr.mxu0 0.0
        %3645 = vmatpush1.msra.mxu0 0.0
        %3646 = vmatprep.subr.mxu0 0.0
        %3647 = vmatpush1.msra.mxu0 0.0
        %3648 = vmatprep.subr.mxu0 0.0
        %3649 = vmatpush1.msra.mxu0 0.0
        %3650 = vmatprep.subr.mxu0 0.0
        %3651 = vmatpush1.msra.mxu0 0.0
        %3652 = vmatprep.subr.mxu0 0.0
        %3653 = vmatpush1.msra.mxu0 0.0
        %3654 = vmatprep.subr.mxu0 0.0
        %3655 = vmatpush1.msra.mxu0 0.0
        %3656 = vmatprep.subr.mxu0 0.0
        %3657 = vmatpush1.msra.mxu0 0.0
        %3658 = vmatprep.subr.mxu0 0.0
        %3659 = vmatpush1.msra.mxu0 0.0
        %3660 = vmatprep.subr.mxu0 0.0
        %3661 = vmatpush1.msra.mxu0 0.0
        %3662 = vmatprep.subr.mxu0 0.0
        %3663 = vmatpush1.msra.mxu0 0.0
        %3664 = vmatprep.subr.mxu0 0.0
        %3665 = vmatpush1.msra.mxu0 0.0
        %3666 = vmatprep.subr.mxu0 0.0
        %3667 = vmatpush1.msra.mxu0 0.0
        %3668 = vmatprep.subr.mxu0 0.0
        %3669 = vmatpush1.msra.mxu0 0.0
        %3670 = vmatprep.subr.mxu0 0.0
        %3671 = vmatpush1.msra.mxu0 0.0
        %3672 = vmatprep.subr.mxu0 0.0
        %3673 = vmatpush1.msra.mxu0 0.0
        %3674 = vmatprep.subr.mxu0 0.0
        %3675 = vmatpush1.msra.mxu0 0.0
        %3676 = vmatprep.subr.mxu0 0.0
        %3677 = vmatpush1.msra.mxu0 0.0
        %3678 = vmatprep.mubr.f32.mxu0 0.0
        %3679 = vmatmul.mubr.f32.gmra.mrb[0].mxu0 %v3609
        %v3680 = vpop.f32.mrb[0].mxu0
        %v3681 = vadd.f32 0.0, %v3680
        %v3682 = vpop.f32.mrb[0].mxu0
        %3683 = vmatprep.mubr.f32.mxu0 0.0
        %3684 = vmatmul.mubr.f32.gmra.mrb[0].mxu0 %v3612
        %v3685 = vpop.f32.mrb[0].mxu0
        %v3686 = vadd.f32 0.0, %v3685
        %v3687 = vpop.f32.mrb[0].mxu0
        %3688 = vdwg.mxu0
        %v3689 = vadd.f32 %v3601, %v3681
        %v3690 = vadd.f32 %v3602, %v3686
        %v3691 = vld [vmem:[#allocation6 + $0xb] sm:$0xff]
        %v3692 = vld [vmem:[#allocation6 + $0x13] sm:$0xff]
        %s3693 = scalar_lea.vmem [#allocation15], 96
        %v3694 = vld [vmem:[%s3693] sm:$0xff]
        %v3695 = vld [vmem:[%s3693 + $0x8] sm:$0xff]
        %v3697 = vsel %vm978, %v3691, 0
        %v3700 = vsel %vm978, %v3692, 0
        %3702 = vmatprep.subr.mxu0 0.0
        %3703 = vmatpush1.msra.mxu0 %v3694
        %3704 = vmatprep.subr.mxu0 0.0
        %3705 = vmatpush1.msra.mxu0 %v3695
        %3706 = vmatprep.subr.mxu0 0.0
        %3707 = vmatpush1.msra.mxu0 0.0
        %3708 = vmatprep.subr.mxu0 0.0
        %3709 = vmatpush1.msra.mxu0 0.0
        %3710 = vmatprep.subr.mxu0 0.0
        %3711 = vmatpush1.msra.mxu0 0.0
        %3712 = vmatprep.subr.mxu0 0.0
        %3713 = vmatpush1.msra.mxu0 0.0
        %3714 = vmatprep.subr.mxu0 0.0
        %3715 = vmatpush1.msra.mxu0 0.0
        %3716 = vmatprep.subr.mxu0 0.0
        %3717 = vmatpush1.msra.mxu0 0.0
        %3718 = vmatprep.subr.mxu0 0.0
        %3719 = vmatpush1.msra.mxu0 0.0
        %3720 = vmatprep.subr.mxu0 0.0
        %3721 = vmatpush1.msra.mxu0 0.0
        %3722 = vmatprep.subr.mxu0 0.0
        %3723 = vmatpush1.msra.mxu0 0.0
        %3724 = vmatprep.subr.mxu0 0.0
        %3725 = vmatpush1.msra.mxu0 0.0
        %3726 = vmatprep.subr.mxu0 0.0
        %3727 = vmatpush1.msra.mxu0 0.0
        %3728 = vmatprep.subr.mxu0 0.0
        %3729 = vmatpush1.msra.mxu0 0.0
        %3730 = vmatprep.subr.mxu0 0.0
        %3731 = vmatpush1.msra.mxu0 0.0
        %3732 = vmatprep.subr.mxu0 0.0
        %3733 = vmatpush1.msra.mxu0 0.0
        %3734 = vmatprep.subr.mxu0 0.0
        %3735 = vmatpush1.msra.mxu0 0.0
        %3736 = vmatprep.subr.mxu0 0.0
        %3737 = vmatpush1.msra.mxu0 0.0
        %3738 = vmatprep.subr.mxu0 0.0
        %3739 = vmatpush1.msra.mxu0 0.0
        %3740 = vmatprep.subr.mxu0 0.0
        %3741 = vmatpush1.msra.mxu0 0.0
        %3742 = vmatprep.subr.mxu0 0.0
        %3743 = vmatpush1.msra.mxu0 0.0
        %3744 = vmatprep.subr.mxu0 0.0
        %3745 = vmatpush1.msra.mxu0 0.0
        %3746 = vmatprep.subr.mxu0 0.0
        %3747 = vmatpush1.msra.mxu0 0.0
        %3748 = vmatprep.subr.mxu0 0.0
        %3749 = vmatpush1.msra.mxu0 0.0
        %3750 = vmatprep.subr.mxu0 0.0
        %3751 = vmatpush1.msra.mxu0 0.0
        %3752 = vmatprep.subr.mxu0 0.0
        %3753 = vmatpush1.msra.mxu0 0.0
        %3754 = vmatprep.subr.mxu0 0.0
        %3755 = vmatpush1.msra.mxu0 0.0
        %3756 = vmatprep.subr.mxu0 0.0
        %3757 = vmatpush1.msra.mxu0 0.0
        %3758 = vmatprep.subr.mxu0 0.0
        %3759 = vmatpush1.msra.mxu0 0.0
        %3760 = vmatprep.subr.mxu0 0.0
        %3761 = vmatpush1.msra.mxu0 0.0
        %3762 = vmatprep.subr.mxu0 0.0
        %3763 = vmatpush1.msra.mxu0 0.0
        %3764 = vmatprep.subr.mxu0 0.0
        %3765 = vmatpush1.msra.mxu0 0.0
        %3766 = vmatprep.mubr.f32.mxu0 0.0
        %3767 = vmatmul.mubr.f32.gmra.mrb[0].mxu0 %v3697
        %v3768 = vpop.f32.mrb[0].mxu0
        %v3769 = vadd.f32 0.0, %v3768
        %v3770 = vpop.f32.mrb[0].mxu0
        %3771 = vmatprep.mubr.f32.mxu0 0.0
        %3772 = vmatmul.mubr.f32.gmra.mrb[0].mxu0 %v3700
        %v3773 = vpop.f32.mrb[0].mxu0
        %v3774 = vadd.f32 0.0, %v3773
        %v3775 = vpop.f32.mrb[0].mxu0
        %3776 = vdwg.mxu0
        %v3777 = vadd.f32 %v3689, %v3769
        %v3778 = vadd.f32 %v3690, %v3774
        %v3779 = vld [vmem:[#allocation7 + $0x5] sm:$0xff]
        %v3780 = vld [vmem:[#allocation7 + $0xd] sm:$0xff]
        %s3781 = scalar_lea.vmem [#allocation15], 112
        %v3782 = vld [vmem:[%s3781] sm:$0xff]
        %v3783 = vld [vmem:[%s3781 + $0x8] sm:$0xff]
        %v3785 = vsel %vm978, %v3779, 0
        %v3788 = vsel %vm978, %v3780, 0
        %3790 = vmatprep.subr.mxu0 0.0
        %3791 = vmatpush1.msra.mxu0 %v3782
        %3792 = vmatprep.subr.mxu0 0.0
        %3793 = vmatpush1.msra.mxu0 %v3783
        %3794 = vmatprep.subr.mxu0 0.0
        %3795 = vmatpush1.msra.mxu0 0.0
        %3796 = vmatprep.subr.mxu0 0.0
        %3797 = vmatpush1.msra.mxu0 0.0
        %3798 = vmatprep.subr.mxu0 0.0
        %3799 = vmatpush1.msra.mxu0 0.0
        %3800 = vmatprep.subr.mxu0 0.0
        %3801 = vmatpush1.msra.mxu0 0.0
        %3802 = vmatprep.subr.mxu0 0.0
        %3803 = vmatpush1.msra.mxu0 0.0
        %3804 = vmatprep.subr.mxu0 0.0
        %3805 = vmatpush1.msra.mxu0 0.0
        %3806 = vmatprep.subr.mxu0 0.0
        %3807 = vmatpush1.msra.mxu0 0.0
        %3808 = vmatprep.subr.mxu0 0.0
        %3809 = vmatpush1.msra.mxu0 0.0
        %3810 = vmatprep.subr.mxu0 0.0
        %3811 = vmatpush1.msra.mxu0 0.0
        %3812 = vmatprep.subr.mxu0 0.0
        %3813 = vmatpush1.msra.mxu0 0.0
        %3814 = vmatprep.subr.mxu0 0.0
        %3815 = vmatpush1.msra.mxu0 0.0
        %3816 = vmatprep.subr.mxu0 0.0
        %3817 = vmatpush1.msra.mxu0 0.0
        %3818 = vmatprep.subr.mxu0 0.0
        %3819 = vmatpush1.msra.mxu0 0.0
        %3820 = vmatprep.subr.mxu0 0.0
        %3821 = vmatpush1.msra.mxu0 0.0
        %3822 = vmatprep.subr.mxu0 0.0
        %3823 = vmatpush1.msra.mxu0 0.0
        %3824 = vmatprep.subr.mxu0 0.0
        %3825 = vmatpush1.msra.mxu0 0.0
        %3826 = vmatprep.subr.mxu0 0.0
        %3827 = vmatpush1.msra.mxu0 0.0
        %3828 = vmatprep.subr.mxu0 0.0
        %3829 = vmatpush1.msra.mxu0 0.0
        %3830 = vmatprep.subr.mxu0 0.0
        %3831 = vmatpush1.msra.mxu0 0.0
        %3832 = vmatprep.subr.mxu0 0.0
        %3833 = vmatpush1.msra.mxu0 0.0
        %3834 = vmatprep.subr.mxu0 0.0
        %3835 = vmatpush1.msra.mxu0 0.0
        %3836 = vmatprep.subr.mxu0 0.0
        %3837 = vmatpush1.msra.mxu0 0.0
        %3838 = vmatprep.subr.mxu0 0.0
        %3839 = vmatpush1.msra.mxu0 0.0
        %3840 = vmatprep.subr.mxu0 0.0
        %3841 = vmatpush1.msra.mxu0 0.0
        %3842 = vmatprep.subr.mxu0 0.0
        %3843 = vmatpush1.msra.mxu0 0.0
        %3844 = vmatprep.subr.mxu0 0.0
        %3845 = vmatpush1.msra.mxu0 0.0
        %3846 = vmatprep.subr.mxu0 0.0
        %3847 = vmatpush1.msra.mxu0 0.0
        %3848 = vmatprep.subr.mxu0 0.0
        %3849 = vmatpush1.msra.mxu0 0.0
        %3850 = vmatprep.subr.mxu0 0.0
        %3851 = vmatpush1.msra.mxu0 0.0
        %3852 = vmatprep.subr.mxu0 0.0
        %3853 = vmatpush1.msra.mxu0 0.0
        %3854 = vmatprep.mubr.f32.mxu0 0.0
        %3855 = vmatmul.mubr.f32.gmra.mrb[0].mxu0 %v3785
        %v3856 = vpop.f32.mrb[0].mxu0
        %v3857 = vadd.f32 0.0, %v3856
        %v3858 = vpop.f32.mrb[0].mxu0
        %3859 = vmatprep.mubr.f32.mxu0 0.0
        %3860 = vmatmul.mubr.f32.gmra.mrb[0].mxu0 %v3788
        %v3861 = vpop.f32.mrb[0].mxu0
        %v3862 = vadd.f32 0.0, %v3861
        %v3863 = vpop.f32.mrb[0].mxu0
        %3864 = vdwg.mxu0
        %v3865 = vadd.f32 %v3777, %v3857
        %v3866 = vadd.f32 %v3778, %v3862
        %v3867 = vld [vmem:[#allocation7 + $0x6] sm:$0xff]
        %v3868 = vld [vmem:[#allocation7 + $0xe] sm:$0xff]
        %s3869 = scalar_lea.vmem [#allocation15], 128
        %v3870 = vld [vmem:[%s3869] sm:$0xff]
        %v3871 = vld [vmem:[%s3869 + $0x8] sm:$0xff]
        %v3873 = vsel %vm978, %v3867, 0
        %v3876 = vsel %vm978, %v3868, 0
        %3878 = vmatprep.subr.mxu0 0.0
        %3879 = vmatpush1.msra.mxu0 %v3870
        %3880 = vmatprep.subr.mxu0 0.0
        %3881 = vmatpush1.msra.mxu0 %v3871
        %3882 = vmatprep.subr.mxu0 0.0
        %3883 = vmatpush1.msra.mxu0 0.0
        %3884 = vmatprep.subr.mxu0 0.0
        %3885 = vmatpush1.msra.mxu0 0.0
        %3886 = vmatprep.subr.mxu0 0.0
        %3887 = vmatpush1.msra.mxu0 0.0
        %3888 = vmatprep.subr.mxu0 0.0
        %3889 = vmatpush1.msra.mxu0 0.0
        %3890 = vmatprep.subr.mxu0 0.0
        %3891 = vmatpush1.msra.mxu0 0.0
        %3892 = vmatprep.subr.mxu0 0.0
        %3893 = vmatpush1.msra.mxu0 0.0
        %3894 = vmatprep.subr.mxu0 0.0
        %3895 = vmatpush1.msra.mxu0 0.0
        %3896 = vmatprep.subr.mxu0 0.0
        %3897 = vmatpush1.msra.mxu0 0.0
        %3898 = vmatprep.subr.mxu0 0.0
        %3899 = vmatpush1.msra.mxu0 0.0
        %3900 = vmatprep.subr.mxu0 0.0
        %3901 = vmatpush1.msra.mxu0 0.0
        %3902 = vmatprep.subr.mxu0 0.0
        %3903 = vmatpush1.msra.mxu0 0.0
        %3904 = vmatprep.subr.mxu0 0.0
        %3905 = vmatpush1.msra.mxu0 0.0
        %3906 = vmatprep.subr.mxu0 0.0
        %3907 = vmatpush1.msra.mxu0 0.0
        %3908 = vmatprep.subr.mxu0 0.0
        %3909 = vmatpush1.msra.mxu0 0.0
        %3910 = vmatprep.subr.mxu0 0.0
        %3911 = vmatpush1.msra.mxu0 0.0
        %3912 = vmatprep.subr.mxu0 0.0
        %3913 = vmatpush1.msra.mxu0 0.0
        %3914 = vmatprep.subr.mxu0 0.0
        %3915 = vmatpush1.msra.mxu0 0.0
        %3916 = vmatprep.subr.mxu0 0.0
        %3917 = vmatpush1.msra.mxu0 0.0
        %3918 = vmatprep.subr.mxu0 0.0
        %3919 = vmatpush1.msra.mxu0 0.0
        %3920 = vmatprep.subr.mxu0 0.0
        %3921 = vmatpush1.msra.mxu0 0.0
        %3922 = vmatprep.subr.mxu0 0.0
        %3923 = vmatpush1.msra.mxu0 0.0
        %3924 = vmatprep.subr.mxu0 0.0
        %3925 = vmatpush1.msra.mxu0 0.0
        %3926 = vmatprep.subr.mxu0 0.0
        %3927 = vmatpush1.msra.mxu0 0.0
        %3928 = vmatprep.subr.mxu0 0.0
        %3929 = vmatpush1.msra.mxu0 0.0
        %3930 = vmatprep.subr.mxu0 0.0
        %3931 = vmatpush1.msra.mxu0 0.0
        %3932 = vmatprep.subr.mxu0 0.0
        %3933 = vmatpush1.msra.mxu0 0.0
        %3934 = vmatprep.subr.mxu0 0.0
        %3935 = vmatpush1.msra.mxu0 0.0
        %3936 = vmatprep.subr.mxu0 0.0
        %3937 = vmatpush1.msra.mxu0 0.0
        %3938 = vmatprep.subr.mxu0 0.0
        %3939 = vmatpush1.msra.mxu0 0.0
        %3940 = vmatprep.subr.mxu0 0.0
        %3941 = vmatpush1.msra.mxu0 0.0
        %3942 = vmatprep.mubr.f32.mxu0 0.0
        %3943 = vmatmul.mubr.f32.gmra.mrb[0].mxu0 %v3873
        %v3944 = vpop.f32.mrb[0].mxu0
        %v3945 = vadd.f32 0.0, %v3944
        %v3946 = vpop.f32.mrb[0].mxu0
        %3947 = vmatprep.mubr.f32.mxu0 0.0
        %3948 = vmatmul.mubr.f32.gmra.mrb[0].mxu0 %v3876
        %v3949 = vpop.f32.mrb[0].mxu0
        %v3950 = vadd.f32 0.0, %v3949
        %v3951 = vpop.f32.mrb[0].mxu0
        %3952 = vdwg.mxu0
        %v3953 = vadd.f32 %v3865, %v3945
        %v3954 = vadd.f32 %v3866, %v3950
        %v3955 = vld [vmem:[#allocation7 + $0x7] sm:$0xff]
        %v3956 = vld [vmem:[#allocation7 + $0xf] sm:$0xff]
        %s3957 = scalar_lea.vmem [#allocation15], 144
        %v3958 = vld [vmem:[%s3957] sm:$0xff]
        %v3959 = vld [vmem:[%s3957 + $0x8] sm:$0xff]
        %v3961 = vsel %vm978, %v3955, 0
        %v3964 = vsel %vm978, %v3956, 0
        %3966 = vmatprep.subr.mxu0 0.0
        %3967 = vmatpush1.msra.mxu0 %v3958
        %3968 = vmatprep.subr.mxu0 0.0
        %3969 = vmatpush1.msra.mxu0 %v3959
        %3970 = vmatprep.subr.mxu0 0.0
        %3971 = vmatpush1.msra.mxu0 0.0
        %3972 = vmatprep.subr.mxu0 0.0
        %3973 = vmatpush1.msra.mxu0 0.0
        %3974 = vmatprep.subr.mxu0 0.0
        %3975 = vmatpush1.msra.mxu0 0.0
        %3976 = vmatprep.subr.mxu0 0.0
        %3977 = vmatpush1.msra.mxu0 0.0
        %3978 = vmatprep.subr.mxu0 0.0
        %3979 = vmatpush1.msra.mxu0 0.0
        %3980 = vmatprep.subr.mxu0 0.0
        %3981 = vmatpush1.msra.mxu0 0.0
        %3982 = vmatprep.subr.mxu0 0.0
        %3983 = vmatpush1.msra.mxu0 0.0
        %3984 = vmatprep.subr.mxu0 0.0
        %3985 = vmatpush1.msra.mxu0 0.0
        %3986 = vmatprep.subr.mxu0 0.0
        %3987 = vmatpush1.msra.mxu0 0.0
        %3988 = vmatprep.subr.mxu0 0.0
        %3989 = vmatpush1.msra.mxu0 0.0
        %3990 = vmatprep.subr.mxu0 0.0
        %3991 = vmatpush1.msra.mxu0 0.0
        %3992 = vmatprep.subr.mxu0 0.0
        %3993 = vmatpush1.msra.mxu0 0.0
        %3994 = vmatprep.subr.mxu0 0.0
        %3995 = vmatpush1.msra.mxu0 0.0
        %3996 = vmatprep.subr.mxu0 0.0
        %3997 = vmatpush1.msra.mxu0 0.0
        %3998 = vmatprep.subr.mxu0 0.0
        %3999 = vmatpush1.msra.mxu0 0.0
        %4000 = vmatprep.subr.mxu0 0.0
        %4001 = vmatpush1.msra.mxu0 0.0
        %4002 = vmatprep.subr.mxu0 0.0
        %4003 = vmatpush1.msra.mxu0 0.0
        %4004 = vmatprep.subr.mxu0 0.0
        %4005 = vmatpush1.msra.mxu0 0.0
        %4006 = vmatprep.subr.mxu0 0.0
        %4007 = vmatpush1.msra.mxu0 0.0
        %4008 = vmatprep.subr.mxu0 0.0
        %4009 = vmatpush1.msra.mxu0 0.0
        %4010 = vmatprep.subr.mxu0 0.0
        %4011 = vmatpush1.msra.mxu0 0.0
        %4012 = vmatprep.subr.mxu0 0.0
        %4013 = vmatpush1.msra.mxu0 0.0
        %4014 = vmatprep.subr.mxu0 0.0
        %4015 = vmatpush1.msra.mxu0 0.0
        %4016 = vmatprep.subr.mxu0 0.0
        %4017 = vmatpush1.msra.mxu0 0.0
        %4018 = vmatprep.subr.mxu0 0.0
        %4019 = vmatpush1.msra.mxu0 0.0
        %4020 = vmatprep.subr.mxu0 0.0
        %4021 = vmatpush1.msra.mxu0 0.0
        %4022 = vmatprep.subr.mxu0 0.0
        %4023 = vmatpush1.msra.mxu0 0.0
        %4024 = vmatprep.subr.mxu0 0.0
        %4025 = vmatpush1.msra.mxu0 0.0
        %4026 = vmatprep.subr.mxu0 0.0
        %4027 = vmatpush1.msra.mxu0 0.0
        %4028 = vmatprep.subr.mxu0 0.0
        %4029 = vmatpush1.msra.mxu0 0.0
        %4030 = vmatprep.mubr.f32.mxu0 0.0
        %4031 = vmatmul.mubr.f32.gmra.mrb[0].mxu0 %v3961
        %v4032 = vpop.f32.mrb[0].mxu0
        %v4033 = vadd.f32 0.0, %v4032
        %v4034 = vpop.f32.mrb[0].mxu0
        %4035 = vmatprep.mubr.f32.mxu0 0.0
        %4036 = vmatmul.mubr.f32.gmra.mrb[0].mxu0 %v3964
        %v4037 = vpop.f32.mrb[0].mxu0
        %v4038 = vadd.f32 0.0, %v4037
        %v4039 = vpop.f32.mrb[0].mxu0
        %4040 = vdwg.mxu0
        %v4041 = vadd.f32 %v3953, %v4033
        %v4042 = vadd.f32 %v3954, %v4038
        %v4043 = vld [vmem:[#allocation7 + $0x8] sm:$0xff]
        %v4044 = vld [vmem:[#allocation7 + $0x10] sm:$0xff]
        %s4045 = scalar_lea.vmem [#allocation15], 160
        %v4046 = vld [vmem:[%s4045] sm:$0xff]
        %v4047 = vld [vmem:[%s4045 + $0x8] sm:$0xff]
        %v4049 = vsel %vm978, %v4043, 0
        %v4052 = vsel %vm978, %v4044, 0
        %4054 = vmatprep.subr.mxu0 0.0
        %4055 = vmatpush1.msra.mxu0 %v4046
        %4056 = vmatprep.subr.mxu0 0.0
        %4057 = vmatpush1.msra.mxu0 %v4047
        %4058 = vmatprep.subr.mxu0 0.0
        %4059 = vmatpush1.msra.mxu0 0.0
        %4060 = vmatprep.subr.mxu0 0.0
        %4061 = vmatpush1.msra.mxu0 0.0
        %4062 = vmatprep.subr.mxu0 0.0
        %4063 = vmatpush1.msra.mxu0 0.0
        %4064 = vmatprep.subr.mxu0 0.0
        %4065 = vmatpush1.msra.mxu0 0.0
        %4066 = vmatprep.subr.mxu0 0.0
        %4067 = vmatpush1.msra.mxu0 0.0
        %4068 = vmatprep.subr.mxu0 0.0
        %4069 = vmatpush1.msra.mxu0 0.0
        %4070 = vmatprep.subr.mxu0 0.0
        %4071 = vmatpush1.msra.mxu0 0.0
        %4072 = vmatprep.subr.mxu0 0.0
        %4073 = vmatpush1.msra.mxu0 0.0
        %4074 = vmatprep.subr.mxu0 0.0
        %4075 = vmatpush1.msra.mxu0 0.0
        %4076 = vmatprep.subr.mxu0 0.0
        %4077 = vmatpush1.msra.mxu0 0.0
        %4078 = vmatprep.subr.mxu0 0.0
        %4079 = vmatpush1.msra.mxu0 0.0
        %4080 = vmatprep.subr.mxu0 0.0
        %4081 = vmatpush1.msra.mxu0 0.0
        %4082 = vmatprep.subr.mxu0 0.0
        %4083 = vmatpush1.msra.mxu0 0.0
        %4084 = vmatprep.subr.mxu0 0.0
        %4085 = vmatpush1.msra.mxu0 0.0
        %4086 = vmatprep.subr.mxu0 0.0
        %4087 = vmatpush1.msra.mxu0 0.0
        %4088 = vmatprep.subr.mxu0 0.0
        %4089 = vmatpush1.msra.mxu0 0.0
        %4090 = vmatprep.subr.mxu0 0.0
        %4091 = vmatpush1.msra.mxu0 0.0
        %4092 = vmatprep.subr.mxu0 0.0
        %4093 = vmatpush1.msra.mxu0 0.0
        %4094 = vmatprep.subr.mxu0 0.0
        %4095 = vmatpush1.msra.mxu0 0.0
        %4096 = vmatprep.subr.mxu0 0.0
        %4097 = vmatpush1.msra.mxu0 0.0
        %4098 = vmatprep.subr.mxu0 0.0
        %4099 = vmatpush1.msra.mxu0 0.0
        %4100 = vmatprep.subr.mxu0 0.0
        %4101 = vmatpush1.msra.mxu0 0.0
        %4102 = vmatprep.subr.mxu0 0.0
        %4103 = vmatpush1.msra.mxu0 0.0
        %4104 = vmatprep.subr.mxu0 0.0
        %4105 = vmatpush1.msra.mxu0 0.0
        %4106 = vmatprep.subr.mxu0 0.0
        %4107 = vmatpush1.msra.mxu0 0.0
        %4108 = vmatprep.subr.mxu0 0.0
        %4109 = vmatpush1.msra.mxu0 0.0
        %4110 = vmatprep.subr.mxu0 0.0
        %4111 = vmatpush1.msra.mxu0 0.0
        %4112 = vmatprep.subr.mxu0 0.0
        %4113 = vmatpush1.msra.mxu0 0.0
        %4114 = vmatprep.subr.mxu0 0.0
        %4115 = vmatpush1.msra.mxu0 0.0
        %4116 = vmatprep.subr.mxu0 0.0
        %4117 = vmatpush1.msra.mxu0 0.0
        %4118 = vmatprep.mubr.f32.mxu0 0.0
        %4119 = vmatmul.mubr.f32.gmra.mrb[0].mxu0 %v4049
        %v4120 = vpop.f32.mrb[0].mxu0
        %v4121 = vadd.f32 0.0, %v4120
        %v4122 = vpop.f32.mrb[0].mxu0
        %4123 = vmatprep.mubr.f32.mxu0 0.0
        %4124 = vmatmul.mubr.f32.gmra.mrb[0].mxu0 %v4052
        %v4125 = vpop.f32.mrb[0].mxu0
        %v4126 = vadd.f32 0.0, %v4125
        %v4127 = vpop.f32.mrb[0].mxu0
        %4128 = vdwg.mxu0
        %v4129 = vadd.f32 %v4041, %v4121
        %v4130 = vadd.f32 %v4042, %v4126
        %v4131 = vld [vmem:[#allocation7 + $0x9] sm:$0xff]
        %v4132 = vld [vmem:[#allocation7 + $0x11] sm:$0xff]
        %s4133 = scalar_lea.vmem [#allocation15], 176
        %v4134 = vld [vmem:[%s4133] sm:$0xff]
        %v4135 = vld [vmem:[%s4133 + $0x8] sm:$0xff]
        %v4137 = vsel %vm978, %v4131, 0
        %v4140 = vsel %vm978, %v4132, 0
        %4142 = vmatprep.subr.mxu0 0.0
        %4143 = vmatpush1.msra.mxu0 %v4134
        %4144 = vmatprep.subr.mxu0 0.0
        %4145 = vmatpush1.msra.mxu0 %v4135
        %4146 = vmatprep.subr.mxu0 0.0
        %4147 = vmatpush1.msra.mxu0 0.0
        %4148 = vmatprep.subr.mxu0 0.0
        %4149 = vmatpush1.msra.mxu0 0.0
        %4150 = vmatprep.subr.mxu0 0.0
        %4151 = vmatpush1.msra.mxu0 0.0
        %4152 = vmatprep.subr.mxu0 0.0
        %4153 = vmatpush1.msra.mxu0 0.0
        %4154 = vmatprep.subr.mxu0 0.0
        %4155 = vmatpush1.msra.mxu0 0.0
        %4156 = vmatprep.subr.mxu0 0.0
        %4157 = vmatpush1.msra.mxu0 0.0
        %4158 = vmatprep.subr.mxu0 0.0
        %4159 = vmatpush1.msra.mxu0 0.0
        %4160 = vmatprep.subr.mxu0 0.0
        %4161 = vmatpush1.msra.mxu0 0.0
        %4162 = vmatprep.subr.mxu0 0.0
        %4163 = vmatpush1.msra.mxu0 0.0
        %4164 = vmatprep.subr.mxu0 0.0
        %4165 = vmatpush1.msra.mxu0 0.0
        %4166 = vmatprep.subr.mxu0 0.0
        %4167 = vmatpush1.msra.mxu0 0.0
        %4168 = vmatprep.subr.mxu0 0.0
        %4169 = vmatpush1.msra.mxu0 0.0
        %4170 = vmatprep.subr.mxu0 0.0
        %4171 = vmatpush1.msra.mxu0 0.0
        %4172 = vmatprep.subr.mxu0 0.0
        %4173 = vmatpush1.msra.mxu0 0.0
        %4174 = vmatprep.subr.mxu0 0.0
        %4175 = vmatpush1.msra.mxu0 0.0
        %4176 = vmatprep.subr.mxu0 0.0
        %4177 = vmatpush1.msra.mxu0 0.0
        %4178 = vmatprep.subr.mxu0 0.0
        %4179 = vmatpush1.msra.mxu0 0.0
        %4180 = vmatprep.subr.mxu0 0.0
        %4181 = vmatpush1.msra.mxu0 0.0
        %4182 = vmatprep.subr.mxu0 0.0
        %4183 = vmatpush1.msra.mxu0 0.0
        %4184 = vmatprep.subr.mxu0 0.0
        %4185 = vmatpush1.msra.mxu0 0.0
        %4186 = vmatprep.subr.mxu0 0.0
        %4187 = vmatpush1.msra.mxu0 0.0
        %4188 = vmatprep.subr.mxu0 0.0
        %4189 = vmatpush1.msra.mxu0 0.0
        %4190 = vmatprep.subr.mxu0 0.0
        %4191 = vmatpush1.msra.mxu0 0.0
        %4192 = vmatprep.subr.mxu0 0.0
        %4193 = vmatpush1.msra.mxu0 0.0
        %4194 = vmatprep.subr.mxu0 0.0
        %4195 = vmatpush1.msra.mxu0 0.0
        %4196 = vmatprep.subr.mxu0 0.0
        %4197 = vmatpush1.msra.mxu0 0.0
        %4198 = vmatprep.subr.mxu0 0.0
        %4199 = vmatpush1.msra.mxu0 0.0
        %4200 = vmatprep.subr.mxu0 0.0
        %4201 = vmatpush1.msra.mxu0 0.0
        %4202 = vmatprep.subr.mxu0 0.0
        %4203 = vmatpush1.msra.mxu0 0.0
        %4204 = vmatprep.subr.mxu0 0.0
        %4205 = vmatpush1.msra.mxu0 0.0
        %4206 = vmatprep.mubr.f32.mxu0 0.0
        %4207 = vmatmul.mubr.f32.gmra.mrb[0].mxu0 %v4137
        %v4208 = vpop.f32.mrb[0].mxu0
        %v4209 = vadd.f32 0.0, %v4208
        %v4210 = vpop.f32.mrb[0].mxu0
        %4211 = vmatprep.mubr.f32.mxu0 0.0
        %4212 = vmatmul.mubr.f32.gmra.mrb[0].mxu0 %v4140
        %v4213 = vpop.f32.mrb[0].mxu0
        %v4214 = vadd.f32 0.0, %v4213
        %v4215 = vpop.f32.mrb[0].mxu0
        %4216 = vdwg.mxu0
        %v4217 = vadd.f32 %v4129, %v4209
        %v4218 = vadd.f32 %v4130, %v4214
        %v4219 = vld [vmem:[#allocation7 + $0xa] sm:$0xff]
        %v4220 = vld [vmem:[#allocation7 + $0x12] sm:$0xff]
        %s4221 = scalar_lea.vmem [#allocation15], 192
        %v4222 = vld [vmem:[%s4221] sm:$0xff]
        %v4223 = vld [vmem:[%s4221 + $0x8] sm:$0xff]
        %v4225 = vsel %vm978, %v4219, 0
        %v4228 = vsel %vm978, %v4220, 0
        %4230 = vmatprep.subr.mxu0 0.0
        %4231 = vmatpush1.msra.mxu0 %v4222
        %4232 = vmatprep.subr.mxu0 0.0
        %4233 = vmatpush1.msra.mxu0 %v4223
        %4234 = vmatprep.subr.mxu0 0.0
        %4235 = vmatpush1.msra.mxu0 0.0
        %4236 = vmatprep.subr.mxu0 0.0
        %4237 = vmatpush1.msra.mxu0 0.0
        %4238 = vmatprep.subr.mxu0 0.0
        %4239 = vmatpush1.msra.mxu0 0.0
        %4240 = vmatprep.subr.mxu0 0.0
        %4241 = vmatpush1.msra.mxu0 0.0
        %4242 = vmatprep.subr.mxu0 0.0
        %4243 = vmatpush1.msra.mxu0 0.0
        %4244 = vmatprep.subr.mxu0 0.0
        %4245 = vmatpush1.msra.mxu0 0.0
        %4246 = vmatprep.subr.mxu0 0.0
        %4247 = vmatpush1.msra.mxu0 0.0
        %4248 = vmatprep.subr.mxu0 0.0
        %4249 = vmatpush1.msra.mxu0 0.0
        %4250 = vmatprep.subr.mxu0 0.0
        %4251 = vmatpush1.msra.mxu0 0.0
        %4252 = vmatprep.subr.mxu0 0.0
        %4253 = vmatpush1.msra.mxu0 0.0
        %4254 = vmatprep.subr.mxu0 0.0
        %4255 = vmatpush1.msra.mxu0 0.0
        %4256 = vmatprep.subr.mxu0 0.0
        %4257 = vmatpush1.msra.mxu0 0.0
        %4258 = vmatprep.subr.mxu0 0.0
        %4259 = vmatpush1.msra.mxu0 0.0
        %4260 = vmatprep.subr.mxu0 0.0
        %4261 = vmatpush1.msra.mxu0 0.0
        %4262 = vmatprep.subr.mxu0 0.0
        %4263 = vmatpush1.msra.mxu0 0.0
        %4264 = vmatprep.subr.mxu0 0.0
        %4265 = vmatpush1.msra.mxu0 0.0
        %4266 = vmatprep.subr.mxu0 0.0
        %4267 = vmatpush1.msra.mxu0 0.0
        %4268 = vmatprep.subr.mxu0 0.0
        %4269 = vmatpush1.msra.mxu0 0.0
        %4270 = vmatprep.subr.mxu0 0.0
        %4271 = vmatpush1.msra.mxu0 0.0
        %4272 = vmatprep.subr.mxu0 0.0
        %4273 = vmatpush1.msra.mxu0 0.0
        %4274 = vmatprep.subr.mxu0 0.0
        %4275 = vmatpush1.msra.mxu0 0.0
        %4276 = vmatprep.subr.mxu0 0.0
        %4277 = vmatpush1.msra.mxu0 0.0
        %4278 = vmatprep.subr.mxu0 0.0
        %4279 = vmatpush1.msra.mxu0 0.0
        %4280 = vmatprep.subr.mxu0 0.0
        %4281 = vmatpush1.msra.mxu0 0.0
        %4282 = vmatprep.subr.mxu0 0.0
        %4283 = vmatpush1.msra.mxu0 0.0
        %4284 = vmatprep.subr.mxu0 0.0
        %4285 = vmatpush1.msra.mxu0 0.0
        %4286 = vmatprep.subr.mxu0 0.0
        %4287 = vmatpush1.msra.mxu0 0.0
        %4288 = vmatprep.subr.mxu0 0.0
        %4289 = vmatpush1.msra.mxu0 0.0
        %4290 = vmatprep.subr.mxu0 0.0
        %4291 = vmatpush1.msra.mxu0 0.0
        %4292 = vmatprep.subr.mxu0 0.0
        %4293 = vmatpush1.msra.mxu0 0.0
        %4294 = vmatprep.mubr.f32.mxu0 0.0
        %4295 = vmatmul.mubr.f32.gmra.mrb[0].mxu0 %v4225
        %v4296 = vpop.f32.mrb[0].mxu0
        %v4297 = vadd.f32 0.0, %v4296
        %v4298 = vpop.f32.mrb[0].mxu0
        %4299 = vmatprep.mubr.f32.mxu0 0.0
        %4300 = vmatmul.mubr.f32.gmra.mrb[0].mxu0 %v4228
        %v4301 = vpop.f32.mrb[0].mxu0
        %v4302 = vadd.f32 0.0, %v4301
        %v4303 = vpop.f32.mrb[0].mxu0
        %4304 = vdwg.mxu0
        %v4305 = vadd.f32 %v4217, %v4297
        %v4306 = vadd.f32 %v4218, %v4302
        %v4307 = vld [vmem:[#allocation7 + $0xb] sm:$0xff]
        %v4308 = vld [vmem:[#allocation7 + $0x13] sm:$0xff]
        %s4309 = scalar_lea.vmem [#allocation15], 208
        %v4310 = vld [vmem:[%s4309] sm:$0xff]
        %v4311 = vld [vmem:[%s4309 + $0x8] sm:$0xff]
        %v4313 = vsel %vm978, %v4307, 0
        %v4316 = vsel %vm978, %v4308, 0
        %4318 = vmatprep.subr.mxu0 0.0
        %4319 = vmatpush1.msra.mxu0 %v4310
        %4320 = vmatprep.subr.mxu0 0.0
        %4321 = vmatpush1.msra.mxu0 %v4311
        %4322 = vmatprep.subr.mxu0 0.0
        %4323 = vmatpush1.msra.mxu0 0.0
        %4324 = vmatprep.subr.mxu0 0.0
        %4325 = vmatpush1.msra.mxu0 0.0
        %4326 = vmatprep.subr.mxu0 0.0
        %4327 = vmatpush1.msra.mxu0 0.0
        %4328 = vmatprep.subr.mxu0 0.0
        %4329 = vmatpush1.msra.mxu0 0.0
        %4330 = vmatprep.subr.mxu0 0.0
        %4331 = vmatpush1.msra.mxu0 0.0
        %4332 = vmatprep.subr.mxu0 0.0
        %4333 = vmatpush1.msra.mxu0 0.0
        %4334 = vmatprep.subr.mxu0 0.0
        %4335 = vmatpush1.msra.mxu0 0.0
        %4336 = vmatprep.subr.mxu0 0.0
        %4337 = vmatpush1.msra.mxu0 0.0
        %4338 = vmatprep.subr.mxu0 0.0
        %4339 = vmatpush1.msra.mxu0 0.0
        %4340 = vmatprep.subr.mxu0 0.0
        %4341 = vmatpush1.msra.mxu0 0.0
        %4342 = vmatprep.subr.mxu0 0.0
        %4343 = vmatpush1.msra.mxu0 0.0
        %4344 = vmatprep.subr.mxu0 0.0
        %4345 = vmatpush1.msra.mxu0 0.0
        %4346 = vmatprep.subr.mxu0 0.0
        %4347 = vmatpush1.msra.mxu0 0.0
        %4348 = vmatprep.subr.mxu0 0.0
        %4349 = vmatpush1.msra.mxu0 0.0
        %4350 = vmatprep.subr.mxu0 0.0
        %4351 = vmatpush1.msra.mxu0 0.0
        %4352 = vmatprep.subr.mxu0 0.0
        %4353 = vmatpush1.msra.mxu0 0.0
        %4354 = vmatprep.subr.mxu0 0.0
        %4355 = vmatpush1.msra.mxu0 0.0
        %4356 = vmatprep.subr.mxu0 0.0
        %4357 = vmatpush1.msra.mxu0 0.0
        %4358 = vmatprep.subr.mxu0 0.0
        %4359 = vmatpush1.msra.mxu0 0.0
        %4360 = vmatprep.subr.mxu0 0.0
        %4361 = vmatpush1.msra.mxu0 0.0
        %4362 = vmatprep.subr.mxu0 0.0
        %4363 = vmatpush1.msra.mxu0 0.0
        %4364 = vmatprep.subr.mxu0 0.0
        %4365 = vmatpush1.msra.mxu0 0.0
        %4366 = vmatprep.subr.mxu0 0.0
        %4367 = vmatpush1.msra.mxu0 0.0
        %4368 = vmatprep.subr.mxu0 0.0
        %4369 = vmatpush1.msra.mxu0 0.0
        %4370 = vmatprep.subr.mxu0 0.0
        %4371 = vmatpush1.msra.mxu0 0.0
        %4372 = vmatprep.subr.mxu0 0.0
        %4373 = vmatpush1.msra.mxu0 0.0
        %4374 = vmatprep.subr.mxu0 0.0
        %4375 = vmatpush1.msra.mxu0 0.0
        %4376 = vmatprep.subr.mxu0 0.0
        %4377 = vmatpush1.msra.mxu0 0.0
        %4378 = vmatprep.subr.mxu0 0.0
        %4379 = vmatpush1.msra.mxu0 0.0
        %4380 = vmatprep.subr.mxu0 0.0
        %4381 = vmatpush1.msra.mxu0 0.0
        %4382 = vmatprep.mubr.f32.mxu0 0.0
        %4383 = vmatmul.mubr.f32.gmra.mrb[0].mxu0 %v4313
        %v4384 = vpop.f32.mrb[0].mxu0
        %v4385 = vadd.f32 0.0, %v4384
        %v4386 = vpop.f32.mrb[0].mxu0
        %4387 = vmatprep.mubr.f32.mxu0 0.0
        %4388 = vmatmul.mubr.f32.gmra.mrb[0].mxu0 %v4316
        %v4389 = vpop.f32.mrb[0].mxu0
        %v4390 = vadd.f32 0.0, %v4389
        %v4391 = vpop.f32.mrb[0].mxu0
        %4392 = vdwg.mxu0
        %v4393 = vadd.f32 %v4305, %v4385
        %v4394 = vadd.f32 %v4306, %v4390
        %v4395 = vstv %s3167
        %v4396 = vadd.f32 %v4393, %v4395
        %v4397 = vadd.f32 %v4394, %v4395
        %v4398 = vxor.u32 %v4396, 2147483648
        %v4399 = vxor.u32 %v4397, 2147483648
        %v4400 = vmul.f32 %v4398, 1.442695
        %v4401 = vpow.pop %v4400
        %v4402 = vmul.f32 %v4399, 1.442695
        %v4403 = vpow.pop %v4402
        %v4404 = vadd.f32 %v4401, 1.0
        %v4405 = vadd.f32 %v4403, 1.0
        %v4406 = vrcp.pop %v4404
        %v4407 = vmul.f32 1.0, %v4406
        %v4408 = vrcp.pop %v4405
        %v4409 = vmul.f32 1.0, %v4408
        %v4411 = vsel %vm978, %v3166, 0
        %4413 = vmatprep.subr.mxu0 %v400
        %4414 = vmatpush1.msra.mxu0 %v399
        %4415 = vmatprep.subr.mxu0 %v402
        %4416 = vmatpush1.msra.mxu0 %v401
        %4417 = vmatprep.subr.mxu0 0.0
        %4418 = vmatpush1.msra.mxu0 0.0
        %4419 = vmatprep.subr.mxu0 0.0
        %4420 = vmatpush1.msra.mxu0 0.0
        %4421 = vmatprep.subr.mxu0 0.0
        %4422 = vmatpush1.msra.mxu0 0.0
        %4423 = vmatprep.subr.mxu0 0.0
        %4424 = vmatpush1.msra.mxu0 0.0
        %4425 = vmatprep.subr.mxu0 0.0
        %4426 = vmatpush1.msra.mxu0 0.0
        %4427 = vmatprep.subr.mxu0 0.0
        %4428 = vmatpush1.msra.mxu0 0.0
        %4429 = vmatprep.subr.mxu0 0.0
        %4430 = vmatpush1.msra.mxu0 0.0
        %4431 = vmatprep.subr.mxu0 0.0
        %4432 = vmatpush1.msra.mxu0 0.0
        %4433 = vmatprep.subr.mxu0 0.0
        %4434 = vmatpush1.msra.mxu0 0.0
        %4435 = vmatprep.subr.mxu0 0.0
        %4436 = vmatpush1.msra.mxu0 0.0
        %4437 = vmatprep.subr.mxu0 0.0
        %4438 = vmatpush1.msra.mxu0 0.0
        %4439 = vmatprep.subr.mxu0 0.0
        %4440 = vmatpush1.msra.mxu0 0.0
        %4441 = vmatprep.subr.mxu0 0.0
        %4442 = vmatpush1.msra.mxu0 0.0
        %4443 = vmatprep.subr.mxu0 0.0
        %4444 = vmatpush1.msra.mxu0 0.0
        %4445 = vmatprep.subr.mxu0 0.0
        %4446 = vmatpush1.msra.mxu0 0.0
        %4447 = vmatprep.subr.mxu0 0.0
        %4448 = vmatpush1.msra.mxu0 0.0
        %4449 = vmatprep.subr.mxu0 0.0
        %4450 = vmatpush1.msra.mxu0 0.0
        %4451 = vmatprep.subr.mxu0 0.0
        %4452 = vmatpush1.msra.mxu0 0.0
        %4453 = vmatprep.subr.mxu0 0.0
        %4454 = vmatpush1.msra.mxu0 0.0
        %4455 = vmatprep.subr.mxu0 0.0
        %4456 = vmatpush1.msra.mxu0 0.0
        %4457 = vmatprep.subr.mxu0 0.0
        %4458 = vmatpush1.msra.mxu0 0.0
        %4459 = vmatprep.subr.mxu0 0.0
        %4460 = vmatpush1.msra.mxu0 0.0
        %4461 = vmatprep.subr.mxu0 0.0
        %4462 = vmatpush1.msra.mxu0 0.0
        %4463 = vmatprep.subr.mxu0 0.0
        %4464 = vmatpush1.msra.mxu0 0.0
        %4465 = vmatprep.subr.mxu0 0.0
        %4466 = vmatpush1.msra.mxu0 0.0
        %4467 = vmatprep.subr.mxu0 0.0
        %4468 = vmatpush1.msra.mxu0 0.0
        %4469 = vmatprep.subr.mxu0 0.0
        %4470 = vmatpush1.msra.mxu0 0.0
        %4471 = vmatprep.subr.mxu0 0.0
        %4472 = vmatpush1.msra.mxu0 0.0
        %4473 = vmatprep.subr.mxu0 0.0
        %4474 = vmatpush1.msra.mxu0 0.0
        %4475 = vmatprep.subr.mxu0 0.0
        %4476 = vmatpush1.msra.mxu0 0.0
        %4477 = vmatprep.mubr.f32.mxu0 0.0
        %4478 = vmatmul.mubr.f32.gmra.mrb[0].mxu0 %v4411
        %v4479 = vpop.f32.mrb[0].mxu0
        %v4480 = vadd.f32 0.0, %v4479
        %v4481 = vpop.f32.mrb[0].mxu0
        %v4482 = vadd.f32 0.0, %v4481
        %4483 = vdwg.mxu0
        %v4485 = vsel %vm978, %v4407, 0
        %v4488 = vsel %vm978, %v4409, 0
        %4490 = vmatprep.subr.mxu0 %v396
        %4491 = vmatpush1.msra.mxu0 %v395
        %4492 = vmatprep.subr.mxu0 %v398
        %4493 = vmatpush1.msra.mxu0 %v397
        %4494 = vmatprep.subr.mxu0 0.0
        %4495 = vmatpush1.msra.mxu0 0.0
        %4496 = vmatprep.subr.mxu0 0.0
        %4497 = vmatpush1.msra.mxu0 0.0
        %4498 = vmatprep.subr.mxu0 0.0
        %4499 = vmatpush1.msra.mxu0 0.0
        %4500 = vmatprep.subr.mxu0 0.0
        %4501 = vmatpush1.msra.mxu0 0.0
        %4502 = vmatprep.subr.mxu0 0.0
        %4503 = vmatpush1.msra.mxu0 0.0
        %4504 = vmatprep.subr.mxu0 0.0
        %4505 = vmatpush1.msra.mxu0 0.0
        %4506 = vmatprep.subr.mxu0 0.0
        %4507 = vmatpush1.msra.mxu0 0.0
        %4508 = vmatprep.subr.mxu0 0.0
        %4509 = vmatpush1.msra.mxu0 0.0
        %4510 = vmatprep.subr.mxu0 0.0
        %4511 = vmatpush1.msra.mxu0 0.0
        %4512 = vmatprep.subr.mxu0 0.0
        %4513 = vmatpush1.msra.mxu0 0.0
        %4514 = vmatprep.subr.mxu0 0.0
        %4515 = vmatpush1.msra.mxu0 0.0
        %4516 = vmatprep.subr.mxu0 0.0
        %4517 = vmatpush1.msra.mxu0 0.0
        %4518 = vmatprep.subr.mxu0 0.0
        %4519 = vmatpush1.msra.mxu0 0.0
        %4520 = vmatprep.subr.mxu0 0.0
        %4521 = vmatpush1.msra.mxu0 0.0
        %4522 = vmatprep.subr.mxu0 0.0
        %4523 = vmatpush1.msra.mxu0 0.0
        %4524 = vmatprep.subr.mxu0 0.0
        %4525 = vmatpush1.msra.mxu0 0.0
        %4526 = vmatprep.subr.mxu0 0.0
        %4527 = vmatpush1.msra.mxu0 0.0
        %4528 = vmatprep.subr.mxu0 0.0
        %4529 = vmatpush1.msra.mxu0 0.0
        %4530 = vmatprep.subr.mxu0 0.0
        %4531 = vmatpush1.msra.mxu0 0.0
        %4532 = vmatprep.subr.mxu0 0.0
        %4533 = vmatpush1.msra.mxu0 0.0
        %4534 = vmatprep.subr.mxu0 0.0
        %4535 = vmatpush1.msra.mxu0 0.0
        %4536 = vmatprep.subr.mxu0 0.0
        %4537 = vmatpush1.msra.mxu0 0.0
        %4538 = vmatprep.subr.mxu0 0.0
        %4539 = vmatpush1.msra.mxu0 0.0
        %4540 = vmatprep.subr.mxu0 0.0
        %4541 = vmatpush1.msra.mxu0 0.0
        %4542 = vmatprep.subr.mxu0 0.0
        %4543 = vmatpush1.msra.mxu0 0.0
        %4544 = vmatprep.subr.mxu0 0.0
        %4545 = vmatpush1.msra.mxu0 0.0
        %4546 = vmatprep.subr.mxu0 0.0
        %4547 = vmatpush1.msra.mxu0 0.0
        %4548 = vmatprep.subr.mxu0 0.0
        %4549 = vmatpush1.msra.mxu0 0.0
        %4550 = vmatprep.subr.mxu0 0.0
        %4551 = vmatpush1.msra.mxu0 0.0
        %4552 = vmatprep.subr.mxu0 0.0
        %4553 = vmatpush1.msra.mxu0 0.0
        %4554 = vmatprep.mubr.f32.mxu0 0.0
        %4555 = vmatmul.mubr.f32.gmra.mrb[0].mxu0 %v4485
        %v4556 = vpop.f32.mrb[0].mxu0
        %v4557 = vadd.f32 0.0, %v4556
        %v4558 = vpop.f32.mrb[0].mxu0
        %v4559 = vadd.f32 0.0, %v4558
        %4560 = vmatprep.mubr.f32.mxu0 0.0
        %4561 = vmatmul.mubr.f32.gmra.mrb[0].mxu0 %v4488
        %v4562 = vpop.f32.mrb[0].mxu0
        %v4563 = vadd.f32 0.0, %v4562
        %v4564 = vpop.f32.mrb[0].mxu0
        %v4565 = vadd.f32 0.0, %v4564
        %4566 = vdwg.mxu0
        %v4567 = vmul.f32 %v4557, %v399
        %v4568 = vmul.f32 %v4559, %v400
        %v4569 = vmul.f32 %v4563, %v401
        %v4570 = vmul.f32 %v4565, %v402
        %v4571 = vadd.f32 %v4567, %v4569
        %v4572 = vrot.slane %v4571, 4
        %v4573 = vadd.f32 %v4571, %v4572
        %v4574 = vrot.slane %v4573, 2
        %v4575 = vadd.f32 %v4573, %v4574
        %v4576 = vrot.slane %v4575, 1
        %v4577 = vadd.f32 %v4575, %v4576
        %v4578 = vadd.f32 %v4568, %v4570
        %v4579 = vrot.slane %v4578, 4
        %v4580 = vadd.f32 %v4578, %v4579
        %v4581 = vrot.slane %v4580, 2
        %v4582 = vadd.f32 %v4580, %v4581
        %v4583 = vrot.slane %v4582, 1
        %v4584 = vadd.f32 %v4582, %v4583
        %v4586 = vsel %vm978, %v2068, 0
        %4588 = vmatprep.subr.mxu0 %v396
        %4589 = vmatpush1.msra.mxu0 %v395
        %4590 = vmatprep.subr.mxu0 %v398
        %4591 = vmatpush1.msra.mxu0 %v397
        %4592 = vmatprep.subr.mxu0 0.0
        %4593 = vmatpush1.msra.mxu0 0.0
        %4594 = vmatprep.subr.mxu0 0.0
        %4595 = vmatpush1.msra.mxu0 0.0
        %4596 = vmatprep.subr.mxu0 0.0
        %4597 = vmatpush1.msra.mxu0 0.0
        %4598 = vmatprep.subr.mxu0 0.0
        %4599 = vmatpush1.msra.mxu0 0.0
        %4600 = vmatprep.subr.mxu0 0.0
        %4601 = vmatpush1.msra.mxu0 0.0
        %4602 = vmatprep.subr.mxu0 0.0
        %4603 = vmatpush1.msra.mxu0 0.0
        %4604 = vmatprep.subr.mxu0 0.0
        %4605 = vmatpush1.msra.mxu0 0.0
        %4606 = vmatprep.subr.mxu0 0.0
        %4607 = vmatpush1.msra.mxu0 0.0
        %4608 = vmatprep.subr.mxu0 0.0
        %4609 = vmatpush1.msra.mxu0 0.0
        %4610 = vmatprep.subr.mxu0 0.0
        %4611 = vmatpush1.msra.mxu0 0.0
        %4612 = vmatprep.subr.mxu0 0.0
        %4613 = vmatpush1.msra.mxu0 0.0
        %4614 = vmatprep.subr.mxu0 0.0
        %4615 = vmatpush1.msra.mxu0 0.0
        %4616 = vmatprep.subr.mxu0 0.0
        %4617 = vmatpush1.msra.mxu0 0.0
        %4618 = vmatprep.subr.mxu0 0.0
        %4619 = vmatpush1.msra.mxu0 0.0
        %4620 = vmatprep.subr.mxu0 0.0
        %4621 = vmatpush1.msra.mxu0 0.0
        %4622 = vmatprep.subr.mxu0 0.0
        %4623 = vmatpush1.msra.mxu0 0.0
        %4624 = vmatprep.subr.mxu0 0.0
        %4625 = vmatpush1.msra.mxu0 0.0
        %4626 = vmatprep.subr.mxu0 0.0
        %4627 = vmatpush1.msra.mxu0 0.0
        %4628 = vmatprep.subr.mxu0 0.0
        %4629 = vmatpush1.msra.mxu0 0.0
        %4630 = vmatprep.subr.mxu0 0.0
        %4631 = vmatpush1.msra.mxu0 0.0
        %4632 = vmatprep.subr.mxu0 0.0
        %4633 = vmatpush1.msra.mxu0 0.0
        %4634 = vmatprep.subr.mxu0 0.0
        %4635 = vmatpush1.msra.mxu0 0.0
        %4636 = vmatprep.subr.mxu0 0.0
        %4637 = vmatpush1.msra.mxu0 0.0
        %4638 = vmatprep.subr.mxu0 0.0
        %4639 = vmatpush1.msra.mxu0 0.0
        %4640 = vmatprep.subr.mxu0 0.0
        %4641 = vmatpush1.msra.mxu0 0.0
        %4642 = vmatprep.subr.mxu0 0.0
        %4643 = vmatpush1.msra.mxu0 0.0
        %4644 = vmatprep.subr.mxu0 0.0
        %4645 = vmatpush1.msra.mxu0 0.0
        %4646 = vmatprep.subr.mxu0 0.0
        %4647 = vmatpush1.msra.mxu0 0.0
        %4648 = vmatprep.subr.mxu0 0.0
        %4649 = vmatpush1.msra.mxu0 0.0
        %4650 = vmatprep.subr.mxu0 0.0
        %4651 = vmatpush1.msra.mxu0 0.0
        %4652 = vmatprep.mubr.f32.mxu0 0.0
        %4653 = vmatmul.mubr.f32.gmra.mrb[0].mxu0 %v4586
        %v4654 = vpop.f32.mrb[0].mxu0
        %v4655 = vadd.f32 %v4480, %v4654
        %v4656 = vpop.f32.mrb[0].mxu0
        %v4657 = vadd.f32 %v4482, %v4656
        %4658 = vdwg.mxu0
        %v4659 = vadd.f32 %v4655, %v4577
        %v4660 = vadd.f32 %v4657, %v4584
        %v4661 = vmul.f32 %v4659, 0.33333334
        %v4662 = vmul.f32 %v4660, 0.33333334
        %v4665 = vcombine.low %v4661, %v4662
        %v4667 = vmul.f32 %v403, %v4665
        %4668 = vst [vmem:[%s381] sm:$0xff] %v4667
        %s4669 = sand.u32 %s188, 1
        %s4670 = scalar_lea.sflag [#allocation10], %s4669
        %s4671 = sand.u32 %s188, 1
        %s4672 = smul.addr %s4671, 8
        %s4673 = scalar_lea.vmem [#allocation21], %s4672
        // Predicated region
        $region77: #{tpu_custom_call.1} parent=47 // pred_check
          %p4674 = pneg %p198
        $region78: #{tpu_custom_call.1} parent=47 // pred_check_branch
          %4676 = sbr.rel (%p4674) target = $region80
        $region79: #{tpu_custom_call.1} parent=47 // pred_region
          %s4678 = ssub.s32 128, 128
          %4679 = vsyncadd %s4670, %s4678
          %s4680 = smul.addr %s28, 2
          %s4681 = smul.addr %s4680, 64
          %s4682 = scalar_lea.hbm %s7, %s4681
          %s4684 = sshll.u32 %s4673, 4
          %s4685 = int_to_ptr.vmem [resolvable:$true] %s4684
          %4687 = dma.vmem_to_hbm [thread:$0]  %s4685, 128, %s4682, %s4670
        $region80: #{tpu_custom_call.1} parent=47 // pred_fallthru
          _
      $region48: #{tpu_custom_call.1} parent=5 // pred_fallthru
        _
      %p4688 = scmp.le.s32.totalorder 2, %s23
      // Predicated region
      $region81: #{tpu_custom_call.1} parent=5 // pred_check
        %p4689 = pneg %p4688
      $region82: #{tpu_custom_call.1} parent=5 // pred_check_branch
        %4691 = sbr.rel (%p4689) target = $region84
      $region83: #{tpu_custom_call.1} parent=5 // pred_region
        %s4692 = ssub.s32 %s23, 2
        // Predicated region
        $region85: #{tpu_custom_call.1} parent=83 // pred_check
          %p4693 = pneg %p204
        $region86: #{tpu_custom_call.1} parent=83 // pred_check_branch
          %4695 = sbr.rel (%p4693) target = $region88
        $region87: #{tpu_custom_call.1} parent=83 // pred_region
          %s4696 = sand.u32 %s189, 1
          %s4697 = scalar_lea.sflag [#allocation10], %s4696
          %s4698 = sand.u32 %s189, 1
          %s4699 = smul.addr %s4698, 8
          %s4700 = scalar_lea.vmem [#allocation21], %s4699
          %4701 = dma.done %s4697, 128
        $region88: #{tpu_custom_call.1} parent=83 // pred_fallthru
          _
      $region84: #{tpu_custom_call.1} parent=5 // pred_fallthru
        _
    $region6: #{tpu_custom_call.1} parent=1 // loop_footer
      %s27 = sadd.s32 1, %s23
    $region7: #{tpu_custom_call.1} parent=1 // loop_footer_branch
      %22 = sbr.rel target = $region3
    $region8: #{tpu_custom_call.1} parent=1 // loop_exit
      _
    %4702 = vsyncpa [#allocation9], 1
    %s4703 = scalar_lea.sflag [#allocation9], 1
    %4704 = vsyncpa %s4703, 1
    %4705 = vsyncpa [#allocation13], 1
    %4706 = vsyncpa [#allocation16], 1
    %4707 = vsyncpa [#allocation19], 1
    %4708 = vsyncpa [#allocation10], 1
    %s4709 = scalar_lea.sflag [#allocation10], 1
    %4710 = vsyncpa %s4709, 1
    %4711 = vsyncpa [#allocation11], 1
    %s4712 = scalar_lea.sflag [#allocation11], 1
    %4713 = vsyncpa %s4712, 1

</llo_original>
